<compile_context>
chip_gen: v7x
topology: tpu7x:2x2x1
jax: 0.10.0
libtpu: 0.0.40
codegen_flags: <defaults>
</compile_context>

<pallas_src>
import functools

import jax
import jax.numpy as jnp
from jax.experimental import pallas as pl
from jax.experimental.pallas import tpu as pltpu

# MXU operand dtype (accumulation stays f32).
MXU_DTYPE = jnp.bfloat16

# GRU time steps per grid step (statically unrolled inside the kernel).
GRU_CHUNK = 16

# Row-tile for the row-parallel kernels.
ROW_TILE = 1024


# ----------------------------- GRU recurrence kernel -----------------------------

def _gru_kernel(x_ref, wih_ref, whh_ref, bih_ref, bhh_ref, o_ref, h_scr, *, chunk, bd):
    """One chunk of GRU steps for one dilated-batch slice.

    gi = x @ Wih is hoisted out of the recurrence (chunk-level matmuls, off the serial
    path); the in-loop work is only the three h @ Whh_g matmuls + gate math.  Gate
    weights are stacked on a leading axis so no lane slicing happens per step.
    """
    @pl.when(pl.program_id(1) == 0)
    def _():
        h_scr[...] = jnp.zeros_like(h_scr)

    xc = x_ref[0]                                                    # (chunk*bd, Din) bf16
    # hoisted, chunk-level input-gate matmuls (independent of h)
    gi_r = jnp.dot(xc, wih_ref[0], preferred_element_type=jnp.float32) + bih_ref[0]
    gi_z = jnp.dot(xc, wih_ref[1], preferred_element_type=jnp.float32) + bih_ref[1]
    gi_n = jnp.dot(xc, wih_ref[2], preferred_element_type=jnp.float32) + bih_ref[2]

    whh_r, whh_z, whh_n = whh_ref[0], whh_ref[1], whh_ref[2]         # (H, H) bf16
    bhh_r, bhh_z, bhh_n = bhh_ref[0], bhh_ref[1], bhh_ref[2]         # (1, H) f32

    h = h_scr[...]                                                   # (bd, H) f32
    for t in range(chunk):                                           # static unroll
        lo = t * bd
        hb = h.astype(whh_r.dtype)
        gh_r = jnp.dot(hb, whh_r, preferred_element_type=jnp.float32) + bhh_r
        gh_z = jnp.dot(hb, whh_z, preferred_element_type=jnp.float32) + bhh_z
        gh_n = jnp.dot(hb, whh_n, preferred_element_type=jnp.float32) + bhh_n
        r = jax.nn.sigmoid(gi_r[lo:lo + bd] + gh_r)
        z = jax.nn.sigmoid(gi_z[lo:lo + bd] + gh_z)
        n = jnp.tanh(gi_n[lo:lo + bd] + r * gh_n)
        h = (1.0 - z) * n + z * h
        o_ref[0, lo:lo + bd, :] = h.astype(o_ref.dtype)
    h_scr[...] = h


def pallas_gru_seq(x, wih, whh, bih, bhh):
    """x: (Ts, Bd, Din) -> (Ts, Bd, H) bf16.

    wih: (3, Din, H), whh: (3, H, H), bih/bhh: (3, 1, H); gate order [r, z, n].
    """
    Ts, Bd, Din = x.shape
    H = whh.shape[1]

    # Split the dilated batch across a leading "parallel" grid axis when big enough
    # (uses both v7x TensorCores; harmless on v5e/v6e which have a single core).
    nsplit = 2 if (Bd % 2 == 0 and Bd >= 8) else 1
    bd = Bd // nsplit

    chunk = Ts if Ts <= GRU_CHUNK else GRU_CHUNK
    Ts_pad = pl.cdiv(Ts, chunk) * chunk
    xp = x
    if Ts_pad != Ts:
        # extra zero steps at the end: their outputs are sliced away below.
        xp = jnp.concatenate(
            [x, jnp.zeros((Ts_pad - Ts, Bd, Din), x.dtype)], axis=0)

    # (Ts_pad, Bd, Din) -> (nsplit, Ts_pad*bd, Din): rows within a split are in
    # (t, batch) order so one grid step owns one contiguous chunk slab.
    xs = (xp.reshape(Ts_pad, nsplit, bd, Din)
            .transpose(1, 0, 2, 3)
            .reshape(nsplit, Ts_pad * bd, Din)).astype(MXU_DTYPE)

    out = pl.pallas_call(
        functools.partial(_gru_kernel, chunk=chunk, bd=bd),
        out_shape=jax.ShapeDtypeStruct((nsplit, Ts_pad * bd, H), MXU_DTYPE),
        grid=(nsplit, Ts_pad // chunk),
        in_specs=[
            pl.BlockSpec((1, chunk * bd, Din), lambda s, g: (s, g, 0)),
            pl.BlockSpec((3, Din, H), lambda s, g: (0, 0, 0)),
            pl.BlockSpec((3, H, H), lambda s, g: (0, 0, 0)),
            pl.BlockSpec((3, 1, H), lambda s, g: (0, 0, 0)),
            pl.BlockSpec((3, 1, H), lambda s, g: (0, 0, 0)),
        ],
        out_specs=pl.BlockSpec((1, chunk * bd, H), lambda s, g: (s, g, 0)),
        scratch_shapes=[pltpu.VMEM((bd, H), jnp.float32)],
        compiler_params=pltpu.CompilerParams(
            dimension_semantics=("parallel", "arbitrary")),
    )(xs, wih.astype(MXU_DTYPE), whh.astype(MXU_DTYPE), bih, bhh)

    return (out.reshape(nsplit, Ts_pad, bd, H)
               .transpose(1, 0, 2, 3)
               .reshape(Ts_pad, Bd, H)[:Ts])


# ----------------------------- fused linear + assign-prob kernel -----------------------------

def _layer_fused_kernel(f_ref, lw_ref, lb_ref, cn_ref, p_ref, y_ref, *, tau):
    """Per row-tile: y = relu(f @ Wlin + b);  P = softmax_c(exp(cos(f, centroid_c)/tau))."""
    fb = f_ref[...]                                                   # (TM, H) bf16
    ff = fb.astype(jnp.float32)
    y = jnp.dot(fb, lw_ref[...], preferred_element_type=jnp.float32) + lb_ref[...]
    y_ref[...] = jnp.maximum(y, 0.0)
    fn = jnp.sqrt(jnp.sum(ff * ff, axis=1, keepdims=True))            # (TM, 1)
    inv_fn = pl.reciprocal(jnp.maximum(fn, 1e-8), approx=True)        # EUP, off the VALU
    dots = jnp.dot(fb, cn_ref[...], preferred_element_type=jnp.float32)   # (TM, C)
    e = jnp.exp(dots * inv_fn * (1.0 / tau))
    p_ref[...] = e * pl.reciprocal(jnp.sum(e, axis=1, keepdims=True), approx=True)


def pallas_layer_fused(f2d, lin_wt, lin_b, cents_nt, tau, tm=ROW_TILE):
    """f2d: (N, H) bf16; lin_wt: (H, H) bf16; lin_b: (1, H) f32; cents_nt: (H, C) bf16."""
    N, H = f2d.shape
    C = cents_nt.shape[1]
    TM = N if N <= tm else tm
    P, y = pl.pallas_call(
        functools.partial(_layer_fused_kernel, tau=float(tau)),
        out_shape=(jax.ShapeDtypeStruct((N, C), jnp.float32),
                   jax.ShapeDtypeStruct((N, H), jnp.float32)),
        grid=(pl.cdiv(N, TM),),
        in_specs=[
            pl.BlockSpec((TM, H), lambda i: (i, 0)),
            pl.BlockSpec((H, H), lambda i: (0, 0)),
            pl.BlockSpec((1, H), lambda i: (0, 0)),
            pl.BlockSpec((H, C), lambda i: (0, 0)),
        ],
        out_specs=[
            pl.BlockSpec((TM, C), lambda i: (i, 0)),
            pl.BlockSpec((TM, H), lambda i: (i, 0)),
        ],
        compiler_params=pltpu.CompilerParams(dimension_semantics=("parallel",)),
    )(f2d, lin_wt, lin_b, cents_nt)
    return P, y


# ----------------------------- fused MLP(concat) kernel -----------------------------

def _mlp_fused_kernel(fh_ref, fn_ref, wt_ref, wb_ref, b_ref, o_ref):
    """mlp(cat([f_hat, f_next], -1)) == f_hat @ W_top + f_next @ W_bot + b (no concat)."""
    y = (jnp.dot(fh_ref[0], wt_ref[...], preferred_element_type=jnp.float32)
         + jnp.dot(fn_ref[...], wb_ref[...], preferred_element_type=jnp.float32)
         + b_ref[...])
    o_ref[0] = y


def pallas_mlp_fused(fh3, fn2, wt_top, wt_bot, b, tm=ROW_TILE):
    """fh3: (C_l, M, H) bf16 (M=B*T); fn2: (M, H) bf16 broadcast over C_l via index_map."""
    C_l, M, H = fh3.shape
    TM = M if M <= tm else tm
    return pl.pallas_call(
        _mlp_fused_kernel,
        out_shape=jax.ShapeDtypeStruct((C_l, M, H), jnp.float32),
        grid=(C_l, pl.cdiv(M, TM)),
        in_specs=[
            pl.BlockSpec((1, TM, H), lambda k, i: (k, i, 0)),
            pl.BlockSpec((TM, H), lambda k, i: (i, 0)),
            pl.BlockSpec((H, H), lambda k, i: (0, 0)),
            pl.BlockSpec((H, H), lambda k, i: (0, 0)),
            pl.BlockSpec((1, H), lambda k, i: (0, 0)),
        ],
        out_specs=pl.BlockSpec((1, TM, H), lambda k, i: (k, i, 0)),
        compiler_params=pltpu.CompilerParams(
            dimension_semantics=("parallel", "parallel")),
    )(fh3, fn2, wt_top, wt_bot, b)


# ----------------------------- plain row-tiled linear -----------------------------

def _linear_kernel(x_ref, wt_ref, b_ref, o_ref, *, relu):
    y = jnp.dot(x_ref[...], wt_ref[...], preferred_element_type=jnp.float32) + b_ref[...]
    if relu:
        y = jnp.maximum(y, 0.0)
    o_ref[...] = y


def pallas_linear(x2d, wt, b, relu=False, tm=ROW_TILE):
    """x2d: (N, Din); wt: (Din, Dout) pre-transposed bf16; b: (1, Dout) f32."""
    N, Din = x2d.shape
    Dout = wt.shape[1]
    TM = N if N <= tm else tm
    return pl.pallas_call(
        functools.partial(_linear_kernel, relu=relu),
        out_shape=jax.ShapeDtypeStruct((N, Dout), jnp.float32),
        grid=(pl.cdiv(N, TM),),
        in_specs=[
            pl.BlockSpec((TM, Din), lambda i: (i, 0)),
            pl.BlockSpec((Din, Dout), lambda i: (0, 0)),
            pl.BlockSpec((1, Dout), lambda i: (0, 0)),
        ],
        out_specs=pl.BlockSpec((TM, Dout), lambda i: (i, 0)),
        compiler_params=pltpu.CompilerParams(dimension_semantics=("parallel",)),
    )(x2d.astype(MXU_DTYPE), wt, b)


# ----------------------------- anomaly cosine-sum kernel -----------------------------

def _cos_sum_kernel(f_ref, w_ref, o_ref):
    """sum_c cos(f, c_c) == (f . sum_c c_norm_c) / max(||f||, eps) -- single reduction."""
    f = f_ref[...].astype(jnp.float32)                                # (TM, H)
    dots = jnp.sum(f * w_ref[...], axis=1, keepdims=True)             # (TM, 1)
    norm = jnp.sqrt(jnp.sum(f * f, axis=1, keepdims=True))
    o_ref[...] = dots * pl.reciprocal(jnp.maximum(norm, 1e-8), approx=True)


def pallas_cos_sum(f2d, w_sum, tm=ROW_TILE):
    """f2d: (N, H) bf16; w_sum: (1, H) f32 (column-sum of the normalized centroids)."""
    N, H = f2d.shape
    TM = N if N <= tm else tm
    return pl.pallas_call(
        _cos_sum_kernel,
        out_shape=jax.ShapeDtypeStruct((N, 1), jnp.float32),
        grid=(pl.cdiv(N, TM),),
        in_specs=[pl.BlockSpec((TM, H), lambda i: (i, 0)),
                  pl.BlockSpec((1, H), lambda i: (0, 0))],
        out_specs=pl.BlockSpec((TM, 1), lambda i: (i, 0)),
        compiler_params=pltpu.CompilerParams(dimension_semantics=("parallel",)),
    )(f2d, w_sum)


# ----------------------------- centroid diversity kernel -----------------------------

def _centroid_ci_kernel(ct_ref, c_ref, o_ref):
    g = jnp.dot(ct_ref[0], c_ref[0], preferred_element_type=jnp.float32)   # (H, H)
    Hh = g.shape[0]
    row = jax.lax.broadcasted_iota(jnp.int32, (Hh, Hh), 0)
    col = jax.lax.broadcasted_iota(jnp.int32, (Hh, Hh), 1)
    ci = g - jnp.where(row == col, 1.0, 0.0).astype(jnp.float32)
    o_ref[0] = ci * ci


def pallas_centroid_ci_sq(cc):
    """cc: (L, C0, H) zero-padded centroids -> (L, H, H) of (C^T C - I)^2.

    Padded rows are exactly zero, so the padded Gram equals the unpadded Gram.
    """
    L, C0, H = cc.shape
    ccT = jnp.transpose(cc, (0, 2, 1))
    return pl.pallas_call(
        _centroid_ci_kernel,
        out_shape=jax.ShapeDtypeStruct((L, H, H), jnp.float32),
        grid=(L,),
        in_specs=[pl.BlockSpec((1, H, C0), lambda l: (l, 0, 0)),
                  pl.BlockSpec((1, C0, H), lambda l: (l, 0, 0))],
        out_specs=pl.BlockSpec((1, H, H), lambda l: (l, 0, 0)),
        compiler_params=pltpu.CompilerParams(dimension_semantics=("parallel",)),
    )(ccT, cc)


# ----------------------------- model (glue in plain JAX) -----------------------------

def drnn_forward(x, gru_params, n_layers, n_hidden):
    """Dilated GRU stack. x: (T, B, n_input) -> (n_layers, T, B, n_hidden) bf16."""
    T, B, _ = x.shape
    outs = []
    inputs = x
    for i in range(n_layers):
        rate = 2 ** i
        Ts = -(-T // rate)
        pad = Ts * rate - T
        xp = inputs
        if pad > 0:
            xp = jnp.concatenate(
                [inputs, jnp.zeros((pad, B, inputs.shape[2]), inputs.dtype)], axis=0)
        # torch _prepare_inputs: cat([x[j::rate] for j], dim=1) == reshape (Ts, rate*B, D)
        dil = xp.reshape(Ts, rate * B, xp.shape[2])
        p = gru_params[i]
        h_seq = pallas_gru_seq(dil, p["wih"], p["whh"], p["bih"], p["bhh"])
        # torch _split_outputs + _unpad_outputs == reshape (Ts*rate, B, H)[:T]
        out = h_seq.reshape(Ts * rate, B, n_hidden)[:T]
        outs.append(out)
        inputs = out
    return jnp.stack(outs)


def _normalized_centroids(cents):
    """(C, H) -> row-normalized (torch CosineSimilarity eps clamp), f32."""
    norms = jnp.sqrt(jnp.sum(cents * cents, axis=1, keepdims=True))
    return cents / jnp.maximum(norms, 1e-8)


def thoc_forward(x, params, *, n_layers, n_hidden, n_centroids, tau):
    H = n_hidden
    T, B, n_input = x.shape
    out = drnn_forward(x, params["gru"], n_layers, H)        # (L, T, B, H) bf16
    cc = params["cluster_centers"]                           # (L, C0, H) (zero-padded)

    # Pre-cast MXU weight operands once per forward (weights stored as (Din, Dout)).
    lin_wt = params["linear_wt"].astype(MXU_DTYPE)
    mlp_wt = params["mlp_wt"].astype(MXU_DTYPE)              # (2H, H)
    mlp_wt_top, mlp_wt_bot = mlp_wt[:H], mlp_wt[H:]          # multiply f_hat / f_next
    ss_wt = params["ss_wt"].astype(MXU_DTYPE)

    R = jnp.ones((B, T, 1), jnp.float32)
    f_bar = out[0][None]                                     # (1, T, B, H) bf16
    f_hat = None

    for layer in range(n_layers):
        C_l = n_centroids[layer]
        cents_nt = _normalized_centroids(cc[layer, :C_l]).T.astype(MXU_DTYPE)  # (H, C_l)
        K = f_bar.shape[0]

        # Fused: P = assign_prob(f_bar, cents), y = relu(linear(f_bar)) in one pass.
        f_flat = f_bar.reshape(K * T * B, H).astype(MXU_DTYPE)   # contiguous (k,t,b) rows
        P_flat, y_flat = pallas_layer_fused(f_flat, lin_wt, params["linear_b"],
                                            cents_nt, tau)
        P = P_flat.reshape(K, T, B, C_l)
        y = y_flat.reshape(K, T, B, H)

        # calculate_R (tiny glue reduction; mirrors the reference's quirky exp/sum mix)
        PR = jnp.einsum("ktbi,btk->bti", P, R)
        R = jnp.exp(PR) / jnp.sum(PR, axis=2, keepdims=True)

        # update: f_hat[b,t,c] = sum_k relu(linear(f_bar[k,t,b])) * P[k,t,b,c]
        f_hat = jnp.einsum("ktbh,ktbc->btch", y, P)          # (B, T, C_l, H) f32

        if layer != n_layers - 1:
            f_next = out[layer + 1]                          # (T, B, H) bf16
            fh = (jnp.transpose(f_hat, (2, 0, 1, 3))
                    .reshape(C_l, B * T, H).astype(MXU_DTYPE))
            fn = jnp.transpose(f_next, (1, 0, 2)).reshape(B * T, H)
            mlp_out = pallas_mlp_fused(fh, fn, mlp_wt_top, mlp_wt_bot,
                                       params["mlp_b"])      # (C_l, B*T, H) f32
            # TODO(synk): replicates the reference's raw .view((T, B, H)) of a
            # (B, T, H)-ordered buffer (intentionally keeps the torch B/T scramble).
            f_bar = mlp_out.reshape(C_l, T, B, H)

    # anomaly score: sum_c cos(f_hat, c_c) collapses to one reduction against the
    # column-sum of the normalized centroids (no (N, C) cosine matrix round trip).
    C_last = n_centroids[-1]
    w_sum = jnp.sum(_normalized_centroids(cc[n_layers - 1, :C_last]),
                    axis=0, keepdims=True)                   # (1, H) f32
    cos_sum = pallas_cos_sum(
        f_hat.reshape(B * T * C_last, H).astype(MXU_DTYPE), w_sum
    ).reshape(B, T, C_last)
    anomaly_score = jnp.sum(R * (float(C_last) - cos_sum), axis=2).reshape(B * T)

    # centroid diversity regularizer (single pallas_call, grid over layers)
    ci_sq = pallas_centroid_ci_sq(cc)                        # (L, H, H)
    centroids_diff = jnp.mean(ci_sq, axis=(1, 2))

    # self-supervision head over every DRNN layer output
    out_f = pallas_linear(out.reshape(n_layers * T * B, H), ss_wt, params["ss_b"],
                          relu=False).reshape(n_layers, T, B, n_input)

    return anomaly_score, centroids_diff, out_f


# ----------------------------- deterministic parameter init -----------------------------

def init_params(key, n_input, n_hidden, n_layers, n_centroids):
    H = n_hidden
    keys = jax.random.split(key, n_layers + 5)
    kb = 1.0 / (H ** 0.5)

    gru = []
    for i in range(n_layers):
        Din = n_input if i == 0 else H
        k1, k2, k3, k4 = jax.random.split(keys[i], 4)
        gru.append(dict(
            # gate-stacked layout: leading axis is [r | z | n]
            wih=jax.random.uniform(k1, (3, Din, H), jnp.float32, -kb, kb),
            whh=jax.random.uniform(k2, (3, H, H), jnp.float32, -kb, kb),
            bih=jax.random.uniform(k3, (3, 1, H), jnp.float32, -kb, kb),
            bhh=jax.random.uniform(k4, (3, 1, H), jnp.float32, -kb, kb),
        ))

    # TODO(synk): original code initializes cluster_centers via kmeans on DRNN hiddens;
    # here we use deterministic random centers (zero-padded to n_centroids[0]) instead.
    C0 = n_centroids[0]
    cc = jax.random.normal(keys[n_layers], (n_layers, C0, H), jnp.float32)
    mask = (jnp.arange(C0)[None, :, None] <
            jnp.asarray(n_centroids, jnp.int32)[:, None, None]).astype(jnp.float32)
    cc = cc * mask

    k_mlp, k_lin, k_ss = keys[n_layers + 1], keys[n_layers + 2], keys[n_layers + 3]
    km = 1.0 / ((2 * H) ** 0.5)
    kl = 1.0 / (H ** 0.5)
    # dense weights stored pre-transposed as (Din, Dout); biases as (1, Dout)
    params = dict(
        gru=gru,
        cluster_centers=cc,
        mlp_wt=jax.random.uniform(k_mlp, (2 * H, H), jnp.float32, -km, km),
        mlp_b=jax.random.uniform(jax.random.fold_in(k_mlp, 1), (1, H), jnp.float32, -km, km),
        linear_wt=jax.random.uniform(k_lin, (H, H), jnp.float32, -kl, kl),
        linear_b=jax.random.uniform(jax.random.fold_in(k_lin, 1), (1, H), jnp.float32, -kl, kl),
        ss_wt=jax.random.uniform(k_ss, (H, n_input), jnp.float32, -kl, kl),
        ss_b=jax.random.uniform(jax.random.fold_in(k_ss, 1), (1, n_input), jnp.float32, -kl, kl),
    )
    return params


# ----------------------------- main -----------------------------

if __name__ == "__main__":
    n_input, n_hidden, n_layers = 4, 16, 3
    n_centroids = (6, 4, 2)
    T, B = 8, 2
    tau = 1.0

    key = jax.random.PRNGKey(0)
    k_param, k_x = jax.random.split(key)
    params = init_params(k_param, n_input, n_hidden, n_layers, n_centroids)

    # layout: x is (T, B, n_input)  (batch_first=False, time-major like the PyTorch module)
    x = jax.random.normal(k_x, (T, B, n_input), jnp.float32)

    fwd = jax.jit(functools.partial(
        thoc_forward, n_layers=n_layers, n_hidden=n_hidden,
        n_centroids=n_centroids, tau=tau))
    anomaly_score, centroids_diff, out_f = fwd(x, params)

    jax.block_until_ready((anomaly_score, centroids_diff, out_f))
    assert anomaly_score.shape == (B * T,)
    assert centroids_diff.shape == (n_layers,)
    assert out_f.shape == (n_layers, T, B, n_input)
    print("KERNEL_OK")
</pallas_src>

<mosaic_0001>
module attributes {stable_mosaic.version = 11 : i64} {
  func.func @_gru_kernel(%arg0: i32, %arg1: i32, %arg2: memref<1x16x4xbf16, #tpu.memory_space<vmem>>, %arg3: memref<3x4x16xbf16, #tpu.memory_space<vmem>>, %arg4: memref<3x16x16xbf16, #tpu.memory_space<vmem>>, %arg5: memref<3x1x16xf32, #tpu.memory_space<vmem>>, %arg6: memref<3x1x16xf32, #tpu.memory_space<vmem>>, %arg7: memref<1x16x16xbf16, #tpu.memory_space<vmem>>, %arg8: memref<2x16xf32, #tpu.memory_space<vmem>>) attributes {dimension_semantics = [#tpu.dimension_semantics<parallel>, #tpu.dimension_semantics<arbitrary>], iteration_bounds = array<i64: 1, 1>, scalar_prefetch = 0 : i64, scratch_operands = 1 : i64, tpu.core_type = #tpu.core_type<tc>, window_params = [{transform_indices = @transform_0, window_bounds = array<i64: 1, 16, 4>}, {pipeline_mode = #tpu.pipeline_mode<synchronous>, transform_indices = @transform_1, window_bounds = array<i64: 3, 4, 16>}, {pipeline_mode = #tpu.pipeline_mode<synchronous>, transform_indices = @transform_2, window_bounds = array<i64: 3, 16, 16>}, {pipeline_mode = #tpu.pipeline_mode<synchronous>, transform_indices = @transform_3, window_bounds = array<i64: 3, 1, 16>}, {pipeline_mode = #tpu.pipeline_mode<synchronous>, transform_indices = @transform_4, window_bounds = array<i64: 3, 1, 16>}, {transform_indices = @transform_5, window_bounds = array<i64: 1, 16, 16>}]} {
    %c0_i32 = arith.constant 0 : i32
    %0 = arith.cmpi eq, %arg1, %c0_i32 : i32
    %1 = arith.extui %0 : i1 to i32
    %c0_i32_0 = arith.constant 0 : i32
    %2 = arith.cmpi ne, %1, %c0_i32_0 : i32
    scf.if %2 {
      %cst_109 = arith.constant 0.000000e+00 : f32
      %336 = vector.broadcast %cst_109 : f32 to vector<2x16xf32>
      %c0_110 = arith.constant 0 : index
      %c0_111 = arith.constant 0 : index
      %337 = vector.load %arg8[%c0_110, %c0_111] : memref<2x16xf32, #tpu.memory_space<vmem>>, vector<2x16xf32>
      tpu.vector_store %arg8[%c0_110, %c0_111], %336 {strides = array<i32>} : memref<2x16xf32, #tpu.memory_space<vmem>>, vector<2x16xf32>,
    } else {
    }
    %c0 = arith.constant 0 : index
    %c0_1 = arith.constant 0 : index
    %c0_2 = arith.constant 0 : index
    %3 = vector.load %arg2[%c0, %c0_1, %c0_2] : memref<1x16x4xbf16, #tpu.memory_space<vmem>>, vector<1x16x4xbf16>
    %4 = vector.shape_cast %3 : vector<1x16x4xbf16> to vector<16x4xbf16>
    %c0_3 = arith.constant 0 : index
    %c0_4 = arith.constant 0 : index
    %c0_5 = arith.constant 0 : index
    %5 = vector.load %arg3[%c0_3, %c0_4, %c0_5] : memref<3x4x16xbf16, #tpu.memory_space<vmem>>, vector<1x4x16xbf16>
    %6 = vector.shape_cast %5 : vector<1x4x16xbf16> to vector<4x16xbf16>
    %cst = arith.constant dense<0.000000e+00> : vector<16x16xf32>
    %7 = tpu.matmul %4, %6, %cst {dimension_numbers = #tpu.dot_dimension_numbers<[1], [0], [0], [1], [0, 0, 1, 1], [], []>} : vector<16x4xbf16>, vector<4x16xbf16>, vector<16x16xf32> -> vector<16x16xf32>
    %c0_6 = arith.constant 0 : index
    %c0_7 = arith.constant 0 : index
    %c0_8 = arith.constant 0 : index
    %8 = vector.load %arg5[%c0_6, %c0_7, %c0_8] : memref<3x1x16xf32, #tpu.memory_space<vmem>>, vector<1x1x16xf32>
    %9 = vector.shape_cast %8 : vector<1x1x16xf32> to vector<1x16xf32>
    %10 = vector.broadcast %9 : vector<1x16xf32> to vector<16x16xf32>
    %11 = arith.addf %7, %10 : vector<16x16xf32>
    %c1 = arith.constant 1 : index
    %c0_9 = arith.constant 0 : index
    %c0_10 = arith.constant 0 : index
    %12 = vector.load %arg3[%c1, %c0_9, %c0_10] : memref<3x4x16xbf16, #tpu.memory_space<vmem>>, vector<1x4x16xbf16>
    %13 = vector.shape_cast %12 : vector<1x4x16xbf16> to vector<4x16xbf16>
    %cst_11 = arith.constant dense<0.000000e+00> : vector<16x16xf32>
    %14 = tpu.matmul %4, %13, %cst_11 {dimension_numbers = #tpu.dot_dimension_numbers<[1], [0], [0], [1], [0, 0, 1, 1], [], []>} : vector<16x4xbf16>, vector<4x16xbf16>, vector<16x16xf32> -> vector<16x16xf32>
    %c1_12 = arith.constant 1 : index
    %c0_13 = arith.constant 0 : index
    %c0_14 = arith.constant 0 : index
    %15 = vector.load %arg5[%c1_12, %c0_13, %c0_14] : memref<3x1x16xf32, #tpu.memory_space<vmem>>, vector<1x1x16xf32>
    %16 = vector.shape_cast %15 : vector<1x1x16xf32> to vector<1x16xf32>
    %17 = vector.broadcast %16 : vector<1x16xf32> to vector<16x16xf32>
    %18 = arith.addf %14, %17 : vector<16x16xf32>
    %c2 = arith.constant 2 : index
    %c0_15 = arith.constant 0 : index
    %c0_16 = arith.constant 0 : index
    %19 = vector.load %arg3[%c2, %c0_15, %c0_16] : memref<3x4x16xbf16, #tpu.memory_space<vmem>>, vector<1x4x16xbf16>
    %20 = vector.shape_cast %19 : vector<1x4x16xbf16> to vector<4x16xbf16>
    %cst_17 = arith.constant dense<0.000000e+00> : vector<16x16xf32>
    %21 = tpu.matmul %4, %20, %cst_17 {dimension_numbers = #tpu.dot_dimension_numbers<[1], [0], [0], [1], [0, 0, 1, 1], [], []>} : vector<16x4xbf16>, vector<4x16xbf16>, vector<16x16xf32> -> vector<16x16xf32>
    %c2_18 = arith.constant 2 : index
    %c0_19 = arith.constant 0 : index
    %c0_20 = arith.constant 0 : index
    %22 = vector.load %arg5[%c2_18, %c0_19, %c0_20] : memref<3x1x16xf32, #tpu.memory_space<vmem>>, vector<1x1x16xf32>
    %23 = vector.shape_cast %22 : vector<1x1x16xf32> to vector<1x16xf32>
    %24 = vector.broadcast %23 : vector<1x16xf32> to vector<16x16xf32>
    %25 = arith.addf %21, %24 : vector<16x16xf32>
    %c0_21 = arith.constant 0 : index
    %c0_22 = arith.constant 0 : index
    %c0_23 = arith.constant 0 : index
    %26 = vector.load %arg4[%c0_21, %c0_22, %c0_23] : memref<3x16x16xbf16, #tpu.memory_space<vmem>>, vector<1x16x16xbf16>
    %27 = vector.shape_cast %26 : vector<1x16x16xbf16> to vector<16x16xbf16>
    %c1_24 = arith.constant 1 : index
    %c0_25 = arith.constant 0 : index
    %c0_26 = arith.constant 0 : index
    %28 = vector.load %arg4[%c1_24, %c0_25, %c0_26] : memref<3x16x16xbf16, #tpu.memory_space<vmem>>, vector<1x16x16xbf16>
    %29 = vector.shape_cast %28 : vector<1x16x16xbf16> to vector<16x16xbf16>
    %c2_27 = arith.constant 2 : index
    %c0_28 = arith.constant 0 : index
    %c0_29 = arith.constant 0 : index
    %30 = vector.load %arg4[%c2_27, %c0_28, %c0_29] : memref<3x16x16xbf16, #tpu.memory_space<vmem>>, vector<1x16x16xbf16>
    %31 = vector.shape_cast %30 : vector<1x16x16xbf16> to vector<16x16xbf16>
    %c0_30 = arith.constant 0 : index
    %c0_31 = arith.constant 0 : index
    %c0_32 = arith.constant 0 : index
    %32 = vector.load %arg6[%c0_30, %c0_31, %c0_32] : memref<3x1x16xf32, #tpu.memory_space<vmem>>, vector<1x1x16xf32>
    %33 = vector.shape_cast %32 : vector<1x1x16xf32> to vector<1x16xf32>
    %c1_33 = arith.constant 1 : index
    %c0_34 = arith.constant 0 : index
    %c0_35 = arith.constant 0 : index
    %34 = vector.load %arg6[%c1_33, %c0_34, %c0_35] : memref<3x1x16xf32, #tpu.memory_space<vmem>>, vector<1x1x16xf32>
    %35 = vector.shape_cast %34 : vector<1x1x16xf32> to vector<1x16xf32>
    %c2_36 = arith.constant 2 : index
    %c0_37 = arith.constant 0 : index
    %c0_38 = arith.constant 0 : index
    %36 = vector.load %arg6[%c2_36, %c0_37, %c0_38] : memref<3x1x16xf32, #tpu.memory_space<vmem>>, vector<1x1x16xf32>
    %37 = vector.shape_cast %36 : vector<1x1x16xf32> to vector<1x16xf32>
    %c0_39 = arith.constant 0 : index
    %c0_40 = arith.constant 0 : index
    %38 = vector.load %arg8[%c0_39, %c0_40] : memref<2x16xf32, #tpu.memory_space<vmem>>, vector<2x16xf32>
    %39 = arith.truncf %38 : vector<2x16xf32> to vector<2x16xbf16>
    %cst_41 = arith.constant dense<0.000000e+00> : vector<2x16xf32>
    %40 = tpu.matmul %39, %27, %cst_41 {dimension_numbers = #tpu.dot_dimension_numbers<[1], [0], [0], [1], [0, 0, 1, 1], [], []>} : vector<2x16xbf16>, vector<16x16xbf16>, vector<2x16xf32> -> vector<2x16xf32>
    %41 = vector.broadcast %33 : vector<1x16xf32> to vector<2x16xf32>
    %42 = arith.addf %40, %41 : vector<2x16xf32>
    %cst_42 = arith.constant dense<0.000000e+00> : vector<2x16xf32>
    %43 = tpu.matmul %39, %29, %cst_42 {dimension_numbers = #tpu.dot_dimension_numbers<[1], [0], [0], [1], [0, 0, 1, 1], [], []>} : vector<2x16xbf16>, vector<16x16xbf16>, vector<2x16xf32> -> vector<2x16xf32>
    %44 = vector.broadcast %35 : vector<1x16xf32> to vector<2x16xf32>
    %45 = arith.addf %43, %44 : vector<2x16xf32>
    %cst_43 = arith.constant dense<0.000000e+00> : vector<2x16xf32>
    %46 = tpu.matmul %39, %31, %cst_43 {dimension_numbers = #tpu.dot_dimension_numbers<[1], [0], [0], [1], [0, 0, 1, 1], [], []>} : vector<2x16xbf16>, vector<16x16xbf16>, vector<2x16xf32> -> vector<2x16xf32>
    %47 = vector.broadcast %37 : vector<1x16xf32> to vector<2x16xf32>
    %48 = arith.addf %46, %47 : vector<2x16xf32>
    %49 = vector.extract_strided_slice %11 {offsets = [0, 0], sizes = [2, 16], strides = [1, 1]} : vector<16x16xf32> to vector<2x16xf32>
    %50 = arith.addf %49, %42 : vector<2x16xf32>
    %51 = arith.negf %50 : vector<2x16xf32>
    %52 = math.exp %51 : vector<2x16xf32>
    %cst_44 = arith.constant 1.000000e+00 : f32
    %53 = vector.broadcast %cst_44 : f32 to vector<2x16xf32>
    %54 = arith.addf %53, %52 : vector<2x16xf32>
    %55 = arith.divf %53, %54 : vector<2x16xf32>
    %56 = vector.extract_strided_slice %18 {offsets = [0, 0], sizes = [2, 16], strides = [1, 1]} : vector<16x16xf32> to vector<2x16xf32>
    %57 = arith.addf %56, %45 : vector<2x16xf32>
    %58 = arith.negf %57 : vector<2x16xf32>
    %59 = math.exp %58 : vector<2x16xf32>
    %cst_45 = arith.constant 1.000000e+00 : f32
    %60 = vector.broadcast %cst_45 : f32 to vector<2x16xf32>
    %61 = arith.addf %60, %59 : vector<2x16xf32>
    %62 = arith.divf %60, %61 : vector<2x16xf32>
    %63 = vector.extract_strided_slice %25 {offsets = [0, 0], sizes = [2, 16], strides = [1, 1]} : vector<16x16xf32> to vector<2x16xf32>
    %64 = arith.mulf %55, %48 : vector<2x16xf32>
    %65 = arith.addf %63, %64 : vector<2x16xf32>
    %66 = math.tanh %65 : vector<2x16xf32>
    %cst_46 = arith.constant 1.000000e+00 : f32
    %67 = vector.broadcast %cst_46 : f32 to vector<2x16xf32>
    %68 = arith.subf %67, %62 : vector<2x16xf32>
    %69 = arith.mulf %68, %66 : vector<2x16xf32>
    %70 = arith.mulf %62, %38 : vector<2x16xf32>
    %71 = arith.addf %69, %70 : vector<2x16xf32>
    %72 = arith.truncf %71 : vector<2x16xf32> to vector<2x16xbf16>
    %c0_47 = arith.constant 0 : index
    %c0_48 = arith.constant 0 : index
    %c0_49 = arith.constant 0 : index
    %73 = vector.load %arg7[%c0_47, %c0_48, %c0_49] : memref<1x16x16xbf16, #tpu.memory_space<vmem>>, vector<1x2x16xbf16>
    %74 = vector.shape_cast %73 : vector<1x2x16xbf16> to vector<2x16xbf16>
    %75 = vector.shape_cast %72 : vector<2x16xbf16> to vector<1x2x16xbf16>
    tpu.vector_store %arg7[%c0_47, %c0_48, %c0_49], %75 {strides = array<i32>} : memref<1x16x16xbf16, #tpu.memory_space<vmem>>, vector<1x2x16xbf16>,
    %76 = arith.truncf %71 : vector<2x16xf32> to vector<2x16xbf16>
    %cst_50 = arith.constant dense<0.000000e+00> : vector<2x16xf32>
    %77 = tpu.matmul %76, %27, %cst_50 {dimension_numbers = #tpu.dot_dimension_numbers<[1], [0], [0], [1], [0, 0, 1, 1], [], []>} : vector<2x16xbf16>, vector<16x16xbf16>, vector<2x16xf32> -> vector<2x16xf32>
    %78 = vector.broadcast %33 : vector<1x16xf32> to vector<2x16xf32>
    %79 = arith.addf %77, %78 : vector<2x16xf32>
    %cst_51 = arith.constant dense<0.000000e+00> : vector<2x16xf32>
    %80 = tpu.matmul %76, %29, %cst_51 {dimension_numbers = #tpu.dot_dimension_numbers<[1], [0], [0], [1], [0, 0, 1, 1], [], []>} : vector<2x16xbf16>, vector<16x16xbf16>, vector<2x16xf32> -> vector<2x16xf32>
    %81 = vector.broadcast %35 : vector<1x16xf32> to vector<2x16xf32>
    %82 = arith.addf %80, %81 : vector<2x16xf32>
    %cst_52 = arith.constant dense<0.000000e+00> : vector<2x16xf32>
    %83 = tpu.matmul %76, %31, %cst_52 {dimension_numbers = #tpu.dot_dimension_numbers<[1], [0], [0], [1], [0, 0, 1, 1], [], []>} : vector<2x16xbf16>, vector<16x16xbf16>, vector<2x16xf32> -> vector<2x16xf32>
    %84 = vector.broadcast %37 : vector<1x16xf32> to vector<2x16xf32>
    %85 = arith.addf %83, %84 : vector<2x16xf32>
    %86 = vector.extract_strided_slice %11 {offsets = [2, 0], sizes = [2, 16], strides = [1, 1]} : vector<16x16xf32> to vector<2x16xf32>
    %87 = arith.addf %86, %79 : vector<2x16xf32>
    %88 = arith.negf %87 : vector<2x16xf32>
    %89 = math.exp %88 : vector<2x16xf32>
    %cst_53 = arith.constant 1.000000e+00 : f32
    %90 = vector.broadcast %cst_53 : f32 to vector<2x16xf32>
    %91 = arith.addf %90, %89 : vector<2x16xf32>
    %92 = arith.divf %90, %91 : vector<2x16xf32>
    %93 = vector.extract_strided_slice %18 {offsets = [2, 0], sizes = [2, 16], strides = [1, 1]} : vector<16x16xf32> to vector<2x16xf32>
    %94 = arith.addf %93, %82 : vector<2x16xf32>
    %95 = arith.negf %94 : vector<2x16xf32>
    %96 = math.exp %95 : vector<2x16xf32>
    %cst_54 = arith.constant 1.000000e+00 : f32
    %97 = vector.broadcast %cst_54 : f32 to vector<2x16xf32>
    %98 = arith.addf %97, %96 : vector<2x16xf32>
    %99 = arith.divf %97, %98 : vector<2x16xf32>
    %100 = vector.extract_strided_slice %25 {offsets = [2, 0], sizes = [2, 16], strides = [1, 1]} : vector<16x16xf32> to vector<2x16xf32>
    %101 = arith.mulf %92, %85 : vector<2x16xf32>
    %102 = arith.addf %100, %101 : vector<2x16xf32>
    %103 = math.tanh %102 : vector<2x16xf32>
    %cst_55 = arith.constant 1.000000e+00 : f32
    %104 = vector.broadcast %cst_55 : f32 to vector<2x16xf32>
    %105 = arith.subf %104, %99 : vector<2x16xf32>
    %106 = arith.mulf %105, %103 : vector<2x16xf32>
    %107 = arith.mulf %99, %71 : vector<2x16xf32>
    %108 = arith.addf %106, %107 : vector<2x16xf32>
    %109 = arith.truncf %108 : vector<2x16xf32> to vector<2x16xbf16>
    %c0_56 = arith.constant 0 : index
    %c2_57 = arith.constant 2 : index
    %c0_58 = arith.constant 0 : index
    %110 = vector.load %arg7[%c0_56, %c2_57, %c0_58] : memref<1x16x16xbf16, #tpu.memory_space<vmem>>, vector<1x2x16xbf16>
    %111 = vector.shape_cast %110 : vector<1x2x16xbf16> to vector<2x16xbf16>
    %112 = vector.shape_cast %109 : vector<2x16xbf16> to vector<1x2x16xbf16>
    tpu.vector_store %arg7[%c0_56, %c2_57, %c0_58], %112 {strides = array<i32>} : memref<1x16x16xbf16, #tpu.memory_space<vmem>>, vector<1x2x16xbf16>,
    %113 = arith.truncf %108 : vector<2x16xf32> to vector<2x16xbf16>
    %cst_59 = arith.constant dense<0.000000e+00> : vector<2x16xf32>
    %114 = tpu.matmul %113, %27, %cst_59 {dimension_numbers = #tpu.dot_dimension_numbers<[1], [0], [0], [1], [0, 0, 1, 1], [], []>} : vector<2x16xbf16>, vector<16x16xbf16>, vector<2x16xf32> -> vector<2x16xf32>
    %115 = vector.broadcast %33 : vector<1x16xf32> to vector<2x16xf32>
    %116 = arith.addf %114, %115 : vector<2x16xf32>
    %cst_60 = arith.constant dense<0.000000e+00> : vector<2x16xf32>
    %117 = tpu.matmul %113, %29, %cst_60 {dimension_numbers = #tpu.dot_dimension_numbers<[1], [0], [0], [1], [0, 0, 1, 1], [], []>} : vector<2x16xbf16>, vector<16x16xbf16>, vector<2x16xf32> -> vector<2x16xf32>
    %118 = vector.broadcast %35 : vector<1x16xf32> to vector<2x16xf32>
    %119 = arith.addf %117, %118 : vector<2x16xf32>
    %cst_61 = arith.constant dense<0.000000e+00> : vector<2x16xf32>
    %120 = tpu.matmul %113, %31, %cst_61 {dimension_numbers = #tpu.dot_dimension_numbers<[1], [0], [0], [1], [0, 0, 1, 1], [], []>} : vector<2x16xbf16>, vector<16x16xbf16>, vector<2x16xf32> -> vector<2x16xf32>
    %121 = vector.broadcast %37 : vector<1x16xf32> to vector<2x16xf32>
    %122 = arith.addf %120, %121 : vector<2x16xf32>
    %123 = vector.extract_strided_slice %11 {offsets = [4, 0], sizes = [2, 16], strides = [1, 1]} : vector<16x16xf32> to vector<2x16xf32>
    %124 = arith.addf %123, %116 : vector<2x16xf32>
    %125 = arith.negf %124 : vector<2x16xf32>
    %126 = math.exp %125 : vector<2x16xf32>
    %cst_62 = arith.constant 1.000000e+00 : f32
    %127 = vector.broadcast %cst_62 : f32 to vector<2x16xf32>
    %128 = arith.addf %127, %126 : vector<2x16xf32>
    %129 = arith.divf %127, %128 : vector<2x16xf32>
    %130 = vector.extract_strided_slice %18 {offsets = [4, 0], sizes = [2, 16], strides = [1, 1]} : vector<16x16xf32> to vector<2x16xf32>
    %131 = arith.addf %130, %119 : vector<2x16xf32>
    %132 = arith.negf %131 : vector<2x16xf32>
    %133 = math.exp %132 : vector<2x16xf32>
    %cst_63 = arith.constant 1.000000e+00 : f32
    %134 = vector.broadcast %cst_63 : f32 to vector<2x16xf32>
    %135 = arith.addf %134, %133 : vector<2x16xf32>
    %136 = arith.divf %134, %135 : vector<2x16xf32>
    %137 = vector.extract_strided_slice %25 {offsets = [4, 0], sizes = [2, 16], strides = [1, 1]} : vector<16x16xf32> to vector<2x16xf32>
    %138 = arith.mulf %129, %122 : vector<2x16xf32>
    %139 = arith.addf %137, %138 : vector<2x16xf32>
    %140 = math.tanh %139 : vector<2x16xf32>
    %cst_64 = arith.constant 1.000000e+00 : f32
    %141 = vector.broadcast %cst_64 : f32 to vector<2x16xf32>
    %142 = arith.subf %141, %136 : vector<2x16xf32>
    %143 = arith.mulf %142, %140 : vector<2x16xf32>
    %144 = arith.mulf %136, %108 : vector<2x16xf32>
    %145 = arith.addf %143, %144 : vector<2x16xf32>
    %146 = arith.truncf %145 : vector<2x16xf32> to vector<2x16xbf16>
    %c0_65 = arith.constant 0 : index
    %c4 = arith.constant 4 : index
    %c0_66 = arith.constant 0 : index
    %147 = vector.load %arg7[%c0_65, %c4, %c0_66] : memref<1x16x16xbf16, #tpu.memory_space<vmem>>, vector<1x2x16xbf16>
    %148 = vector.shape_cast %147 : vector<1x2x16xbf16> to vector<2x16xbf16>
    %149 = vector.shape_cast %146 : vector<2x16xbf16> to vector<1x2x16xbf16>
    tpu.vector_store %arg7[%c0_65, %c4, %c0_66], %149 {strides = array<i32>} : memref<1x16x16xbf16, #tpu.memory_space<vmem>>, vector<1x2x16xbf16>,
    %150 = arith.truncf %145 : vector<2x16xf32> to vector<2x16xbf16>
    %cst_67 = arith.constant dense<0.000000e+00> : vector<2x16xf32>
    %151 = tpu.matmul %150, %27, %cst_67 {dimension_numbers = #tpu.dot_dimension_numbers<[1], [0], [0], [1], [0, 0, 1, 1], [], []>} : vector<2x16xbf16>, vector<16x16xbf16>, vector<2x16xf32> -> vector<2x16xf32>
    %152 = vector.broadcast %33 : vector<1x16xf32> to vector<2x16xf32>
    %153 = arith.addf %151, %152 : vector<2x16xf32>
    %cst_68 = arith.constant dense<0.000000e+00> : vector<2x16xf32>
    %154 = tpu.matmul %150, %29, %cst_68 {dimension_numbers = #tpu.dot_dimension_numbers<[1], [0], [0], [1], [0, 0, 1, 1], [], []>} : vector<2x16xbf16>, vector<16x16xbf16>, vector<2x16xf32> -> vector<2x16xf32>
    %155 = vector.broadcast %35 : vector<1x16xf32> to vector<2x16xf32>
    %156 = arith.addf %154, %155 : vector<2x16xf32>
    %cst_69 = arith.constant dense<0.000000e+00> : vector<2x16xf32>
    %157 = tpu.matmul %150, %31, %cst_69 {dimension_numbers = #tpu.dot_dimension_numbers<[1], [0], [0], [1], [0, 0, 1, 1], [], []>} : vector<2x16xbf16>, vector<16x16xbf16>, vector<2x16xf32> -> vector<2x16xf32>
    %158 = vector.broadcast %37 : vector<1x16xf32> to vector<2x16xf32>
    %159 = arith.addf %157, %158 : vector<2x16xf32>
    %160 = vector.extract_strided_slice %11 {offsets = [6, 0], sizes = [2, 16], strides = [1, 1]} : vector<16x16xf32> to vector<2x16xf32>
    %161 = arith.addf %160, %153 : vector<2x16xf32>
    %162 = arith.negf %161 : vector<2x16xf32>
    %163 = math.exp %162 : vector<2x16xf32>
    %cst_70 = arith.constant 1.000000e+00 : f32
    %164 = vector.broadcast %cst_70 : f32 to vector<2x16xf32>
    %165 = arith.addf %164, %163 : vector<2x16xf32>
    %166 = arith.divf %164, %165 : vector<2x16xf32>
    %167 = vector.extract_strided_slice %18 {offsets = [6, 0], sizes = [2, 16], strides = [1, 1]} : vector<16x16xf32> to vector<2x16xf32>
    %168 = arith.addf %167, %156 : vector<2x16xf32>
    %169 = arith.negf %168 : vector<2x16xf32>
    %170 = math.exp %169 : vector<2x16xf32>
    %cst_71 = arith.constant 1.000000e+00 : f32
    %171 = vector.broadcast %cst_71 : f32 to vector<2x16xf32>
    %172 = arith.addf %171, %170 : vector<2x16xf32>
    %173 = arith.divf %171, %172 : vector<2x16xf32>
    %174 = vector.extract_strided_slice %25 {offsets = [6, 0], sizes = [2, 16], strides = [1, 1]} : vector<16x16xf32> to vector<2x16xf32>
    %175 = arith.mulf %166, %159 : vector<2x16xf32>
    %176 = arith.addf %174, %175 : vector<2x16xf32>
    %177 = math.tanh %176 : vector<2x16xf32>
    %cst_72 = arith.constant 1.000000e+00 : f32
    %178 = vector.broadcast %cst_72 : f32 to vector<2x16xf32>
    %179 = arith.subf %178, %173 : vector<2x16xf32>
    %180 = arith.mulf %179, %177 : vector<2x16xf32>
    %181 = arith.mulf %173, %145 : vector<2x16xf32>
    %182 = arith.addf %180, %181 : vector<2x16xf32>
    %183 = arith.truncf %182 : vector<2x16xf32> to vector<2x16xbf16>
    %c0_73 = arith.constant 0 : index
    %c6 = arith.constant 6 : index
    %c0_74 = arith.constant 0 : index
    %184 = vector.load %arg7[%c0_73, %c6, %c0_74] : memref<1x16x16xbf16, #tpu.memory_space<vmem>>, vector<1x2x16xbf16>
    %185 = vector.shape_cast %184 : vector<1x2x16xbf16> to vector<2x16xbf16>
    %186 = vector.shape_cast %183 : vector<2x16xbf16> to vector<1x2x16xbf16>
    tpu.vector_store %arg7[%c0_73, %c6, %c0_74], %186 {strides = array<i32>} : memref<1x16x16xbf16, #tpu.memory_space<vmem>>, vector<1x2x16xbf16>,
    %187 = arith.truncf %182 : vector<2x16xf32> to vector<2x16xbf16>
    %cst_75 = arith.constant dense<0.000000e+00> : vector<2x16xf32>
    %188 = tpu.matmul %187, %27, %cst_75 {dimension_numbers = #tpu.dot_dimension_numbers<[1], [0], [0], [1], [0, 0, 1, 1], [], []>} : vector<2x16xbf16>, vector<16x16xbf16>, vector<2x16xf32> -> vector<2x16xf32>
    %189 = vector.broadcast %33 : vector<1x16xf32> to vector<2x16xf32>
    %190 = arith.addf %188, %189 : vector<2x16xf32>
    %cst_76 = arith.constant dense<0.000000e+00> : vector<2x16xf32>
    %191 = tpu.matmul %187, %29, %cst_76 {dimension_numbers = #tpu.dot_dimension_numbers<[1], [0], [0], [1], [0, 0, 1, 1], [], []>} : vector<2x16xbf16>, vector<16x16xbf16>, vector<2x16xf32> -> vector<2x16xf32>
    %192 = vector.broadcast %35 : vector<1x16xf32> to vector<2x16xf32>
    %193 = arith.addf %191, %192 : vector<2x16xf32>
    %cst_77 = arith.constant dense<0.000000e+00> : vector<2x16xf32>
    %194 = tpu.matmul %187, %31, %cst_77 {dimension_numbers = #tpu.dot_dimension_numbers<[1], [0], [0], [1], [0, 0, 1, 1], [], []>} : vector<2x16xbf16>, vector<16x16xbf16>, vector<2x16xf32> -> vector<2x16xf32>
    %195 = vector.broadcast %37 : vector<1x16xf32> to vector<2x16xf32>
    %196 = arith.addf %194, %195 : vector<2x16xf32>
    %197 = vector.extract_strided_slice %11 {offsets = [8, 0], sizes = [2, 16], strides = [1, 1]} : vector<16x16xf32> to vector<2x16xf32>
    %198 = arith.addf %197, %190 : vector<2x16xf32>
    %199 = arith.negf %198 : vector<2x16xf32>
    %200 = math.exp %199 : vector<2x16xf32>
    %cst_78 = arith.constant 1.000000e+00 : f32
    %201 = vector.broadcast %cst_78 : f32 to vector<2x16xf32>
    %202 = arith.addf %201, %200 : vector<2x16xf32>
    %203 = arith.divf %201, %202 : vector<2x16xf32>
    %204 = vector.extract_strided_slice %18 {offsets = [8, 0], sizes = [2, 16], strides = [1, 1]} : vector<16x16xf32> to vector<2x16xf32>
    %205 = arith.addf %204, %193 : vector<2x16xf32>
    %206 = arith.negf %205 : vector<2x16xf32>
    %207 = math.exp %206 : vector<2x16xf32>
    %cst_79 = arith.constant 1.000000e+00 : f32
    %208 = vector.broadcast %cst_79 : f32 to vector<2x16xf32>
    %209 = arith.addf %208, %207 : vector<2x16xf32>
    %210 = arith.divf %208, %209 : vector<2x16xf32>
    %211 = vector.extract_strided_slice %25 {offsets = [8, 0], sizes = [2, 16], strides = [1, 1]} : vector<16x16xf32> to vector<2x16xf32>
    %212 = arith.mulf %203, %196 : vector<2x16xf32>
    %213 = arith.addf %211, %212 : vector<2x16xf32>
    %214 = math.tanh %213 : vector<2x16xf32>
    %cst_80 = arith.constant 1.000000e+00 : f32
    %215 = vector.broadcast %cst_80 : f32 to vector<2x16xf32>
    %216 = arith.subf %215, %210 : vector<2x16xf32>
    %217 = arith.mulf %216, %214 : vector<2x16xf32>
    %218 = arith.mulf %210, %182 : vector<2x16xf32>
    %219 = arith.addf %217, %218 : vector<2x16xf32>
    %220 = arith.truncf %219 : vector<2x16xf32> to vector<2x16xbf16>
    %c0_81 = arith.constant 0 : index
    %c8 = arith.constant 8 : index
    %c0_82 = arith.constant 0 : index
    %221 = vector.load %arg7[%c0_81, %c8, %c0_82] : memref<1x16x16xbf16, #tpu.memory_space<vmem>>, vector<1x2x16xbf16>
    %222 = vector.shape_cast %221 : vector<1x2x16xbf16> to vector<2x16xbf16>
    %223 = vector.shape_cast %220 : vector<2x16xbf16> to vector<1x2x16xbf16>
    tpu.vector_store %arg7[%c0_81, %c8, %c0_82], %223 {strides = array<i32>} : memref<1x16x16xbf16, #tpu.memory_space<vmem>>, vector<1x2x16xbf16>,
    %224 = arith.truncf %219 : vector<2x16xf32> to vector<2x16xbf16>
    %cst_83 = arith.constant dense<0.000000e+00> : vector<2x16xf32>
    %225 = tpu.matmul %224, %27, %cst_83 {dimension_numbers = #tpu.dot_dimension_numbers<[1], [0], [0], [1], [0, 0, 1, 1], [], []>} : vector<2x16xbf16>, vector<16x16xbf16>, vector<2x16xf32> -> vector<2x16xf32>
    %226 = vector.broadcast %33 : vector<1x16xf32> to vector<2x16xf32>
    %227 = arith.addf %225, %226 : vector<2x16xf32>
    %cst_84 = arith.constant dense<0.000000e+00> : vector<2x16xf32>
    %228 = tpu.matmul %224, %29, %cst_84 {dimension_numbers = #tpu.dot_dimension_numbers<[1], [0], [0], [1], [0, 0, 1, 1], [], []>} : vector<2x16xbf16>, vector<16x16xbf16>, vector<2x16xf32> -> vector<2x16xf32>
    %229 = vector.broadcast %35 : vector<1x16xf32> to vector<2x16xf32>
    %230 = arith.addf %228, %229 : vector<2x16xf32>
    %cst_85 = arith.constant dense<0.000000e+00> : vector<2x16xf32>
    %231 = tpu.matmul %224, %31, %cst_85 {dimension_numbers = #tpu.dot_dimension_numbers<[1], [0], [0], [1], [0, 0, 1, 1], [], []>} : vector<2x16xbf16>, vector<16x16xbf16>, vector<2x16xf32> -> vector<2x16xf32>
    %232 = vector.broadcast %37 : vector<1x16xf32> to vector<2x16xf32>
    %233 = arith.addf %231, %232 : vector<2x16xf32>
    %234 = vector.extract_strided_slice %11 {offsets = [10, 0], sizes = [2, 16], strides = [1, 1]} : vector<16x16xf32> to vector<2x16xf32>
    %235 = arith.addf %234, %227 : vector<2x16xf32>
    %236 = arith.negf %235 : vector<2x16xf32>
    %237 = math.exp %236 : vector<2x16xf32>
    %cst_86 = arith.constant 1.000000e+00 : f32
    %238 = vector.broadcast %cst_86 : f32 to vector<2x16xf32>
    %239 = arith.addf %238, %237 : vector<2x16xf32>
    %240 = arith.divf %238, %239 : vector<2x16xf32>
    %241 = vector.extract_strided_slice %18 {offsets = [10, 0], sizes = [2, 16], strides = [1, 1]} : vector<16x16xf32> to vector<2x16xf32>
    %242 = arith.addf %241, %230 : vector<2x16xf32>
    %243 = arith.negf %242 : vector<2x16xf32>
    %244 = math.exp %243 : vector<2x16xf32>
    %cst_87 = arith.constant 1.000000e+00 : f32
    %245 = vector.broadcast %cst_87 : f32 to vector<2x16xf32>
    %246 = arith.addf %245, %244 : vector<2x16xf32>
    %247 = arith.divf %245, %246 : vector<2x16xf32>
    %248 = vector.extract_strided_slice %25 {offsets = [10, 0], sizes = [2, 16], strides = [1, 1]} : vector<16x16xf32> to vector<2x16xf32>
    %249 = arith.mulf %240, %233 : vector<2x16xf32>
    %250 = arith.addf %248, %249 : vector<2x16xf32>
    %251 = math.tanh %250 : vector<2x16xf32>
    %cst_88 = arith.constant 1.000000e+00 : f32
    %252 = vector.broadcast %cst_88 : f32 to vector<2x16xf32>
    %253 = arith.subf %252, %247 : vector<2x16xf32>
    %254 = arith.mulf %253, %251 : vector<2x16xf32>
    %255 = arith.mulf %247, %219 : vector<2x16xf32>
    %256 = arith.addf %254, %255 : vector<2x16xf32>
    %257 = arith.truncf %256 : vector<2x16xf32> to vector<2x16xbf16>
    %c0_89 = arith.constant 0 : index
    %c10 = arith.constant 10 : index
    %c0_90 = arith.constant 0 : index
    %258 = vector.load %arg7[%c0_89, %c10, %c0_90] : memref<1x16x16xbf16, #tpu.memory_space<vmem>>, vector<1x2x16xbf16>
    %259 = vector.shape_cast %258 : vector<1x2x16xbf16> to vector<2x16xbf16>
    %260 = vector.shape_cast %257 : vector<2x16xbf16> to vector<1x2x16xbf16>
    tpu.vector_store %arg7[%c0_89, %c10, %c0_90], %260 {strides = array<i32>} : memref<1x16x16xbf16, #tpu.memory_space<vmem>>, vector<1x2x16xbf16>,
    %261 = arith.truncf %256 : vector<2x16xf32> to vector<2x16xbf16>
    %cst_91 = arith.constant dense<0.000000e+00> : vector<2x16xf32>
    %262 = tpu.matmul %261, %27, %cst_91 {dimension_numbers = #tpu.dot_dimension_numbers<[1], [0], [0], [1], [0, 0, 1, 1], [], []>} : vector<2x16xbf16>, vector<16x16xbf16>, vector<2x16xf32> -> vector<2x16xf32>
    %263 = vector.broadcast %33 : vector<1x16xf32> to vector<2x16xf32>
    %264 = arith.addf %262, %263 : vector<2x16xf32>
    %cst_92 = arith.constant dense<0.000000e+00> : vector<2x16xf32>
    %265 = tpu.matmul %261, %29, %cst_92 {dimension_numbers = #tpu.dot_dimension_numbers<[1], [0], [0], [1], [0, 0, 1, 1], [], []>} : vector<2x16xbf16>, vector<16x16xbf16>, vector<2x16xf32> -> vector<2x16xf32>
    %266 = vector.broadcast %35 : vector<1x16xf32> to vector<2x16xf32>
    %267 = arith.addf %265, %266 : vector<2x16xf32>
    %cst_93 = arith.constant dense<0.000000e+00> : vector<2x16xf32>
    %268 = tpu.matmul %261, %31, %cst_93 {dimension_numbers = #tpu.dot_dimension_numbers<[1], [0], [0], [1], [0, 0, 1, 1], [], []>} : vector<2x16xbf16>, vector<16x16xbf16>, vector<2x16xf32> -> vector<2x16xf32>
    %269 = vector.broadcast %37 : vector<1x16xf32> to vector<2x16xf32>
    %270 = arith.addf %268, %269 : vector<2x16xf32>
    %271 = vector.extract_strided_slice %11 {offsets = [12, 0], sizes = [2, 16], strides = [1, 1]} : vector<16x16xf32> to vector<2x16xf32>
    %272 = arith.addf %271, %264 : vector<2x16xf32>
    %273 = arith.negf %272 : vector<2x16xf32>
    %274 = math.exp %273 : vector<2x16xf32>
    %cst_94 = arith.constant 1.000000e+00 : f32
    %275 = vector.broadcast %cst_94 : f32 to vector<2x16xf32>
    %276 = arith.addf %275, %274 : vector<2x16xf32>
    %277 = arith.divf %275, %276 : vector<2x16xf32>
    %278 = vector.extract_strided_slice %18 {offsets = [12, 0], sizes = [2, 16], strides = [1, 1]} : vector<16x16xf32> to vector<2x16xf32>
    %279 = arith.addf %278, %267 : vector<2x16xf32>
    %280 = arith.negf %279 : vector<2x16xf32>
    %281 = math.exp %280 : vector<2x16xf32>
    %cst_95 = arith.constant 1.000000e+00 : f32
    %282 = vector.broadcast %cst_95 : f32 to vector<2x16xf32>
    %283 = arith.addf %282, %281 : vector<2x16xf32>
    %284 = arith.divf %282, %283 : vector<2x16xf32>
    %285 = vector.extract_strided_slice %25 {offsets = [12, 0], sizes = [2, 16], strides = [1, 1]} : vector<16x16xf32> to vector<2x16xf32>
    %286 = arith.mulf %277, %270 : vector<2x16xf32>
    %287 = arith.addf %285, %286 : vector<2x16xf32>
    %288 = math.tanh %287 : vector<2x16xf32>
    %cst_96 = arith.constant 1.000000e+00 : f32
    %289 = vector.broadcast %cst_96 : f32 to vector<2x16xf32>
    %290 = arith.subf %289, %284 : vector<2x16xf32>
    %291 = arith.mulf %290, %288 : vector<2x16xf32>
    %292 = arith.mulf %284, %256 : vector<2x16xf32>
    %293 = arith.addf %291, %292 : vector<2x16xf32>
    %294 = arith.truncf %293 : vector<2x16xf32> to vector<2x16xbf16>
    %c0_97 = arith.constant 0 : index
    %c12 = arith.constant 12 : index
    %c0_98 = arith.constant 0 : index
    %295 = vector.load %arg7[%c0_97, %c12, %c0_98] : memref<1x16x16xbf16, #tpu.memory_space<vmem>>, vector<1x2x16xbf16>
    %296 = vector.shape_cast %295 : vector<1x2x16xbf16> to vector<2x16xbf16>
    %297 = vector.shape_cast %294 : vector<2x16xbf16> to vector<1x2x16xbf16>
    tpu.vector_store %arg7[%c0_97, %c12, %c0_98], %297 {strides = array<i32>} : memref<1x16x16xbf16, #tpu.memory_space<vmem>>, vector<1x2x16xbf16>,
    %298 = arith.truncf %293 : vector<2x16xf32> to vector<2x16xbf16>
    %cst_99 = arith.constant dense<0.000000e+00> : vector<2x16xf32>
    %299 = tpu.matmul %298, %27, %cst_99 {dimension_numbers = #tpu.dot_dimension_numbers<[1], [0], [0], [1], [0, 0, 1, 1], [], []>} : vector<2x16xbf16>, vector<16x16xbf16>, vector<2x16xf32> -> vector<2x16xf32>
    %300 = vector.broadcast %33 : vector<1x16xf32> to vector<2x16xf32>
    %301 = arith.addf %299, %300 : vector<2x16xf32>
    %cst_100 = arith.constant dense<0.000000e+00> : vector<2x16xf32>
    %302 = tpu.matmul %298, %29, %cst_100 {dimension_numbers = #tpu.dot_dimension_numbers<[1], [0], [0], [1], [0, 0, 1, 1], [], []>} : vector<2x16xbf16>, vector<16x16xbf16>, vector<2x16xf32> -> vector<2x16xf32>
    %303 = vector.broadcast %35 : vector<1x16xf32> to vector<2x16xf32>
    %304 = arith.addf %302, %303 : vector<2x16xf32>
    %cst_101 = arith.constant dense<0.000000e+00> : vector<2x16xf32>
    %305 = tpu.matmul %298, %31, %cst_101 {dimension_numbers = #tpu.dot_dimension_numbers<[1], [0], [0], [1], [0, 0, 1, 1], [], []>} : vector<2x16xbf16>, vector<16x16xbf16>, vector<2x16xf32> -> vector<2x16xf32>
    %306 = vector.broadcast %37 : vector<1x16xf32> to vector<2x16xf32>
    %307 = arith.addf %305, %306 : vector<2x16xf32>
    %308 = vector.extract_strided_slice %11 {offsets = [14, 0], sizes = [2, 16], strides = [1, 1]} : vector<16x16xf32> to vector<2x16xf32>
    %309 = arith.addf %308, %301 : vector<2x16xf32>
    %310 = arith.negf %309 : vector<2x16xf32>
    %311 = math.exp %310 : vector<2x16xf32>
    %cst_102 = arith.constant 1.000000e+00 : f32
    %312 = vector.broadcast %cst_102 : f32 to vector<2x16xf32>
    %313 = arith.addf %312, %311 : vector<2x16xf32>
    %314 = arith.divf %312, %313 : vector<2x16xf32>
    %315 = vector.extract_strided_slice %18 {offsets = [14, 0], sizes = [2, 16], strides = [1, 1]} : vector<16x16xf32> to vector<2x16xf32>
    %316 = arith.addf %315, %304 : vector<2x16xf32>
    %317 = arith.negf %316 : vector<2x16xf32>
    %318 = math.exp %317 : vector<2x16xf32>
    %cst_103 = arith.constant 1.000000e+00 : f32
    %319 = vector.broadcast %cst_103 : f32 to vector<2x16xf32>
    %320 = arith.addf %319, %318 : vector<2x16xf32>
    %321 = arith.divf %319, %320 : vector<2x16xf32>
    %322 = vector.extract_strided_slice %25 {offsets = [14, 0], sizes = [2, 16], strides = [1, 1]} : vector<16x16xf32> to vector<2x16xf32>
    %323 = arith.mulf %314, %307 : vector<2x16xf32>
    %324 = arith.addf %322, %323 : vector<2x16xf32>
    %325 = math.tanh %324 : vector<2x16xf32>
    %cst_104 = arith.constant 1.000000e+00 : f32
    %326 = vector.broadcast %cst_104 : f32 to vector<2x16xf32>
    %327 = arith.subf %326, %321 : vector<2x16xf32>
    %328 = arith.mulf %327, %325 : vector<2x16xf32>
    %329 = arith.mulf %321, %293 : vector<2x16xf32>
    %330 = arith.addf %328, %329 : vector<2x16xf32>
    %331 = arith.truncf %330 : vector<2x16xf32> to vector<2x16xbf16>
    %c0_105 = arith.constant 0 : index
    %c14 = arith.constant 14 : index
    %c0_106 = arith.constant 0 : index
    %332 = vector.load %arg7[%c0_105, %c14, %c0_106] : memref<1x16x16xbf16, #tpu.memory_space<vmem>>, vector<1x2x16xbf16>
    %333 = vector.shape_cast %332 : vector<1x2x16xbf16> to vector<2x16xbf16>
    %334 = vector.shape_cast %331 : vector<2x16xbf16> to vector<1x2x16xbf16>
    tpu.vector_store %arg7[%c0_105, %c14, %c0_106], %334 {strides = array<i32>} : memref<1x16x16xbf16, #tpu.memory_space<vmem>>, vector<1x2x16xbf16>,
    %c0_107 = arith.constant 0 : index
    %c0_108 = arith.constant 0 : index
    %335 = vector.load %arg8[%c0_107, %c0_108] : memref<2x16xf32, #tpu.memory_space<vmem>>, vector<2x16xf32>
    tpu.vector_store %arg8[%c0_107, %c0_108], %330 {strides = array<i32>} : memref<2x16xf32, #tpu.memory_space<vmem>>, vector<2x16xf32>,
    return
  }
  func.func @transform_0(%arg0: i32, %arg1: i32) -> (i32, i32, i32) {
    %c0_i32 = arith.constant 0 : i32
    %c0_i32_0 = arith.constant 0 : i32
    return %arg0, %arg1, %c0_i32 : i32, i32, i32
  }
  func.func @transform_1(%arg0: i32, %arg1: i32) -> (i32, i32, i32) {
    %c0_i32 = arith.constant 0 : i32
    %c0_i32_0 = arith.constant 0 : i32
    %c0_i32_1 = arith.constant 0 : i32
    %c0_i32_2 = arith.constant 0 : i32
    return %c0_i32, %c0_i32_0, %c0_i32_1 : i32, i32, i32
  }
  func.func @transform_2(%arg0: i32, %arg1: i32) -> (i32, i32, i32) {
    %c0_i32 = arith.constant 0 : i32
    %c0_i32_0 = arith.constant 0 : i32
    %c0_i32_1 = arith.constant 0 : i32
    %c0_i32_2 = arith.constant 0 : i32
    return %c0_i32, %c0_i32_0, %c0_i32_1 : i32, i32, i32
  }
  func.func @transform_3(%arg0: i32, %arg1: i32) -> (i32, i32, i32) {
    %c0_i32 = arith.constant 0 : i32
    %c0_i32_0 = arith.constant 0 : i32
    %c0_i32_1 = arith.constant 0 : i32
    %c0_i32_2 = arith.constant 0 : i32
    return %c0_i32, %c0_i32_0, %c0_i32_1 : i32, i32, i32
  }
  func.func @transform_4(%arg0: i32, %arg1: i32) -> (i32, i32, i32) {
    %c0_i32 = arith.constant 0 : i32
    %c0_i32_0 = arith.constant 0 : i32
    %c0_i32_1 = arith.constant 0 : i32
    %c0_i32_2 = arith.constant 0 : i32
    return %c0_i32, %c0_i32_0, %c0_i32_1 : i32, i32, i32
  }
  func.func @transform_5(%arg0: i32, %arg1: i32) -> (i32, i32, i32) {
    %c0_i32 = arith.constant 0 : i32
    %c0_i32_0 = arith.constant 0 : i32
    return %arg0, %arg1, %c0_i32 : i32, i32, i32
  }
}

module attributes {stable_mosaic.version = 11 : i64} {
  func.func @_layer_fused_kernel(%arg0: i32, %arg1: memref<16x16xbf16, #tpu.memory_space<vmem>>, %arg2: memref<16x16xbf16, #tpu.memory_space<vmem>>, %arg3: memref<1x16xf32, #tpu.memory_space<vmem>>, %arg4: memref<16x6xbf16, #tpu.memory_space<vmem>>, %arg5: memref<16x6xf32, #tpu.memory_space<vmem>>, %arg6: memref<16x16xf32, #tpu.memory_space<vmem>>) attributes {dimension_semantics = [#tpu.dimension_semantics<parallel>], iteration_bounds = array<i64: 1>, scalar_prefetch = 0 : i64, scratch_operands = 0 : i64, tpu.core_type = #tpu.core_type<tc>, window_params = [{transform_indices = @transform_0, window_bounds = array<i64: 16, 16>}, {pipeline_mode = #tpu.pipeline_mode<synchronous>, transform_indices = @transform_1, window_bounds = array<i64: 16, 16>}, {pipeline_mode = #tpu.pipeline_mode<synchronous>, transform_indices = @transform_2, window_bounds = array<i64: 1, 16>}, {pipeline_mode = #tpu.pipeline_mode<synchronous>, transform_indices = @transform_3, window_bounds = array<i64: 16, 6>}, {transform_indices = @transform_4, window_bounds = array<i64: 16, 6>}, {transform_indices = @transform_5, window_bounds = array<i64: 16, 16>}]} {
    %c0 = arith.constant 0 : index
    %c0_0 = arith.constant 0 : index
    %0 = vector.load %arg1[%c0, %c0_0] : memref<16x16xbf16, #tpu.memory_space<vmem>>, vector<16x16xbf16>
    %1 = arith.extf %0 : vector<16x16xbf16> to vector<16x16xf32>
    %c0_1 = arith.constant 0 : index
    %c0_2 = arith.constant 0 : index
    %2 = vector.load %arg2[%c0_1, %c0_2] : memref<16x16xbf16, #tpu.memory_space<vmem>>, vector<16x16xbf16>
    %cst = arith.constant dense<0.000000e+00> : vector<16x16xf32>
    %3 = tpu.matmul %0, %2, %cst {dimension_numbers = #tpu.dot_dimension_numbers<[1], [0], [0], [1], [0, 0, 1, 1], [], []>} : vector<16x16xbf16>, vector<16x16xbf16>, vector<16x16xf32> -> vector<16x16xf32>
    %c0_3 = arith.constant 0 : index
    %c0_4 = arith.constant 0 : index
    %4 = vector.load %arg3[%c0_3, %c0_4] : memref<1x16xf32, #tpu.memory_space<vmem>>, vector<1x16xf32>
    %5 = vector.broadcast %4 : vector<1x16xf32> to vector<16x16xf32>
    %6 = arith.addf %3, %5 : vector<16x16xf32>
    %cst_5 = arith.constant 0.000000e+00 : f32
    %7 = vector.broadcast %cst_5 : f32 to vector<16x16xf32>
    %8 = arith.maximumf %6, %7 : vector<16x16xf32>
    %c0_6 = arith.constant 0 : index
    %c0_7 = arith.constant 0 : index
    %9 = vector.load %arg6[%c0_6, %c0_7] : memref<16x16xf32, #tpu.memory_space<vmem>>, vector<16x16xf32>
    tpu.vector_store %arg6[%c0_6, %c0_7], %8 {strides = array<i32>} : memref<16x16xf32, #tpu.memory_space<vmem>>, vector<16x16xf32>,
    %10 = arith.mulf %1, %1 : vector<16x16xf32>
    %cst_8 = arith.constant dense<0.000000e+00> : vector<16xf32>
    %11 = vector.multi_reduction <add>, %10, %cst_8 [1] : vector<16x16xf32> to vector<16xf32>
    %12 = vector.shape_cast %11 : vector<16xf32> to vector<16x1xf32>
    %13 = math.sqrt %12 : vector<16x1xf32>
    %cst_9 = arith.constant 9.99999993E-9 : f32
    %14 = vector.broadcast %cst_9 : f32 to vector<16x1xf32>
    %15 = arith.maximumf %13, %14 : vector<16x1xf32>
    %16 = tpu.reciprocal %15 {approx = true} : vector<16x1xf32> -> vector<16x1xf32>
    %c0_10 = arith.constant 0 : index
    %c0_11 = arith.constant 0 : index
    %17 = vector.load %arg4[%c0_10, %c0_11] : memref<16x6xbf16, #tpu.memory_space<vmem>>, vector<16x6xbf16>
    %cst_12 = arith.constant dense<0.000000e+00> : vector<16x6xf32>
    %18 = tpu.matmul %0, %17, %cst_12 {dimension_numbers = #tpu.dot_dimension_numbers<[1], [0], [0], [1], [0, 0, 1, 1], [], []>} : vector<16x16xbf16>, vector<16x6xbf16>, vector<16x6xf32> -> vector<16x6xf32>
    %19 = vector.broadcast %16 : vector<16x1xf32> to vector<16x6xf32>
    %20 = arith.mulf %18, %19 : vector<16x6xf32>
    %cst_13 = arith.constant 1.000000e+00 : f32
    %21 = vector.broadcast %cst_13 : f32 to vector<16x6xf32>
    %22 = arith.mulf %20, %21 : vector<16x6xf32>
    %23 = math.exp %22 : vector<16x6xf32>
    %cst_14 = arith.constant dense<0.000000e+00> : vector<16xf32>
    %24 = vector.multi_reduction <add>, %23, %cst_14 [1] : vector<16x6xf32> to vector<16xf32>
    %25 = vector.shape_cast %24 : vector<16xf32> to vector<16x1xf32>
    %26 = tpu.reciprocal %25 {approx = true} : vector<16x1xf32> -> vector<16x1xf32>
    %27 = vector.broadcast %26 : vector<16x1xf32> to vector<16x6xf32>
    %28 = arith.mulf %23, %27 : vector<16x6xf32>
    %c0_15 = arith.constant 0 : index
    %c0_16 = arith.constant 0 : index
    %29 = vector.load %arg5[%c0_15, %c0_16] : memref<16x6xf32, #tpu.memory_space<vmem>>, vector<16x6xf32>
    tpu.vector_store %arg5[%c0_15, %c0_16], %28 {strides = array<i32>} : memref<16x6xf32, #tpu.memory_space<vmem>>, vector<16x6xf32>,
    return
  }
  func.func @transform_0(%arg0: i32) -> (i32, i32) {
    %c0_i32 = arith.constant 0 : i32
    %c0_i32_0 = arith.constant 0 : i32
    return %arg0, %c0_i32 : i32, i32
  }
  func.func @transform_1(%arg0: i32) -> (i32, i32) {
    %c0_i32 = arith.constant 0 : i32
    %c0_i32_0 = arith.constant 0 : i32
    %c0_i32_1 = arith.constant 0 : i32
    return %c0_i32, %c0_i32_0 : i32, i32
  }
  func.func @transform_2(%arg0: i32) -> (i32, i32) {
    %c0_i32 = arith.constant 0 : i32
    %c0_i32_0 = arith.constant 0 : i32
    %c0_i32_1 = arith.constant 0 : i32
    return %c0_i32, %c0_i32_0 : i32, i32
  }
  func.func @transform_3(%arg0: i32) -> (i32, i32) {
    %c0_i32 = arith.constant 0 : i32
    %c0_i32_0 = arith.constant 0 : i32
    %c0_i32_1 = arith.constant 0 : i32
    return %c0_i32, %c0_i32_0 : i32, i32
  }
  func.func @transform_4(%arg0: i32) -> (i32, i32) {
    %c0_i32 = arith.constant 0 : i32
    %c0_i32_0 = arith.constant 0 : i32
    return %arg0, %c0_i32 : i32, i32
  }
  func.func @transform_5(%arg0: i32) -> (i32, i32) {
    %c0_i32 = arith.constant 0 : i32
    %c0_i32_0 = arith.constant 0 : i32
    return %arg0, %c0_i32 : i32, i32
  }
}

module attributes {stable_mosaic.version = 11 : i64} {
  func.func @_gru_kernel(%arg0: i32, %arg1: i32, %arg2: memref<1x16x16xbf16, #tpu.memory_space<vmem>>, %arg3: memref<3x16x16xbf16, #tpu.memory_space<vmem>>, %arg4: memref<3x16x16xbf16, #tpu.memory_space<vmem>>, %arg5: memref<3x1x16xf32, #tpu.memory_space<vmem>>, %arg6: memref<3x1x16xf32, #tpu.memory_space<vmem>>, %arg7: memref<1x16x16xbf16, #tpu.memory_space<vmem>>, %arg8: memref<4x16xf32, #tpu.memory_space<vmem>>) attributes {dimension_semantics = [#tpu.dimension_semantics<parallel>, #tpu.dimension_semantics<arbitrary>], iteration_bounds = array<i64: 1, 1>, scalar_prefetch = 0 : i64, scratch_operands = 1 : i64, tpu.core_type = #tpu.core_type<tc>, window_params = [{transform_indices = @transform_0, window_bounds = array<i64: 1, 16, 16>}, {pipeline_mode = #tpu.pipeline_mode<synchronous>, transform_indices = @transform_1, window_bounds = array<i64: 3, 16, 16>}, {pipeline_mode = #tpu.pipeline_mode<synchronous>, transform_indices = @transform_2, window_bounds = array<i64: 3, 16, 16>}, {pipeline_mode = #tpu.pipeline_mode<synchronous>, transform_indices = @transform_3, window_bounds = array<i64: 3, 1, 16>}, {pipeline_mode = #tpu.pipeline_mode<synchronous>, transform_indices = @transform_4, window_bounds = array<i64: 3, 1, 16>}, {transform_indices = @transform_5, window_bounds = array<i64: 1, 16, 16>}]} {
    %c0_i32 = arith.constant 0 : i32
    %0 = arith.cmpi eq, %arg1, %c0_i32 : i32
    %1 = arith.extui %0 : i1 to i32
    %c0_i32_0 = arith.constant 0 : i32
    %2 = arith.cmpi ne, %1, %c0_i32_0 : i32
    scf.if %2 {
      %cst_76 = arith.constant 0.000000e+00 : f32
      %188 = vector.broadcast %cst_76 : f32 to vector<4x16xf32>
      %c0_77 = arith.constant 0 : index
      %c0_78 = arith.constant 0 : index
      %189 = vector.load %arg8[%c0_77, %c0_78] : memref<4x16xf32, #tpu.memory_space<vmem>>, vector<4x16xf32>
      tpu.vector_store %arg8[%c0_77, %c0_78], %188 {strides = array<i32>} : memref<4x16xf32, #tpu.memory_space<vmem>>, vector<4x16xf32>,
    } else {
    }
    %c0 = arith.constant 0 : index
    %c0_1 = arith.constant 0 : index
    %c0_2 = arith.constant 0 : index
    %3 = vector.load %arg2[%c0, %c0_1, %c0_2] : memref<1x16x16xbf16, #tpu.memory_space<vmem>>, vector<1x16x16xbf16>
    %4 = vector.shape_cast %3 : vector<1x16x16xbf16> to vector<16x16xbf16>
    %c0_3 = arith.constant 0 : index
    %c0_4 = arith.constant 0 : index
    %c0_5 = arith.constant 0 : index
    %5 = vector.load %arg3[%c0_3, %c0_4, %c0_5] : memref<3x16x16xbf16, #tpu.memory_space<vmem>>, vector<1x16x16xbf16>
    %6 = vector.shape_cast %5 : vector<1x16x16xbf16> to vector<16x16xbf16>
    %cst = arith.constant dense<0.000000e+00> : vector<16x16xf32>
    %7 = tpu.matmul %4, %6, %cst {dimension_numbers = #tpu.dot_dimension_numbers<[1], [0], [0], [1], [0, 0, 1, 1], [], []>} : vector<16x16xbf16>, vector<16x16xbf16>, vector<16x16xf32> -> vector<16x16xf32>
    %c0_6 = arith.constant 0 : index
    %c0_7 = arith.constant 0 : index
    %c0_8 = arith.constant 0 : index
    %8 = vector.load %arg5[%c0_6, %c0_7, %c0_8] : memref<3x1x16xf32, #tpu.memory_space<vmem>>, vector<1x1x16xf32>
    %9 = vector.shape_cast %8 : vector<1x1x16xf32> to vector<1x16xf32>
    %10 = vector.broadcast %9 : vector<1x16xf32> to vector<16x16xf32>
    %11 = arith.addf %7, %10 : vector<16x16xf32>
    %c1 = arith.constant 1 : index
    %c0_9 = arith.constant 0 : index
    %c0_10 = arith.constant 0 : index
    %12 = vector.load %arg3[%c1, %c0_9, %c0_10] : memref<3x16x16xbf16, #tpu.memory_space<vmem>>, vector<1x16x16xbf16>
    %13 = vector.shape_cast %12 : vector<1x16x16xbf16> to vector<16x16xbf16>
    %cst_11 = arith.constant dense<0.000000e+00> : vector<16x16xf32>
    %14 = tpu.matmul %4, %13, %cst_11 {dimension_numbers = #tpu.dot_dimension_numbers<[1], [0], [0], [1], [0, 0, 1, 1], [], []>} : vector<16x16xbf16>, vector<16x16xbf16>, vector<16x16xf32> -> vector<16x16xf32>
    %c1_12 = arith.constant 1 : index
    %c0_13 = arith.constant 0 : index
    %c0_14 = arith.constant 0 : index
    %15 = vector.load %arg5[%c1_12, %c0_13, %c0_14] : memref<3x1x16xf32, #tpu.memory_space<vmem>>, vector<1x1x16xf32>
    %16 = vector.shape_cast %15 : vector<1x1x16xf32> to vector<1x16xf32>
    %17 = vector.broadcast %16 : vector<1x16xf32> to vector<16x16xf32>
    %18 = arith.addf %14, %17 : vector<16x16xf32>
    %c2 = arith.constant 2 : index
    %c0_15 = arith.constant 0 : index
    %c0_16 = arith.constant 0 : index
    %19 = vector.load %arg3[%c2, %c0_15, %c0_16] : memref<3x16x16xbf16, #tpu.memory_space<vmem>>, vector<1x16x16xbf16>
    %20 = vector.shape_cast %19 : vector<1x16x16xbf16> to vector<16x16xbf16>
    %cst_17 = arith.constant dense<0.000000e+00> : vector<16x16xf32>
    %21 = tpu.matmul %4, %20, %cst_17 {dimension_numbers = #tpu.dot_dimension_numbers<[1], [0], [0], [1], [0, 0, 1, 1], [], []>} : vector<16x16xbf16>, vector<16x16xbf16>, vector<16x16xf32> -> vector<16x16xf32>
    %c2_18 = arith.constant 2 : index
    %c0_19 = arith.constant 0 : index
    %c0_20 = arith.constant 0 : index
    %22 = vector.load %arg5[%c2_18, %c0_19, %c0_20] : memref<3x1x16xf32, #tpu.memory_space<vmem>>, vector<1x1x16xf32>
    %23 = vector.shape_cast %22 : vector<1x1x16xf32> to vector<1x16xf32>
    %24 = vector.broadcast %23 : vector<1x16xf32> to vector<16x16xf32>
    %25 = arith.addf %21, %24 : vector<16x16xf32>
    %c0_21 = arith.constant 0 : index
    %c0_22 = arith.constant 0 : index
    %c0_23 = arith.constant 0 : index
    %26 = vector.load %arg4[%c0_21, %c0_22, %c0_23] : memref<3x16x16xbf16, #tpu.memory_space<vmem>>, vector<1x16x16xbf16>
    %27 = vector.shape_cast %26 : vector<1x16x16xbf16> to vector<16x16xbf16>
    %c1_24 = arith.constant 1 : index
    %c0_25 = arith.constant 0 : index
    %c0_26 = arith.constant 0 : index
    %28 = vector.load %arg4[%c1_24, %c0_25, %c0_26] : memref<3x16x16xbf16, #tpu.memory_space<vmem>>, vector<1x16x16xbf16>
    %29 = vector.shape_cast %28 : vector<1x16x16xbf16> to vector<16x16xbf16>
    %c2_27 = arith.constant 2 : index
    %c0_28 = arith.constant 0 : index
    %c0_29 = arith.constant 0 : index
    %30 = vector.load %arg4[%c2_27, %c0_28, %c0_29] : memref<3x16x16xbf16, #tpu.memory_space<vmem>>, vector<1x16x16xbf16>
    %31 = vector.shape_cast %30 : vector<1x16x16xbf16> to vector<16x16xbf16>
    %c0_30 = arith.constant 0 : index
    %c0_31 = arith.constant 0 : index
    %c0_32 = arith.constant 0 : index
    %32 = vector.load %arg6[%c0_30, %c0_31, %c0_32] : memref<3x1x16xf32, #tpu.memory_space<vmem>>, vector<1x1x16xf32>
    %33 = vector.shape_cast %32 : vector<1x1x16xf32> to vector<1x16xf32>
    %c1_33 = arith.constant 1 : index
    %c0_34 = arith.constant 0 : index
    %c0_35 = arith.constant 0 : index
    %34 = vector.load %arg6[%c1_33, %c0_34, %c0_35] : memref<3x1x16xf32, #tpu.memory_space<vmem>>, vector<1x1x16xf32>
    %35 = vector.shape_cast %34 : vector<1x1x16xf32> to vector<1x16xf32>
    %c2_36 = arith.constant 2 : index
    %c0_37 = arith.constant 0 : index
    %c0_38 = arith.constant 0 : index
    %36 = vector.load %arg6[%c2_36, %c0_37, %c0_38] : memref<3x1x16xf32, #tpu.memory_space<vmem>>, vector<1x1x16xf32>
    %37 = vector.shape_cast %36 : vector<1x1x16xf32> to vector<1x16xf32>
    %c0_39 = arith.constant 0 : index
    %c0_40 = arith.constant 0 : index
    %38 = vector.load %arg8[%c0_39, %c0_40] : memref<4x16xf32, #tpu.memory_space<vmem>>, vector<4x16xf32>
    %39 = arith.truncf %38 : vector<4x16xf32> to vector<4x16xbf16>
    %cst_41 = arith.constant dense<0.000000e+00> : vector<4x16xf32>
    %40 = tpu.matmul %39, %27, %cst_41 {dimension_numbers = #tpu.dot_dimension_numbers<[1], [0], [0], [1], [0, 0, 1, 1], [], []>} : vector<4x16xbf16>, vector<16x16xbf16>, vector<4x16xf32> -> vector<4x16xf32>
    %41 = vector.broadcast %33 : vector<1x16xf32> to vector<4x16xf32>
    %42 = arith.addf %40, %41 : vector<4x16xf32>
    %cst_42 = arith.constant dense<0.000000e+00> : vector<4x16xf32>
    %43 = tpu.matmul %39, %29, %cst_42 {dimension_numbers = #tpu.dot_dimension_numbers<[1], [0], [0], [1], [0, 0, 1, 1], [], []>} : vector<4x16xbf16>, vector<16x16xbf16>, vector<4x16xf32> -> vector<4x16xf32>
    %44 = vector.broadcast %35 : vector<1x16xf32> to vector<4x16xf32>
    %45 = arith.addf %43, %44 : vector<4x16xf32>
    %cst_43 = arith.constant dense<0.000000e+00> : vector<4x16xf32>
    %46 = tpu.matmul %39, %31, %cst_43 {dimension_numbers = #tpu.dot_dimension_numbers<[1], [0], [0], [1], [0, 0, 1, 1], [], []>} : vector<4x16xbf16>, vector<16x16xbf16>, vector<4x16xf32> -> vector<4x16xf32>
    %47 = vector.broadcast %37 : vector<1x16xf32> to vector<4x16xf32>
    %48 = arith.addf %46, %47 : vector<4x16xf32>
    %49 = vector.extract_strided_slice %11 {offsets = [0, 0], sizes = [4, 16], strides = [1, 1]} : vector<16x16xf32> to vector<4x16xf32>
    %50 = arith.addf %49, %42 : vector<4x16xf32>
    %51 = arith.negf %50 : vector<4x16xf32>
    %52 = math.exp %51 : vector<4x16xf32>
    %cst_44 = arith.constant 1.000000e+00 : f32
    %53 = vector.broadcast %cst_44 : f32 to vector<4x16xf32>
    %54 = arith.addf %53, %52 : vector<4x16xf32>
    %55 = arith.divf %53, %54 : vector<4x16xf32>
    %56 = vector.extract_strided_slice %18 {offsets = [0, 0], sizes = [4, 16], strides = [1, 1]} : vector<16x16xf32> to vector<4x16xf32>
    %57 = arith.addf %56, %45 : vector<4x16xf32>
    %58 = arith.negf %57 : vector<4x16xf32>
    %59 = math.exp %58 : vector<4x16xf32>
    %cst_45 = arith.constant 1.000000e+00 : f32
    %60 = vector.broadcast %cst_45 : f32 to vector<4x16xf32>
    %61 = arith.addf %60, %59 : vector<4x16xf32>
    %62 = arith.divf %60, %61 : vector<4x16xf32>
    %63 = vector.extract_strided_slice %25 {offsets = [0, 0], sizes = [4, 16], strides = [1, 1]} : vector<16x16xf32> to vector<4x16xf32>
    %64 = arith.mulf %55, %48 : vector<4x16xf32>
    %65 = arith.addf %63, %64 : vector<4x16xf32>
    %66 = math.tanh %65 : vector<4x16xf32>
    %cst_46 = arith.constant 1.000000e+00 : f32
    %67 = vector.broadcast %cst_46 : f32 to vector<4x16xf32>
    %68 = arith.subf %67, %62 : vector<4x16xf32>
    %69 = arith.mulf %68, %66 : vector<4x16xf32>
    %70 = arith.mulf %62, %38 : vector<4x16xf32>
    %71 = arith.addf %69, %70 : vector<4x16xf32>
    %72 = arith.truncf %71 : vector<4x16xf32> to vector<4x16xbf16>
    %c0_47 = arith.constant 0 : index
    %c0_48 = arith.constant 0 : index
    %c0_49 = arith.constant 0 : index
    %73 = vector.load %arg7[%c0_47, %c0_48, %c0_49] : memref<1x16x16xbf16, #tpu.memory_space<vmem>>, vector<1x4x16xbf16>
    %74 = vector.shape_cast %73 : vector<1x4x16xbf16> to vector<4x16xbf16>
    %75 = vector.shape_cast %72 : vector<4x16xbf16> to vector<1x4x16xbf16>
    tpu.vector_store %arg7[%c0_47, %c0_48, %c0_49], %75 {strides = array<i32>} : memref<1x16x16xbf16, #tpu.memory_space<vmem>>, vector<1x4x16xbf16>,
    %76 = arith.truncf %71 : vector<4x16xf32> to vector<4x16xbf16>
    %cst_50 = arith.constant dense<0.000000e+00> : vector<4x16xf32>
    %77 = tpu.matmul %76, %27, %cst_50 {dimension_numbers = #tpu.dot_dimension_numbers<[1], [0], [0], [1], [0, 0, 1, 1], [], []>} : vector<4x16xbf16>, vector<16x16xbf16>, vector<4x16xf32> -> vector<4x16xf32>
    %78 = vector.broadcast %33 : vector<1x16xf32> to vector<4x16xf32>
    %79 = arith.addf %77, %78 : vector<4x16xf32>
    %cst_51 = arith.constant dense<0.000000e+00> : vector<4x16xf32>
    %80 = tpu.matmul %76, %29, %cst_51 {dimension_numbers = #tpu.dot_dimension_numbers<[1], [0], [0], [1], [0, 0, 1, 1], [], []>} : vector<4x16xbf16>, vector<16x16xbf16>, vector<4x16xf32> -> vector<4x16xf32>
    %81 = vector.broadcast %35 : vector<1x16xf32> to vector<4x16xf32>
    %82 = arith.addf %80, %81 : vector<4x16xf32>
    %cst_52 = arith.constant dense<0.000000e+00> : vector<4x16xf32>
    %83 = tpu.matmul %76, %31, %cst_52 {dimension_numbers = #tpu.dot_dimension_numbers<[1], [0], [0], [1], [0, 0, 1, 1], [], []>} : vector<4x16xbf16>, vector<16x16xbf16>, vector<4x16xf32> -> vector<4x16xf32>
    %84 = vector.broadcast %37 : vector<1x16xf32> to vector<4x16xf32>
    %85 = arith.addf %83, %84 : vector<4x16xf32>
    %86 = vector.extract_strided_slice %11 {offsets = [4, 0], sizes = [4, 16], strides = [1, 1]} : vector<16x16xf32> to vector<4x16xf32>
    %87 = arith.addf %86, %79 : vector<4x16xf32>
    %88 = arith.negf %87 : vector<4x16xf32>
    %89 = math.exp %88 : vector<4x16xf32>
    %cst_53 = arith.constant 1.000000e+00 : f32
    %90 = vector.broadcast %cst_53 : f32 to vector<4x16xf32>
    %91 = arith.addf %90, %89 : vector<4x16xf32>
    %92 = arith.divf %90, %91 : vector<4x16xf32>
    %93 = vector.extract_strided_slice %18 {offsets = [4, 0], sizes = [4, 16], strides = [1, 1]} : vector<16x16xf32> to vector<4x16xf32>
    %94 = arith.addf %93, %82 : vector<4x16xf32>
    %95 = arith.negf %94 : vector<4x16xf32>
    %96 = math.exp %95 : vector<4x16xf32>
    %cst_54 = arith.constant 1.000000e+00 : f32
    %97 = vector.broadcast %cst_54 : f32 to vector<4x16xf32>
    %98 = arith.addf %97, %96 : vector<4x16xf32>
    %99 = arith.divf %97, %98 : vector<4x16xf32>
    %100 = vector.extract_strided_slice %25 {offsets = [4, 0], sizes = [4, 16], strides = [1, 1]} : vector<16x16xf32> to vector<4x16xf32>
    %101 = arith.mulf %92, %85 : vector<4x16xf32>
    %102 = arith.addf %100, %101 : vector<4x16xf32>
    %103 = math.tanh %102 : vector<4x16xf32>
    %cst_55 = arith.constant 1.000000e+00 : f32
    %104 = vector.broadcast %cst_55 : f32 to vector<4x16xf32>
    %105 = arith.subf %104, %99 : vector<4x16xf32>
    %106 = arith.mulf %105, %103 : vector<4x16xf32>
    %107 = arith.mulf %99, %71 : vector<4x16xf32>
    %108 = arith.addf %106, %107 : vector<4x16xf32>
    %109 = arith.truncf %108 : vector<4x16xf32> to vector<4x16xbf16>
    %c0_56 = arith.constant 0 : index
    %c4 = arith.constant 4 : index
    %c0_57 = arith.constant 0 : index
    %110 = vector.load %arg7[%c0_56, %c4, %c0_57] : memref<1x16x16xbf16, #tpu.memory_space<vmem>>, vector<1x4x16xbf16>
    %111 = vector.shape_cast %110 : vector<1x4x16xbf16> to vector<4x16xbf16>
    %112 = vector.shape_cast %109 : vector<4x16xbf16> to vector<1x4x16xbf16>
    tpu.vector_store %arg7[%c0_56, %c4, %c0_57], %112 {strides = array<i32>} : memref<1x16x16xbf16, #tpu.memory_space<vmem>>, vector<1x4x16xbf16>,
    %113 = arith.truncf %108 : vector<4x16xf32> to vector<4x16xbf16>
    %cst_58 = arith.constant dense<0.000000e+00> : vector<4x16xf32>
    %114 = tpu.matmul %113, %27, %cst_58 {dimension_numbers = #tpu.dot_dimension_numbers<[1], [0], [0], [1], [0, 0, 1, 1], [], []>} : vector<4x16xbf16>, vector<16x16xbf16>, vector<4x16xf32> -> vector<4x16xf32>
    %115 = vector.broadcast %33 : vector<1x16xf32> to vector<4x16xf32>
    %116 = arith.addf %114, %115 : vector<4x16xf32>
    %cst_59 = arith.constant dense<0.000000e+00> : vector<4x16xf32>
    %117 = tpu.matmul %113, %29, %cst_59 {dimension_numbers = #tpu.dot_dimension_numbers<[1], [0], [0], [1], [0, 0, 1, 1], [], []>} : vector<4x16xbf16>, vector<16x16xbf16>, vector<4x16xf32> -> vector<4x16xf32>
    %118 = vector.broadcast %35 : vector<1x16xf32> to vector<4x16xf32>
    %119 = arith.addf %117, %118 : vector<4x16xf32>
    %cst_60 = arith.constant dense<0.000000e+00> : vector<4x16xf32>
    %120 = tpu.matmul %113, %31, %cst_60 {dimension_numbers = #tpu.dot_dimension_numbers<[1], [0], [0], [1], [0, 0, 1, 1], [], []>} : vector<4x16xbf16>, vector<16x16xbf16>, vector<4x16xf32> -> vector<4x16xf32>
    %121 = vector.broadcast %37 : vector<1x16xf32> to vector<4x16xf32>
    %122 = arith.addf %120, %121 : vector<4x16xf32>
    %123 = vector.extract_strided_slice %11 {offsets = [8, 0], sizes = [4, 16], strides = [1, 1]} : vector<16x16xf32> to vector<4x16xf32>
    %124 = arith.addf %123, %116 : vector<4x16xf32>
    %125 = arith.negf %124 : vector<4x16xf32>
    %126 = math.exp %125 : vector<4x16xf32>
    %cst_61 = arith.constant 1.000000e+00 : f32
    %127 = vector.broadcast %cst_61 : f32 to vector<4x16xf32>
    %128 = arith.addf %127, %126 : vector<4x16xf32>
    %129 = arith.divf %127, %128 : vector<4x16xf32>
    %130 = vector.extract_strided_slice %18 {offsets = [8, 0], sizes = [4, 16], strides = [1, 1]} : vector<16x16xf32> to vector<4x16xf32>
    %131 = arith.addf %130, %119 : vector<4x16xf32>
    %132 = arith.negf %131 : vector<4x16xf32>
    %133 = math.exp %132 : vector<4x16xf32>
    %cst_62 = arith.constant 1.000000e+00 : f32
    %134 = vector.broadcast %cst_62 : f32 to vector<4x16xf32>
    %135 = arith.addf %134, %133 : vector<4x16xf32>
    %136 = arith.divf %134, %135 : vector<4x16xf32>
    %137 = vector.extract_strided_slice %25 {offsets = [8, 0], sizes = [4, 16], strides = [1, 1]} : vector<16x16xf32> to vector<4x16xf32>
    %138 = arith.mulf %129, %122 : vector<4x16xf32>
    %139 = arith.addf %137, %138 : vector<4x16xf32>
    %140 = math.tanh %139 : vector<4x16xf32>
    %cst_63 = arith.constant 1.000000e+00 : f32
    %141 = vector.broadcast %cst_63 : f32 to vector<4x16xf32>
    %142 = arith.subf %141, %136 : vector<4x16xf32>
    %143 = arith.mulf %142, %140 : vector<4x16xf32>
    %144 = arith.mulf %136, %108 : vector<4x16xf32>
    %145 = arith.addf %143, %144 : vector<4x16xf32>
    %146 = arith.truncf %145 : vector<4x16xf32> to vector<4x16xbf16>
    %c0_64 = arith.constant 0 : index
    %c8 = arith.constant 8 : index
    %c0_65 = arith.constant 0 : index
    %147 = vector.load %arg7[%c0_64, %c8, %c0_65] : memref<1x16x16xbf16, #tpu.memory_space<vmem>>, vector<1x4x16xbf16>
    %148 = vector.shape_cast %147 : vector<1x4x16xbf16> to vector<4x16xbf16>
    %149 = vector.shape_cast %146 : vector<4x16xbf16> to vector<1x4x16xbf16>
    tpu.vector_store %arg7[%c0_64, %c8, %c0_65], %149 {strides = array<i32>} : memref<1x16x16xbf16, #tpu.memory_space<vmem>>, vector<1x4x16xbf16>,
    %150 = arith.truncf %145 : vector<4x16xf32> to vector<4x16xbf16>
    %cst_66 = arith.constant dense<0.000000e+00> : vector<4x16xf32>
    %151 = tpu.matmul %150, %27, %cst_66 {dimension_numbers = #tpu.dot_dimension_numbers<[1], [0], [0], [1], [0, 0, 1, 1], [], []>} : vector<4x16xbf16>, vector<16x16xbf16>, vector<4x16xf32> -> vector<4x16xf32>
    %152 = vector.broadcast %33 : vector<1x16xf32> to vector<4x16xf32>
    %153 = arith.addf %151, %152 : vector<4x16xf32>
    %cst_67 = arith.constant dense<0.000000e+00> : vector<4x16xf32>
    %154 = tpu.matmul %150, %29, %cst_67 {dimension_numbers = #tpu.dot_dimension_numbers<[1], [0], [0], [1], [0, 0, 1, 1], [], []>} : vector<4x16xbf16>, vector<16x16xbf16>, vector<4x16xf32> -> vector<4x16xf32>
    %155 = vector.broadcast %35 : vector<1x16xf32> to vector<4x16xf32>
    %156 = arith.addf %154, %155 : vector<4x16xf32>
    %cst_68 = arith.constant dense<0.000000e+00> : vector<4x16xf32>
    %157 = tpu.matmul %150, %31, %cst_68 {dimension_numbers = #tpu.dot_dimension_numbers<[1], [0], [0], [1], [0, 0, 1, 1], [], []>} : vector<4x16xbf16>, vector<16x16xbf16>, vector<4x16xf32> -> vector<4x16xf32>
    %158 = vector.broadcast %37 : vector<1x16xf32> to vector<4x16xf32>
    %159 = arith.addf %157, %158 : vector<4x16xf32>
    %160 = vector.extract_strided_slice %11 {offsets = [12, 0], sizes = [4, 16], strides = [1, 1]} : vector<16x16xf32> to vector<4x16xf32>
    %161 = arith.addf %160, %153 : vector<4x16xf32>
    %162 = arith.negf %161 : vector<4x16xf32>
    %163 = math.exp %162 : vector<4x16xf32>
    %cst_69 = arith.constant 1.000000e+00 : f32
    %164 = vector.broadcast %cst_69 : f32 to vector<4x16xf32>
    %165 = arith.addf %164, %163 : vector<4x16xf32>
    %166 = arith.divf %164, %165 : vector<4x16xf32>
    %167 = vector.extract_strided_slice %18 {offsets = [12, 0], sizes = [4, 16], strides = [1, 1]} : vector<16x16xf32> to vector<4x16xf32>
    %168 = arith.addf %167, %156 : vector<4x16xf32>
    %169 = arith.negf %168 : vector<4x16xf32>
    %170 = math.exp %169 : vector<4x16xf32>
    %cst_70 = arith.constant 1.000000e+00 : f32
    %171 = vector.broadcast %cst_70 : f32 to vector<4x16xf32>
    %172 = arith.addf %171, %170 : vector<4x16xf32>
    %173 = arith.divf %171, %172 : vector<4x16xf32>
    %174 = vector.extract_strided_slice %25 {offsets = [12, 0], sizes = [4, 16], strides = [1, 1]} : vector<16x16xf32> to vector<4x16xf32>
    %175 = arith.mulf %166, %159 : vector<4x16xf32>
    %176 = arith.addf %174, %175 : vector<4x16xf32>
    %177 = math.tanh %176 : vector<4x16xf32>
    %cst_71 = arith.constant 1.000000e+00 : f32
    %178 = vector.broadcast %cst_71 : f32 to vector<4x16xf32>
    %179 = arith.subf %178, %173 : vector<4x16xf32>
    %180 = arith.mulf %179, %177 : vector<4x16xf32>
    %181 = arith.mulf %173, %145 : vector<4x16xf32>
    %182 = arith.addf %180, %181 : vector<4x16xf32>
    %183 = arith.truncf %182 : vector<4x16xf32> to vector<4x16xbf16>
    %c0_72 = arith.constant 0 : index
    %c12 = arith.constant 12 : index
    %c0_73 = arith.constant 0 : index
    %184 = vector.load %arg7[%c0_72, %c12, %c0_73] : memref<1x16x16xbf16, #tpu.memory_space<vmem>>, vector<1x4x16xbf16>
    %185 = vector.shape_cast %184 : vector<1x4x16xbf16> to vector<4x16xbf16>
    %186 = vector.shape_cast %183 : vector<4x16xbf16> to vector<1x4x16xbf16>
    tpu.vector_store %arg7[%c0_72, %c12, %c0_73], %186 {strides = array<i32>} : memref<1x16x16xbf16, #tpu.memory_space<vmem>>, vector<1x4x16xbf16>,
    %c0_74 = arith.constant 0 : index
    %c0_75 = arith.constant 0 : index
    %187 = vector.load %arg8[%c0_74, %c0_75] : memref<4x16xf32, #tpu.memory_space<vmem>>, vector<4x16xf32>
    tpu.vector_store %arg8[%c0_74, %c0_75], %182 {strides = array<i32>} : memref<4x16xf32, #tpu.memory_space<vmem>>, vector<4x16xf32>,
    return
  }
  func.func @transform_0(%arg0: i32, %arg1: i32) -> (i32, i32, i32) {
    %c0_i32 = arith.constant 0 : i32
    %c0_i32_0 = arith.constant 0 : i32
    return %arg0, %arg1, %c0_i32 : i32, i32, i32
  }
  func.func @transform_1(%arg0: i32, %arg1: i32) -> (i32, i32, i32) {
    %c0_i32 = arith.constant 0 : i32
    %c0_i32_0 = arith.constant 0 : i32
    %c0_i32_1 = arith.constant 0 : i32
    %c0_i32_2 = arith.constant 0 : i32
    return %c0_i32, %c0_i32_0, %c0_i32_1 : i32, i32, i32
  }
  func.func @transform_2(%arg0: i32, %arg1: i32) -> (i32, i32, i32) {
    %c0_i32 = arith.constant 0 : i32
    %c0_i32_0 = arith.constant 0 : i32
    %c0_i32_1 = arith.constant 0 : i32
    %c0_i32_2 = arith.constant 0 : i32
    return %c0_i32, %c0_i32_0, %c0_i32_1 : i32, i32, i32
  }
  func.func @transform_3(%arg0: i32, %arg1: i32) -> (i32, i32, i32) {
    %c0_i32 = arith.constant 0 : i32
    %c0_i32_0 = arith.constant 0 : i32
    %c0_i32_1 = arith.constant 0 : i32
    %c0_i32_2 = arith.constant 0 : i32
    return %c0_i32, %c0_i32_0, %c0_i32_1 : i32, i32, i32
  }
  func.func @transform_4(%arg0: i32, %arg1: i32) -> (i32, i32, i32) {
    %c0_i32 = arith.constant 0 : i32
    %c0_i32_0 = arith.constant 0 : i32
    %c0_i32_1 = arith.constant 0 : i32
    %c0_i32_2 = arith.constant 0 : i32
    return %c0_i32, %c0_i32_0, %c0_i32_1 : i32, i32, i32
  }
  func.func @transform_5(%arg0: i32, %arg1: i32) -> (i32, i32, i32) {
    %c0_i32 = arith.constant 0 : i32
    %c0_i32_0 = arith.constant 0 : i32
    return %arg0, %arg1, %c0_i32 : i32, i32, i32
  }
}

module attributes {stable_mosaic.version = 11 : i64} {
  func.func @_mlp_fused_kernel(%arg0: i32, %arg1: i32, %arg2: memref<1x16x16xbf16, #tpu.memory_space<vmem>>, %arg3: memref<16x16xbf16, #tpu.memory_space<vmem>>, %arg4: memref<16x16xbf16, #tpu.memory_space<vmem>>, %arg5: memref<16x16xbf16, #tpu.memory_space<vmem>>, %arg6: memref<1x16xf32, #tpu.memory_space<vmem>>, %arg7: memref<1x16x16xf32, #tpu.memory_space<vmem>>) attributes {dimension_semantics = [#tpu.dimension_semantics<parallel>, #tpu.dimension_semantics<parallel>], iteration_bounds = array<i64: 6, 1>, scalar_prefetch = 0 : i64, scratch_operands = 0 : i64, tpu.core_type = #tpu.core_type<tc>, window_params = [{transform_indices = @transform_0, window_bounds = array<i64: 1, 16, 16>}, {transform_indices = @transform_1, window_bounds = array<i64: 16, 16>}, {pipeline_mode = #tpu.pipeline_mode<synchronous>, transform_indices = @transform_2, window_bounds = array<i64: 16, 16>}, {pipeline_mode = #tpu.pipeline_mode<synchronous>, transform_indices = @transform_3, window_bounds = array<i64: 16, 16>}, {pipeline_mode = #tpu.pipeline_mode<synchronous>, transform_indices = @transform_4, window_bounds = array<i64: 1, 16>}, {transform_indices = @transform_5, window_bounds = array<i64: 1, 16, 16>}]} {
    %c0 = arith.constant 0 : index
    %c0_0 = arith.constant 0 : index
    %c0_1 = arith.constant 0 : index
    %0 = vector.load %arg2[%c0, %c0_0, %c0_1] : memref<1x16x16xbf16, #tpu.memory_space<vmem>>, vector<1x16x16xbf16>
    %1 = vector.shape_cast %0 : vector<1x16x16xbf16> to vector<16x16xbf16>
    %c0_2 = arith.constant 0 : index
    %c0_3 = arith.constant 0 : index
    %2 = vector.load %arg4[%c0_2, %c0_3] : memref<16x16xbf16, #tpu.memory_space<vmem>>, vector<16x16xbf16>
    %cst = arith.constant dense<0.000000e+00> : vector<16x16xf32>
    %3 = tpu.matmul %1, %2, %cst {dimension_numbers = #tpu.dot_dimension_numbers<[1], [0], [0], [1], [0, 0, 1, 1], [], []>} : vector<16x16xbf16>, vector<16x16xbf16>, vector<16x16xf32> -> vector<16x16xf32>
    %c0_4 = arith.constant 0 : index
    %c0_5 = arith.constant 0 : index
    %4 = vector.load %arg3[%c0_4, %c0_5] : memref<16x16xbf16, #tpu.memory_space<vmem>>, vector<16x16xbf16>
    %c0_6 = arith.constant 0 : index
    %c0_7 = arith.constant 0 : index
    %5 = vector.load %arg5[%c0_6, %c0_7] : memref<16x16xbf16, #tpu.memory_space<vmem>>, vector<16x16xbf16>
    %cst_8 = arith.constant dense<0.000000e+00> : vector<16x16xf32>
    %6 = tpu.matmul %4, %5, %cst_8 {dimension_numbers = #tpu.dot_dimension_numbers<[1], [0], [0], [1], [0, 0, 1, 1], [], []>} : vector<16x16xbf16>, vector<16x16xbf16>, vector<16x16xf32> -> vector<16x16xf32>
    %7 = arith.addf %3, %6 : vector<16x16xf32>
    %c0_9 = arith.constant 0 : index
    %c0_10 = arith.constant 0 : index
    %8 = vector.load %arg6[%c0_9, %c0_10] : memref<1x16xf32, #tpu.memory_space<vmem>>, vector<1x16xf32>
    %9 = vector.broadcast %8 : vector<1x16xf32> to vector<16x16xf32>
    %10 = arith.addf %7, %9 : vector<16x16xf32>
    %c0_11 = arith.constant 0 : index
    %c0_12 = arith.constant 0 : index
    %c0_13 = arith.constant 0 : index
    %11 = vector.load %arg7[%c0_11, %c0_12, %c0_13] : memref<1x16x16xf32, #tpu.memory_space<vmem>>, vector<1x16x16xf32>
    %12 = vector.shape_cast %11 : vector<1x16x16xf32> to vector<16x16xf32>
    %13 = vector.shape_cast %10 : vector<16x16xf32> to vector<1x16x16xf32>
    tpu.vector_store %arg7[%c0_11, %c0_12, %c0_13], %13 {strides = array<i32>} : memref<1x16x16xf32, #tpu.memory_space<vmem>>, vector<1x16x16xf32>,
    return
  }
  func.func @transform_0(%arg0: i32, %arg1: i32) -> (i32, i32, i32) {
    %c0_i32 = arith.constant 0 : i32
    %c0_i32_0 = arith.constant 0 : i32
    return %arg0, %arg1, %c0_i32 : i32, i32, i32
  }
  func.func @transform_1(%arg0: i32, %arg1: i32) -> (i32, i32) {
    %c0_i32 = arith.constant 0 : i32
    %c0_i32_0 = arith.constant 0 : i32
    return %arg1, %c0_i32 : i32, i32
  }
  func.func @transform_2(%arg0: i32, %arg1: i32) -> (i32, i32) {
    %c0_i32 = arith.constant 0 : i32
    %c0_i32_0 = arith.constant 0 : i32
    %c0_i32_1 = arith.constant 0 : i32
    return %c0_i32, %c0_i32_0 : i32, i32
  }
  func.func @transform_3(%arg0: i32, %arg1: i32) -> (i32, i32) {
    %c0_i32 = arith.constant 0 : i32
    %c0_i32_0 = arith.constant 0 : i32
    %c0_i32_1 = arith.constant 0 : i32
    return %c0_i32, %c0_i32_0 : i32, i32
  }
  func.func @transform_4(%arg0: i32, %arg1: i32) -> (i32, i32) {
    %c0_i32 = arith.constant 0 : i32
    %c0_i32_0 = arith.constant 0 : i32
    %c0_i32_1 = arith.constant 0 : i32
    return %c0_i32, %c0_i32_0 : i32, i32
  }
  func.func @transform_5(%arg0: i32, %arg1: i32) -> (i32, i32, i32) {
    %c0_i32 = arith.constant 0 : i32
    %c0_i32_0 = arith.constant 0 : i32
    return %arg0, %arg1, %c0_i32 : i32, i32, i32
  }
}

module attributes {stable_mosaic.version = 11 : i64} {
  func.func @_layer_fused_kernel(%arg0: i32, %arg1: memref<96x16xbf16, #tpu.memory_space<vmem>>, %arg2: memref<16x16xbf16, #tpu.memory_space<vmem>>, %arg3: memref<1x16xf32, #tpu.memory_space<vmem>>, %arg4: memref<16x4xbf16, #tpu.memory_space<vmem>>, %arg5: memref<96x4xf32, #tpu.memory_space<vmem>>, %arg6: memref<96x16xf32, #tpu.memory_space<vmem>>) attributes {dimension_semantics = [#tpu.dimension_semantics<parallel>], iteration_bounds = array<i64: 1>, scalar_prefetch = 0 : i64, scratch_operands = 0 : i64, tpu.core_type = #tpu.core_type<tc>, window_params = [{transform_indices = @transform_0, window_bounds = array<i64: 96, 16>}, {pipeline_mode = #tpu.pipeline_mode<synchronous>, transform_indices = @transform_1, window_bounds = array<i64: 16, 16>}, {pipeline_mode = #tpu.pipeline_mode<synchronous>, transform_indices = @transform_2, window_bounds = array<i64: 1, 16>}, {pipeline_mode = #tpu.pipeline_mode<synchronous>, transform_indices = @transform_3, window_bounds = array<i64: 16, 4>}, {transform_indices = @transform_4, window_bounds = array<i64: 96, 4>}, {transform_indices = @transform_5, window_bounds = array<i64: 96, 16>}]} {
    %c0 = arith.constant 0 : index
    %c0_0 = arith.constant 0 : index
    %0 = vector.load %arg1[%c0, %c0_0] : memref<96x16xbf16, #tpu.memory_space<vmem>>, vector<96x16xbf16>
    %1 = arith.extf %0 : vector<96x16xbf16> to vector<96x16xf32>
    %c0_1 = arith.constant 0 : index
    %c0_2 = arith.constant 0 : index
    %2 = vector.load %arg2[%c0_1, %c0_2] : memref<16x16xbf16, #tpu.memory_space<vmem>>, vector<16x16xbf16>
    %cst = arith.constant dense<0.000000e+00> : vector<96x16xf32>
    %3 = tpu.matmul %0, %2, %cst {dimension_numbers = #tpu.dot_dimension_numbers<[1], [0], [0], [1], [0, 0, 1, 1], [], []>} : vector<96x16xbf16>, vector<16x16xbf16>, vector<96x16xf32> -> vector<96x16xf32>
    %c0_3 = arith.constant 0 : index
    %c0_4 = arith.constant 0 : index
    %4 = vector.load %arg3[%c0_3, %c0_4] : memref<1x16xf32, #tpu.memory_space<vmem>>, vector<1x16xf32>
    %5 = vector.broadcast %4 : vector<1x16xf32> to vector<96x16xf32>
    %6 = arith.addf %3, %5 : vector<96x16xf32>
    %cst_5 = arith.constant 0.000000e+00 : f32
    %7 = vector.broadcast %cst_5 : f32 to vector<96x16xf32>
    %8 = arith.maximumf %6, %7 : vector<96x16xf32>
    %c0_6 = arith.constant 0 : index
    %c0_7 = arith.constant 0 : index
    %9 = vector.load %arg6[%c0_6, %c0_7] : memref<96x16xf32, #tpu.memory_space<vmem>>, vector<96x16xf32>
    tpu.vector_store %arg6[%c0_6, %c0_7], %8 {strides = array<i32>} : memref<96x16xf32, #tpu.memory_space<vmem>>, vector<96x16xf32>,
    %10 = arith.mulf %1, %1 : vector<96x16xf32>
    %cst_8 = arith.constant dense<0.000000e+00> : vector<96xf32>
    %11 = vector.multi_reduction <add>, %10, %cst_8 [1] : vector<96x16xf32> to vector<96xf32>
    %12 = vector.shape_cast %11 : vector<96xf32> to vector<96x1xf32>
    %13 = math.sqrt %12 : vector<96x1xf32>
    %cst_9 = arith.constant 9.99999993E-9 : f32
    %14 = vector.broadcast %cst_9 : f32 to vector<96x1xf32>
    %15 = arith.maximumf %13, %14 : vector<96x1xf32>
    %16 = tpu.reciprocal %15 {approx = true} : vector<96x1xf32> -> vector<96x1xf32>
    %c0_10 = arith.constant 0 : index
    %c0_11 = arith.constant 0 : index
    %17 = vector.load %arg4[%c0_10, %c0_11] : memref<16x4xbf16, #tpu.memory_space<vmem>>, vector<16x4xbf16>
    %cst_12 = arith.constant dense<0.000000e+00> : vector<96x4xf32>
    %18 = tpu.matmul %0, %17, %cst_12 {dimension_numbers = #tpu.dot_dimension_numbers<[1], [0], [0], [1], [0, 0, 1, 1], [], []>} : vector<96x16xbf16>, vector<16x4xbf16>, vector<96x4xf32> -> vector<96x4xf32>
    %19 = vector.broadcast %16 : vector<96x1xf32> to vector<96x4xf32>
    %20 = arith.mulf %18, %19 : vector<96x4xf32>
    %cst_13 = arith.constant 1.000000e+00 : f32
    %21 = vector.broadcast %cst_13 : f32 to vector<96x4xf32>
    %22 = arith.mulf %20, %21 : vector<96x4xf32>
    %23 = math.exp %22 : vector<96x4xf32>
    %cst_14 = arith.constant dense<0.000000e+00> : vector<96xf32>
    %24 = vector.multi_reduction <add>, %23, %cst_14 [1] : vector<96x4xf32> to vector<96xf32>
    %25 = vector.shape_cast %24 : vector<96xf32> to vector<96x1xf32>
    %26 = tpu.reciprocal %25 {approx = true} : vector<96x1xf32> -> vector<96x1xf32>
    %27 = vector.broadcast %26 : vector<96x1xf32> to vector<96x4xf32>
    %28 = arith.mulf %23, %27 : vector<96x4xf32>
    %c0_15 = arith.constant 0 : index
    %c0_16 = arith.constant 0 : index
    %29 = vector.load %arg5[%c0_15, %c0_16] : memref<96x4xf32, #tpu.memory_space<vmem>>, vector<96x4xf32>
    tpu.vector_store %arg5[%c0_15, %c0_16], %28 {strides = array<i32>} : memref<96x4xf32, #tpu.memory_space<vmem>>, vector<96x4xf32>,
    return
  }
  func.func @transform_0(%arg0: i32) -> (i32, i32) {
    %c0_i32 = arith.constant 0 : i32
    %c0_i32_0 = arith.constant 0 : i32
    return %arg0, %c0_i32 : i32, i32
  }
  func.func @transform_1(%arg0: i32) -> (i32, i32) {
    %c0_i32 = arith.constant 0 : i32
    %c0_i32_0 = arith.constant 0 : i32
    %c0_i32_1 = arith.constant 0 : i32
    return %c0_i32, %c0_i32_0 : i32, i32
  }
  func.func @transform_2(%arg0: i32) -> (i32, i32) {
    %c0_i32 = arith.constant 0 : i32
    %c0_i32_0 = arith.constant 0 : i32
    %c0_i32_1 = arith.constant 0 : i32
    return %c0_i32, %c0_i32_0 : i32, i32
  }
  func.func @transform_3(%arg0: i32) -> (i32, i32) {
    %c0_i32 = arith.constant 0 : i32
    %c0_i32_0 = arith.constant 0 : i32
    %c0_i32_1 = arith.constant 0 : i32
    return %c0_i32, %c0_i32_0 : i32, i32
  }
  func.func @transform_4(%arg0: i32) -> (i32, i32) {
    %c0_i32 = arith.constant 0 : i32
    %c0_i32_0 = arith.constant 0 : i32
    return %arg0, %c0_i32 : i32, i32
  }
  func.func @transform_5(%arg0: i32) -> (i32, i32) {
    %c0_i32 = arith.constant 0 : i32
    %c0_i32_0 = arith.constant 0 : i32
    return %arg0, %c0_i32 : i32, i32
  }
}

module attributes {stable_mosaic.version = 11 : i64} {
  func.func @_gru_kernel(%arg0: i32, %arg1: i32, %arg2: memref<1x8x16xbf16, #tpu.memory_space<vmem>>, %arg3: memref<3x16x16xbf16, #tpu.memory_space<vmem>>, %arg4: memref<3x16x16xbf16, #tpu.memory_space<vmem>>, %arg5: memref<3x1x16xf32, #tpu.memory_space<vmem>>, %arg6: memref<3x1x16xf32, #tpu.memory_space<vmem>>, %arg7: memref<1x8x16xbf16, #tpu.memory_space<vmem>>, %arg8: memref<4x16xf32, #tpu.memory_space<vmem>>) attributes {dimension_semantics = [#tpu.dimension_semantics<parallel>, #tpu.dimension_semantics<arbitrary>], iteration_bounds = array<i64: 2, 1>, scalar_prefetch = 0 : i64, scratch_operands = 1 : i64, tpu.core_type = #tpu.core_type<tc>, window_params = [{transform_indices = @transform_0, window_bounds = array<i64: 1, 8, 16>}, {pipeline_mode = #tpu.pipeline_mode<synchronous>, transform_indices = @transform_1, window_bounds = array<i64: 3, 16, 16>}, {pipeline_mode = #tpu.pipeline_mode<synchronous>, transform_indices = @transform_2, window_bounds = array<i64: 3, 16, 16>}, {pipeline_mode = #tpu.pipeline_mode<synchronous>, transform_indices = @transform_3, window_bounds = array<i64: 3, 1, 16>}, {pipeline_mode = #tpu.pipeline_mode<synchronous>, transform_indices = @transform_4, window_bounds = array<i64: 3, 1, 16>}, {transform_indices = @transform_5, window_bounds = array<i64: 1, 8, 16>}]} {
    %c0_i32 = arith.constant 0 : i32
    %0 = arith.cmpi eq, %arg1, %c0_i32 : i32
    %1 = arith.extui %0 : i1 to i32
    %c0_i32_0 = arith.constant 0 : i32
    %2 = arith.cmpi ne, %1, %c0_i32_0 : i32
    scf.if %2 {
      %cst_60 = arith.constant 0.000000e+00 : f32
      %114 = vector.broadcast %cst_60 : f32 to vector<4x16xf32>
      %c0_61 = arith.constant 0 : index
      %c0_62 = arith.constant 0 : index
      %115 = vector.load %arg8[%c0_61, %c0_62] : memref<4x16xf32, #tpu.memory_space<vmem>>, vector<4x16xf32>
      tpu.vector_store %arg8[%c0_61, %c0_62], %114 {strides = array<i32>} : memref<4x16xf32, #tpu.memory_space<vmem>>, vector<4x16xf32>,
    } else {
    }
    %c0 = arith.constant 0 : index
    %c0_1 = arith.constant 0 : index
    %c0_2 = arith.constant 0 : index
    %3 = vector.load %arg2[%c0, %c0_1, %c0_2] : memref<1x8x16xbf16, #tpu.memory_space<vmem>>, vector<1x8x16xbf16>
    %4 = vector.shape_cast %3 : vector<1x8x16xbf16> to vector<8x16xbf16>
    %c0_3 = arith.constant 0 : index
    %c0_4 = arith.constant 0 : index
    %c0_5 = arith.constant 0 : index
    %5 = vector.load %arg3[%c0_3, %c0_4, %c0_5] : memref<3x16x16xbf16, #tpu.memory_space<vmem>>, vector<1x16x16xbf16>
    %6 = vector.shape_cast %5 : vector<1x16x16xbf16> to vector<16x16xbf16>
    %cst = arith.constant dense<0.000000e+00> : vector<8x16xf32>
    %7 = tpu.matmul %4, %6, %cst {dimension_numbers = #tpu.dot_dimension_numbers<[1], [0], [0], [1], [0, 0, 1, 1], [], []>} : vector<8x16xbf16>, vector<16x16xbf16>, vector<8x16xf32> -> vector<8x16xf32>
    %c0_6 = arith.constant 0 : index
    %c0_7 = arith.constant 0 : index
    %c0_8 = arith.constant 0 : index
    %8 = vector.load %arg5[%c0_6, %c0_7, %c0_8] : memref<3x1x16xf32, #tpu.memory_space<vmem>>, vector<1x1x16xf32>
    %9 = vector.shape_cast %8 : vector<1x1x16xf32> to vector<1x16xf32>
    %10 = vector.broadcast %9 : vector<1x16xf32> to vector<8x16xf32>
    %11 = arith.addf %7, %10 : vector<8x16xf32>
    %c1 = arith.constant 1 : index
    %c0_9 = arith.constant 0 : index
    %c0_10 = arith.constant 0 : index
    %12 = vector.load %arg3[%c1, %c0_9, %c0_10] : memref<3x16x16xbf16, #tpu.memory_space<vmem>>, vector<1x16x16xbf16>
    %13 = vector.shape_cast %12 : vector<1x16x16xbf16> to vector<16x16xbf16>
    %cst_11 = arith.constant dense<0.000000e+00> : vector<8x16xf32>
    %14 = tpu.matmul %4, %13, %cst_11 {dimension_numbers = #tpu.dot_dimension_numbers<[1], [0], [0], [1], [0, 0, 1, 1], [], []>} : vector<8x16xbf16>, vector<16x16xbf16>, vector<8x16xf32> -> vector<8x16xf32>
    %c1_12 = arith.constant 1 : index
    %c0_13 = arith.constant 0 : index
    %c0_14 = arith.constant 0 : index
    %15 = vector.load %arg5[%c1_12, %c0_13, %c0_14] : memref<3x1x16xf32, #tpu.memory_space<vmem>>, vector<1x1x16xf32>
    %16 = vector.shape_cast %15 : vector<1x1x16xf32> to vector<1x16xf32>
    %17 = vector.broadcast %16 : vector<1x16xf32> to vector<8x16xf32>
    %18 = arith.addf %14, %17 : vector<8x16xf32>
    %c2 = arith.constant 2 : index
    %c0_15 = arith.constant 0 : index
    %c0_16 = arith.constant 0 : index
    %19 = vector.load %arg3[%c2, %c0_15, %c0_16] : memref<3x16x16xbf16, #tpu.memory_space<vmem>>, vector<1x16x16xbf16>
    %20 = vector.shape_cast %19 : vector<1x16x16xbf16> to vector<16x16xbf16>
    %cst_17 = arith.constant dense<0.000000e+00> : vector<8x16xf32>
    %21 = tpu.matmul %4, %20, %cst_17 {dimension_numbers = #tpu.dot_dimension_numbers<[1], [0], [0], [1], [0, 0, 1, 1], [], []>} : vector<8x16xbf16>, vector<16x16xbf16>, vector<8x16xf32> -> vector<8x16xf32>
    %c2_18 = arith.constant 2 : index
    %c0_19 = arith.constant 0 : index
    %c0_20 = arith.constant 0 : index
    %22 = vector.load %arg5[%c2_18, %c0_19, %c0_20] : memref<3x1x16xf32, #tpu.memory_space<vmem>>, vector<1x1x16xf32>
    %23 = vector.shape_cast %22 : vector<1x1x16xf32> to vector<1x16xf32>
    %24 = vector.broadcast %23 : vector<1x16xf32> to vector<8x16xf32>
    %25 = arith.addf %21, %24 : vector<8x16xf32>
    %c0_21 = arith.constant 0 : index
    %c0_22 = arith.constant 0 : index
    %c0_23 = arith.constant 0 : index
    %26 = vector.load %arg4[%c0_21, %c0_22, %c0_23] : memref<3x16x16xbf16, #tpu.memory_space<vmem>>, vector<1x16x16xbf16>
    %27 = vector.shape_cast %26 : vector<1x16x16xbf16> to vector<16x16xbf16>
    %c1_24 = arith.constant 1 : index
    %c0_25 = arith.constant 0 : index
    %c0_26 = arith.constant 0 : index
    %28 = vector.load %arg4[%c1_24, %c0_25, %c0_26] : memref<3x16x16xbf16, #tpu.memory_space<vmem>>, vector<1x16x16xbf16>
    %29 = vector.shape_cast %28 : vector<1x16x16xbf16> to vector<16x16xbf16>
    %c2_27 = arith.constant 2 : index
    %c0_28 = arith.constant 0 : index
    %c0_29 = arith.constant 0 : index
    %30 = vector.load %arg4[%c2_27, %c0_28, %c0_29] : memref<3x16x16xbf16, #tpu.memory_space<vmem>>, vector<1x16x16xbf16>
    %31 = vector.shape_cast %30 : vector<1x16x16xbf16> to vector<16x16xbf16>
    %c0_30 = arith.constant 0 : index
    %c0_31 = arith.constant 0 : index
    %c0_32 = arith.constant 0 : index
    %32 = vector.load %arg6[%c0_30, %c0_31, %c0_32] : memref<3x1x16xf32, #tpu.memory_space<vmem>>, vector<1x1x16xf32>
    %33 = vector.shape_cast %32 : vector<1x1x16xf32> to vector<1x16xf32>
    %c1_33 = arith.constant 1 : index
    %c0_34 = arith.constant 0 : index
    %c0_35 = arith.constant 0 : index
    %34 = vector.load %arg6[%c1_33, %c0_34, %c0_35] : memref<3x1x16xf32, #tpu.memory_space<vmem>>, vector<1x1x16xf32>
    %35 = vector.shape_cast %34 : vector<1x1x16xf32> to vector<1x16xf32>
    %c2_36 = arith.constant 2 : index
    %c0_37 = arith.constant 0 : index
    %c0_38 = arith.constant 0 : index
    %36 = vector.load %arg6[%c2_36, %c0_37, %c0_38] : memref<3x1x16xf32, #tpu.memory_space<vmem>>, vector<1x1x16xf32>
    %37 = vector.shape_cast %36 : vector<1x1x16xf32> to vector<1x16xf32>
    %c0_39 = arith.constant 0 : index
    %c0_40 = arith.constant 0 : index
    %38 = vector.load %arg8[%c0_39, %c0_40] : memref<4x16xf32, #tpu.memory_space<vmem>>, vector<4x16xf32>
    %39 = arith.truncf %38 : vector<4x16xf32> to vector<4x16xbf16>
    %cst_41 = arith.constant dense<0.000000e+00> : vector<4x16xf32>
    %40 = tpu.matmul %39, %27, %cst_41 {dimension_numbers = #tpu.dot_dimension_numbers<[1], [0], [0], [1], [0, 0, 1, 1], [], []>} : vector<4x16xbf16>, vector<16x16xbf16>, vector<4x16xf32> -> vector<4x16xf32>
    %41 = vector.broadcast %33 : vector<1x16xf32> to vector<4x16xf32>
    %42 = arith.addf %40, %41 : vector<4x16xf32>
    %cst_42 = arith.constant dense<0.000000e+00> : vector<4x16xf32>
    %43 = tpu.matmul %39, %29, %cst_42 {dimension_numbers = #tpu.dot_dimension_numbers<[1], [0], [0], [1], [0, 0, 1, 1], [], []>} : vector<4x16xbf16>, vector<16x16xbf16>, vector<4x16xf32> -> vector<4x16xf32>
    %44 = vector.broadcast %35 : vector<1x16xf32> to vector<4x16xf32>
    %45 = arith.addf %43, %44 : vector<4x16xf32>
    %cst_43 = arith.constant dense<0.000000e+00> : vector<4x16xf32>
    %46 = tpu.matmul %39, %31, %cst_43 {dimension_numbers = #tpu.dot_dimension_numbers<[1], [0], [0], [1], [0, 0, 1, 1], [], []>} : vector<4x16xbf16>, vector<16x16xbf16>, vector<4x16xf32> -> vector<4x16xf32>
    %47 = vector.broadcast %37 : vector<1x16xf32> to vector<4x16xf32>
    %48 = arith.addf %46, %47 : vector<4x16xf32>
    %49 = vector.extract_strided_slice %11 {offsets = [0, 0], sizes = [4, 16], strides = [1, 1]} : vector<8x16xf32> to vector<4x16xf32>
    %50 = arith.addf %49, %42 : vector<4x16xf32>
    %51 = arith.negf %50 : vector<4x16xf32>
    %52 = math.exp %51 : vector<4x16xf32>
    %cst_44 = arith.constant 1.000000e+00 : f32
    %53 = vector.broadcast %cst_44 : f32 to vector<4x16xf32>
    %54 = arith.addf %53, %52 : vector<4x16xf32>
    %55 = arith.divf %53, %54 : vector<4x16xf32>
    %56 = vector.extract_strided_slice %18 {offsets = [0, 0], sizes = [4, 16], strides = [1, 1]} : vector<8x16xf32> to vector<4x16xf32>
    %57 = arith.addf %56, %45 : vector<4x16xf32>
    %58 = arith.negf %57 : vector<4x16xf32>
    %59 = math.exp %58 : vector<4x16xf32>
    %cst_45 = arith.constant 1.000000e+00 : f32
    %60 = vector.broadcast %cst_45 : f32 to vector<4x16xf32>
    %61 = arith.addf %60, %59 : vector<4x16xf32>
    %62 = arith.divf %60, %61 : vector<4x16xf32>
    %63 = vector.extract_strided_slice %25 {offsets = [0, 0], sizes = [4, 16], strides = [1, 1]} : vector<8x16xf32> to vector<4x16xf32>
    %64 = arith.mulf %55, %48 : vector<4x16xf32>
    %65 = arith.addf %63, %64 : vector<4x16xf32>
    %66 = math.tanh %65 : vector<4x16xf32>
    %cst_46 = arith.constant 1.000000e+00 : f32
    %67 = vector.broadcast %cst_46 : f32 to vector<4x16xf32>
    %68 = arith.subf %67, %62 : vector<4x16xf32>
    %69 = arith.mulf %68, %66 : vector<4x16xf32>
    %70 = arith.mulf %62, %38 : vector<4x16xf32>
    %71 = arith.addf %69, %70 : vector<4x16xf32>
    %72 = arith.truncf %71 : vector<4x16xf32> to vector<4x16xbf16>
    %c0_47 = arith.constant 0 : index
    %c0_48 = arith.constant 0 : index
    %c0_49 = arith.constant 0 : index
    %73 = vector.load %arg7[%c0_47, %c0_48, %c0_49] : memref<1x8x16xbf16, #tpu.memory_space<vmem>>, vector<1x4x16xbf16>
    %74 = vector.shape_cast %73 : vector<1x4x16xbf16> to vector<4x16xbf16>
    %75 = vector.shape_cast %72 : vector<4x16xbf16> to vector<1x4x16xbf16>
    tpu.vector_store %arg7[%c0_47, %c0_48, %c0_49], %75 {strides = array<i32>} : memref<1x8x16xbf16, #tpu.memory_space<vmem>>, vector<1x4x16xbf16>,
    %76 = arith.truncf %71 : vector<4x16xf32> to vector<4x16xbf16>
    %cst_50 = arith.constant dense<0.000000e+00> : vector<4x16xf32>
    %77 = tpu.matmul %76, %27, %cst_50 {dimension_numbers = #tpu.dot_dimension_numbers<[1], [0], [0], [1], [0, 0, 1, 1], [], []>} : vector<4x16xbf16>, vector<16x16xbf16>, vector<4x16xf32> -> vector<4x16xf32>
    %78 = vector.broadcast %33 : vector<1x16xf32> to vector<4x16xf32>
    %79 = arith.addf %77, %78 : vector<4x16xf32>
    %cst_51 = arith.constant dense<0.000000e+00> : vector<4x16xf32>
    %80 = tpu.matmul %76, %29, %cst_51 {dimension_numbers = #tpu.dot_dimension_numbers<[1], [0], [0], [1], [0, 0, 1, 1], [], []>} : vector<4x16xbf16>, vector<16x16xbf16>, vector<4x16xf32> -> vector<4x16xf32>
    %81 = vector.broadcast %35 : vector<1x16xf32> to vector<4x16xf32>
    %82 = arith.addf %80, %81 : vector<4x16xf32>
    %cst_52 = arith.constant dense<0.000000e+00> : vector<4x16xf32>
    %83 = tpu.matmul %76, %31, %cst_52 {dimension_numbers = #tpu.dot_dimension_numbers<[1], [0], [0], [1], [0, 0, 1, 1], [], []>} : vector<4x16xbf16>, vector<16x16xbf16>, vector<4x16xf32> -> vector<4x16xf32>
    %84 = vector.broadcast %37 : vector<1x16xf32> to vector<4x16xf32>
    %85 = arith.addf %83, %84 : vector<4x16xf32>
    %86 = vector.extract_strided_slice %11 {offsets = [4, 0], sizes = [4, 16], strides = [1, 1]} : vector<8x16xf32> to vector<4x16xf32>
    %87 = arith.addf %86, %79 : vector<4x16xf32>
    %88 = arith.negf %87 : vector<4x16xf32>
    %89 = math.exp %88 : vector<4x16xf32>
    %cst_53 = arith.constant 1.000000e+00 : f32
    %90 = vector.broadcast %cst_53 : f32 to vector<4x16xf32>
    %91 = arith.addf %90, %89 : vector<4x16xf32>
    %92 = arith.divf %90, %91 : vector<4x16xf32>
    %93 = vector.extract_strided_slice %18 {offsets = [4, 0], sizes = [4, 16], strides = [1, 1]} : vector<8x16xf32> to vector<4x16xf32>
    %94 = arith.addf %93, %82 : vector<4x16xf32>
    %95 = arith.negf %94 : vector<4x16xf32>
    %96 = math.exp %95 : vector<4x16xf32>
    %cst_54 = arith.constant 1.000000e+00 : f32
    %97 = vector.broadcast %cst_54 : f32 to vector<4x16xf32>
    %98 = arith.addf %97, %96 : vector<4x16xf32>
    %99 = arith.divf %97, %98 : vector<4x16xf32>
    %100 = vector.extract_strided_slice %25 {offsets = [4, 0], sizes = [4, 16], strides = [1, 1]} : vector<8x16xf32> to vector<4x16xf32>
    %101 = arith.mulf %92, %85 : vector<4x16xf32>
    %102 = arith.addf %100, %101 : vector<4x16xf32>
    %103 = math.tanh %102 : vector<4x16xf32>
    %cst_55 = arith.constant 1.000000e+00 : f32
    %104 = vector.broadcast %cst_55 : f32 to vector<4x16xf32>
    %105 = arith.subf %104, %99 : vector<4x16xf32>
    %106 = arith.mulf %105, %103 : vector<4x16xf32>
    %107 = arith.mulf %99, %71 : vector<4x16xf32>
    %108 = arith.addf %106, %107 : vector<4x16xf32>
    %109 = arith.truncf %108 : vector<4x16xf32> to vector<4x16xbf16>
    %c0_56 = arith.constant 0 : index
    %c4 = arith.constant 4 : index
    %c0_57 = arith.constant 0 : index
    %110 = vector.load %arg7[%c0_56, %c4, %c0_57] : memref<1x8x16xbf16, #tpu.memory_space<vmem>>, vector<1x4x16xbf16>
    %111 = vector.shape_cast %110 : vector<1x4x16xbf16> to vector<4x16xbf16>
    %112 = vector.shape_cast %109 : vector<4x16xbf16> to vector<1x4x16xbf16>
    tpu.vector_store %arg7[%c0_56, %c4, %c0_57], %112 {strides = array<i32>} : memref<1x8x16xbf16, #tpu.memory_space<vmem>>, vector<1x4x16xbf16>,
    %c0_58 = arith.constant 0 : index
    %c0_59 = arith.constant 0 : index
    %113 = vector.load %arg8[%c0_58, %c0_59] : memref<4x16xf32, #tpu.memory_space<vmem>>, vector<4x16xf32>
    tpu.vector_store %arg8[%c0_58, %c0_59], %108 {strides = array<i32>} : memref<4x16xf32, #tpu.memory_space<vmem>>, vector<4x16xf32>,
    return
  }
  func.func @transform_0(%arg0: i32, %arg1: i32) -> (i32, i32, i32) {
    %c0_i32 = arith.constant 0 : i32
    %c0_i32_0 = arith.constant 0 : i32
    return %arg0, %arg1, %c0_i32 : i32, i32, i32
  }
  func.func @transform_1(%arg0: i32, %arg1: i32) -> (i32, i32, i32) {
    %c0_i32 = arith.constant 0 : i32
    %c0_i32_0 = arith.constant 0 : i32
    %c0_i32_1 = arith.constant 0 : i32
    %c0_i32_2 = arith.constant 0 : i32
    return %c0_i32, %c0_i32_0, %c0_i32_1 : i32, i32, i32
  }
  func.func @transform_2(%arg0: i32, %arg1: i32) -> (i32, i32, i32) {
    %c0_i32 = arith.constant 0 : i32
    %c0_i32_0 = arith.constant 0 : i32
    %c0_i32_1 = arith.constant 0 : i32
    %c0_i32_2 = arith.constant 0 : i32
    return %c0_i32, %c0_i32_0, %c0_i32_1 : i32, i32, i32
  }
  func.func @transform_3(%arg0: i32, %arg1: i32) -> (i32, i32, i32) {
    %c0_i32 = arith.constant 0 : i32
    %c0_i32_0 = arith.constant 0 : i32
    %c0_i32_1 = arith.constant 0 : i32
    %c0_i32_2 = arith.constant 0 : i32
    return %c0_i32, %c0_i32_0, %c0_i32_1 : i32, i32, i32
  }
  func.func @transform_4(%arg0: i32, %arg1: i32) -> (i32, i32, i32) {
    %c0_i32 = arith.constant 0 : i32
    %c0_i32_0 = arith.constant 0 : i32
    %c0_i32_1 = arith.constant 0 : i32
    %c0_i32_2 = arith.constant 0 : i32
    return %c0_i32, %c0_i32_0, %c0_i32_1 : i32, i32, i32
  }
  func.func @transform_5(%arg0: i32, %arg1: i32) -> (i32, i32, i32) {
    %c0_i32 = arith.constant 0 : i32
    %c0_i32_0 = arith.constant 0 : i32
    return %arg0, %arg1, %c0_i32 : i32, i32, i32
  }
}

module attributes {stable_mosaic.version = 11 : i64} {
  func.func @_mlp_fused_kernel(%arg0: i32, %arg1: i32, %arg2: memref<1x16x16xbf16, #tpu.memory_space<vmem>>, %arg3: memref<16x16xbf16, #tpu.memory_space<vmem>>, %arg4: memref<16x16xbf16, #tpu.memory_space<vmem>>, %arg5: memref<16x16xbf16, #tpu.memory_space<vmem>>, %arg6: memref<1x16xf32, #tpu.memory_space<vmem>>, %arg7: memref<1x16x16xf32, #tpu.memory_space<vmem>>) attributes {dimension_semantics = [#tpu.dimension_semantics<parallel>, #tpu.dimension_semantics<parallel>], iteration_bounds = array<i64: 4, 1>, scalar_prefetch = 0 : i64, scratch_operands = 0 : i64, tpu.core_type = #tpu.core_type<tc>, window_params = [{transform_indices = @transform_0, window_bounds = array<i64: 1, 16, 16>}, {transform_indices = @transform_1, window_bounds = array<i64: 16, 16>}, {pipeline_mode = #tpu.pipeline_mode<synchronous>, transform_indices = @transform_2, window_bounds = array<i64: 16, 16>}, {pipeline_mode = #tpu.pipeline_mode<synchronous>, transform_indices = @transform_3, window_bounds = array<i64: 16, 16>}, {pipeline_mode = #tpu.pipeline_mode<synchronous>, transform_indices = @transform_4, window_bounds = array<i64: 1, 16>}, {transform_indices = @transform_5, window_bounds = array<i64: 1, 16, 16>}]} {
    %c0 = arith.constant 0 : index
    %c0_0 = arith.constant 0 : index
    %c0_1 = arith.constant 0 : index
    %0 = vector.load %arg2[%c0, %c0_0, %c0_1] : memref<1x16x16xbf16, #tpu.memory_space<vmem>>, vector<1x16x16xbf16>
    %1 = vector.shape_cast %0 : vector<1x16x16xbf16> to vector<16x16xbf16>
    %c0_2 = arith.constant 0 : index
    %c0_3 = arith.constant 0 : index
    %2 = vector.load %arg4[%c0_2, %c0_3] : memref<16x16xbf16, #tpu.memory_space<vmem>>, vector<16x16xbf16>
    %cst = arith.constant dense<0.000000e+00> : vector<16x16xf32>
    %3 = tpu.matmul %1, %2, %cst {dimension_numbers = #tpu.dot_dimension_numbers<[1], [0], [0], [1], [0, 0, 1, 1], [], []>} : vector<16x16xbf16>, vector<16x16xbf16>, vector<16x16xf32> -> vector<16x16xf32>
    %c0_4 = arith.constant 0 : index
    %c0_5 = arith.constant 0 : index
    %4 = vector.load %arg3[%c0_4, %c0_5] : memref<16x16xbf16, #tpu.memory_space<vmem>>, vector<16x16xbf16>
    %c0_6 = arith.constant 0 : index
    %c0_7 = arith.constant 0 : index
    %5 = vector.load %arg5[%c0_6, %c0_7] : memref<16x16xbf16, #tpu.memory_space<vmem>>, vector<16x16xbf16>
    %cst_8 = arith.constant dense<0.000000e+00> : vector<16x16xf32>
    %6 = tpu.matmul %4, %5, %cst_8 {dimension_numbers = #tpu.dot_dimension_numbers<[1], [0], [0], [1], [0, 0, 1, 1], [], []>} : vector<16x16xbf16>, vector<16x16xbf16>, vector<16x16xf32> -> vector<16x16xf32>
    %7 = arith.addf %3, %6 : vector<16x16xf32>
    %c0_9 = arith.constant 0 : index
    %c0_10 = arith.constant 0 : index
    %8 = vector.load %arg6[%c0_9, %c0_10] : memref<1x16xf32, #tpu.memory_space<vmem>>, vector<1x16xf32>
    %9 = vector.broadcast %8 : vector<1x16xf32> to vector<16x16xf32>
    %10 = arith.addf %7, %9 : vector<16x16xf32>
    %c0_11 = arith.constant 0 : index
    %c0_12 = arith.constant 0 : index
    %c0_13 = arith.constant 0 : index
    %11 = vector.load %arg7[%c0_11, %c0_12, %c0_13] : memref<1x16x16xf32, #tpu.memory_space<vmem>>, vector<1x16x16xf32>
    %12 = vector.shape_cast %11 : vector<1x16x16xf32> to vector<16x16xf32>
    %13 = vector.shape_cast %10 : vector<16x16xf32> to vector<1x16x16xf32>
    tpu.vector_store %arg7[%c0_11, %c0_12, %c0_13], %13 {strides = array<i32>} : memref<1x16x16xf32, #tpu.memory_space<vmem>>, vector<1x16x16xf32>,
    return
  }
  func.func @transform_0(%arg0: i32, %arg1: i32) -> (i32, i32, i32) {
    %c0_i32 = arith.constant 0 : i32
    %c0_i32_0 = arith.constant 0 : i32
    return %arg0, %arg1, %c0_i32 : i32, i32, i32
  }
  func.func @transform_1(%arg0: i32, %arg1: i32) -> (i32, i32) {
    %c0_i32 = arith.constant 0 : i32
    %c0_i32_0 = arith.constant 0 : i32
    return %arg1, %c0_i32 : i32, i32
  }
  func.func @transform_2(%arg0: i32, %arg1: i32) -> (i32, i32) {
    %c0_i32 = arith.constant 0 : i32
    %c0_i32_0 = arith.constant 0 : i32
    %c0_i32_1 = arith.constant 0 : i32
    return %c0_i32, %c0_i32_0 : i32, i32
  }
  func.func @transform_3(%arg0: i32, %arg1: i32) -> (i32, i32) {
    %c0_i32 = arith.constant 0 : i32
    %c0_i32_0 = arith.constant 0 : i32
    %c0_i32_1 = arith.constant 0 : i32
    return %c0_i32, %c0_i32_0 : i32, i32
  }
  func.func @transform_4(%arg0: i32, %arg1: i32) -> (i32, i32) {
    %c0_i32 = arith.constant 0 : i32
    %c0_i32_0 = arith.constant 0 : i32
    %c0_i32_1 = arith.constant 0 : i32
    return %c0_i32, %c0_i32_0 : i32, i32
  }
  func.func @transform_5(%arg0: i32, %arg1: i32) -> (i32, i32, i32) {
    %c0_i32 = arith.constant 0 : i32
    %c0_i32_0 = arith.constant 0 : i32
    return %arg0, %arg1, %c0_i32 : i32, i32, i32
  }
}

module attributes {stable_mosaic.version = 11 : i64} {
  func.func @_layer_fused_kernel(%arg0: i32, %arg1: memref<64x16xbf16, #tpu.memory_space<vmem>>, %arg2: memref<16x16xbf16, #tpu.memory_space<vmem>>, %arg3: memref<1x16xf32, #tpu.memory_space<vmem>>, %arg4: memref<16x2xbf16, #tpu.memory_space<vmem>>, %arg5: memref<64x2xf32, #tpu.memory_space<vmem>>, %arg6: memref<64x16xf32, #tpu.memory_space<vmem>>) attributes {dimension_semantics = [#tpu.dimension_semantics<parallel>], iteration_bounds = array<i64: 1>, scalar_prefetch = 0 : i64, scratch_operands = 0 : i64, tpu.core_type = #tpu.core_type<tc>, window_params = [{transform_indices = @transform_0, window_bounds = array<i64: 64, 16>}, {pipeline_mode = #tpu.pipeline_mode<synchronous>, transform_indices = @transform_1, window_bounds = array<i64: 16, 16>}, {pipeline_mode = #tpu.pipeline_mode<synchronous>, transform_indices = @transform_2, window_bounds = array<i64: 1, 16>}, {pipeline_mode = #tpu.pipeline_mode<synchronous>, transform_indices = @transform_3, window_bounds = array<i64: 16, 2>}, {transform_indices = @transform_4, window_bounds = array<i64: 64, 2>}, {transform_indices = @transform_5, window_bounds = array<i64: 64, 16>}]} {
    %c0 = arith.constant 0 : index
    %c0_0 = arith.constant 0 : index
    %0 = vector.load %arg1[%c0, %c0_0] : memref<64x16xbf16, #tpu.memory_space<vmem>>, vector<64x16xbf16>
    %1 = arith.extf %0 : vector<64x16xbf16> to vector<64x16xf32>
    %c0_1 = arith.constant 0 : index
    %c0_2 = arith.constant 0 : index
    %2 = vector.load %arg2[%c0_1, %c0_2] : memref<16x16xbf16, #tpu.memory_space<vmem>>, vector<16x16xbf16>
    %cst = arith.constant dense<0.000000e+00> : vector<64x16xf32>
    %3 = tpu.matmul %0, %2, %cst {dimension_numbers = #tpu.dot_dimension_numbers<[1], [0], [0], [1], [0, 0, 1, 1], [], []>} : vector<64x16xbf16>, vector<16x16xbf16>, vector<64x16xf32> -> vector<64x16xf32>
    %c0_3 = arith.constant 0 : index
    %c0_4 = arith.constant 0 : index
    %4 = vector.load %arg3[%c0_3, %c0_4] : memref<1x16xf32, #tpu.memory_space<vmem>>, vector<1x16xf32>
    %5 = vector.broadcast %4 : vector<1x16xf32> to vector<64x16xf32>
    %6 = arith.addf %3, %5 : vector<64x16xf32>
    %cst_5 = arith.constant 0.000000e+00 : f32
    %7 = vector.broadcast %cst_5 : f32 to vector<64x16xf32>
    %8 = arith.maximumf %6, %7 : vector<64x16xf32>
    %c0_6 = arith.constant 0 : index
    %c0_7 = arith.constant 0 : index
    %9 = vector.load %arg6[%c0_6, %c0_7] : memref<64x16xf32, #tpu.memory_space<vmem>>, vector<64x16xf32>
    tpu.vector_store %arg6[%c0_6, %c0_7], %8 {strides = array<i32>} : memref<64x16xf32, #tpu.memory_space<vmem>>, vector<64x16xf32>,
    %10 = arith.mulf %1, %1 : vector<64x16xf32>
    %cst_8 = arith.constant dense<0.000000e+00> : vector<64xf32>
    %11 = vector.multi_reduction <add>, %10, %cst_8 [1] : vector<64x16xf32> to vector<64xf32>
    %12 = vector.shape_cast %11 : vector<64xf32> to vector<64x1xf32>
    %13 = math.sqrt %12 : vector<64x1xf32>
    %cst_9 = arith.constant 9.99999993E-9 : f32
    %14 = vector.broadcast %cst_9 : f32 to vector<64x1xf32>
    %15 = arith.maximumf %13, %14 : vector<64x1xf32>
    %16 = tpu.reciprocal %15 {approx = true} : vector<64x1xf32> -> vector<64x1xf32>
    %c0_10 = arith.constant 0 : index
    %c0_11 = arith.constant 0 : index
    %17 = vector.load %arg4[%c0_10, %c0_11] : memref<16x2xbf16, #tpu.memory_space<vmem>>, vector<16x2xbf16>
    %cst_12 = arith.constant dense<0.000000e+00> : vector<64x2xf32>
    %18 = tpu.matmul %0, %17, %cst_12 {dimension_numbers = #tpu.dot_dimension_numbers<[1], [0], [0], [1], [0, 0, 1, 1], [], []>} : vector<64x16xbf16>, vector<16x2xbf16>, vector<64x2xf32> -> vector<64x2xf32>
    %19 = vector.broadcast %16 : vector<64x1xf32> to vector<64x2xf32>
    %20 = arith.mulf %18, %19 : vector<64x2xf32>
    %cst_13 = arith.constant 1.000000e+00 : f32
    %21 = vector.broadcast %cst_13 : f32 to vector<64x2xf32>
    %22 = arith.mulf %20, %21 : vector<64x2xf32>
    %23 = math.exp %22 : vector<64x2xf32>
    %cst_14 = arith.constant dense<0.000000e+00> : vector<64xf32>
    %24 = vector.multi_reduction <add>, %23, %cst_14 [1] : vector<64x2xf32> to vector<64xf32>
    %25 = vector.shape_cast %24 : vector<64xf32> to vector<64x1xf32>
    %26 = tpu.reciprocal %25 {approx = true} : vector<64x1xf32> -> vector<64x1xf32>
    %27 = vector.broadcast %26 : vector<64x1xf32> to vector<64x2xf32>
    %28 = arith.mulf %23, %27 : vector<64x2xf32>
    %c0_15 = arith.constant 0 : index
    %c0_16 = arith.constant 0 : index
    %29 = vector.load %arg5[%c0_15, %c0_16] : memref<64x2xf32, #tpu.memory_space<vmem>>, vector<64x2xf32>
    tpu.vector_store %arg5[%c0_15, %c0_16], %28 {strides = array<i32>} : memref<64x2xf32, #tpu.memory_space<vmem>>, vector<64x2xf32>,
    return
  }
  func.func @transform_0(%arg0: i32) -> (i32, i32) {
    %c0_i32 = arith.constant 0 : i32
    %c0_i32_0 = arith.constant 0 : i32
    return %arg0, %c0_i32 : i32, i32
  }
  func.func @transform_1(%arg0: i32) -> (i32, i32) {
    %c0_i32 = arith.constant 0 : i32
    %c0_i32_0 = arith.constant 0 : i32
    %c0_i32_1 = arith.constant 0 : i32
    return %c0_i32, %c0_i32_0 : i32, i32
  }
  func.func @transform_2(%arg0: i32) -> (i32, i32) {
    %c0_i32 = arith.constant 0 : i32
    %c0_i32_0 = arith.constant 0 : i32
    %c0_i32_1 = arith.constant 0 : i32
    return %c0_i32, %c0_i32_0 : i32, i32
  }
  func.func @transform_3(%arg0: i32) -> (i32, i32) {
    %c0_i32 = arith.constant 0 : i32
    %c0_i32_0 = arith.constant 0 : i32
    %c0_i32_1 = arith.constant 0 : i32
    return %c0_i32, %c0_i32_0 : i32, i32
  }
  func.func @transform_4(%arg0: i32) -> (i32, i32) {
    %c0_i32 = arith.constant 0 : i32
    %c0_i32_0 = arith.constant 0 : i32
    return %arg0, %c0_i32 : i32, i32
  }
  func.func @transform_5(%arg0: i32) -> (i32, i32) {
    %c0_i32 = arith.constant 0 : i32
    %c0_i32_0 = arith.constant 0 : i32
    return %arg0, %c0_i32 : i32, i32
  }
}

module attributes {stable_mosaic.version = 11 : i64} {
  func.func @_cos_sum_kernel(%arg0: i32, %arg1: memref<32x16xbf16, #tpu.memory_space<vmem>>, %arg2: memref<1x16xf32, #tpu.memory_space<vmem>>, %arg3: memref<32x1xf32, #tpu.memory_space<vmem>>) attributes {dimension_semantics = [#tpu.dimension_semantics<parallel>], iteration_bounds = array<i64: 1>, scalar_prefetch = 0 : i64, scratch_operands = 0 : i64, tpu.core_type = #tpu.core_type<tc>, window_params = [{transform_indices = @transform_0, window_bounds = array<i64: 32, 16>}, {pipeline_mode = #tpu.pipeline_mode<synchronous>, transform_indices = @transform_1, window_bounds = array<i64: 1, 16>}, {transform_indices = @transform_2, window_bounds = array<i64: 32, 1>}]} {
    %c0 = arith.constant 0 : index
    %c0_0 = arith.constant 0 : index
    %0 = vector.load %arg1[%c0, %c0_0] : memref<32x16xbf16, #tpu.memory_space<vmem>>, vector<32x16xbf16>
    %1 = arith.extf %0 : vector<32x16xbf16> to vector<32x16xf32>
    %c0_1 = arith.constant 0 : index
    %c0_2 = arith.constant 0 : index
    %2 = vector.load %arg2[%c0_1, %c0_2] : memref<1x16xf32, #tpu.memory_space<vmem>>, vector<1x16xf32>
    %3 = vector.broadcast %2 : vector<1x16xf32> to vector<32x16xf32>
    %4 = arith.mulf %1, %3 : vector<32x16xf32>
    %cst = arith.constant dense<0.000000e+00> : vector<32xf32>
    %5 = vector.multi_reduction <add>, %4, %cst [1] : vector<32x16xf32> to vector<32xf32>
    %6 = vector.shape_cast %5 : vector<32xf32> to vector<32x1xf32>
    %7 = arith.mulf %1, %1 : vector<32x16xf32>
    %cst_3 = arith.constant dense<0.000000e+00> : vector<32xf32>
    %8 = vector.multi_reduction <add>, %7, %cst_3 [1] : vector<32x16xf32> to vector<32xf32>
    %9 = vector.shape_cast %8 : vector<32xf32> to vector<32x1xf32>
    %10 = math.sqrt %9 : vector<32x1xf32>
    %cst_4 = arith.constant 9.99999993E-9 : f32
    %11 = vector.broadcast %cst_4 : f32 to vector<32x1xf32>
    %12 = arith.maximumf %10, %11 : vector<32x1xf32>
    %13 = tpu.reciprocal %12 {approx = true} : vector<32x1xf32> -> vector<32x1xf32>
    %14 = arith.mulf %6, %13 : vector<32x1xf32>
    %c0_5 = arith.constant 0 : index
    %c0_6 = arith.constant 0 : index
    %15 = vector.load %arg3[%c0_5, %c0_6] : memref<32x1xf32, #tpu.memory_space<vmem>>, vector<32x1xf32>
    tpu.vector_store %arg3[%c0_5, %c0_6], %14 {strides = array<i32>} : memref<32x1xf32, #tpu.memory_space<vmem>>, vector<32x1xf32>,
    return
  }
  func.func @transform_0(%arg0: i32) -> (i32, i32) {
    %c0_i32 = arith.constant 0 : i32
    %c0_i32_0 = arith.constant 0 : i32
    return %arg0, %c0_i32 : i32, i32
  }
  func.func @transform_1(%arg0: i32) -> (i32, i32) {
    %c0_i32 = arith.constant 0 : i32
    %c0_i32_0 = arith.constant 0 : i32
    %c0_i32_1 = arith.constant 0 : i32
    return %c0_i32, %c0_i32_0 : i32, i32
  }
  func.func @transform_2(%arg0: i32) -> (i32, i32) {
    %c0_i32 = arith.constant 0 : i32
    %c0_i32_0 = arith.constant 0 : i32
    return %arg0, %c0_i32 : i32, i32
  }
}

module attributes {stable_mosaic.version = 11 : i64} {
  func.func @_linear_kernel(%arg0: i32, %arg1: memref<48x16xbf16, #tpu.memory_space<vmem>>, %arg2: memref<16x4xbf16, #tpu.memory_space<vmem>>, %arg3: memref<1x4xf32, #tpu.memory_space<vmem>>, %arg4: memref<48x4xf32, #tpu.memory_space<vmem>>) attributes {dimension_semantics = [#tpu.dimension_semantics<parallel>], iteration_bounds = array<i64: 1>, scalar_prefetch = 0 : i64, scratch_operands = 0 : i64, tpu.core_type = #tpu.core_type<tc>, window_params = [{transform_indices = @transform_0, window_bounds = array<i64: 48, 16>}, {pipeline_mode = #tpu.pipeline_mode<synchronous>, transform_indices = @transform_1, window_bounds = array<i64: 16, 4>}, {pipeline_mode = #tpu.pipeline_mode<synchronous>, transform_indices = @transform_2, window_bounds = array<i64: 1, 4>}, {transform_indices = @transform_3, window_bounds = array<i64: 48, 4>}]} {
    %c0 = arith.constant 0 : index
    %c0_0 = arith.constant 0 : index
    %0 = vector.load %arg1[%c0, %c0_0] : memref<48x16xbf16, #tpu.memory_space<vmem>>, vector<48x16xbf16>
    %c0_1 = arith.constant 0 : index
    %c0_2 = arith.constant 0 : index
    %1 = vector.load %arg2[%c0_1, %c0_2] : memref<16x4xbf16, #tpu.memory_space<vmem>>, vector<16x4xbf16>
    %cst = arith.constant dense<0.000000e+00> : vector<48x4xf32>
    %2 = tpu.matmul %0, %1, %cst {dimension_numbers = #tpu.dot_dimension_numbers<[1], [0], [0], [1], [0, 0, 1, 1], [], []>} : vector<48x16xbf16>, vector<16x4xbf16>, vector<48x4xf32> -> vector<48x4xf32>
    %c0_3 = arith.constant 0 : index
    %c0_4 = arith.constant 0 : index
    %3 = vector.load %arg3[%c0_3, %c0_4] : memref<1x4xf32, #tpu.memory_space<vmem>>, vector<1x4xf32>
    %4 = vector.broadcast %3 : vector<1x4xf32> to vector<48x4xf32>
    %5 = arith.addf %2, %4 : vector<48x4xf32>
    %c0_5 = arith.constant 0 : index
    %c0_6 = arith.constant 0 : index
    %6 = vector.load %arg4[%c0_5, %c0_6] : memref<48x4xf32, #tpu.memory_space<vmem>>, vector<48x4xf32>
    tpu.vector_store %arg4[%c0_5, %c0_6], %5 {strides = array<i32>} : memref<48x4xf32, #tpu.memory_space<vmem>>, vector<48x4xf32>,
    return
  }
  func.func @transform_0(%arg0: i32) -> (i32, i32) {
    %c0_i32 = arith.constant 0 : i32
    %c0_i32_0 = arith.constant 0 : i32
    return %arg0, %c0_i32 : i32, i32
  }
  func.func @transform_1(%arg0: i32) -> (i32, i32) {
    %c0_i32 = arith.constant 0 : i32
    %c0_i32_0 = arith.constant 0 : i32
    %c0_i32_1 = arith.constant 0 : i32
    return %c0_i32, %c0_i32_0 : i32, i32
  }
  func.func @transform_2(%arg0: i32) -> (i32, i32) {
    %c0_i32 = arith.constant 0 : i32
    %c0_i32_0 = arith.constant 0 : i32
    %c0_i32_1 = arith.constant 0 : i32
    return %c0_i32, %c0_i32_0 : i32, i32
  }
  func.func @transform_3(%arg0: i32) -> (i32, i32) {
    %c0_i32 = arith.constant 0 : i32
    %c0_i32_0 = arith.constant 0 : i32
    return %arg0, %c0_i32 : i32, i32
  }
}

module attributes {stable_mosaic.version = 11 : i64} {
  func.func @_centroid_ci_kernel(%arg0: i32, %arg1: memref<1x16x6xf32, #tpu.memory_space<vmem>>, %arg2: memref<1x6x16xf32, #tpu.memory_space<vmem>>, %arg3: memref<1x16x16xf32, #tpu.memory_space<vmem>>) attributes {dimension_semantics = [#tpu.dimension_semantics<parallel>], iteration_bounds = array<i64: 3>, scalar_prefetch = 0 : i64, scratch_operands = 0 : i64, tpu.core_type = #tpu.core_type<tc>, window_params = [{transform_indices = @transform_0, window_bounds = array<i64: 1, 16, 6>}, {transform_indices = @transform_1, window_bounds = array<i64: 1, 6, 16>}, {transform_indices = @transform_2, window_bounds = array<i64: 1, 16, 16>}]} {
    %c0 = arith.constant 0 : index
    %c0_0 = arith.constant 0 : index
    %c0_1 = arith.constant 0 : index
    %0 = vector.load %arg1[%c0, %c0_0, %c0_1] : memref<1x16x6xf32, #tpu.memory_space<vmem>>, vector<1x16x6xf32>
    %1 = vector.shape_cast %0 : vector<1x16x6xf32> to vector<16x6xf32>
    %c0_2 = arith.constant 0 : index
    %c0_3 = arith.constant 0 : index
    %c0_4 = arith.constant 0 : index
    %2 = vector.load %arg2[%c0_2, %c0_3, %c0_4] : memref<1x6x16xf32, #tpu.memory_space<vmem>>, vector<1x6x16xf32>
    %3 = vector.shape_cast %2 : vector<1x6x16xf32> to vector<6x16xf32>
    %cst = arith.constant dense<0.000000e+00> : vector<16x16xf32>
    %4 = tpu.matmul %1, %3, %cst {dimension_numbers = #tpu.dot_dimension_numbers<[1], [0], [0], [1], [0, 0, 1, 1], [], []>} : vector<16x6xf32>, vector<6x16xf32>, vector<16x16xf32> -> vector<16x16xf32>
    %5 = tpu.iota {dimensions = array<i32: 0>} : vector<16x16xi32>
    %6 = tpu.iota {dimensions = array<i32: 1>} : vector<16x16xi32>
    %7 = arith.cmpi eq, %5, %6 : vector<16x16xi32>
    %cst_5 = arith.constant 1.000000e+00 : f32
    %cst_6 = arith.constant 0.000000e+00 : f32
    %8 = vector.broadcast %cst_5 : f32 to vector<16x16xf32>
    %9 = vector.broadcast %cst_6 : f32 to vector<16x16xf32>
    %10 = arith.select %7, %8, %9 : vector<16x16xi1>, vector<16x16xf32>
    %11 = arith.subf %4, %10 : vector<16x16xf32>
    %12 = arith.mulf %11, %11 : vector<16x16xf32>
    %c0_7 = arith.constant 0 : index
    %c0_8 = arith.constant 0 : index
    %c0_9 = arith.constant 0 : index
    %13 = vector.load %arg3[%c0_7, %c0_8, %c0_9] : memref<1x16x16xf32, #tpu.memory_space<vmem>>, vector<1x16x16xf32>
    %14 = vector.shape_cast %13 : vector<1x16x16xf32> to vector<16x16xf32>
    %15 = vector.shape_cast %12 : vector<16x16xf32> to vector<1x16x16xf32>
    tpu.vector_store %arg3[%c0_7, %c0_8, %c0_9], %15 {strides = array<i32>} : memref<1x16x16xf32, #tpu.memory_space<vmem>>, vector<1x16x16xf32>,
    return
  }
  func.func @transform_0(%arg0: i32) -> (i32, i32, i32) {
    %c0_i32 = arith.constant 0 : i32
    %c0_i32_0 = arith.constant 0 : i32
    %c0_i32_1 = arith.constant 0 : i32
    return %arg0, %c0_i32, %c0_i32_0 : i32, i32, i32
  }
  func.func @transform_1(%arg0: i32) -> (i32, i32, i32) {
    %c0_i32 = arith.constant 0 : i32
    %c0_i32_0 = arith.constant 0 : i32
    %c0_i32_1 = arith.constant 0 : i32
    return %arg0, %c0_i32, %c0_i32_0 : i32, i32, i32
  }
  func.func @transform_2(%arg0: i32) -> (i32, i32, i32) {
    %c0_i32 = arith.constant 0 : i32
    %c0_i32_0 = arith.constant 0 : i32
    %c0_i32_1 = arith.constant 0 : i32
    return %arg0, %c0_i32, %c0_i32_0 : i32, i32, i32
  }
}

</mosaic_0001>

<llo_original>
// kernel: thoc_forward.14
$region0: #{thoc_forward.14}
  #allocation0 [shape = 'u32[]', space=smem, size = 0x4, offset = 0x4, fixed_abs, tag = 'smem constant byte address 0x4 - core index']
  #allocation1 [shape = 'u32[144,128]{1,0:T(1,128)}', space=vmem, size = 0x12000, scoped, tag = 'internal scratch']
  %s0 = inlined_call_operand.vmem [shape: bf16[16,16], index: 0, kind: input, shape index: {}]
  %s1 = inlined_call_operand.vmem [shape: bf16[16,16], index: 1, kind: input, shape index: {}]
  %s2 = inlined_call_operand.vmem [shape: f32[1,16], index: 2, kind: input, shape index: {}]
  %s3 = inlined_call_operand.vmem [shape: bf16[16,6], index: 3, kind: input, shape index: {}]
  %s4 = inlined_call_operand.vmem [shape: f32[16,6], index: 4, kind: output, shape index: {0}]
  %s5 = inlined_call_operand.vmem [shape: f32[16,16], index: 5, kind: output, shape index: {1}]
  %6 = xla_tuple %s4, %s5
  %s7 = sld [smem:[#allocation0]]
  $region34: #{thoc_forward.14} parent=0
    _
  %s9 = ssub.s32 1, %s7
  %s10 = scalar_select 0, %s9, %s7
  // Predicated region
  $region2: #{thoc_forward.14} parent=0 // pred_check
    _
  $region3: #{thoc_forward.14} parent=0 // pred_check_branch
    %12 = sbr.rel (0) target = $region5
  $region4: #{thoc_forward.14} parent=0 // pred_region
    _
  $region5: #{thoc_forward.14} parent=0 // pred_fallthru
    _
  // Predicated region
  $region6: #{thoc_forward.14} parent=0 // pred_check
    _
  $region7: #{thoc_forward.14} parent=0 // pred_check_branch
    %14 = sbr.rel (0) target = $region9
  $region8: #{thoc_forward.14} parent=0 // pred_region
    _
  $region9: #{thoc_forward.14} parent=0 // pred_fallthru
    _
  // Predicated region
  $region10: #{thoc_forward.14} parent=0 // pred_check
    _
  $region11: #{thoc_forward.14} parent=0 // pred_check_branch
    %16 = sbr.rel (0) target = $region13
  $region12: #{thoc_forward.14} parent=0 // pred_region
    _
  $region13: #{thoc_forward.14} parent=0 // pred_fallthru
    _
  // Predicated region
  $region14: #{thoc_forward.14} parent=0 // pred_check
    _
  $region15: #{thoc_forward.14} parent=0 // pred_check_branch
    %18 = sbr.rel (0) target = $region17
  $region16: #{thoc_forward.14} parent=0 // pred_region
    _
  $region17: #{thoc_forward.14} parent=0 // pred_fallthru
    _
  %v20 = vld [vmem:[%s0] sm:$0xf]
  %v21 = vld [vmem:[%s0 + $0x4] sm:$0xf]
  %v22 = vunpack.c.l.bf16 %v20
  %v23 = vunpack.c.l.bf16 %v21
  %v24 = vld [vmem:[%s1] sm:$0xf]
  %v25 = vld [vmem:[%s1 + $0x4] sm:$0xf]
  %v26 = vld [vmem:[%s2] sm:$0x1]
  %v28 = vlaneseq
  %v29 = vshrl.u32 %v28, 7
  %v30 = vsub.s32 0, %v29
  %v31 = vrot.slane %v26, %v30
  %v35 = vunpack.c.l.b16 %v20
  %v36 = vunpack.c.l.b16 %v21
  %v37 = vpack.c.b16 %v36, %v35
  %v40 = vunpack.c.l.b16 %v24
  %v41 = vunpack.c.l.b16 %v25
  %v42 = vpack.c.b16 %v41, %v40
  %vm44 = vcmask 130048
  %v46 = vsel %vm44, %v37, 0
  %48 = vmatprep.subr.bf16.mxu0 0
  %49 = vmatpush1.bf16.msra.mxu0 %v42
  %50 = vmatprep.subr.bf16.mxu0 0
  %51 = vmatpush1.bf16.msra.mxu0 0
  %52 = vmatprep.subr.bf16.mxu0 0
  %53 = vmatpush1.bf16.msra.mxu0 0
  %54 = vmatprep.subr.bf16.mxu0 0
  %55 = vmatpush1.bf16.msra.mxu0 0
  %56 = vmatprep.subr.bf16.mxu0 0
  %57 = vmatpush1.bf16.msra.mxu0 0
  %58 = vmatprep.subr.bf16.mxu0 0
  %59 = vmatpush1.bf16.msra.mxu0 0
  %60 = vmatprep.subr.bf16.mxu0 0
  %61 = vmatpush1.bf16.msra.mxu0 0
  %62 = vmatprep.subr.bf16.mxu0 0
  %63 = vmatpush1.bf16.msra.mxu0 0
  %64 = vmatprep.subr.bf16.mxu0 0
  %65 = vmatpush1.bf16.msra.mxu0 0
  %66 = vmatprep.subr.bf16.mxu0 0
  %67 = vmatpush1.bf16.msra.mxu0 0
  %68 = vmatprep.subr.bf16.mxu0 0
  %69 = vmatpush1.bf16.msra.mxu0 0
  %70 = vmatprep.subr.bf16.mxu0 0
  %71 = vmatpush1.bf16.msra.mxu0 0
  %72 = vmatprep.subr.bf16.mxu0 0
  %73 = vmatpush1.bf16.msra.mxu0 0
  %74 = vmatprep.subr.bf16.mxu0 0
  %75 = vmatpush1.bf16.msra.mxu0 0
  %76 = vmatprep.subr.bf16.mxu0 0
  %77 = vmatpush1.bf16.msra.mxu0 0
  %78 = vmatprep.subr.bf16.mxu0 0
  %79 = vmatpush1.bf16.msra.mxu0 0
  %80 = vmatprep.mubr.bf16.mxu0 0
  %81 = vmatmul.mubr.bf16.gmra.mrb[0].mxu0 %v46
  %v82 = vpop.f32.mrb[0].mxu0
  %v83 = vadd.f32 %v31, %v82
  %v84 = vpop.f32.mrb[0].mxu0
  %v85 = vpop.f32.mrb[0].mxu0
  %v86 = vadd.f32 %v31, %v85
  %v87 = vpop.f32.mrb[0].mxu0
  %88 = vdwg.mxu0
  %v89 = vmax.f32 %v83, 0.0
  %v90 = vmax.f32 %v86, 0.0
  %91 = vst.msk [vmem:[%s5] sm:$0xff] %vm44, %v89
  %92 = vst.msk [vmem:[%s5 + $0x8] sm:$0xff] %vm44, %v90
  %v93 = vmul.f32 %v22, %v22
  %v94 = vmul.f32 %v23, %v23
  %v95 = vsel %vm44, %v93, 0.0
  %96 = vadd.xlane.f32.xlu0 %v95
  %v97 = vpop.xlane.xlu0 %96
  %v98 = vsel %vm44, %v94, 0.0
  %99 = vadd.xlane.f32.xlu0 %v98
  %v100 = vpop.xlane.xlu0 %99
  %v101 = vrsqrt.pop %v97
  %v102 = vmul.f32 %v97, %v101
  %vm103 = vcmp.eq.f32.partialorder %v97, inf
  %v104 = vsel %vm103, %v97, %v102
  %vm105 = vcmp.eq.f32.partialorder %v97, 0.0
  %v106 = vand.u32 %v97, 2147483648
  %v107 = vsel %vm105, %v106, %v104
  %v108 = vrsqrt.pop %v100
  %v109 = vmul.f32 %v100, %v108
  %vm110 = vcmp.eq.f32.partialorder %v100, inf
  %v111 = vsel %vm110, %v100, %v109
  %vm112 = vcmp.eq.f32.partialorder %v100, 0.0
  %v113 = vand.u32 %v100, 2147483648
  %v114 = vsel %vm112, %v113, %v111
  %v115 = vmax.f32 %v107, 1e-08
  %v116 = vmax.f32 %v114, 1e-08
  %v117 = vrcp.pop %v115
  %v118 = vrcp.pop %v116
  %v119 = vld [vmem:[%s3] sm:$0xf]
  %v120 = vld [vmem:[%s3 + $0x4] sm:$0xf]
  %v123 = vunpack.c.l.b16 %v119
  %v124 = vunpack.c.l.b16 %v120
  %v125 = vpack.c.b16 %v124, %v123
  %127 = vmatprep.subr.bf16.mxu0 0
  %128 = vmatpush1.bf16.msra.mxu0 %v125
  %129 = vmatprep.subr.bf16.mxu0 0
  %130 = vmatpush1.bf16.msra.mxu0 0
  %131 = vmatprep.subr.bf16.mxu0 0
  %132 = vmatpush1.bf16.msra.mxu0 0
  %133 = vmatprep.subr.bf16.mxu0 0
  %134 = vmatpush1.bf16.msra.mxu0 0
  %135 = vmatprep.subr.bf16.mxu0 0
  %136 = vmatpush1.bf16.msra.mxu0 0
  %137 = vmatprep.subr.bf16.mxu0 0
  %138 = vmatpush1.bf16.msra.mxu0 0
  %139 = vmatprep.subr.bf16.mxu0 0
  %140 = vmatpush1.bf16.msra.mxu0 0
  %141 = vmatprep.subr.bf16.mxu0 0
  %142 = vmatpush1.bf16.msra.mxu0 0
  %143 = vmatprep.subr.bf16.mxu0 0
  %144 = vmatpush1.bf16.msra.mxu0 0
  %145 = vmatprep.subr.bf16.mxu0 0
  %146 = vmatpush1.bf16.msra.mxu0 0
  %147 = vmatprep.subr.bf16.mxu0 0
  %148 = vmatpush1.bf16.msra.mxu0 0
  %149 = vmatprep.subr.bf16.mxu0 0
  %150 = vmatpush1.bf16.msra.mxu0 0
  %151 = vmatprep.subr.bf16.mxu0 0
  %152 = vmatpush1.bf16.msra.mxu0 0
  %153 = vmatprep.subr.bf16.mxu0 0
  %154 = vmatpush1.bf16.msra.mxu0 0
  %155 = vmatprep.subr.bf16.mxu0 0
  %156 = vmatpush1.bf16.msra.mxu0 0
  %157 = vmatprep.subr.bf16.mxu0 0
  %158 = vmatpush1.bf16.msra.mxu0 0
  %159 = vmatprep.mubr.bf16.mxu0 0
  %160 = vmatmul.mubr.bf16.gmra.mrb[0].mxu0 %v46
  %v161 = vpop.f32.mrb[0].mxu0
  %v162 = vadd.f32 0.0, %v161
  %v163 = vpop.f32.mrb[0].mxu0
  %v164 = vpop.f32.mrb[0].mxu0
  %v165 = vadd.f32 0.0, %v164
  %v166 = vpop.f32.mrb[0].mxu0
  %167 = vdwg.mxu0
  %v168 = vmul.f32 %v162, %v117
  %v169 = vmul.f32 %v165, %v118
  %v170 = vmul.f32 %v168, 1.442695
  %v171 = vpow.pop %v170
  %v172 = vmul.f32 %v169, 1.442695
  %v173 = vpow.pop %v172
  %vm174 = vcmask 48128
  %v175 = vsel %vm174, %v171, 0.0
  %176 = vadd.xlane.f32.xlu0 %v175
  %v177 = vpop.xlane.xlu0 %176
  %v178 = vsel %vm174, %v173, 0.0
  %179 = vadd.xlane.f32.xlu0 %v178
  %v180 = vpop.xlane.xlu0 %179
  %v181 = vrcp.pop %v177
  %v182 = vrcp.pop %v180
  %v183 = vmul.f32 %v171, %v181
  %v184 = vmul.f32 %v173, %v182
  %185 = vst.msk [vmem:[%s4] sm:$0xff] %vm174, %v183
  %186 = vst.msk [vmem:[%s4 + $0x8] sm:$0xff] %vm174, %v184
  // Predicated region
  $region18: #{thoc_forward.14} parent=0 // pred_check
    _
  $region19: #{thoc_forward.14} parent=0 // pred_check_branch
    %188 = sbr.rel (0) target = $region21
  $region20: #{thoc_forward.14} parent=0 // pred_region
    _
  $region21: #{thoc_forward.14} parent=0 // pred_fallthru
    _
  // Predicated region
  $region22: #{thoc_forward.14} parent=0 // pred_check
    _
  $region23: #{thoc_forward.14} parent=0 // pred_check_branch
    %190 = sbr.rel (0) target = $region25
  $region24: #{thoc_forward.14} parent=0 // pred_region
    _
  $region25: #{thoc_forward.14} parent=0 // pred_fallthru
    _
  // Predicated region
  $region26: #{thoc_forward.14} parent=0 // pred_check
    _
  $region27: #{thoc_forward.14} parent=0 // pred_check_branch
    %192 = sbr.rel (0) target = $region29
  $region28: #{thoc_forward.14} parent=0 // pred_region
    _
  $region29: #{thoc_forward.14} parent=0 // pred_fallthru
    _
  // Predicated region
  $region30: #{thoc_forward.14} parent=0 // pred_check
    _
  $region31: #{thoc_forward.14} parent=0 // pred_check_branch
    %194 = sbr.rel (0) target = $region33
  $region32: #{thoc_forward.14} parent=0 // pred_region
    _
  $region33: #{thoc_forward.14} parent=0 // pred_fallthru
    _

// kernel: thoc_forward.15
$region0: #{thoc_forward.15}
  #allocation0 [shape = 'u32[]', space=smem, size = 0x4, offset = 0x4, fixed_abs, tag = 'smem constant byte address 0x4 - core index']
  #allocation1 [shape = 'u32[144,128]{1,0:T(1,128)}', space=vmem, size = 0x12000, scoped, tag = 'internal scratch']
  %s0 = inlined_call_operand.vmem [shape: bf16[6,16,16], index: 0, kind: input, shape index: {}]
  %s1 = inlined_call_operand.vmem [shape: bf16[16,16], index: 1, kind: input, shape index: {}]
  %s2 = inlined_call_operand.vmem [shape: bf16[16,16], index: 2, kind: input, shape index: {}]
  %s3 = inlined_call_operand.vmem [shape: bf16[16,16], index: 3, kind: input, shape index: {}]
  %s4 = inlined_call_operand.vmem [shape: f32[1,16], index: 4, kind: input, shape index: {}]
  %s5 = inlined_call_operand.vmem [shape: f32[6,16,16], index: 5, kind: output, shape index: {}]
  %s6 = sld [smem:[#allocation0]]
  $region53: #{thoc_forward.15} parent=0
    _
  %s8 = ssub.s32 1, %s6
  %s9 = scalar_select 0, %s8, %s6
  loop: start=0, step=1, limit=8
  $region2: #{thoc_forward.15} parent=0 // loop_pre_header
    _
  $region3: #{thoc_forward.15} parent=0 // loop_header
    %s11 = sphi 0, %s15
    %p12 = scmp.ge.s32.totalorder %s11, 8
    %s18 = sphi 0, %s30
    %s19 = sphi 0, %s26
    %s20 = sphi 0, %s18
    %s21 = sphi 0, %s19
    %s22 = sphi 0, %s20
    %s23 = sphi 0, %s21
    %s35 = sphi 0, %s37
    %s38 = sphi 0, %s35
    %s39 = sphi 0, %s38
    %s55 = sphi 0, %s39
    %s61 = sphi 0, %s63
    %s64 = sphi 0, %s61
    %s65 = sphi 0, %s64
    %s81 = sphi 0, %s65
    %s85 = sphi 0, %s85
    %s87 = sphi 0, %s85
    %s88 = sphi 0, %s87
    %s102 = sphi 0, %s88
    %s106 = sphi 0, %s106
    %s108 = sphi 0, %s106
    %s109 = sphi 0, %s108
    %s123 = sphi 0, %s109
    %s127 = sphi 0, %s127
    %s129 = sphi 0, %s127
    %s130 = sphi 0, %s129
    %s144 = sphi 0, %s130
    %s152 = sphi 0, %s154
    %s155 = sphi 0, %s152
    %s156 = sphi 0, %s155
    %s172 = sphi 0, %s156
  $region4: #{thoc_forward.15} parent=0 // loop_header_branch
    %14 = sbr.rel (%p12) target = $region8
  $region5: #{thoc_forward.15} parent=0 // loop_body
    %s16 = ssub.s32 %s11, 1
    %s17 = ssub.s32 %s11, 2
    %s24 = sadd.s32 1, %s19
    %p25 = scmp.ge.s32.totalorder %s24, 1
    %s26 = scalar_select %p25, 0, %s24
    %s27 = sadd.s32 1, %s18
    %s28 = scalar_select %p25, %s27, %s18
    %p29 = scmp.ge.s32.totalorder %s28, 6
    %s30 = scalar_select %p29, 0, %s28
    %s31 = ssub.s32 %s18, %s30
    %s32 = ssub.s32 %s19, %s26
    %s33 = sor.u32 %s31, %s32
    %p34 = scmp.eq.s32.totalorder %s33, 0
    %s36 = sadd.s32 %s35, 1
    %s37 = scalar_select %p34, %s35, %s36
    %p40 = pneg %p34
    %p41 = scmp.eq.s32.totalorder %s11, 5
    %p42 = por %p40, %p41
    %p43 = scmp.ne.s32.totalorder %s35, %s38
    %p44 = scmp.eq.s32.totalorder %s11, 0
    %p45 = por %p43, %p44
    %p46 = scmp.ne.s32.totalorder %s35, %s38
    %p47 = scmp.eq.s32.totalorder %s16, 5
    %p48 = por %p46, %p47
    %p49 = scmp.ne.s32.totalorder %s38, %s39
    %p50 = scmp.eq.s32.totalorder %s16, 0
    %p51 = por %p49, %p50
    %p52 = scmp.ne.s32.totalorder %s38, %s39
    %p53 = scmp.eq.s32.totalorder %s17, 5
    %p54 = por %p52, %p53
    %p56 = scmp.ne.s32.totalorder %s39, %s55
    %p57 = scmp.eq.s32.totalorder %s17, 0
    %p58 = por %p56, %p57
    %s59 = ssub.s32 %s19, %s26
    %p60 = scmp.eq.s32.totalorder %s59, 0
    %s62 = sadd.s32 %s61, 1
    %s63 = scalar_select %p60, %s61, %s62
    %p66 = pneg %p60
    %p67 = scmp.eq.s32.totalorder %s11, 5
    %p68 = por %p66, %p67
    %p69 = scmp.ne.s32.totalorder %s61, %s64
    %p70 = scmp.eq.s32.totalorder %s11, 0
    %p71 = por %p69, %p70
    %p72 = scmp.ne.s32.totalorder %s61, %s64
    %p73 = scmp.eq.s32.totalorder %s16, 5
    %p74 = por %p72, %p73
    %p75 = scmp.ne.s32.totalorder %s64, %s65
    %p76 = scmp.eq.s32.totalorder %s16, 0
    %p77 = por %p75, %p76
    %p78 = scmp.ne.s32.totalorder %s64, %s65
    %p79 = scmp.eq.s32.totalorder %s17, 5
    %p80 = por %p78, %p79
    %p82 = scmp.ne.s32.totalorder %s65, %s81
    %p83 = scmp.eq.s32.totalorder %s17, 0
    %p84 = por %p82, %p83
    %s86 = sadd.s32 %s85, 1
    %p89 = scmp.eq.s32.totalorder %s11, 5
    %p90 = scmp.ne.s32.totalorder %s85, %s87
    %p91 = scmp.eq.s32.totalorder %s11, 0
    %p92 = por %p90, %p91
    %p93 = scmp.ne.s32.totalorder %s85, %s87
    %p94 = scmp.eq.s32.totalorder %s16, 5
    %p95 = por %p93, %p94
    %p96 = scmp.ne.s32.totalorder %s87, %s88
    %p97 = scmp.eq.s32.totalorder %s16, 0
    %p98 = por %p96, %p97
    %p99 = scmp.ne.s32.totalorder %s87, %s88
    %p100 = scmp.eq.s32.totalorder %s17, 5
    %p101 = por %p99, %p100
    %p103 = scmp.ne.s32.totalorder %s88, %s102
    %p104 = scmp.eq.s32.totalorder %s17, 0
    %p105 = por %p103, %p104
    %s107 = sadd.s32 %s106, 1
    %p110 = scmp.eq.s32.totalorder %s11, 5
    %p111 = scmp.ne.s32.totalorder %s106, %s108
    %p112 = scmp.eq.s32.totalorder %s11, 0
    %p113 = por %p111, %p112
    %p114 = scmp.ne.s32.totalorder %s106, %s108
    %p115 = scmp.eq.s32.totalorder %s16, 5
    %p116 = por %p114, %p115
    %p117 = scmp.ne.s32.totalorder %s108, %s109
    %p118 = scmp.eq.s32.totalorder %s16, 0
    %p119 = por %p117, %p118
    %p120 = scmp.ne.s32.totalorder %s108, %s109
    %p121 = scmp.eq.s32.totalorder %s17, 5
    %p122 = por %p120, %p121
    %p124 = scmp.ne.s32.totalorder %s109, %s123
    %p125 = scmp.eq.s32.totalorder %s17, 0
    %p126 = por %p124, %p125
    %s128 = sadd.s32 %s127, 1
    %p131 = scmp.eq.s32.totalorder %s11, 5
    %p132 = scmp.ne.s32.totalorder %s127, %s129
    %p133 = scmp.eq.s32.totalorder %s11, 0
    %p134 = por %p132, %p133
    %p135 = scmp.ne.s32.totalorder %s127, %s129
    %p136 = scmp.eq.s32.totalorder %s16, 5
    %p137 = por %p135, %p136
    %p138 = scmp.ne.s32.totalorder %s129, %s130
    %p139 = scmp.eq.s32.totalorder %s16, 0
    %p140 = por %p138, %p139
    %p141 = scmp.ne.s32.totalorder %s129, %s130
    %p142 = scmp.eq.s32.totalorder %s17, 5
    %p143 = por %p141, %p142
    %p145 = scmp.ne.s32.totalorder %s130, %s144
    %p146 = scmp.eq.s32.totalorder %s17, 0
    %p147 = por %p145, %p146
    %s148 = ssub.s32 %s18, %s30
    %s149 = ssub.s32 %s19, %s26
    %s150 = sor.u32 %s148, %s149
    %p151 = scmp.eq.s32.totalorder %s150, 0
    %s153 = sadd.s32 %s152, 1
    %s154 = scalar_select %p151, %s152, %s153
    %p157 = pneg %p151
    %p158 = scmp.eq.s32.totalorder %s11, 5
    %p159 = por %p157, %p158
    %p160 = scmp.ne.s32.totalorder %s152, %s155
    %p161 = scmp.eq.s32.totalorder %s11, 0
    %p162 = por %p160, %p161
    %p163 = scmp.ne.s32.totalorder %s152, %s155
    %p164 = scmp.eq.s32.totalorder %s16, 5
    %p165 = por %p163, %p164
    %p166 = scmp.ne.s32.totalorder %s155, %s156
    %p167 = scmp.eq.s32.totalorder %s16, 0
    %p168 = por %p166, %p167
    %p169 = scmp.ne.s32.totalorder %s155, %s156
    %p170 = scmp.eq.s32.totalorder %s17, 5
    %p171 = por %p169, %p170
    %p173 = scmp.ne.s32.totalorder %s156, %s172
    %p174 = scmp.eq.s32.totalorder %s17, 0
    %p175 = por %p173, %p174
    %p176 = scmp.le.s32.totalorder 1, %s11
    %p177 = scmp.lt.s32.totalorder %s11, 7
    %p178 = pnand %p176, %p177
    %p179 = pneg %p178
    // Predicated region
    $region9: #{thoc_forward.15} parent=5 // pred_check
      _
    $region10: #{thoc_forward.15} parent=5 // pred_check_branch
      %181 = sbr.rel (%p178) target = $region12
    $region11: #{thoc_forward.15} parent=5 // pred_region
      %s182 = ssub.s32 %s11, 1
      // Predicated region
      $region13: #{thoc_forward.15} parent=11 // pred_check
        %p183 = pneg %p77
      $region14: #{thoc_forward.15} parent=11 // pred_check_branch
        %185 = sbr.rel (%p183) target = $region16
      $region15: #{thoc_forward.15} parent=11 // pred_region
        %s186 = smul.u32 2, %s21
        %p187 = scmp.lt.s32.totalorder %s186, 1
        %s188 = scalar_select %p187, %s186, 1
        %s189 = smul.addr %s188, 4
        %s190 = scalar_lea.vmem %s1, %s189
        %s191 = smul.u32 2, %s21
      $region16: #{thoc_forward.15} parent=11 // pred_fallthru
        _
      // Predicated region
      $region17: #{thoc_forward.15} parent=11 // pred_check
        %p192 = pneg %p98
      $region18: #{thoc_forward.15} parent=11 // pred_check_branch
        %194 = sbr.rel (%p192) target = $region20
      $region19: #{thoc_forward.15} parent=11 // pred_region
        _
      $region20: #{thoc_forward.15} parent=11 // pred_fallthru
        _
      // Predicated region
      $region21: #{thoc_forward.15} parent=11 // pred_check
        %p195 = pneg %p119
      $region22: #{thoc_forward.15} parent=11 // pred_check_branch
        %197 = sbr.rel (%p195) target = $region24
      $region23: #{thoc_forward.15} parent=11 // pred_region
        _
      $region24: #{thoc_forward.15} parent=11 // pred_fallthru
        _
      // Predicated region
      $region25: #{thoc_forward.15} parent=11 // pred_check
        %p198 = pneg %p140
      $region26: #{thoc_forward.15} parent=11 // pred_check_branch
        %200 = sbr.rel (%p198) target = $region28
      $region27: #{thoc_forward.15} parent=11 // pred_region
        _
      $region28: #{thoc_forward.15} parent=11 // pred_fallthru
        _
    $region12: #{thoc_forward.15} parent=5 // pred_fallthru
      _
    %p201 = scmp.lt.s32.totalorder %s11, 6
    // Predicated region
    $region29: #{thoc_forward.15} parent=5 // pred_check
      %p202 = pneg %p201
    $region30: #{thoc_forward.15} parent=5 // pred_check_branch
      %204 = sbr.rel (%p202) target = $region32
    $region31: #{thoc_forward.15} parent=5 // pred_region
      // Predicated region
      $region33: #{thoc_forward.15} parent=31 // pred_check
        %p205 = pneg %p45
      $region34: #{thoc_forward.15} parent=31 // pred_check_branch
        %207 = sbr.rel (%p205) target = $region36
      $region35: #{thoc_forward.15} parent=31 // pred_region
        %s208 = smul.u32 2, %s19
        %p209 = scmp.lt.s32.totalorder %s18, 5
        %s210 = scalar_select %p209, %s18, 5
        %p211 = scmp.lt.s32.totalorder %s208, 1
        %s212 = scalar_select %p211, %s208, 1
        %s213 = smul.addr %s210, 2
        %s214 = sadd.s32 %s212, %s213
        %s215 = smul.addr %s214, 4
        %s216 = scalar_lea.vmem %s0, %s215
        %s217 = smul.u32 2, %s19
      $region36: #{thoc_forward.15} parent=31 // pred_fallthru
        _
    $region32: #{thoc_forward.15} parent=5 // pred_fallthru
      _
    %p218 = scmp.le.s32.totalorder 1, %s11
    %p219 = scmp.lt.s32.totalorder %s11, 7
    %p220 = pnand %p218, %p219
    %p221 = pneg %p220
    // Predicated region
    $region37: #{thoc_forward.15} parent=5 // pred_check
      _
    $region38: #{thoc_forward.15} parent=5 // pred_check_branch
      %223 = sbr.rel (%p220) target = $region40
    $region39: #{thoc_forward.15} parent=5 // pred_region
      %s224 = ssub.s32 %s11, 1
      %s225 = smul.u32 2, %s21
      %p226 = scmp.lt.s32.totalorder %s20, 5
      %s227 = scalar_select %p226, %s20, 5
      %p228 = scmp.lt.s32.totalorder %s225, 1
      %s229 = scalar_select %p228, %s225, 1
      %s230 = smul.addr %s227, 2
      %s231 = sadd.s32 %s229, %s230
      %s232 = smul.addr %s231, 4
      %s233 = scalar_lea.vmem %s0, %s232
      %p234 = pneg %p51
      %p235 = pneg %p48
      %s236 = smul.u32 2, %s21
      %p237 = scmp.lt.s32.totalorder %s236, 1
      %s238 = scalar_select %p237, %s236, 1
      %s239 = smul.addr %s238, 4
      %s240 = scalar_lea.vmem %s1, %s239
      %p241 = pneg %p77
      %p242 = pneg %p74
      %p243 = pneg %p98
      %p244 = pneg %p95
      %p245 = pneg %p119
      %p246 = pneg %p116
      %p247 = pneg %p140
      %p248 = pneg %p137
      %p249 = pneg %p168
      %p250 = pneg %p165
      %s251 = smul.u32 2, %s21
      %p252 = scmp.lt.s32.totalorder %s20, 5
      %s253 = scalar_select %p252, %s20, 5
      %p254 = scmp.lt.s32.totalorder %s251, 1
      %s255 = scalar_select %p254, %s251, 1
      %s256 = smul.addr %s253, 2
      %s257 = sadd.s32 %s255, %s256
      %s258 = smul.addr %s257, 8
      %s259 = scalar_lea.vmem %s5, %s258
      %s260 = smul.u32 2, %s21
      %p261 = scmp.lt.s32.totalorder %s20, 5
      %s262 = scalar_select %p261, %s20, 5
      %p263 = scmp.lt.s32.totalorder %s260, 1
      %s264 = scalar_select %p263, %s260, 1
      %s265 = smul.addr %s262, 2
      %s266 = sadd.s32 %s264, %s265
      %s267 = smul.addr %s266, 4
      %s268 = scalar_lea.vmem %s0, %s267
      %s269 = smul.u32 2, %s21
      %s270 = smul.u32 2, %s21
      %p271 = scmp.lt.s32.totalorder %s270, 1
      %s272 = scalar_select %p271, %s270, 1
      %s273 = smul.addr %s272, 4
      %s274 = scalar_lea.vmem %s1, %s273
      %s275 = smul.u32 2, %s21
      %s276 = smul.u32 2, %s21
      %p277 = scmp.lt.s32.totalorder %s20, 5
      %s278 = scalar_select %p277, %s20, 5
      %p279 = scmp.lt.s32.totalorder %s276, 1
      %s280 = scalar_select %p279, %s276, 1
      %s281 = smul.addr %s278, 2
      %s282 = sadd.s32 %s280, %s281
      %s283 = smul.addr %s282, 8
      %s284 = scalar_lea.vmem %s5, %s283
      %s285 = smul.u32 2, %s21
      %v287 = vld [vmem:[%s268] sm:$0xf]
      %v288 = vld [vmem:[%s268 + $0x4] sm:$0xf]
      %v289 = vld [vmem:[%s2] sm:$0xf]
      %v290 = vld [vmem:[%s2 + $0x4] sm:$0xf]
      %v291 = vld [vmem:[%s274] sm:$0xf]
      %v292 = vld [vmem:[%s274 + $0x4] sm:$0xf]
      %v293 = vld [vmem:[%s3] sm:$0xf]
      %v294 = vld [vmem:[%s3 + $0x4] sm:$0xf]
      %v297 = vunpack.c.l.b16 %v291
      %v298 = vunpack.c.l.b16 %v292
      %v299 = vpack.c.b16 %v298, %v297
      %v302 = vunpack.c.l.b16 %v293
      %v303 = vunpack.c.l.b16 %v294
      %v304 = vpack.c.b16 %v303, %v302
      %vm306 = vcmask 130048
      %v308 = vsel %vm306, %v299, 0
      %310 = vmatprep.subr.bf16.mxu0 0
      %311 = vmatpush1.bf16.msra.mxu0 %v304
      %312 = vmatprep.subr.bf16.mxu0 0
      %313 = vmatpush1.bf16.msra.mxu0 0
      %314 = vmatprep.subr.bf16.mxu0 0
      %315 = vmatpush1.bf16.msra.mxu0 0
      %316 = vmatprep.subr.bf16.mxu0 0
      %317 = vmatpush1.bf16.msra.mxu0 0
      %318 = vmatprep.subr.bf16.mxu0 0
      %319 = vmatpush1.bf16.msra.mxu0 0
      %320 = vmatprep.subr.bf16.mxu0 0
      %321 = vmatpush1.bf16.msra.mxu0 0
      %322 = vmatprep.subr.bf16.mxu0 0
      %323 = vmatpush1.bf16.msra.mxu0 0
      %324 = vmatprep.subr.bf16.mxu0 0
      %325 = vmatpush1.bf16.msra.mxu0 0
      %326 = vmatprep.subr.bf16.mxu0 0
      %327 = vmatpush1.bf16.msra.mxu0 0
      %328 = vmatprep.subr.bf16.mxu0 0
      %329 = vmatpush1.bf16.msra.mxu0 0
      %330 = vmatprep.subr.bf16.mxu0 0
      %331 = vmatpush1.bf16.msra.mxu0 0
      %332 = vmatprep.subr.bf16.mxu0 0
      %333 = vmatpush1.bf16.msra.mxu0 0
      %334 = vmatprep.subr.bf16.mxu0 0
      %335 = vmatpush1.bf16.msra.mxu0 0
      %336 = vmatprep.subr.bf16.mxu0 0
      %337 = vmatpush1.bf16.msra.mxu0 0
      %338 = vmatprep.subr.bf16.mxu0 0
      %339 = vmatpush1.bf16.msra.mxu0 0
      %340 = vmatprep.subr.bf16.mxu0 0
      %341 = vmatpush1.bf16.msra.mxu0 0
      %342 = vmatprep.mubr.bf16.mxu0 0
      %343 = vmatmul.mubr.bf16.gmra.mrb[0].mxu0 %v308
      %v344 = vpop.f32.mrb[0].mxu0
      %v345 = vadd.f32 0.0, %v344
      %v346 = vpop.f32.mrb[0].mxu0
      %v347 = vpop.f32.mrb[0].mxu0
      %v348 = vadd.f32 0.0, %v347
      %v349 = vpop.f32.mrb[0].mxu0
      %350 = vdwg.mxu0
      %v353 = vunpack.c.l.b16 %v287
      %v354 = vunpack.c.l.b16 %v288
      %v355 = vpack.c.b16 %v354, %v353
      %v358 = vunpack.c.l.b16 %v289
      %v359 = vunpack.c.l.b16 %v290
      %v360 = vpack.c.b16 %v359, %v358
      %v363 = vsel %vm306, %v355, 0
      %365 = vmatprep.subr.bf16.mxu0 0
      %366 = vmatpush1.bf16.msra.mxu0 %v360
      %367 = vmatprep.subr.bf16.mxu0 0
      %368 = vmatpush1.bf16.msra.mxu0 0
      %369 = vmatprep.subr.bf16.mxu0 0
      %370 = vmatpush1.bf16.msra.mxu0 0
      %371 = vmatprep.subr.bf16.mxu0 0
      %372 = vmatpush1.bf16.msra.mxu0 0
      %373 = vmatprep.subr.bf16.mxu0 0
      %374 = vmatpush1.bf16.msra.mxu0 0
      %375 = vmatprep.subr.bf16.mxu0 0
      %376 = vmatpush1.bf16.msra.mxu0 0
      %377 = vmatprep.subr.bf16.mxu0 0
      %378 = vmatpush1.bf16.msra.mxu0 0
      %379 = vmatprep.subr.bf16.mxu0 0
      %380 = vmatpush1.bf16.msra.mxu0 0
      %381 = vmatprep.subr.bf16.mxu0 0
      %382 = vmatpush1.bf16.msra.mxu0 0
      %383 = vmatprep.subr.bf16.mxu0 0
      %384 = vmatpush1.bf16.msra.mxu0 0
      %385 = vmatprep.subr.bf16.mxu0 0
      %386 = vmatpush1.bf16.msra.mxu0 0
      %387 = vmatprep.subr.bf16.mxu0 0
      %388 = vmatpush1.bf16.msra.mxu0 0
      %389 = vmatprep.subr.bf16.mxu0 0
      %390 = vmatpush1.bf16.msra.mxu0 0
      %391 = vmatprep.subr.bf16.mxu0 0
      %392 = vmatpush1.bf16.msra.mxu0 0
      %393 = vmatprep.subr.bf16.mxu0 0
      %394 = vmatpush1.bf16.msra.mxu0 0
      %395 = vmatprep.subr.bf16.mxu0 0
      %396 = vmatpush1.bf16.msra.mxu0 0
      %397 = vmatprep.mubr.bf16.mxu0 0
      %398 = vmatmul.mubr.bf16.gmra.mrb[0].mxu0 %v363
      %v399 = vpop.f32.mrb[0].mxu0
      %v400 = vadd.f32 %v345, %v399
      %v401 = vpop.f32.mrb[0].mxu0
      %v402 = vpop.f32.mrb[0].mxu0
      %v403 = vadd.f32 %v348, %v402
      %v404 = vpop.f32.mrb[0].mxu0
      %405 = vdwg.mxu0
      %v406 = vld [vmem:[%s4] sm:$0x1]
      %v408 = vlaneseq
      %v409 = vshrl.u32 %v408, 7
      %v410 = vsub.s32 0, %v409
      %v411 = vrot.slane %v406, %v410
      %v413 = vadd.f32 %v400, %v411
      %v414 = vadd.f32 %v403, %v411
      %415 = vst.msk [vmem:[%s284] sm:$0xff] %vm306, %v413
      %416 = vst.msk [vmem:[%s284 + $0x8] sm:$0xff] %vm306, %v414
      %s417 = smul.u32 2, %s21
      %p418 = scmp.lt.s32.totalorder %s20, 5
      %s419 = scalar_select %p418, %s20, 5
      %p420 = scmp.lt.s32.totalorder %s417, 1
      %s421 = scalar_select %p420, %s417, 1
      %s422 = smul.addr %s419, 2
      %s423 = sadd.s32 %s421, %s422
      %s424 = smul.addr %s423, 8
      %s425 = scalar_lea.vmem %s5, %s424
      // Predicated region
      $region41: #{thoc_forward.15} parent=39 // pred_check
        %p426 = pneg %p165
      $region42: #{thoc_forward.15} parent=39 // pred_check_branch
        %428 = sbr.rel (%p426) target = $region44
      $region43: #{thoc_forward.15} parent=39 // pred_region
        %s429 = smul.u32 2, %s21
      $region44: #{thoc_forward.15} parent=39 // pred_fallthru
        _
    $region40: #{thoc_forward.15} parent=5 // pred_fallthru
      _
    %p430 = scmp.le.s32.totalorder 2, %s11
    // Predicated region
    $region45: #{thoc_forward.15} parent=5 // pred_check
      %p431 = pneg %p430
    $region46: #{thoc_forward.15} parent=5 // pred_check_branch
      %433 = sbr.rel (%p431) target = $region48
    $region47: #{thoc_forward.15} parent=5 // pred_region
      %s434 = ssub.s32 %s11, 2
      // Predicated region
      $region49: #{thoc_forward.15} parent=47 // pred_check
        %p435 = pneg %p171
      $region50: #{thoc_forward.15} parent=47 // pred_check_branch
        %437 = sbr.rel (%p435) target = $region52
      $region51: #{thoc_forward.15} parent=47 // pred_region
        %s438 = smul.u32 2, %s23
        %p439 = scmp.lt.s32.totalorder %s22, 5
        %s440 = scalar_select %p439, %s22, 5
        %p441 = scmp.lt.s32.totalorder %s438, 1
        %s442 = scalar_select %p441, %s438, 1
        %s443 = smul.addr %s440, 2
        %s444 = sadd.s32 %s442, %s443
        %s445 = smul.addr %s444, 8
        %s446 = scalar_lea.vmem %s5, %s445
      $region52: #{thoc_forward.15} parent=47 // pred_fallthru
        _
    $region48: #{thoc_forward.15} parent=5 // pred_fallthru
      _
  $region6: #{thoc_forward.15} parent=0 // loop_footer
    %s15 = sadd.s32 1, %s11
  $region7: #{thoc_forward.15} parent=0 // loop_footer_branch
    %10 = sbr.rel target = $region3
  $region8: #{thoc_forward.15} parent=0 // loop_exit
    _

// kernel: thoc_forward.12
$region0: #{thoc_forward.12}
  #allocation0 [shape = 'u32[]', space=smem, size = 0x4, offset = 0x4, fixed_abs, tag = 'smem constant byte address 0x4 - core index']
  #allocation1 [shape = 'u32[144,128]{1,0:T(1,128)}', space=vmem, size = 0x12000, scoped, tag = 'internal scratch']
  #allocation2 [shape = 'f32[4,16]{1,0:T(4,128)}', space=vmem, size = 0x800, scoped, tag = 'scratch operand']
  %s0 = inlined_call_operand.vmem [shape: bf16[1,16,16], index: 0, kind: input, shape index: {}]
  %s1 = inlined_call_operand.vmem [shape: bf16[3,16,16], index: 1, kind: input, shape index: {}]
  %s2 = inlined_call_operand.vmem [shape: bf16[3,16,16], index: 2, kind: input, shape index: {}]
  %s3 = inlined_call_operand.vmem [shape: f32[3,1,16], index: 3, kind: input, shape index: {}]
  %s4 = inlined_call_operand.vmem [shape: f32[3,1,16], index: 4, kind: input, shape index: {}]
  %s5 = inlined_call_operand.vmem [shape: bf16[1,16,16], index: 5, kind: output, shape index: {}]
  %s6 = sld [smem:[#allocation0]]
  $region34: #{thoc_forward.12} parent=0
    _
  %s8 = ssub.s32 1, %s6
  %s9 = scalar_select 0, %s8, %s6
  // Predicated region
  $region2: #{thoc_forward.12} parent=0 // pred_check
    _
  $region3: #{thoc_forward.12} parent=0 // pred_check_branch
    %11 = sbr.rel (0) target = $region5
  $region4: #{thoc_forward.12} parent=0 // pred_region
    _
  $region5: #{thoc_forward.12} parent=0 // pred_fallthru
    _
  // Predicated region
  $region6: #{thoc_forward.12} parent=0 // pred_check
    _
  $region7: #{thoc_forward.12} parent=0 // pred_check_branch
    %13 = sbr.rel (0) target = $region9
  $region8: #{thoc_forward.12} parent=0 // pred_region
    _
  $region9: #{thoc_forward.12} parent=0 // pred_fallthru
    _
  // Predicated region
  $region10: #{thoc_forward.12} parent=0 // pred_check
    _
  $region11: #{thoc_forward.12} parent=0 // pred_check_branch
    %15 = sbr.rel (0) target = $region13
  $region12: #{thoc_forward.12} parent=0 // pred_region
    _
  $region13: #{thoc_forward.12} parent=0 // pred_fallthru
    _
  // Predicated region
  $region14: #{thoc_forward.12} parent=0 // pred_check
    _
  $region15: #{thoc_forward.12} parent=0 // pred_check_branch
    %17 = sbr.rel (0) target = $region17
  $region16: #{thoc_forward.12} parent=0 // pred_region
    _
  $region17: #{thoc_forward.12} parent=0 // pred_fallthru
    _
  // Predicated region
  $region18: #{thoc_forward.12} parent=0 // pred_check
    _
  $region19: #{thoc_forward.12} parent=0 // pred_check_branch
    %19 = sbr.rel (0) target = $region21
  $region20: #{thoc_forward.12} parent=0 // pred_region
    _
  $region21: #{thoc_forward.12} parent=0 // pred_fallthru
    _
  %p21 = scmp.eq.s32.totalorder 0, 0
  // Predicated region
  $region22: #{thoc_forward.12} parent=0 // pred_check
    %p22 = pneg %p21
  $region23: #{thoc_forward.12} parent=0 // pred_check_branch
    %24 = sbr.rel (%p22) target = $region25
  $region24: #{thoc_forward.12} parent=0 // pred_region
    %vm25 = vcmask 125952
    %26 = vst.msk [vmem:[#allocation2] sm:$0xf] %vm25, 0.0
  $region25: #{thoc_forward.12} parent=0 // pred_fallthru
    _
  %v27 = vld [vmem:[%s0] sm:$0xf]
  %v28 = vld [vmem:[%s0 + $0x4] sm:$0xf]
  %v29 = vld [vmem:[%s1] sm:$0xf]
  %v30 = vld [vmem:[%s1 + $0x4] sm:$0xf]
  %v31 = vld [vmem:[%s3] sm:$0x1]
  %v33 = vlaneseq
  %v34 = vshrl.u32 %v33, 7
  %v35 = vsub.s32 0, %v34
  %v36 = vrot.slane %v31, %v35
  %v40 = vunpack.c.l.b16 %v27
  %v41 = vunpack.c.l.b16 %v28
  %v42 = vpack.c.b16 %v41, %v40
  %v45 = vunpack.c.l.b16 %v29
  %v46 = vunpack.c.l.b16 %v30
  %v47 = vpack.c.b16 %v46, %v45
  %vm49 = vcmask 130048
  %v51 = vsel %vm49, %v42, 0
  %53 = vmatprep.subr.bf16.mxu0 0
  %54 = vmatpush1.bf16.msra.mxu0 %v47
  %55 = vmatprep.subr.bf16.mxu0 0
  %56 = vmatpush1.bf16.msra.mxu0 0
  %57 = vmatprep.subr.bf16.mxu0 0
  %58 = vmatpush1.bf16.msra.mxu0 0
  %59 = vmatprep.subr.bf16.mxu0 0
  %60 = vmatpush1.bf16.msra.mxu0 0
  %61 = vmatprep.subr.bf16.mxu0 0
  %62 = vmatpush1.bf16.msra.mxu0 0
  %63 = vmatprep.subr.bf16.mxu0 0
  %64 = vmatpush1.bf16.msra.mxu0 0
  %65 = vmatprep.subr.bf16.mxu0 0
  %66 = vmatpush1.bf16.msra.mxu0 0
  %67 = vmatprep.subr.bf16.mxu0 0
  %68 = vmatpush1.bf16.msra.mxu0 0
  %69 = vmatprep.subr.bf16.mxu0 0
  %70 = vmatpush1.bf16.msra.mxu0 0
  %71 = vmatprep.subr.bf16.mxu0 0
  %72 = vmatpush1.bf16.msra.mxu0 0
  %73 = vmatprep.subr.bf16.mxu0 0
  %74 = vmatpush1.bf16.msra.mxu0 0
  %75 = vmatprep.subr.bf16.mxu0 0
  %76 = vmatpush1.bf16.msra.mxu0 0
  %77 = vmatprep.subr.bf16.mxu0 0
  %78 = vmatpush1.bf16.msra.mxu0 0
  %79 = vmatprep.subr.bf16.mxu0 0
  %80 = vmatpush1.bf16.msra.mxu0 0
  %81 = vmatprep.subr.bf16.mxu0 0
  %82 = vmatpush1.bf16.msra.mxu0 0
  %83 = vmatprep.subr.bf16.mxu0 0
  %84 = vmatpush1.bf16.msra.mxu0 0
  %85 = vmatprep.mubr.bf16.mxu0 0
  %86 = vmatmul.mubr.bf16.gmra.mrb[0].mxu0 %v51
  %v87 = vpop.f32.mrb[0].mxu0
  %v88 = vadd.f32 %v36, %v87
  %v89 = vpop.f32.mrb[0].mxu0
  %v90 = vpop.f32.mrb[0].mxu0
  %v91 = vadd.f32 %v36, %v90
  %v92 = vpop.f32.mrb[0].mxu0
  %93 = vdwg.mxu0
  %s94 = scalar_lea.vmem %s1, 8
  %v95 = vld [vmem:[%s94] sm:$0xf]
  %v96 = vld [vmem:[%s94 + $0x4] sm:$0xf]
  %s97 = scalar_lea.vmem %s3, 1
  %v98 = vld [vmem:[%s97] sm:$0x1]
  %v100 = vlaneseq
  %v101 = vshrl.u32 %v100, 7
  %v102 = vsub.s32 0, %v101
  %v103 = vrot.slane %v98, %v102
  %v107 = vunpack.c.l.b16 %v95
  %v108 = vunpack.c.l.b16 %v96
  %v109 = vpack.c.b16 %v108, %v107
  %111 = vmatprep.subr.bf16.mxu0 0
  %112 = vmatpush1.bf16.msra.mxu0 %v109
  %113 = vmatprep.subr.bf16.mxu0 0
  %114 = vmatpush1.bf16.msra.mxu0 0
  %115 = vmatprep.subr.bf16.mxu0 0
  %116 = vmatpush1.bf16.msra.mxu0 0
  %117 = vmatprep.subr.bf16.mxu0 0
  %118 = vmatpush1.bf16.msra.mxu0 0
  %119 = vmatprep.subr.bf16.mxu0 0
  %120 = vmatpush1.bf16.msra.mxu0 0
  %121 = vmatprep.subr.bf16.mxu0 0
  %122 = vmatpush1.bf16.msra.mxu0 0
  %123 = vmatprep.subr.bf16.mxu0 0
  %124 = vmatpush1.bf16.msra.mxu0 0
  %125 = vmatprep.subr.bf16.mxu0 0
  %126 = vmatpush1.bf16.msra.mxu0 0
  %127 = vmatprep.subr.bf16.mxu0 0
  %128 = vmatpush1.bf16.msra.mxu0 0
  %129 = vmatprep.subr.bf16.mxu0 0
  %130 = vmatpush1.bf16.msra.mxu0 0
  %131 = vmatprep.subr.bf16.mxu0 0
  %132 = vmatpush1.bf16.msra.mxu0 0
  %133 = vmatprep.subr.bf16.mxu0 0
  %134 = vmatpush1.bf16.msra.mxu0 0
  %135 = vmatprep.subr.bf16.mxu0 0
  %136 = vmatpush1.bf16.msra.mxu0 0
  %137 = vmatprep.subr.bf16.mxu0 0
  %138 = vmatpush1.bf16.msra.mxu0 0
  %139 = vmatprep.subr.bf16.mxu0 0
  %140 = vmatpush1.bf16.msra.mxu0 0
  %141 = vmatprep.subr.bf16.mxu0 0
  %142 = vmatpush1.bf16.msra.mxu0 0
  %143 = vmatprep.mubr.bf16.mxu0 0
  %144 = vmatmul.mubr.bf16.gmra.mrb[0].mxu0 %v51
  %v145 = vpop.f32.mrb[0].mxu0
  %v146 = vadd.f32 %v103, %v145
  %v147 = vpop.f32.mrb[0].mxu0
  %v148 = vpop.f32.mrb[0].mxu0
  %v149 = vadd.f32 %v103, %v148
  %v150 = vpop.f32.mrb[0].mxu0
  %151 = vdwg.mxu0
  %s152 = scalar_lea.vmem %s1, 16
  %v153 = vld [vmem:[%s152] sm:$0xf]
  %v154 = vld [vmem:[%s152 + $0x4] sm:$0xf]
  %s155 = scalar_lea.vmem %s3, 2
  %v156 = vld [vmem:[%s155] sm:$0x1]
  %v158 = vlaneseq
  %v159 = vshrl.u32 %v158, 7
  %v160 = vsub.s32 0, %v159
  %v161 = vrot.slane %v156, %v160
  %v165 = vunpack.c.l.b16 %v153
  %v166 = vunpack.c.l.b16 %v154
  %v167 = vpack.c.b16 %v166, %v165
  %169 = vmatprep.subr.bf16.mxu0 0
  %170 = vmatpush1.bf16.msra.mxu0 %v167
  %171 = vmatprep.subr.bf16.mxu0 0
  %172 = vmatpush1.bf16.msra.mxu0 0
  %173 = vmatprep.subr.bf16.mxu0 0
  %174 = vmatpush1.bf16.msra.mxu0 0
  %175 = vmatprep.subr.bf16.mxu0 0
  %176 = vmatpush1.bf16.msra.mxu0 0
  %177 = vmatprep.subr.bf16.mxu0 0
  %178 = vmatpush1.bf16.msra.mxu0 0
  %179 = vmatprep.subr.bf16.mxu0 0
  %180 = vmatpush1.bf16.msra.mxu0 0
  %181 = vmatprep.subr.bf16.mxu0 0
  %182 = vmatpush1.bf16.msra.mxu0 0
  %183 = vmatprep.subr.bf16.mxu0 0
  %184 = vmatpush1.bf16.msra.mxu0 0
  %185 = vmatprep.subr.bf16.mxu0 0
  %186 = vmatpush1.bf16.msra.mxu0 0
  %187 = vmatprep.subr.bf16.mxu0 0
  %188 = vmatpush1.bf16.msra.mxu0 0
  %189 = vmatprep.subr.bf16.mxu0 0
  %190 = vmatpush1.bf16.msra.mxu0 0
  %191 = vmatprep.subr.bf16.mxu0 0
  %192 = vmatpush1.bf16.msra.mxu0 0
  %193 = vmatprep.subr.bf16.mxu0 0
  %194 = vmatpush1.bf16.msra.mxu0 0
  %195 = vmatprep.subr.bf16.mxu0 0
  %196 = vmatpush1.bf16.msra.mxu0 0
  %197 = vmatprep.subr.bf16.mxu0 0
  %198 = vmatpush1.bf16.msra.mxu0 0
  %199 = vmatprep.subr.bf16.mxu0 0
  %200 = vmatpush1.bf16.msra.mxu0 0
  %201 = vmatprep.mubr.bf16.mxu0 0
  %202 = vmatmul.mubr.bf16.gmra.mrb[0].mxu0 %v51
  %v203 = vpop.f32.mrb[0].mxu0
  %v204 = vadd.f32 %v161, %v203
  %v205 = vpop.f32.mrb[0].mxu0
  %v206 = vpop.f32.mrb[0].mxu0
  %v207 = vadd.f32 %v161, %v206
  %v208 = vpop.f32.mrb[0].mxu0
  %209 = vdwg.mxu0
  %v210 = vld [vmem:[%s2] sm:$0xf]
  %v211 = vld [vmem:[%s2 + $0x4] sm:$0xf]
  %s212 = scalar_lea.vmem %s2, 8
  %v213 = vld [vmem:[%s212] sm:$0xf]
  %v214 = vld [vmem:[%s212 + $0x4] sm:$0xf]
  %s215 = scalar_lea.vmem %s2, 16
  %v216 = vld [vmem:[%s215] sm:$0xf]
  %v217 = vld [vmem:[%s215 + $0x4] sm:$0xf]
  %v218 = vld [vmem:[%s4] sm:$0x1]
  %s219 = scalar_lea.vmem %s4, 1
  %v220 = vld [vmem:[%s219] sm:$0x1]
  %s221 = scalar_lea.vmem %s4, 2
  %v222 = vld [vmem:[%s221] sm:$0x1]
  %v223 = vld [vmem:[#allocation2] sm:$0xf]
  %v224 = vpack.c.bf16 %v223, %v223
  %v226 = vlaneseq
  %v227 = vshrl.u32 %v226, 7
  %v228 = vsub.s32 0, %v227
  %v229 = vrot.slane %v218, %v228
  %v233 = vunpack.c.l.b16 %v210
  %v234 = vunpack.c.l.b16 %v211
  %v235 = vpack.c.b16 %v234, %v233
  %v238 = vsel %vm49, %v224, 0
  %240 = vmatprep.subr.bf16.mxu0 0
  %241 = vmatpush1.bf16.msra.mxu0 %v235
  %242 = vmatprep.subr.bf16.mxu0 0
  %243 = vmatpush1.bf16.msra.mxu0 0
  %244 = vmatprep.subr.bf16.mxu0 0
  %245 = vmatpush1.bf16.msra.mxu0 0
  %246 = vmatprep.subr.bf16.mxu0 0
  %247 = vmatpush1.bf16.msra.mxu0 0
  %248 = vmatprep.subr.bf16.mxu0 0
  %249 = vmatpush1.bf16.msra.mxu0 0
  %250 = vmatprep.subr.bf16.mxu0 0
  %251 = vmatpush1.bf16.msra.mxu0 0
  %252 = vmatprep.subr.bf16.mxu0 0
  %253 = vmatpush1.bf16.msra.mxu0 0
  %254 = vmatprep.subr.bf16.mxu0 0
  %255 = vmatpush1.bf16.msra.mxu0 0
  %256 = vmatprep.subr.bf16.mxu0 0
  %257 = vmatpush1.bf16.msra.mxu0 0
  %258 = vmatprep.subr.bf16.mxu0 0
  %259 = vmatpush1.bf16.msra.mxu0 0
  %260 = vmatprep.subr.bf16.mxu0 0
  %261 = vmatpush1.bf16.msra.mxu0 0
  %262 = vmatprep.subr.bf16.mxu0 0
  %263 = vmatpush1.bf16.msra.mxu0 0
  %264 = vmatprep.subr.bf16.mxu0 0
  %265 = vmatpush1.bf16.msra.mxu0 0
  %266 = vmatprep.subr.bf16.mxu0 0
  %267 = vmatpush1.bf16.msra.mxu0 0
  %268 = vmatprep.subr.bf16.mxu0 0
  %269 = vmatpush1.bf16.msra.mxu0 0
  %270 = vmatprep.subr.bf16.mxu0 0
  %271 = vmatpush1.bf16.msra.mxu0 0
  %272 = vmatprep.mubr.bf16.mxu0 0
  %273 = vmatmul.mubr.bf16.gmra.mrb[0].mxu0 %v238
  %v274 = vpop.f32.mrb[0].mxu0
  %v275 = vadd.f32 %v229, %v274
  %v276 = vpop.f32.mrb[0].mxu0
  %v277 = vpop.f32.mrb[0].mxu0
  %v278 = vpop.f32.mrb[0].mxu0
  %279 = vdwg.mxu0
  %v281 = vlaneseq
  %v282 = vshrl.u32 %v281, 7
  %v283 = vsub.s32 0, %v282
  %v284 = vrot.slane %v220, %v283
  %v288 = vunpack.c.l.b16 %v213
  %v289 = vunpack.c.l.b16 %v214
  %v290 = vpack.c.b16 %v289, %v288
  %292 = vmatprep.subr.bf16.mxu0 0
  %293 = vmatpush1.bf16.msra.mxu0 %v290
  %294 = vmatprep.subr.bf16.mxu0 0
  %295 = vmatpush1.bf16.msra.mxu0 0
  %296 = vmatprep.subr.bf16.mxu0 0
  %297 = vmatpush1.bf16.msra.mxu0 0
  %298 = vmatprep.subr.bf16.mxu0 0
  %299 = vmatpush1.bf16.msra.mxu0 0
  %300 = vmatprep.subr.bf16.mxu0 0
  %301 = vmatpush1.bf16.msra.mxu0 0
  %302 = vmatprep.subr.bf16.mxu0 0
  %303 = vmatpush1.bf16.msra.mxu0 0
  %304 = vmatprep.subr.bf16.mxu0 0
  %305 = vmatpush1.bf16.msra.mxu0 0
  %306 = vmatprep.subr.bf16.mxu0 0
  %307 = vmatpush1.bf16.msra.mxu0 0
  %308 = vmatprep.subr.bf16.mxu0 0
  %309 = vmatpush1.bf16.msra.mxu0 0
  %310 = vmatprep.subr.bf16.mxu0 0
  %311 = vmatpush1.bf16.msra.mxu0 0
  %312 = vmatprep.subr.bf16.mxu0 0
  %313 = vmatpush1.bf16.msra.mxu0 0
  %314 = vmatprep.subr.bf16.mxu0 0
  %315 = vmatpush1.bf16.msra.mxu0 0
  %316 = vmatprep.subr.bf16.mxu0 0
  %317 = vmatpush1.bf16.msra.mxu0 0
  %318 = vmatprep.subr.bf16.mxu0 0
  %319 = vmatpush1.bf16.msra.mxu0 0
  %320 = vmatprep.subr.bf16.mxu0 0
  %321 = vmatpush1.bf16.msra.mxu0 0
  %322 = vmatprep.subr.bf16.mxu0 0
  %323 = vmatpush1.bf16.msra.mxu0 0
  %324 = vmatprep.mubr.bf16.mxu0 0
  %325 = vmatmul.mubr.bf16.gmra.mrb[0].mxu0 %v238
  %v326 = vpop.f32.mrb[0].mxu0
  %v327 = vadd.f32 %v284, %v326
  %v328 = vpop.f32.mrb[0].mxu0
  %v329 = vpop.f32.mrb[0].mxu0
  %v330 = vpop.f32.mrb[0].mxu0
  %331 = vdwg.mxu0
  %v333 = vlaneseq
  %v334 = vshrl.u32 %v333, 7
  %v335 = vsub.s32 0, %v334
  %v336 = vrot.slane %v222, %v335
  %v340 = vunpack.c.l.b16 %v216
  %v341 = vunpack.c.l.b16 %v217
  %v342 = vpack.c.b16 %v341, %v340
  %344 = vmatprep.subr.bf16.mxu0 0
  %345 = vmatpush1.bf16.msra.mxu0 %v342
  %346 = vmatprep.subr.bf16.mxu0 0
  %347 = vmatpush1.bf16.msra.mxu0 0
  %348 = vmatprep.subr.bf16.mxu0 0
  %349 = vmatpush1.bf16.msra.mxu0 0
  %350 = vmatprep.subr.bf16.mxu0 0
  %351 = vmatpush1.bf16.msra.mxu0 0
  %352 = vmatprep.subr.bf16.mxu0 0
  %353 = vmatpush1.bf16.msra.mxu0 0
  %354 = vmatprep.subr.bf16.mxu0 0
  %355 = vmatpush1.bf16.msra.mxu0 0
  %356 = vmatprep.subr.bf16.mxu0 0
  %357 = vmatpush1.bf16.msra.mxu0 0
  %358 = vmatprep.subr.bf16.mxu0 0
  %359 = vmatpush1.bf16.msra.mxu0 0
  %360 = vmatprep.subr.bf16.mxu0 0
  %361 = vmatpush1.bf16.msra.mxu0 0
  %362 = vmatprep.subr.bf16.mxu0 0
  %363 = vmatpush1.bf16.msra.mxu0 0
  %364 = vmatprep.subr.bf16.mxu0 0
  %365 = vmatpush1.bf16.msra.mxu0 0
  %366 = vmatprep.subr.bf16.mxu0 0
  %367 = vmatpush1.bf16.msra.mxu0 0
  %368 = vmatprep.subr.bf16.mxu0 0
  %369 = vmatpush1.bf16.msra.mxu0 0
  %370 = vmatprep.subr.bf16.mxu0 0
  %371 = vmatpush1.bf16.msra.mxu0 0
  %372 = vmatprep.subr.bf16.mxu0 0
  %373 = vmatpush1.bf16.msra.mxu0 0
  %374 = vmatprep.subr.bf16.mxu0 0
  %375 = vmatpush1.bf16.msra.mxu0 0
  %376 = vmatprep.mubr.bf16.mxu0 0
  %377 = vmatmul.mubr.bf16.gmra.mrb[0].mxu0 %v238
  %v378 = vpop.f32.mrb[0].mxu0
  %v379 = vadd.f32 %v336, %v378
  %v380 = vpop.f32.mrb[0].mxu0
  %v381 = vpop.f32.mrb[0].mxu0
  %v382 = vpop.f32.mrb[0].mxu0
  %383 = vdwg.mxu0
  %v384 = vadd.f32 %v88, %v275
  %v385 = vxor.u32 %v384, 2147483648
  %v386 = vmul.f32 %v385, 1.442695
  %v387 = vpow.pop %v386
  %v388 = vadd.f32 %v387, 1.0
  %v389 = vrcp.pop %v388
  %v390 = vmul.f32 1.0, %v389
  %v391 = vadd.f32 %v146, %v327
  %v392 = vxor.u32 %v391, 2147483648
  %v393 = vmul.f32 %v392, 1.442695
  %v394 = vpow.pop %v393
  %v395 = vadd.f32 %v394, 1.0
  %v396 = vrcp.pop %v395
  %v397 = vmul.f32 1.0, %v396
  %v398 = vmul.f32 %v390, %v379
  %v399 = vadd.f32 %v204, %v398
  %v400 = vtanh.pop %v399
  %v401 = vsub.f32 1.0, %v397
  %v402 = vmul.f32 %v401, %v400
  %v403 = vmul.f32 %v397, %v223
  %v404 = vadd.f32 %v402, %v403
  %v405 = vpack.c.bf16 %v404, %v404
  %vm406 = vcmask 123904
  %407 = vst.msk [vmem:[%s5] sm:$0x3] %vm406, %v405
  %v409 = vsel %vm49, %v405, 0
  %411 = vmatprep.subr.bf16.mxu0 0
  %412 = vmatpush1.bf16.msra.mxu0 %v235
  %413 = vmatprep.subr.bf16.mxu0 0
  %414 = vmatpush1.bf16.msra.mxu0 0
  %415 = vmatprep.subr.bf16.mxu0 0
  %416 = vmatpush1.bf16.msra.mxu0 0
  %417 = vmatprep.subr.bf16.mxu0 0
  %418 = vmatpush1.bf16.msra.mxu0 0
  %419 = vmatprep.subr.bf16.mxu0 0
  %420 = vmatpush1.bf16.msra.mxu0 0
  %421 = vmatprep.subr.bf16.mxu0 0
  %422 = vmatpush1.bf16.msra.mxu0 0
  %423 = vmatprep.subr.bf16.mxu0 0
  %424 = vmatpush1.bf16.msra.mxu0 0
  %425 = vmatprep.subr.bf16.mxu0 0
  %426 = vmatpush1.bf16.msra.mxu0 0
  %427 = vmatprep.subr.bf16.mxu0 0
  %428 = vmatpush1.bf16.msra.mxu0 0
  %429 = vmatprep.subr.bf16.mxu0 0
  %430 = vmatpush1.bf16.msra.mxu0 0
  %431 = vmatprep.subr.bf16.mxu0 0
  %432 = vmatpush1.bf16.msra.mxu0 0
  %433 = vmatprep.subr.bf16.mxu0 0
  %434 = vmatpush1.bf16.msra.mxu0 0
  %435 = vmatprep.subr.bf16.mxu0 0
  %436 = vmatpush1.bf16.msra.mxu0 0
  %437 = vmatprep.subr.bf16.mxu0 0
  %438 = vmatpush1.bf16.msra.mxu0 0
  %439 = vmatprep.subr.bf16.mxu0 0
  %440 = vmatpush1.bf16.msra.mxu0 0
  %441 = vmatprep.subr.bf16.mxu0 0
  %442 = vmatpush1.bf16.msra.mxu0 0
  %443 = vmatprep.mubr.bf16.mxu0 0
  %444 = vmatmul.mubr.bf16.gmra.mrb[0].mxu0 %v409
  %v445 = vpop.f32.mrb[0].mxu0
  %v446 = vadd.f32 %v229, %v445
  %v447 = vpop.f32.mrb[0].mxu0
  %v448 = vpop.f32.mrb[0].mxu0
  %v449 = vpop.f32.mrb[0].mxu0
  %450 = vdwg.mxu0
  %451 = vmatprep.subr.bf16.mxu0 0
  %452 = vmatpush1.bf16.msra.mxu0 %v290
  %453 = vmatprep.subr.bf16.mxu0 0
  %454 = vmatpush1.bf16.msra.mxu0 0
  %455 = vmatprep.subr.bf16.mxu0 0
  %456 = vmatpush1.bf16.msra.mxu0 0
  %457 = vmatprep.subr.bf16.mxu0 0
  %458 = vmatpush1.bf16.msra.mxu0 0
  %459 = vmatprep.subr.bf16.mxu0 0
  %460 = vmatpush1.bf16.msra.mxu0 0
  %461 = vmatprep.subr.bf16.mxu0 0
  %462 = vmatpush1.bf16.msra.mxu0 0
  %463 = vmatprep.subr.bf16.mxu0 0
  %464 = vmatpush1.bf16.msra.mxu0 0
  %465 = vmatprep.subr.bf16.mxu0 0
  %466 = vmatpush1.bf16.msra.mxu0 0
  %467 = vmatprep.subr.bf16.mxu0 0
  %468 = vmatpush1.bf16.msra.mxu0 0
  %469 = vmatprep.subr.bf16.mxu0 0
  %470 = vmatpush1.bf16.msra.mxu0 0
  %471 = vmatprep.subr.bf16.mxu0 0
  %472 = vmatpush1.bf16.msra.mxu0 0
  %473 = vmatprep.subr.bf16.mxu0 0
  %474 = vmatpush1.bf16.msra.mxu0 0
  %475 = vmatprep.subr.bf16.mxu0 0
  %476 = vmatpush1.bf16.msra.mxu0 0
  %477 = vmatprep.subr.bf16.mxu0 0
  %478 = vmatpush1.bf16.msra.mxu0 0
  %479 = vmatprep.subr.bf16.mxu0 0
  %480 = vmatpush1.bf16.msra.mxu0 0
  %481 = vmatprep.subr.bf16.mxu0 0
  %482 = vmatpush1.bf16.msra.mxu0 0
  %483 = vmatprep.mubr.bf16.mxu0 0
  %484 = vmatmul.mubr.bf16.gmra.mrb[0].mxu0 %v409
  %v485 = vpop.f32.mrb[0].mxu0
  %v486 = vadd.f32 %v284, %v485
  %v487 = vpop.f32.mrb[0].mxu0
  %v488 = vpop.f32.mrb[0].mxu0
  %v489 = vpop.f32.mrb[0].mxu0
  %490 = vdwg.mxu0
  %491 = vmatprep.subr.bf16.mxu0 0
  %492 = vmatpush1.bf16.msra.mxu0 %v342
  %493 = vmatprep.subr.bf16.mxu0 0
  %494 = vmatpush1.bf16.msra.mxu0 0
  %495 = vmatprep.subr.bf16.mxu0 0
  %496 = vmatpush1.bf16.msra.mxu0 0
  %497 = vmatprep.subr.bf16.mxu0 0
  %498 = vmatpush1.bf16.msra.mxu0 0
  %499 = vmatprep.subr.bf16.mxu0 0
  %500 = vmatpush1.bf16.msra.mxu0 0
  %501 = vmatprep.subr.bf16.mxu0 0
  %502 = vmatpush1.bf16.msra.mxu0 0
  %503 = vmatprep.subr.bf16.mxu0 0
  %504 = vmatpush1.bf16.msra.mxu0 0
  %505 = vmatprep.subr.bf16.mxu0 0
  %506 = vmatpush1.bf16.msra.mxu0 0
  %507 = vmatprep.subr.bf16.mxu0 0
  %508 = vmatpush1.bf16.msra.mxu0 0
  %509 = vmatprep.subr.bf16.mxu0 0
  %510 = vmatpush1.bf16.msra.mxu0 0
  %511 = vmatprep.subr.bf16.mxu0 0
  %512 = vmatpush1.bf16.msra.mxu0 0
  %513 = vmatprep.subr.bf16.mxu0 0
  %514 = vmatpush1.bf16.msra.mxu0 0
  %515 = vmatprep.subr.bf16.mxu0 0
  %516 = vmatpush1.bf16.msra.mxu0 0
  %517 = vmatprep.subr.bf16.mxu0 0
  %518 = vmatpush1.bf16.msra.mxu0 0
  %519 = vmatprep.subr.bf16.mxu0 0
  %520 = vmatpush1.bf16.msra.mxu0 0
  %521 = vmatprep.subr.bf16.mxu0 0
  %522 = vmatpush1.bf16.msra.mxu0 0
  %523 = vmatprep.mubr.bf16.mxu0 0
  %524 = vmatmul.mubr.bf16.gmra.mrb[0].mxu0 %v409
  %v525 = vpop.f32.mrb[0].mxu0
  %v526 = vadd.f32 %v336, %v525
  %v527 = vpop.f32.mrb[0].mxu0
  %v528 = vpop.f32.mrb[0].mxu0
  %v529 = vpop.f32.mrb[0].mxu0
  %530 = vdwg.mxu0
  %v532 = vrot.slane %v446, 4
  %v534 = vadd.f32 %v88, %v532
  %v535 = vxor.u32 %v534, 2147483648
  %v536 = vmul.f32 %v535, 1.442695
  %v537 = vpow.pop %v536
  %v538 = vadd.f32 %v537, 1.0
  %v539 = vrcp.pop %v538
  %v540 = vmul.f32 1.0, %v539
  %v542 = vrot.slane %v486, 4
  %v544 = vadd.f32 %v146, %v542
  %v545 = vxor.u32 %v544, 2147483648
  %v546 = vmul.f32 %v545, 1.442695
  %v547 = vpow.pop %v546
  %v548 = vadd.f32 %v547, 1.0
  %v549 = vrcp.pop %v548
  %v550 = vmul.f32 1.0, %v549
  %v552 = vrot.slane %v526, 4
  %v554 = vmul.f32 %v540, %v552
  %v555 = vadd.f32 %v204, %v554
  %v556 = vtanh.pop %v555
  %v557 = vsub.f32 1.0, %v550
  %v558 = vmul.f32 %v557, %v556
  %v560 = vrot.slane %v404, 4
  %v562 = vmul.f32 %v550, %v560
  %v563 = vadd.f32 %v558, %v562
  %v564 = vpack.c.bf16 %v563, %v563
  %vm565 = vcmask 125954
  %566 = vst.msk [vmem:[%s5] sm:$0xc] %vm565, %v564
  %v568 = vrot.slane %v564, 2
  %v570 = vsel %vm49, %v568, 0
  %572 = vmatprep.subr.bf16.mxu0 0
  %573 = vmatpush1.bf16.msra.mxu0 %v235
  %574 = vmatprep.subr.bf16.mxu0 0
  %575 = vmatpush1.bf16.msra.mxu0 0
  %576 = vmatprep.subr.bf16.mxu0 0
  %577 = vmatpush1.bf16.msra.mxu0 0
  %578 = vmatprep.subr.bf16.mxu0 0
  %579 = vmatpush1.bf16.msra.mxu0 0
  %580 = vmatprep.subr.bf16.mxu0 0
  %581 = vmatpush1.bf16.msra.mxu0 0
  %582 = vmatprep.subr.bf16.mxu0 0
  %583 = vmatpush1.bf16.msra.mxu0 0
  %584 = vmatprep.subr.bf16.mxu0 0
  %585 = vmatpush1.bf16.msra.mxu0 0
  %586 = vmatprep.subr.bf16.mxu0 0
  %587 = vmatpush1.bf16.msra.mxu0 0
  %588 = vmatprep.subr.bf16.mxu0 0
  %589 = vmatpush1.bf16.msra.mxu0 0
  %590 = vmatprep.subr.bf16.mxu0 0
  %591 = vmatpush1.bf16.msra.mxu0 0
  %592 = vmatprep.subr.bf16.mxu0 0
  %593 = vmatpush1.bf16.msra.mxu0 0
  %594 = vmatprep.subr.bf16.mxu0 0
  %595 = vmatpush1.bf16.msra.mxu0 0
  %596 = vmatprep.subr.bf16.mxu0 0
  %597 = vmatpush1.bf16.msra.mxu0 0
  %598 = vmatprep.subr.bf16.mxu0 0
  %599 = vmatpush1.bf16.msra.mxu0 0
  %600 = vmatprep.subr.bf16.mxu0 0
  %601 = vmatpush1.bf16.msra.mxu0 0
  %602 = vmatprep.subr.bf16.mxu0 0
  %603 = vmatpush1.bf16.msra.mxu0 0
  %604 = vmatprep.mubr.bf16.mxu0 0
  %605 = vmatmul.mubr.bf16.gmra.mrb[0].mxu0 %v570
  %v606 = vpop.f32.mrb[0].mxu0
  %v607 = vadd.f32 %v229, %v606
  %v608 = vpop.f32.mrb[0].mxu0
  %v609 = vpop.f32.mrb[0].mxu0
  %v610 = vpop.f32.mrb[0].mxu0
  %611 = vdwg.mxu0
  %612 = vmatprep.subr.bf16.mxu0 0
  %613 = vmatpush1.bf16.msra.mxu0 %v290
  %614 = vmatprep.subr.bf16.mxu0 0
  %615 = vmatpush1.bf16.msra.mxu0 0
  %616 = vmatprep.subr.bf16.mxu0 0
  %617 = vmatpush1.bf16.msra.mxu0 0
  %618 = vmatprep.subr.bf16.mxu0 0
  %619 = vmatpush1.bf16.msra.mxu0 0
  %620 = vmatprep.subr.bf16.mxu0 0
  %621 = vmatpush1.bf16.msra.mxu0 0
  %622 = vmatprep.subr.bf16.mxu0 0
  %623 = vmatpush1.bf16.msra.mxu0 0
  %624 = vmatprep.subr.bf16.mxu0 0
  %625 = vmatpush1.bf16.msra.mxu0 0
  %626 = vmatprep.subr.bf16.mxu0 0
  %627 = vmatpush1.bf16.msra.mxu0 0
  %628 = vmatprep.subr.bf16.mxu0 0
  %629 = vmatpush1.bf16.msra.mxu0 0
  %630 = vmatprep.subr.bf16.mxu0 0
  %631 = vmatpush1.bf16.msra.mxu0 0
  %632 = vmatprep.subr.bf16.mxu0 0
  %633 = vmatpush1.bf16.msra.mxu0 0
  %634 = vmatprep.subr.bf16.mxu0 0
  %635 = vmatpush1.bf16.msra.mxu0 0
  %636 = vmatprep.subr.bf16.mxu0 0
  %637 = vmatpush1.bf16.msra.mxu0 0
  %638 = vmatprep.subr.bf16.mxu0 0
  %639 = vmatpush1.bf16.msra.mxu0 0
  %640 = vmatprep.subr.bf16.mxu0 0
  %641 = vmatpush1.bf16.msra.mxu0 0
  %642 = vmatprep.subr.bf16.mxu0 0
  %643 = vmatpush1.bf16.msra.mxu0 0
  %644 = vmatprep.mubr.bf16.mxu0 0
  %645 = vmatmul.mubr.bf16.gmra.mrb[0].mxu0 %v570
  %v646 = vpop.f32.mrb[0].mxu0
  %v647 = vadd.f32 %v284, %v646
  %v648 = vpop.f32.mrb[0].mxu0
  %v649 = vpop.f32.mrb[0].mxu0
  %v650 = vpop.f32.mrb[0].mxu0
  %651 = vdwg.mxu0
  %652 = vmatprep.subr.bf16.mxu0 0
  %653 = vmatpush1.bf16.msra.mxu0 %v342
  %654 = vmatprep.subr.bf16.mxu0 0
  %655 = vmatpush1.bf16.msra.mxu0 0
  %656 = vmatprep.subr.bf16.mxu0 0
  %657 = vmatpush1.bf16.msra.mxu0 0
  %658 = vmatprep.subr.bf16.mxu0 0
  %659 = vmatpush1.bf16.msra.mxu0 0
  %660 = vmatprep.subr.bf16.mxu0 0
  %661 = vmatpush1.bf16.msra.mxu0 0
  %662 = vmatprep.subr.bf16.mxu0 0
  %663 = vmatpush1.bf16.msra.mxu0 0
  %664 = vmatprep.subr.bf16.mxu0 0
  %665 = vmatpush1.bf16.msra.mxu0 0
  %666 = vmatprep.subr.bf16.mxu0 0
  %667 = vmatpush1.bf16.msra.mxu0 0
  %668 = vmatprep.subr.bf16.mxu0 0
  %669 = vmatpush1.bf16.msra.mxu0 0
  %670 = vmatprep.subr.bf16.mxu0 0
  %671 = vmatpush1.bf16.msra.mxu0 0
  %672 = vmatprep.subr.bf16.mxu0 0
  %673 = vmatpush1.bf16.msra.mxu0 0
  %674 = vmatprep.subr.bf16.mxu0 0
  %675 = vmatpush1.bf16.msra.mxu0 0
  %676 = vmatprep.subr.bf16.mxu0 0
  %677 = vmatpush1.bf16.msra.mxu0 0
  %678 = vmatprep.subr.bf16.mxu0 0
  %679 = vmatpush1.bf16.msra.mxu0 0
  %680 = vmatprep.subr.bf16.mxu0 0
  %681 = vmatpush1.bf16.msra.mxu0 0
  %682 = vmatprep.subr.bf16.mxu0 0
  %683 = vmatpush1.bf16.msra.mxu0 0
  %684 = vmatprep.mubr.bf16.mxu0 0
  %685 = vmatmul.mubr.bf16.gmra.mrb[0].mxu0 %v570
  %v686 = vpop.f32.mrb[0].mxu0
  %v687 = vadd.f32 %v336, %v686
  %v688 = vpop.f32.mrb[0].mxu0
  %v689 = vpop.f32.mrb[0].mxu0
  %v690 = vpop.f32.mrb[0].mxu0
  %691 = vdwg.mxu0
  %v692 = vadd.f32 %v91, %v607
  %v693 = vxor.u32 %v692, 2147483648
  %v694 = vmul.f32 %v693, 1.442695
  %v695 = vpow.pop %v694
  %v696 = vadd.f32 %v695, 1.0
  %v697 = vrcp.pop %v696
  %v698 = vmul.f32 1.0, %v697
  %v699 = vadd.f32 %v149, %v647
  %v700 = vxor.u32 %v699, 2147483648
  %v701 = vmul.f32 %v700, 1.442695
  %v702 = vpow.pop %v701
  %v703 = vadd.f32 %v702, 1.0
  %v704 = vrcp.pop %v703
  %v705 = vmul.f32 1.0, %v704
  %v706 = vmul.f32 %v698, %v687
  %v707 = vadd.f32 %v207, %v706
  %v708 = vtanh.pop %v707
  %v709 = vsub.f32 1.0, %v705
  %v710 = vmul.f32 %v709, %v708
  %v712 = vrot.slane %v563, 4
  %v714 = vmul.f32 %v705, %v712
  %v715 = vadd.f32 %v710, %v714
  %v716 = vpack.c.bf16 %v715, %v715
  %717 = vst.msk [vmem:[%s5 + $0x4] sm:$0x3] %vm406, %v716
  %v719 = vsel %vm49, %v716, 0
  %721 = vmatprep.subr.bf16.mxu0 0
  %722 = vmatpush1.bf16.msra.mxu0 %v235
  %723 = vmatprep.subr.bf16.mxu0 0
  %724 = vmatpush1.bf16.msra.mxu0 0
  %725 = vmatprep.subr.bf16.mxu0 0
  %726 = vmatpush1.bf16.msra.mxu0 0
  %727 = vmatprep.subr.bf16.mxu0 0
  %728 = vmatpush1.bf16.msra.mxu0 0
  %729 = vmatprep.subr.bf16.mxu0 0
  %730 = vmatpush1.bf16.msra.mxu0 0
  %731 = vmatprep.subr.bf16.mxu0 0
  %732 = vmatpush1.bf16.msra.mxu0 0
  %733 = vmatprep.subr.bf16.mxu0 0
  %734 = vmatpush1.bf16.msra.mxu0 0
  %735 = vmatprep.subr.bf16.mxu0 0
  %736 = vmatpush1.bf16.msra.mxu0 0
  %737 = vmatprep.subr.bf16.mxu0 0
  %738 = vmatpush1.bf16.msra.mxu0 0
  %739 = vmatprep.subr.bf16.mxu0 0
  %740 = vmatpush1.bf16.msra.mxu0 0
  %741 = vmatprep.subr.bf16.mxu0 0
  %742 = vmatpush1.bf16.msra.mxu0 0
  %743 = vmatprep.subr.bf16.mxu0 0
  %744 = vmatpush1.bf16.msra.mxu0 0
  %745 = vmatprep.subr.bf16.mxu0 0
  %746 = vmatpush1.bf16.msra.mxu0 0
  %747 = vmatprep.subr.bf16.mxu0 0
  %748 = vmatpush1.bf16.msra.mxu0 0
  %749 = vmatprep.subr.bf16.mxu0 0
  %750 = vmatpush1.bf16.msra.mxu0 0
  %751 = vmatprep.subr.bf16.mxu0 0
  %752 = vmatpush1.bf16.msra.mxu0 0
  %753 = vmatprep.mubr.bf16.mxu0 0
  %754 = vmatmul.mubr.bf16.gmra.mrb[0].mxu0 %v719
  %v755 = vpop.f32.mrb[0].mxu0
  %v756 = vadd.f32 %v229, %v755
  %v757 = vpop.f32.mrb[0].mxu0
  %v758 = vpop.f32.mrb[0].mxu0
  %v759 = vpop.f32.mrb[0].mxu0
  %760 = vdwg.mxu0
  %761 = vmatprep.subr.bf16.mxu0 0
  %762 = vmatpush1.bf16.msra.mxu0 %v290
  %763 = vmatprep.subr.bf16.mxu0 0
  %764 = vmatpush1.bf16.msra.mxu0 0
  %765 = vmatprep.subr.bf16.mxu0 0
  %766 = vmatpush1.bf16.msra.mxu0 0
  %767 = vmatprep.subr.bf16.mxu0 0
  %768 = vmatpush1.bf16.msra.mxu0 0
  %769 = vmatprep.subr.bf16.mxu0 0
  %770 = vmatpush1.bf16.msra.mxu0 0
  %771 = vmatprep.subr.bf16.mxu0 0
  %772 = vmatpush1.bf16.msra.mxu0 0
  %773 = vmatprep.subr.bf16.mxu0 0
  %774 = vmatpush1.bf16.msra.mxu0 0
  %775 = vmatprep.subr.bf16.mxu0 0
  %776 = vmatpush1.bf16.msra.mxu0 0
  %777 = vmatprep.subr.bf16.mxu0 0
  %778 = vmatpush1.bf16.msra.mxu0 0
  %779 = vmatprep.subr.bf16.mxu0 0
  %780 = vmatpush1.bf16.msra.mxu0 0
  %781 = vmatprep.subr.bf16.mxu0 0
  %782 = vmatpush1.bf16.msra.mxu0 0
  %783 = vmatprep.subr.bf16.mxu0 0
  %784 = vmatpush1.bf16.msra.mxu0 0
  %785 = vmatprep.subr.bf16.mxu0 0
  %786 = vmatpush1.bf16.msra.mxu0 0
  %787 = vmatprep.subr.bf16.mxu0 0
  %788 = vmatpush1.bf16.msra.mxu0 0
  %789 = vmatprep.subr.bf16.mxu0 0
  %790 = vmatpush1.bf16.msra.mxu0 0
  %791 = vmatprep.subr.bf16.mxu0 0
  %792 = vmatpush1.bf16.msra.mxu0 0
  %793 = vmatprep.mubr.bf16.mxu0 0
  %794 = vmatmul.mubr.bf16.gmra.mrb[0].mxu0 %v719
  %v795 = vpop.f32.mrb[0].mxu0
  %v796 = vadd.f32 %v284, %v795
  %v797 = vpop.f32.mrb[0].mxu0
  %v798 = vpop.f32.mrb[0].mxu0
  %v799 = vpop.f32.mrb[0].mxu0
  %800 = vdwg.mxu0
  %801 = vmatprep.subr.bf16.mxu0 0
  %802 = vmatpush1.bf16.msra.mxu0 %v342
  %803 = vmatprep.subr.bf16.mxu0 0
  %804 = vmatpush1.bf16.msra.mxu0 0
  %805 = vmatprep.subr.bf16.mxu0 0
  %806 = vmatpush1.bf16.msra.mxu0 0
  %807 = vmatprep.subr.bf16.mxu0 0
  %808 = vmatpush1.bf16.msra.mxu0 0
  %809 = vmatprep.subr.bf16.mxu0 0
  %810 = vmatpush1.bf16.msra.mxu0 0
  %811 = vmatprep.subr.bf16.mxu0 0
  %812 = vmatpush1.bf16.msra.mxu0 0
  %813 = vmatprep.subr.bf16.mxu0 0
  %814 = vmatpush1.bf16.msra.mxu0 0
  %815 = vmatprep.subr.bf16.mxu0 0
  %816 = vmatpush1.bf16.msra.mxu0 0
  %817 = vmatprep.subr.bf16.mxu0 0
  %818 = vmatpush1.bf16.msra.mxu0 0
  %819 = vmatprep.subr.bf16.mxu0 0
  %820 = vmatpush1.bf16.msra.mxu0 0
  %821 = vmatprep.subr.bf16.mxu0 0
  %822 = vmatpush1.bf16.msra.mxu0 0
  %823 = vmatprep.subr.bf16.mxu0 0
  %824 = vmatpush1.bf16.msra.mxu0 0
  %825 = vmatprep.subr.bf16.mxu0 0
  %826 = vmatpush1.bf16.msra.mxu0 0
  %827 = vmatprep.subr.bf16.mxu0 0
  %828 = vmatpush1.bf16.msra.mxu0 0
  %829 = vmatprep.subr.bf16.mxu0 0
  %830 = vmatpush1.bf16.msra.mxu0 0
  %831 = vmatprep.subr.bf16.mxu0 0
  %832 = vmatpush1.bf16.msra.mxu0 0
  %833 = vmatprep.mubr.bf16.mxu0 0
  %834 = vmatmul.mubr.bf16.gmra.mrb[0].mxu0 %v719
  %v835 = vpop.f32.mrb[0].mxu0
  %v836 = vadd.f32 %v336, %v835
  %v837 = vpop.f32.mrb[0].mxu0
  %v838 = vpop.f32.mrb[0].mxu0
  %v839 = vpop.f32.mrb[0].mxu0
  %840 = vdwg.mxu0
  %v842 = vrot.slane %v756, 4
  %v844 = vadd.f32 %v91, %v842
  %v845 = vxor.u32 %v844, 2147483648
  %v846 = vmul.f32 %v845, 1.442695
  %v847 = vpow.pop %v846
  %v848 = vadd.f32 %v847, 1.0
  %v849 = vrcp.pop %v848
  %v850 = vmul.f32 1.0, %v849
  %v852 = vrot.slane %v796, 4
  %v854 = vadd.f32 %v149, %v852
  %v855 = vxor.u32 %v854, 2147483648
  %v856 = vmul.f32 %v855, 1.442695
  %v857 = vpow.pop %v856
  %v858 = vadd.f32 %v857, 1.0
  %v859 = vrcp.pop %v858
  %v860 = vmul.f32 1.0, %v859
  %v862 = vrot.slane %v836, 4
  %v864 = vmul.f32 %v850, %v862
  %v865 = vadd.f32 %v207, %v864
  %v866 = vtanh.pop %v865
  %v867 = vsub.f32 1.0, %v860
  %v868 = vmul.f32 %v867, %v866
  %v870 = vrot.slane %v715, 4
  %v872 = vmul.f32 %v860, %v870
  %v873 = vadd.f32 %v868, %v872
  %v874 = vpack.c.bf16 %v873, %v873
  %875 = vst.msk [vmem:[%s5 + $0x4] sm:$0xc] %vm565, %v874
  %vm876 = vcmask 130052
  %877 = vst.msk [vmem:[#allocation2 - $0x4] sm:$0xf0] %vm876, %v873
  // Predicated region
  $region26: #{thoc_forward.12} parent=0 // pred_check
    _
  $region27: #{thoc_forward.12} parent=0 // pred_check_branch
    %879 = sbr.rel (0) target = $region29
  $region28: #{thoc_forward.12} parent=0 // pred_region
    _
  $region29: #{thoc_forward.12} parent=0 // pred_fallthru
    _
  // Predicated region
  $region30: #{thoc_forward.12} parent=0 // pred_check
    _
  $region31: #{thoc_forward.12} parent=0 // pred_check_branch
    %881 = sbr.rel (0) target = $region33
  $region32: #{thoc_forward.12} parent=0 // pred_region
    _
  $region33: #{thoc_forward.12} parent=0 // pred_fallthru
    _

// kernel: thoc_forward.11
$region0: #{thoc_forward.11}
  #allocation0 [shape = 'u32[]', space=smem, size = 0x4, offset = 0x4, fixed_abs, tag = 'smem constant byte address 0x4 - core index']
  #allocation1 [shape = 'u32[144,128]{1,0:T(1,128)}', space=vmem, size = 0x12000, scoped, tag = 'internal scratch']
  #allocation2 [shape = 'f32[2,16]{1,0:T(2,128)}', space=vmem, size = 0x400, scoped, tag = 'scratch operand']
  %s0 = inlined_call_operand.vmem [shape: bf16[1,16,4], index: 0, kind: input, shape index: {}]
  %s1 = inlined_call_operand.vmem [shape: bf16[3,4,16], index: 1, kind: input, shape index: {}]
  %s2 = inlined_call_operand.vmem [shape: bf16[3,16,16], index: 2, kind: input, shape index: {}]
  %s3 = inlined_call_operand.vmem [shape: f32[3,1,16], index: 3, kind: input, shape index: {}]
  %s4 = inlined_call_operand.vmem [shape: f32[3,1,16], index: 4, kind: input, shape index: {}]
  %s5 = inlined_call_operand.vmem [shape: bf16[1,16,16], index: 5, kind: output, shape index: {}]
  %s6 = sld [smem:[#allocation0]]
  $region34: #{thoc_forward.11} parent=0
    _
  %s8 = ssub.s32 1, %s6
  %s9 = scalar_select 0, %s8, %s6
  // Predicated region
  $region2: #{thoc_forward.11} parent=0 // pred_check
    _
  $region3: #{thoc_forward.11} parent=0 // pred_check_branch
    %11 = sbr.rel (0) target = $region5
  $region4: #{thoc_forward.11} parent=0 // pred_region
    _
  $region5: #{thoc_forward.11} parent=0 // pred_fallthru
    _
  // Predicated region
  $region6: #{thoc_forward.11} parent=0 // pred_check
    _
  $region7: #{thoc_forward.11} parent=0 // pred_check_branch
    %13 = sbr.rel (0) target = $region9
  $region8: #{thoc_forward.11} parent=0 // pred_region
    _
  $region9: #{thoc_forward.11} parent=0 // pred_fallthru
    _
  // Predicated region
  $region10: #{thoc_forward.11} parent=0 // pred_check
    _
  $region11: #{thoc_forward.11} parent=0 // pred_check_branch
    %15 = sbr.rel (0) target = $region13
  $region12: #{thoc_forward.11} parent=0 // pred_region
    _
  $region13: #{thoc_forward.11} parent=0 // pred_fallthru
    _
  // Predicated region
  $region14: #{thoc_forward.11} parent=0 // pred_check
    _
  $region15: #{thoc_forward.11} parent=0 // pred_check_branch
    %17 = sbr.rel (0) target = $region17
  $region16: #{thoc_forward.11} parent=0 // pred_region
    _
  $region17: #{thoc_forward.11} parent=0 // pred_fallthru
    _
  // Predicated region
  $region18: #{thoc_forward.11} parent=0 // pred_check
    _
  $region19: #{thoc_forward.11} parent=0 // pred_check_branch
    %19 = sbr.rel (0) target = $region21
  $region20: #{thoc_forward.11} parent=0 // pred_region
    _
  $region21: #{thoc_forward.11} parent=0 // pred_fallthru
    _
  %p21 = scmp.eq.s32.totalorder 0, 0
  // Predicated region
  $region22: #{thoc_forward.11} parent=0 // pred_check
    %p22 = pneg %p21
  $region23: #{thoc_forward.11} parent=0 // pred_check_branch
    %24 = sbr.rel (%p22) target = $region25
  $region24: #{thoc_forward.11} parent=0 // pred_region
    %vm25 = vcmask 123904
    %26 = vst.msk [vmem:[#allocation2] sm:$0x3] %vm25, 0.0
  $region25: #{thoc_forward.11} parent=0 // pred_fallthru
    _
  %v27 = vld [vmem:[%s0] sm:$0xf]
  %v28 = vld [vmem:[%s0 + $0x4] sm:$0xf]
  %v29 = vld [vmem:[%s1] sm:$0x3]
  %v30 = vld [vmem:[%s3] sm:$0x1]
  %v32 = vlaneseq
  %v33 = vshrl.u32 %v32, 7
  %v34 = vsub.s32 0, %v33
  %v35 = vrot.slane %v30, %v34
  %v39 = vunpack.c.l.b16 %v27
  %v40 = vunpack.c.l.b16 %v28
  %v41 = vpack.c.b16 %v40, %v39
  %vm42 = vcmask 31744
  %v44 = vsel %vm42, %v41, 0
  %vm46 = vcmask 1041408
  %v48 = vsel %vm46, %v29, 0
  %50 = vmatprep.subr.bf16.mxu0 0
  %51 = vmatpush1.bf16.msra.mxu0 %v48
  %52 = vmatprep.subr.bf16.mxu0 0
  %53 = vmatpush1.bf16.msra.mxu0 0
  %54 = vmatprep.subr.bf16.mxu0 0
  %55 = vmatpush1.bf16.msra.mxu0 0
  %56 = vmatprep.subr.bf16.mxu0 0
  %57 = vmatpush1.bf16.msra.mxu0 0
  %58 = vmatprep.subr.bf16.mxu0 0
  %59 = vmatpush1.bf16.msra.mxu0 0
  %60 = vmatprep.subr.bf16.mxu0 0
  %61 = vmatpush1.bf16.msra.mxu0 0
  %62 = vmatprep.subr.bf16.mxu0 0
  %63 = vmatpush1.bf16.msra.mxu0 0
  %64 = vmatprep.subr.bf16.mxu0 0
  %65 = vmatpush1.bf16.msra.mxu0 0
  %66 = vmatprep.subr.bf16.mxu0 0
  %67 = vmatpush1.bf16.msra.mxu0 0
  %68 = vmatprep.subr.bf16.mxu0 0
  %69 = vmatpush1.bf16.msra.mxu0 0
  %70 = vmatprep.subr.bf16.mxu0 0
  %71 = vmatpush1.bf16.msra.mxu0 0
  %72 = vmatprep.subr.bf16.mxu0 0
  %73 = vmatpush1.bf16.msra.mxu0 0
  %74 = vmatprep.subr.bf16.mxu0 0
  %75 = vmatpush1.bf16.msra.mxu0 0
  %76 = vmatprep.subr.bf16.mxu0 0
  %77 = vmatpush1.bf16.msra.mxu0 0
  %78 = vmatprep.subr.bf16.mxu0 0
  %79 = vmatpush1.bf16.msra.mxu0 0
  %80 = vmatprep.subr.bf16.mxu0 0
  %81 = vmatpush1.bf16.msra.mxu0 0
  %82 = vmatprep.mubr.bf16.mxu0 0
  %83 = vmatmul.mubr.bf16.gmra.mrb[0].mxu0 %v44
  %v84 = vpop.f32.mrb[0].mxu0
  %v85 = vadd.f32 %v35, %v84
  %v86 = vpop.f32.mrb[0].mxu0
  %v87 = vpop.f32.mrb[0].mxu0
  %v88 = vadd.f32 %v35, %v87
  %v89 = vpop.f32.mrb[0].mxu0
  %90 = vdwg.mxu0
  %s91 = scalar_lea.vmem %s1, 2
  %v92 = vld [vmem:[%s91] sm:$0x3]
  %s93 = scalar_lea.vmem %s3, 1
  %v94 = vld [vmem:[%s93] sm:$0x1]
  %v96 = vlaneseq
  %v97 = vshrl.u32 %v96, 7
  %v98 = vsub.s32 0, %v97
  %v99 = vrot.slane %v94, %v98
  %v102 = vsel %vm46, %v92, 0
  %104 = vmatprep.subr.bf16.mxu0 0
  %105 = vmatpush1.bf16.msra.mxu0 %v102
  %106 = vmatprep.subr.bf16.mxu0 0
  %107 = vmatpush1.bf16.msra.mxu0 0
  %108 = vmatprep.subr.bf16.mxu0 0
  %109 = vmatpush1.bf16.msra.mxu0 0
  %110 = vmatprep.subr.bf16.mxu0 0
  %111 = vmatpush1.bf16.msra.mxu0 0
  %112 = vmatprep.subr.bf16.mxu0 0
  %113 = vmatpush1.bf16.msra.mxu0 0
  %114 = vmatprep.subr.bf16.mxu0 0
  %115 = vmatpush1.bf16.msra.mxu0 0
  %116 = vmatprep.subr.bf16.mxu0 0
  %117 = vmatpush1.bf16.msra.mxu0 0
  %118 = vmatprep.subr.bf16.mxu0 0
  %119 = vmatpush1.bf16.msra.mxu0 0
  %120 = vmatprep.subr.bf16.mxu0 0
  %121 = vmatpush1.bf16.msra.mxu0 0
  %122 = vmatprep.subr.bf16.mxu0 0
  %123 = vmatpush1.bf16.msra.mxu0 0
  %124 = vmatprep.subr.bf16.mxu0 0
  %125 = vmatpush1.bf16.msra.mxu0 0
  %126 = vmatprep.subr.bf16.mxu0 0
  %127 = vmatpush1.bf16.msra.mxu0 0
  %128 = vmatprep.subr.bf16.mxu0 0
  %129 = vmatpush1.bf16.msra.mxu0 0
  %130 = vmatprep.subr.bf16.mxu0 0
  %131 = vmatpush1.bf16.msra.mxu0 0
  %132 = vmatprep.subr.bf16.mxu0 0
  %133 = vmatpush1.bf16.msra.mxu0 0
  %134 = vmatprep.subr.bf16.mxu0 0
  %135 = vmatpush1.bf16.msra.mxu0 0
  %136 = vmatprep.mubr.bf16.mxu0 0
  %137 = vmatmul.mubr.bf16.gmra.mrb[0].mxu0 %v44
  %v138 = vpop.f32.mrb[0].mxu0
  %v139 = vadd.f32 %v99, %v138
  %v140 = vpop.f32.mrb[0].mxu0
  %v141 = vpop.f32.mrb[0].mxu0
  %v142 = vadd.f32 %v99, %v141
  %v143 = vpop.f32.mrb[0].mxu0
  %144 = vdwg.mxu0
  %s145 = scalar_lea.vmem %s1, 4
  %v146 = vld [vmem:[%s145] sm:$0x3]
  %s147 = scalar_lea.vmem %s3, 2
  %v148 = vld [vmem:[%s147] sm:$0x1]
  %v150 = vlaneseq
  %v151 = vshrl.u32 %v150, 7
  %v152 = vsub.s32 0, %v151
  %v153 = vrot.slane %v148, %v152
  %v156 = vsel %vm46, %v146, 0
  %158 = vmatprep.subr.bf16.mxu0 0
  %159 = vmatpush1.bf16.msra.mxu0 %v156
  %160 = vmatprep.subr.bf16.mxu0 0
  %161 = vmatpush1.bf16.msra.mxu0 0
  %162 = vmatprep.subr.bf16.mxu0 0
  %163 = vmatpush1.bf16.msra.mxu0 0
  %164 = vmatprep.subr.bf16.mxu0 0
  %165 = vmatpush1.bf16.msra.mxu0 0
  %166 = vmatprep.subr.bf16.mxu0 0
  %167 = vmatpush1.bf16.msra.mxu0 0
  %168 = vmatprep.subr.bf16.mxu0 0
  %169 = vmatpush1.bf16.msra.mxu0 0
  %170 = vmatprep.subr.bf16.mxu0 0
  %171 = vmatpush1.bf16.msra.mxu0 0
  %172 = vmatprep.subr.bf16.mxu0 0
  %173 = vmatpush1.bf16.msra.mxu0 0
  %174 = vmatprep.subr.bf16.mxu0 0
  %175 = vmatpush1.bf16.msra.mxu0 0
  %176 = vmatprep.subr.bf16.mxu0 0
  %177 = vmatpush1.bf16.msra.mxu0 0
  %178 = vmatprep.subr.bf16.mxu0 0
  %179 = vmatpush1.bf16.msra.mxu0 0
  %180 = vmatprep.subr.bf16.mxu0 0
  %181 = vmatpush1.bf16.msra.mxu0 0
  %182 = vmatprep.subr.bf16.mxu0 0
  %183 = vmatpush1.bf16.msra.mxu0 0
  %184 = vmatprep.subr.bf16.mxu0 0
  %185 = vmatpush1.bf16.msra.mxu0 0
  %186 = vmatprep.subr.bf16.mxu0 0
  %187 = vmatpush1.bf16.msra.mxu0 0
  %188 = vmatprep.subr.bf16.mxu0 0
  %189 = vmatpush1.bf16.msra.mxu0 0
  %190 = vmatprep.mubr.bf16.mxu0 0
  %191 = vmatmul.mubr.bf16.gmra.mrb[0].mxu0 %v44
  %v192 = vpop.f32.mrb[0].mxu0
  %v193 = vadd.f32 %v153, %v192
  %v194 = vpop.f32.mrb[0].mxu0
  %v195 = vpop.f32.mrb[0].mxu0
  %v196 = vadd.f32 %v153, %v195
  %v197 = vpop.f32.mrb[0].mxu0
  %198 = vdwg.mxu0
  %v199 = vld [vmem:[%s2] sm:$0xf]
  %v200 = vld [vmem:[%s2 + $0x4] sm:$0xf]
  %s201 = scalar_lea.vmem %s2, 8
  %v202 = vld [vmem:[%s201] sm:$0xf]
  %v203 = vld [vmem:[%s201 + $0x4] sm:$0xf]
  %s204 = scalar_lea.vmem %s2, 16
  %v205 = vld [vmem:[%s204] sm:$0xf]
  %v206 = vld [vmem:[%s204 + $0x4] sm:$0xf]
  %v207 = vld [vmem:[%s4] sm:$0x1]
  %s208 = scalar_lea.vmem %s4, 1
  %v209 = vld [vmem:[%s208] sm:$0x1]
  %s210 = scalar_lea.vmem %s4, 2
  %v211 = vld [vmem:[%s210] sm:$0x1]
  %v212 = vld [vmem:[#allocation2] sm:$0x3]
  %v213 = vpack.c.bf16 %v212, %v212
  %v215 = vlaneseq
  %v216 = vshrl.u32 %v215, 7
  %v217 = vsub.s32 0, %v216
  %v218 = vrot.slane %v207, %v217
  %v222 = vunpack.c.l.b16 %v199
  %v223 = vunpack.c.l.b16 %v200
  %v224 = vpack.c.b16 %v223, %v222
  %vm226 = vcmask 130048
  %v228 = vsel %vm226, %v213, 0
  %230 = vmatprep.subr.bf16.mxu0 0
  %231 = vmatpush1.bf16.msra.mxu0 %v224
  %232 = vmatprep.subr.bf16.mxu0 0
  %233 = vmatpush1.bf16.msra.mxu0 0
  %234 = vmatprep.subr.bf16.mxu0 0
  %235 = vmatpush1.bf16.msra.mxu0 0
  %236 = vmatprep.subr.bf16.mxu0 0
  %237 = vmatpush1.bf16.msra.mxu0 0
  %238 = vmatprep.subr.bf16.mxu0 0
  %239 = vmatpush1.bf16.msra.mxu0 0
  %240 = vmatprep.subr.bf16.mxu0 0
  %241 = vmatpush1.bf16.msra.mxu0 0
  %242 = vmatprep.subr.bf16.mxu0 0
  %243 = vmatpush1.bf16.msra.mxu0 0
  %244 = vmatprep.subr.bf16.mxu0 0
  %245 = vmatpush1.bf16.msra.mxu0 0
  %246 = vmatprep.subr.bf16.mxu0 0
  %247 = vmatpush1.bf16.msra.mxu0 0
  %248 = vmatprep.subr.bf16.mxu0 0
  %249 = vmatpush1.bf16.msra.mxu0 0
  %250 = vmatprep.subr.bf16.mxu0 0
  %251 = vmatpush1.bf16.msra.mxu0 0
  %252 = vmatprep.subr.bf16.mxu0 0
  %253 = vmatpush1.bf16.msra.mxu0 0
  %254 = vmatprep.subr.bf16.mxu0 0
  %255 = vmatpush1.bf16.msra.mxu0 0
  %256 = vmatprep.subr.bf16.mxu0 0
  %257 = vmatpush1.bf16.msra.mxu0 0
  %258 = vmatprep.subr.bf16.mxu0 0
  %259 = vmatpush1.bf16.msra.mxu0 0
  %260 = vmatprep.subr.bf16.mxu0 0
  %261 = vmatpush1.bf16.msra.mxu0 0
  %262 = vmatprep.mubr.bf16.mxu0 0
  %263 = vmatmul.mubr.bf16.gmra.mrb[0].mxu0 %v228
  %v264 = vpop.f32.mrb[0].mxu0
  %v265 = vadd.f32 %v218, %v264
  %v266 = vpop.f32.mrb[0].mxu0
  %v267 = vpop.f32.mrb[0].mxu0
  %v268 = vpop.f32.mrb[0].mxu0
  %269 = vdwg.mxu0
  %v271 = vlaneseq
  %v272 = vshrl.u32 %v271, 7
  %v273 = vsub.s32 0, %v272
  %v274 = vrot.slane %v209, %v273
  %v278 = vunpack.c.l.b16 %v202
  %v279 = vunpack.c.l.b16 %v203
  %v280 = vpack.c.b16 %v279, %v278
  %282 = vmatprep.subr.bf16.mxu0 0
  %283 = vmatpush1.bf16.msra.mxu0 %v280
  %284 = vmatprep.subr.bf16.mxu0 0
  %285 = vmatpush1.bf16.msra.mxu0 0
  %286 = vmatprep.subr.bf16.mxu0 0
  %287 = vmatpush1.bf16.msra.mxu0 0
  %288 = vmatprep.subr.bf16.mxu0 0
  %289 = vmatpush1.bf16.msra.mxu0 0
  %290 = vmatprep.subr.bf16.mxu0 0
  %291 = vmatpush1.bf16.msra.mxu0 0
  %292 = vmatprep.subr.bf16.mxu0 0
  %293 = vmatpush1.bf16.msra.mxu0 0
  %294 = vmatprep.subr.bf16.mxu0 0
  %295 = vmatpush1.bf16.msra.mxu0 0
  %296 = vmatprep.subr.bf16.mxu0 0
  %297 = vmatpush1.bf16.msra.mxu0 0
  %298 = vmatprep.subr.bf16.mxu0 0
  %299 = vmatpush1.bf16.msra.mxu0 0
  %300 = vmatprep.subr.bf16.mxu0 0
  %301 = vmatpush1.bf16.msra.mxu0 0
  %302 = vmatprep.subr.bf16.mxu0 0
  %303 = vmatpush1.bf16.msra.mxu0 0
  %304 = vmatprep.subr.bf16.mxu0 0
  %305 = vmatpush1.bf16.msra.mxu0 0
  %306 = vmatprep.subr.bf16.mxu0 0
  %307 = vmatpush1.bf16.msra.mxu0 0
  %308 = vmatprep.subr.bf16.mxu0 0
  %309 = vmatpush1.bf16.msra.mxu0 0
  %310 = vmatprep.subr.bf16.mxu0 0
  %311 = vmatpush1.bf16.msra.mxu0 0
  %312 = vmatprep.subr.bf16.mxu0 0
  %313 = vmatpush1.bf16.msra.mxu0 0
  %314 = vmatprep.mubr.bf16.mxu0 0
  %315 = vmatmul.mubr.bf16.gmra.mrb[0].mxu0 %v228
  %v316 = vpop.f32.mrb[0].mxu0
  %v317 = vadd.f32 %v274, %v316
  %v318 = vpop.f32.mrb[0].mxu0
  %v319 = vpop.f32.mrb[0].mxu0
  %v320 = vpop.f32.mrb[0].mxu0
  %321 = vdwg.mxu0
  %v323 = vlaneseq
  %v324 = vshrl.u32 %v323, 7
  %v325 = vsub.s32 0, %v324
  %v326 = vrot.slane %v211, %v325
  %v330 = vunpack.c.l.b16 %v205
  %v331 = vunpack.c.l.b16 %v206
  %v332 = vpack.c.b16 %v331, %v330
  %334 = vmatprep.subr.bf16.mxu0 0
  %335 = vmatpush1.bf16.msra.mxu0 %v332
  %336 = vmatprep.subr.bf16.mxu0 0
  %337 = vmatpush1.bf16.msra.mxu0 0
  %338 = vmatprep.subr.bf16.mxu0 0
  %339 = vmatpush1.bf16.msra.mxu0 0
  %340 = vmatprep.subr.bf16.mxu0 0
  %341 = vmatpush1.bf16.msra.mxu0 0
  %342 = vmatprep.subr.bf16.mxu0 0
  %343 = vmatpush1.bf16.msra.mxu0 0
  %344 = vmatprep.subr.bf16.mxu0 0
  %345 = vmatpush1.bf16.msra.mxu0 0
  %346 = vmatprep.subr.bf16.mxu0 0
  %347 = vmatpush1.bf16.msra.mxu0 0
  %348 = vmatprep.subr.bf16.mxu0 0
  %349 = vmatpush1.bf16.msra.mxu0 0
  %350 = vmatprep.subr.bf16.mxu0 0
  %351 = vmatpush1.bf16.msra.mxu0 0
  %352 = vmatprep.subr.bf16.mxu0 0
  %353 = vmatpush1.bf16.msra.mxu0 0
  %354 = vmatprep.subr.bf16.mxu0 0
  %355 = vmatpush1.bf16.msra.mxu0 0
  %356 = vmatprep.subr.bf16.mxu0 0
  %357 = vmatpush1.bf16.msra.mxu0 0
  %358 = vmatprep.subr.bf16.mxu0 0
  %359 = vmatpush1.bf16.msra.mxu0 0
  %360 = vmatprep.subr.bf16.mxu0 0
  %361 = vmatpush1.bf16.msra.mxu0 0
  %362 = vmatprep.subr.bf16.mxu0 0
  %363 = vmatpush1.bf16.msra.mxu0 0
  %364 = vmatprep.subr.bf16.mxu0 0
  %365 = vmatpush1.bf16.msra.mxu0 0
  %366 = vmatprep.mubr.bf16.mxu0 0
  %367 = vmatmul.mubr.bf16.gmra.mrb[0].mxu0 %v228
  %v368 = vpop.f32.mrb[0].mxu0
  %v369 = vadd.f32 %v326, %v368
  %v370 = vpop.f32.mrb[0].mxu0
  %v371 = vpop.f32.mrb[0].mxu0
  %v372 = vpop.f32.mrb[0].mxu0
  %373 = vdwg.mxu0
  %v374 = vadd.f32 %v85, %v265
  %v375 = vxor.u32 %v374, 2147483648
  %v376 = vmul.f32 %v375, 1.442695
  %v377 = vpow.pop %v376
  %v378 = vadd.f32 %v377, 1.0
  %v379 = vrcp.pop %v378
  %v380 = vmul.f32 1.0, %v379
  %v381 = vadd.f32 %v139, %v317
  %v382 = vxor.u32 %v381, 2147483648
  %v383 = vmul.f32 %v382, 1.442695
  %v384 = vpow.pop %v383
  %v385 = vadd.f32 %v384, 1.0
  %v386 = vrcp.pop %v385
  %v387 = vmul.f32 1.0, %v386
  %v388 = vmul.f32 %v380, %v369
  %v389 = vadd.f32 %v193, %v388
  %v390 = vtanh.pop %v389
  %v391 = vsub.f32 1.0, %v387
  %v392 = vmul.f32 %v391, %v390
  %v393 = vmul.f32 %v387, %v212
  %v394 = vadd.f32 %v392, %v393
  %v395 = vpack.c.bf16 %v394, %v394
  %vm396 = vcmask 122880
  %397 = vst.msk [vmem:[%s5] sm:$0x1] %vm396, %v395
  %v399 = vsel %vm226, %v395, 0
  %401 = vmatprep.subr.bf16.mxu0 0
  %402 = vmatpush1.bf16.msra.mxu0 %v224
  %403 = vmatprep.subr.bf16.mxu0 0
  %404 = vmatpush1.bf16.msra.mxu0 0
  %405 = vmatprep.subr.bf16.mxu0 0
  %406 = vmatpush1.bf16.msra.mxu0 0
  %407 = vmatprep.subr.bf16.mxu0 0
  %408 = vmatpush1.bf16.msra.mxu0 0
  %409 = vmatprep.subr.bf16.mxu0 0
  %410 = vmatpush1.bf16.msra.mxu0 0
  %411 = vmatprep.subr.bf16.mxu0 0
  %412 = vmatpush1.bf16.msra.mxu0 0
  %413 = vmatprep.subr.bf16.mxu0 0
  %414 = vmatpush1.bf16.msra.mxu0 0
  %415 = vmatprep.subr.bf16.mxu0 0
  %416 = vmatpush1.bf16.msra.mxu0 0
  %417 = vmatprep.subr.bf16.mxu0 0
  %418 = vmatpush1.bf16.msra.mxu0 0
  %419 = vmatprep.subr.bf16.mxu0 0
  %420 = vmatpush1.bf16.msra.mxu0 0
  %421 = vmatprep.subr.bf16.mxu0 0
  %422 = vmatpush1.bf16.msra.mxu0 0
  %423 = vmatprep.subr.bf16.mxu0 0
  %424 = vmatpush1.bf16.msra.mxu0 0
  %425 = vmatprep.subr.bf16.mxu0 0
  %426 = vmatpush1.bf16.msra.mxu0 0
  %427 = vmatprep.subr.bf16.mxu0 0
  %428 = vmatpush1.bf16.msra.mxu0 0
  %429 = vmatprep.subr.bf16.mxu0 0
  %430 = vmatpush1.bf16.msra.mxu0 0
  %431 = vmatprep.subr.bf16.mxu0 0
  %432 = vmatpush1.bf16.msra.mxu0 0
  %433 = vmatprep.mubr.bf16.mxu0 0
  %434 = vmatmul.mubr.bf16.gmra.mrb[0].mxu0 %v399
  %v435 = vpop.f32.mrb[0].mxu0
  %v436 = vadd.f32 %v218, %v435
  %v437 = vpop.f32.mrb[0].mxu0
  %v438 = vpop.f32.mrb[0].mxu0
  %v439 = vpop.f32.mrb[0].mxu0
  %440 = vdwg.mxu0
  %441 = vmatprep.subr.bf16.mxu0 0
  %442 = vmatpush1.bf16.msra.mxu0 %v280
  %443 = vmatprep.subr.bf16.mxu0 0
  %444 = vmatpush1.bf16.msra.mxu0 0
  %445 = vmatprep.subr.bf16.mxu0 0
  %446 = vmatpush1.bf16.msra.mxu0 0
  %447 = vmatprep.subr.bf16.mxu0 0
  %448 = vmatpush1.bf16.msra.mxu0 0
  %449 = vmatprep.subr.bf16.mxu0 0
  %450 = vmatpush1.bf16.msra.mxu0 0
  %451 = vmatprep.subr.bf16.mxu0 0
  %452 = vmatpush1.bf16.msra.mxu0 0
  %453 = vmatprep.subr.bf16.mxu0 0
  %454 = vmatpush1.bf16.msra.mxu0 0
  %455 = vmatprep.subr.bf16.mxu0 0
  %456 = vmatpush1.bf16.msra.mxu0 0
  %457 = vmatprep.subr.bf16.mxu0 0
  %458 = vmatpush1.bf16.msra.mxu0 0
  %459 = vmatprep.subr.bf16.mxu0 0
  %460 = vmatpush1.bf16.msra.mxu0 0
  %461 = vmatprep.subr.bf16.mxu0 0
  %462 = vmatpush1.bf16.msra.mxu0 0
  %463 = vmatprep.subr.bf16.mxu0 0
  %464 = vmatpush1.bf16.msra.mxu0 0
  %465 = vmatprep.subr.bf16.mxu0 0
  %466 = vmatpush1.bf16.msra.mxu0 0
  %467 = vmatprep.subr.bf16.mxu0 0
  %468 = vmatpush1.bf16.msra.mxu0 0
  %469 = vmatprep.subr.bf16.mxu0 0
  %470 = vmatpush1.bf16.msra.mxu0 0
  %471 = vmatprep.subr.bf16.mxu0 0
  %472 = vmatpush1.bf16.msra.mxu0 0
  %473 = vmatprep.mubr.bf16.mxu0 0
  %474 = vmatmul.mubr.bf16.gmra.mrb[0].mxu0 %v399
  %v475 = vpop.f32.mrb[0].mxu0
  %v476 = vadd.f32 %v274, %v475
  %v477 = vpop.f32.mrb[0].mxu0
  %v478 = vpop.f32.mrb[0].mxu0
  %v479 = vpop.f32.mrb[0].mxu0
  %480 = vdwg.mxu0
  %481 = vmatprep.subr.bf16.mxu0 0
  %482 = vmatpush1.bf16.msra.mxu0 %v332
  %483 = vmatprep.subr.bf16.mxu0 0
  %484 = vmatpush1.bf16.msra.mxu0 0
  %485 = vmatprep.subr.bf16.mxu0 0
  %486 = vmatpush1.bf16.msra.mxu0 0
  %487 = vmatprep.subr.bf16.mxu0 0
  %488 = vmatpush1.bf16.msra.mxu0 0
  %489 = vmatprep.subr.bf16.mxu0 0
  %490 = vmatpush1.bf16.msra.mxu0 0
  %491 = vmatprep.subr.bf16.mxu0 0
  %492 = vmatpush1.bf16.msra.mxu0 0
  %493 = vmatprep.subr.bf16.mxu0 0
  %494 = vmatpush1.bf16.msra.mxu0 0
  %495 = vmatprep.subr.bf16.mxu0 0
  %496 = vmatpush1.bf16.msra.mxu0 0
  %497 = vmatprep.subr.bf16.mxu0 0
  %498 = vmatpush1.bf16.msra.mxu0 0
  %499 = vmatprep.subr.bf16.mxu0 0
  %500 = vmatpush1.bf16.msra.mxu0 0
  %501 = vmatprep.subr.bf16.mxu0 0
  %502 = vmatpush1.bf16.msra.mxu0 0
  %503 = vmatprep.subr.bf16.mxu0 0
  %504 = vmatpush1.bf16.msra.mxu0 0
  %505 = vmatprep.subr.bf16.mxu0 0
  %506 = vmatpush1.bf16.msra.mxu0 0
  %507 = vmatprep.subr.bf16.mxu0 0
  %508 = vmatpush1.bf16.msra.mxu0 0
  %509 = vmatprep.subr.bf16.mxu0 0
  %510 = vmatpush1.bf16.msra.mxu0 0
  %511 = vmatprep.subr.bf16.mxu0 0
  %512 = vmatpush1.bf16.msra.mxu0 0
  %513 = vmatprep.mubr.bf16.mxu0 0
  %514 = vmatmul.mubr.bf16.gmra.mrb[0].mxu0 %v399
  %v515 = vpop.f32.mrb[0].mxu0
  %v516 = vadd.f32 %v326, %v515
  %v517 = vpop.f32.mrb[0].mxu0
  %v518 = vpop.f32.mrb[0].mxu0
  %v519 = vpop.f32.mrb[0].mxu0
  %520 = vdwg.mxu0
  %v522 = vrot.slane %v436, 6
  %v524 = vadd.f32 %v85, %v522
  %v525 = vxor.u32 %v524, 2147483648
  %v526 = vmul.f32 %v525, 1.442695
  %v527 = vpow.pop %v526
  %v528 = vadd.f32 %v527, 1.0
  %v529 = vrcp.pop %v528
  %v530 = vmul.f32 1.0, %v529
  %v532 = vrot.slane %v476, 6
  %v534 = vadd.f32 %v139, %v532
  %v535 = vxor.u32 %v534, 2147483648
  %v536 = vmul.f32 %v535, 1.442695
  %v537 = vpow.pop %v536
  %v538 = vadd.f32 %v537, 1.0
  %v539 = vrcp.pop %v538
  %v540 = vmul.f32 1.0, %v539
  %v542 = vrot.slane %v516, 6
  %v544 = vmul.f32 %v530, %v542
  %v545 = vadd.f32 %v193, %v544
  %v546 = vtanh.pop %v545
  %v547 = vsub.f32 1.0, %v540
  %v548 = vmul.f32 %v547, %v546
  %v550 = vrot.slane %v394, 6
  %v552 = vmul.f32 %v540, %v550
  %v553 = vadd.f32 %v548, %v552
  %v554 = vpack.c.bf16 %v553, %v553
  %vm555 = vcmask 123905
  %556 = vst.msk [vmem:[%s5] sm:$0x2] %vm555, %v554
  %v558 = vrot.slane %v554, 1
  %v560 = vsel %vm226, %v558, 0
  %562 = vmatprep.subr.bf16.mxu0 0
  %563 = vmatpush1.bf16.msra.mxu0 %v224
  %564 = vmatprep.subr.bf16.mxu0 0
  %565 = vmatpush1.bf16.msra.mxu0 0
  %566 = vmatprep.subr.bf16.mxu0 0
  %567 = vmatpush1.bf16.msra.mxu0 0
  %568 = vmatprep.subr.bf16.mxu0 0
  %569 = vmatpush1.bf16.msra.mxu0 0
  %570 = vmatprep.subr.bf16.mxu0 0
  %571 = vmatpush1.bf16.msra.mxu0 0
  %572 = vmatprep.subr.bf16.mxu0 0
  %573 = vmatpush1.bf16.msra.mxu0 0
  %574 = vmatprep.subr.bf16.mxu0 0
  %575 = vmatpush1.bf16.msra.mxu0 0
  %576 = vmatprep.subr.bf16.mxu0 0
  %577 = vmatpush1.bf16.msra.mxu0 0
  %578 = vmatprep.subr.bf16.mxu0 0
  %579 = vmatpush1.bf16.msra.mxu0 0
  %580 = vmatprep.subr.bf16.mxu0 0
  %581 = vmatpush1.bf16.msra.mxu0 0
  %582 = vmatprep.subr.bf16.mxu0 0
  %583 = vmatpush1.bf16.msra.mxu0 0
  %584 = vmatprep.subr.bf16.mxu0 0
  %585 = vmatpush1.bf16.msra.mxu0 0
  %586 = vmatprep.subr.bf16.mxu0 0
  %587 = vmatpush1.bf16.msra.mxu0 0
  %588 = vmatprep.subr.bf16.mxu0 0
  %589 = vmatpush1.bf16.msra.mxu0 0
  %590 = vmatprep.subr.bf16.mxu0 0
  %591 = vmatpush1.bf16.msra.mxu0 0
  %592 = vmatprep.subr.bf16.mxu0 0
  %593 = vmatpush1.bf16.msra.mxu0 0
  %594 = vmatprep.mubr.bf16.mxu0 0
  %595 = vmatmul.mubr.bf16.gmra.mrb[0].mxu0 %v560
  %v596 = vpop.f32.mrb[0].mxu0
  %v597 = vadd.f32 %v218, %v596
  %v598 = vpop.f32.mrb[0].mxu0
  %v599 = vpop.f32.mrb[0].mxu0
  %v600 = vpop.f32.mrb[0].mxu0
  %601 = vdwg.mxu0
  %602 = vmatprep.subr.bf16.mxu0 0
  %603 = vmatpush1.bf16.msra.mxu0 %v280
  %604 = vmatprep.subr.bf16.mxu0 0
  %605 = vmatpush1.bf16.msra.mxu0 0
  %606 = vmatprep.subr.bf16.mxu0 0
  %607 = vmatpush1.bf16.msra.mxu0 0
  %608 = vmatprep.subr.bf16.mxu0 0
  %609 = vmatpush1.bf16.msra.mxu0 0
  %610 = vmatprep.subr.bf16.mxu0 0
  %611 = vmatpush1.bf16.msra.mxu0 0
  %612 = vmatprep.subr.bf16.mxu0 0
  %613 = vmatpush1.bf16.msra.mxu0 0
  %614 = vmatprep.subr.bf16.mxu0 0
  %615 = vmatpush1.bf16.msra.mxu0 0
  %616 = vmatprep.subr.bf16.mxu0 0
  %617 = vmatpush1.bf16.msra.mxu0 0
  %618 = vmatprep.subr.bf16.mxu0 0
  %619 = vmatpush1.bf16.msra.mxu0 0
  %620 = vmatprep.subr.bf16.mxu0 0
  %621 = vmatpush1.bf16.msra.mxu0 0
  %622 = vmatprep.subr.bf16.mxu0 0
  %623 = vmatpush1.bf16.msra.mxu0 0
  %624 = vmatprep.subr.bf16.mxu0 0
  %625 = vmatpush1.bf16.msra.mxu0 0
  %626 = vmatprep.subr.bf16.mxu0 0
  %627 = vmatpush1.bf16.msra.mxu0 0
  %628 = vmatprep.subr.bf16.mxu0 0
  %629 = vmatpush1.bf16.msra.mxu0 0
  %630 = vmatprep.subr.bf16.mxu0 0
  %631 = vmatpush1.bf16.msra.mxu0 0
  %632 = vmatprep.subr.bf16.mxu0 0
  %633 = vmatpush1.bf16.msra.mxu0 0
  %634 = vmatprep.mubr.bf16.mxu0 0
  %635 = vmatmul.mubr.bf16.gmra.mrb[0].mxu0 %v560
  %v636 = vpop.f32.mrb[0].mxu0
  %v637 = vadd.f32 %v274, %v636
  %v638 = vpop.f32.mrb[0].mxu0
  %v639 = vpop.f32.mrb[0].mxu0
  %v640 = vpop.f32.mrb[0].mxu0
  %641 = vdwg.mxu0
  %642 = vmatprep.subr.bf16.mxu0 0
  %643 = vmatpush1.bf16.msra.mxu0 %v332
  %644 = vmatprep.subr.bf16.mxu0 0
  %645 = vmatpush1.bf16.msra.mxu0 0
  %646 = vmatprep.subr.bf16.mxu0 0
  %647 = vmatpush1.bf16.msra.mxu0 0
  %648 = vmatprep.subr.bf16.mxu0 0
  %649 = vmatpush1.bf16.msra.mxu0 0
  %650 = vmatprep.subr.bf16.mxu0 0
  %651 = vmatpush1.bf16.msra.mxu0 0
  %652 = vmatprep.subr.bf16.mxu0 0
  %653 = vmatpush1.bf16.msra.mxu0 0
  %654 = vmatprep.subr.bf16.mxu0 0
  %655 = vmatpush1.bf16.msra.mxu0 0
  %656 = vmatprep.subr.bf16.mxu0 0
  %657 = vmatpush1.bf16.msra.mxu0 0
  %658 = vmatprep.subr.bf16.mxu0 0
  %659 = vmatpush1.bf16.msra.mxu0 0
  %660 = vmatprep.subr.bf16.mxu0 0
  %661 = vmatpush1.bf16.msra.mxu0 0
  %662 = vmatprep.subr.bf16.mxu0 0
  %663 = vmatpush1.bf16.msra.mxu0 0
  %664 = vmatprep.subr.bf16.mxu0 0
  %665 = vmatpush1.bf16.msra.mxu0 0
  %666 = vmatprep.subr.bf16.mxu0 0
  %667 = vmatpush1.bf16.msra.mxu0 0
  %668 = vmatprep.subr.bf16.mxu0 0
  %669 = vmatpush1.bf16.msra.mxu0 0
  %670 = vmatprep.subr.bf16.mxu0 0
  %671 = vmatpush1.bf16.msra.mxu0 0
  %672 = vmatprep.subr.bf16.mxu0 0
  %673 = vmatpush1.bf16.msra.mxu0 0
  %674 = vmatprep.mubr.bf16.mxu0 0
  %675 = vmatmul.mubr.bf16.gmra.mrb[0].mxu0 %v560
  %v676 = vpop.f32.mrb[0].mxu0
  %v677 = vadd.f32 %v326, %v676
  %v678 = vpop.f32.mrb[0].mxu0
  %v679 = vpop.f32.mrb[0].mxu0
  %v680 = vpop.f32.mrb[0].mxu0
  %681 = vdwg.mxu0
  %v683 = vrot.slane %v597, 4
  %v685 = vadd.f32 %v85, %v683
  %v686 = vxor.u32 %v685, 2147483648
  %v687 = vmul.f32 %v686, 1.442695
  %v688 = vpow.pop %v687
  %v689 = vadd.f32 %v688, 1.0
  %v690 = vrcp.pop %v689
  %v691 = vmul.f32 1.0, %v690
  %v693 = vrot.slane %v637, 4
  %v695 = vadd.f32 %v139, %v693
  %v696 = vxor.u32 %v695, 2147483648
  %v697 = vmul.f32 %v696, 1.442695
  %v698 = vpow.pop %v697
  %v699 = vadd.f32 %v698, 1.0
  %v700 = vrcp.pop %v699
  %v701 = vmul.f32 1.0, %v700
  %v703 = vrot.slane %v677, 4
  %v705 = vmul.f32 %v691, %v703
  %v706 = vadd.f32 %v193, %v705
  %v707 = vtanh.pop %v706
  %v708 = vsub.f32 1.0, %v701
  %v709 = vmul.f32 %v708, %v707
  %v711 = vrot.slane %v553, 6
  %v713 = vmul.f32 %v701, %v711
  %v714 = vadd.f32 %v709, %v713
  %v715 = vpack.c.bf16 %v714, %v714
  %vm716 = vcmask 124930
  %717 = vst.msk [vmem:[%s5] sm:$0x4] %vm716, %v715
  %v719 = vrot.slane %v715, 2
  %v721 = vsel %vm226, %v719, 0
  %723 = vmatprep.subr.bf16.mxu0 0
  %724 = vmatpush1.bf16.msra.mxu0 %v224
  %725 = vmatprep.subr.bf16.mxu0 0
  %726 = vmatpush1.bf16.msra.mxu0 0
  %727 = vmatprep.subr.bf16.mxu0 0
  %728 = vmatpush1.bf16.msra.mxu0 0
  %729 = vmatprep.subr.bf16.mxu0 0
  %730 = vmatpush1.bf16.msra.mxu0 0
  %731 = vmatprep.subr.bf16.mxu0 0
  %732 = vmatpush1.bf16.msra.mxu0 0
  %733 = vmatprep.subr.bf16.mxu0 0
  %734 = vmatpush1.bf16.msra.mxu0 0
  %735 = vmatprep.subr.bf16.mxu0 0
  %736 = vmatpush1.bf16.msra.mxu0 0
  %737 = vmatprep.subr.bf16.mxu0 0
  %738 = vmatpush1.bf16.msra.mxu0 0
  %739 = vmatprep.subr.bf16.mxu0 0
  %740 = vmatpush1.bf16.msra.mxu0 0
  %741 = vmatprep.subr.bf16.mxu0 0
  %742 = vmatpush1.bf16.msra.mxu0 0
  %743 = vmatprep.subr.bf16.mxu0 0
  %744 = vmatpush1.bf16.msra.mxu0 0
  %745 = vmatprep.subr.bf16.mxu0 0
  %746 = vmatpush1.bf16.msra.mxu0 0
  %747 = vmatprep.subr.bf16.mxu0 0
  %748 = vmatpush1.bf16.msra.mxu0 0
  %749 = vmatprep.subr.bf16.mxu0 0
  %750 = vmatpush1.bf16.msra.mxu0 0
  %751 = vmatprep.subr.bf16.mxu0 0
  %752 = vmatpush1.bf16.msra.mxu0 0
  %753 = vmatprep.subr.bf16.mxu0 0
  %754 = vmatpush1.bf16.msra.mxu0 0
  %755 = vmatprep.mubr.bf16.mxu0 0
  %756 = vmatmul.mubr.bf16.gmra.mrb[0].mxu0 %v721
  %v757 = vpop.f32.mrb[0].mxu0
  %v758 = vadd.f32 %v218, %v757
  %v759 = vpop.f32.mrb[0].mxu0
  %v760 = vpop.f32.mrb[0].mxu0
  %v761 = vpop.f32.mrb[0].mxu0
  %762 = vdwg.mxu0
  %763 = vmatprep.subr.bf16.mxu0 0
  %764 = vmatpush1.bf16.msra.mxu0 %v280
  %765 = vmatprep.subr.bf16.mxu0 0
  %766 = vmatpush1.bf16.msra.mxu0 0
  %767 = vmatprep.subr.bf16.mxu0 0
  %768 = vmatpush1.bf16.msra.mxu0 0
  %769 = vmatprep.subr.bf16.mxu0 0
  %770 = vmatpush1.bf16.msra.mxu0 0
  %771 = vmatprep.subr.bf16.mxu0 0
  %772 = vmatpush1.bf16.msra.mxu0 0
  %773 = vmatprep.subr.bf16.mxu0 0
  %774 = vmatpush1.bf16.msra.mxu0 0
  %775 = vmatprep.subr.bf16.mxu0 0
  %776 = vmatpush1.bf16.msra.mxu0 0
  %777 = vmatprep.subr.bf16.mxu0 0
  %778 = vmatpush1.bf16.msra.mxu0 0
  %779 = vmatprep.subr.bf16.mxu0 0
  %780 = vmatpush1.bf16.msra.mxu0 0
  %781 = vmatprep.subr.bf16.mxu0 0
  %782 = vmatpush1.bf16.msra.mxu0 0
  %783 = vmatprep.subr.bf16.mxu0 0
  %784 = vmatpush1.bf16.msra.mxu0 0
  %785 = vmatprep.subr.bf16.mxu0 0
  %786 = vmatpush1.bf16.msra.mxu0 0
  %787 = vmatprep.subr.bf16.mxu0 0
  %788 = vmatpush1.bf16.msra.mxu0 0
  %789 = vmatprep.subr.bf16.mxu0 0
  %790 = vmatpush1.bf16.msra.mxu0 0
  %791 = vmatprep.subr.bf16.mxu0 0
  %792 = vmatpush1.bf16.msra.mxu0 0
  %793 = vmatprep.subr.bf16.mxu0 0
  %794 = vmatpush1.bf16.msra.mxu0 0
  %795 = vmatprep.mubr.bf16.mxu0 0
  %796 = vmatmul.mubr.bf16.gmra.mrb[0].mxu0 %v721
  %v797 = vpop.f32.mrb[0].mxu0
  %v798 = vadd.f32 %v274, %v797
  %v799 = vpop.f32.mrb[0].mxu0
  %v800 = vpop.f32.mrb[0].mxu0
  %v801 = vpop.f32.mrb[0].mxu0
  %802 = vdwg.mxu0
  %803 = vmatprep.subr.bf16.mxu0 0
  %804 = vmatpush1.bf16.msra.mxu0 %v332
  %805 = vmatprep.subr.bf16.mxu0 0
  %806 = vmatpush1.bf16.msra.mxu0 0
  %807 = vmatprep.subr.bf16.mxu0 0
  %808 = vmatpush1.bf16.msra.mxu0 0
  %809 = vmatprep.subr.bf16.mxu0 0
  %810 = vmatpush1.bf16.msra.mxu0 0
  %811 = vmatprep.subr.bf16.mxu0 0
  %812 = vmatpush1.bf16.msra.mxu0 0
  %813 = vmatprep.subr.bf16.mxu0 0
  %814 = vmatpush1.bf16.msra.mxu0 0
  %815 = vmatprep.subr.bf16.mxu0 0
  %816 = vmatpush1.bf16.msra.mxu0 0
  %817 = vmatprep.subr.bf16.mxu0 0
  %818 = vmatpush1.bf16.msra.mxu0 0
  %819 = vmatprep.subr.bf16.mxu0 0
  %820 = vmatpush1.bf16.msra.mxu0 0
  %821 = vmatprep.subr.bf16.mxu0 0
  %822 = vmatpush1.bf16.msra.mxu0 0
  %823 = vmatprep.subr.bf16.mxu0 0
  %824 = vmatpush1.bf16.msra.mxu0 0
  %825 = vmatprep.subr.bf16.mxu0 0
  %826 = vmatpush1.bf16.msra.mxu0 0
  %827 = vmatprep.subr.bf16.mxu0 0
  %828 = vmatpush1.bf16.msra.mxu0 0
  %829 = vmatprep.subr.bf16.mxu0 0
  %830 = vmatpush1.bf16.msra.mxu0 0
  %831 = vmatprep.subr.bf16.mxu0 0
  %832 = vmatpush1.bf16.msra.mxu0 0
  %833 = vmatprep.subr.bf16.mxu0 0
  %834 = vmatpush1.bf16.msra.mxu0 0
  %835 = vmatprep.mubr.bf16.mxu0 0
  %836 = vmatmul.mubr.bf16.gmra.mrb[0].mxu0 %v721
  %v837 = vpop.f32.mrb[0].mxu0
  %v838 = vadd.f32 %v326, %v837
  %v839 = vpop.f32.mrb[0].mxu0
  %v840 = vpop.f32.mrb[0].mxu0
  %v841 = vpop.f32.mrb[0].mxu0
  %842 = vdwg.mxu0
  %v844 = vrot.slane %v758, 2
  %v846 = vadd.f32 %v85, %v844
  %v847 = vxor.u32 %v846, 2147483648
  %v848 = vmul.f32 %v847, 1.442695
  %v849 = vpow.pop %v848
  %v850 = vadd.f32 %v849, 1.0
  %v851 = vrcp.pop %v850
  %v852 = vmul.f32 1.0, %v851
  %v854 = vrot.slane %v798, 2
  %v856 = vadd.f32 %v139, %v854
  %v857 = vxor.u32 %v856, 2147483648
  %v858 = vmul.f32 %v857, 1.442695
  %v859 = vpow.pop %v858
  %v860 = vadd.f32 %v859, 1.0
  %v861 = vrcp.pop %v860
  %v862 = vmul.f32 1.0, %v861
  %v864 = vrot.slane %v838, 2
  %v866 = vmul.f32 %v852, %v864
  %v867 = vadd.f32 %v193, %v866
  %v868 = vtanh.pop %v867
  %v869 = vsub.f32 1.0, %v862
  %v870 = vmul.f32 %v869, %v868
  %v872 = vrot.slane %v714, 6
  %v874 = vmul.f32 %v862, %v872
  %v875 = vadd.f32 %v870, %v874
  %v876 = vpack.c.bf16 %v875, %v875
  %vm877 = vcmask 125955
  %878 = vst.msk [vmem:[%s5] sm:$0x8] %vm877, %v876
  %v880 = vrot.slane %v876, 3
  %v882 = vsel %vm226, %v880, 0
  %884 = vmatprep.subr.bf16.mxu0 0
  %885 = vmatpush1.bf16.msra.mxu0 %v224
  %886 = vmatprep.subr.bf16.mxu0 0
  %887 = vmatpush1.bf16.msra.mxu0 0
  %888 = vmatprep.subr.bf16.mxu0 0
  %889 = vmatpush1.bf16.msra.mxu0 0
  %890 = vmatprep.subr.bf16.mxu0 0
  %891 = vmatpush1.bf16.msra.mxu0 0
  %892 = vmatprep.subr.bf16.mxu0 0
  %893 = vmatpush1.bf16.msra.mxu0 0
  %894 = vmatprep.subr.bf16.mxu0 0
  %895 = vmatpush1.bf16.msra.mxu0 0
  %896 = vmatprep.subr.bf16.mxu0 0
  %897 = vmatpush1.bf16.msra.mxu0 0
  %898 = vmatprep.subr.bf16.mxu0 0
  %899 = vmatpush1.bf16.msra.mxu0 0
  %900 = vmatprep.subr.bf16.mxu0 0
  %901 = vmatpush1.bf16.msra.mxu0 0
  %902 = vmatprep.subr.bf16.mxu0 0
  %903 = vmatpush1.bf16.msra.mxu0 0
  %904 = vmatprep.subr.bf16.mxu0 0
  %905 = vmatpush1.bf16.msra.mxu0 0
  %906 = vmatprep.subr.bf16.mxu0 0
  %907 = vmatpush1.bf16.msra.mxu0 0
  %908 = vmatprep.subr.bf16.mxu0 0
  %909 = vmatpush1.bf16.msra.mxu0 0
  %910 = vmatprep.subr.bf16.mxu0 0
  %911 = vmatpush1.bf16.msra.mxu0 0
  %912 = vmatprep.subr.bf16.mxu0 0
  %913 = vmatpush1.bf16.msra.mxu0 0
  %914 = vmatprep.subr.bf16.mxu0 0
  %915 = vmatpush1.bf16.msra.mxu0 0
  %916 = vmatprep.mubr.bf16.mxu0 0
  %917 = vmatmul.mubr.bf16.gmra.mrb[0].mxu0 %v882
  %v918 = vpop.f32.mrb[0].mxu0
  %v919 = vadd.f32 %v218, %v918
  %v920 = vpop.f32.mrb[0].mxu0
  %v921 = vpop.f32.mrb[0].mxu0
  %v922 = vpop.f32.mrb[0].mxu0
  %923 = vdwg.mxu0
  %924 = vmatprep.subr.bf16.mxu0 0
  %925 = vmatpush1.bf16.msra.mxu0 %v280
  %926 = vmatprep.subr.bf16.mxu0 0
  %927 = vmatpush1.bf16.msra.mxu0 0
  %928 = vmatprep.subr.bf16.mxu0 0
  %929 = vmatpush1.bf16.msra.mxu0 0
  %930 = vmatprep.subr.bf16.mxu0 0
  %931 = vmatpush1.bf16.msra.mxu0 0
  %932 = vmatprep.subr.bf16.mxu0 0
  %933 = vmatpush1.bf16.msra.mxu0 0
  %934 = vmatprep.subr.bf16.mxu0 0
  %935 = vmatpush1.bf16.msra.mxu0 0
  %936 = vmatprep.subr.bf16.mxu0 0
  %937 = vmatpush1.bf16.msra.mxu0 0
  %938 = vmatprep.subr.bf16.mxu0 0
  %939 = vmatpush1.bf16.msra.mxu0 0
  %940 = vmatprep.subr.bf16.mxu0 0
  %941 = vmatpush1.bf16.msra.mxu0 0
  %942 = vmatprep.subr.bf16.mxu0 0
  %943 = vmatpush1.bf16.msra.mxu0 0
  %944 = vmatprep.subr.bf16.mxu0 0
  %945 = vmatpush1.bf16.msra.mxu0 0
  %946 = vmatprep.subr.bf16.mxu0 0
  %947 = vmatpush1.bf16.msra.mxu0 0
  %948 = vmatprep.subr.bf16.mxu0 0
  %949 = vmatpush1.bf16.msra.mxu0 0
  %950 = vmatprep.subr.bf16.mxu0 0
  %951 = vmatpush1.bf16.msra.mxu0 0
  %952 = vmatprep.subr.bf16.mxu0 0
  %953 = vmatpush1.bf16.msra.mxu0 0
  %954 = vmatprep.subr.bf16.mxu0 0
  %955 = vmatpush1.bf16.msra.mxu0 0
  %956 = vmatprep.mubr.bf16.mxu0 0
  %957 = vmatmul.mubr.bf16.gmra.mrb[0].mxu0 %v882
  %v958 = vpop.f32.mrb[0].mxu0
  %v959 = vadd.f32 %v274, %v958
  %v960 = vpop.f32.mrb[0].mxu0
  %v961 = vpop.f32.mrb[0].mxu0
  %v962 = vpop.f32.mrb[0].mxu0
  %963 = vdwg.mxu0
  %964 = vmatprep.subr.bf16.mxu0 0
  %965 = vmatpush1.bf16.msra.mxu0 %v332
  %966 = vmatprep.subr.bf16.mxu0 0
  %967 = vmatpush1.bf16.msra.mxu0 0
  %968 = vmatprep.subr.bf16.mxu0 0
  %969 = vmatpush1.bf16.msra.mxu0 0
  %970 = vmatprep.subr.bf16.mxu0 0
  %971 = vmatpush1.bf16.msra.mxu0 0
  %972 = vmatprep.subr.bf16.mxu0 0
  %973 = vmatpush1.bf16.msra.mxu0 0
  %974 = vmatprep.subr.bf16.mxu0 0
  %975 = vmatpush1.bf16.msra.mxu0 0
  %976 = vmatprep.subr.bf16.mxu0 0
  %977 = vmatpush1.bf16.msra.mxu0 0
  %978 = vmatprep.subr.bf16.mxu0 0
  %979 = vmatpush1.bf16.msra.mxu0 0
  %980 = vmatprep.subr.bf16.mxu0 0
  %981 = vmatpush1.bf16.msra.mxu0 0
  %982 = vmatprep.subr.bf16.mxu0 0
  %983 = vmatpush1.bf16.msra.mxu0 0
  %984 = vmatprep.subr.bf16.mxu0 0
  %985 = vmatpush1.bf16.msra.mxu0 0
  %986 = vmatprep.subr.bf16.mxu0 0
  %987 = vmatpush1.bf16.msra.mxu0 0
  %988 = vmatprep.subr.bf16.mxu0 0
  %989 = vmatpush1.bf16.msra.mxu0 0
  %990 = vmatprep.subr.bf16.mxu0 0
  %991 = vmatpush1.bf16.msra.mxu0 0
  %992 = vmatprep.subr.bf16.mxu0 0
  %993 = vmatpush1.bf16.msra.mxu0 0
  %994 = vmatprep.subr.bf16.mxu0 0
  %995 = vmatpush1.bf16.msra.mxu0 0
  %996 = vmatprep.mubr.bf16.mxu0 0
  %997 = vmatmul.mubr.bf16.gmra.mrb[0].mxu0 %v882
  %v998 = vpop.f32.mrb[0].mxu0
  %v999 = vadd.f32 %v326, %v998
  %v1000 = vpop.f32.mrb[0].mxu0
  %v1001 = vpop.f32.mrb[0].mxu0
  %v1002 = vpop.f32.mrb[0].mxu0
  %1003 = vdwg.mxu0
  %v1004 = vadd.f32 %v88, %v919
  %v1005 = vxor.u32 %v1004, 2147483648
  %v1006 = vmul.f32 %v1005, 1.442695
  %v1007 = vpow.pop %v1006
  %v1008 = vadd.f32 %v1007, 1.0
  %v1009 = vrcp.pop %v1008
  %v1010 = vmul.f32 1.0, %v1009
  %v1011 = vadd.f32 %v142, %v959
  %v1012 = vxor.u32 %v1011, 2147483648
  %v1013 = vmul.f32 %v1012, 1.442695
  %v1014 = vpow.pop %v1013
  %v1015 = vadd.f32 %v1014, 1.0
  %v1016 = vrcp.pop %v1015
  %v1017 = vmul.f32 1.0, %v1016
  %v1018 = vmul.f32 %v1010, %v999
  %v1019 = vadd.f32 %v196, %v1018
  %v1020 = vtanh.pop %v1019
  %v1021 = vsub.f32 1.0, %v1017
  %v1022 = vmul.f32 %v1021, %v1020
  %v1024 = vrot.slane %v875, 6
  %v1026 = vmul.f32 %v1017, %v1024
  %v1027 = vadd.f32 %v1022, %v1026
  %v1028 = vpack.c.bf16 %v1027, %v1027
  %1029 = vst.msk [vmem:[%s5 + $0x4] sm:$0x1] %vm396, %v1028
  %v1031 = vsel %vm226, %v1028, 0
  %1033 = vmatprep.subr.bf16.mxu0 0
  %1034 = vmatpush1.bf16.msra.mxu0 %v224
  %1035 = vmatprep.subr.bf16.mxu0 0
  %1036 = vmatpush1.bf16.msra.mxu0 0
  %1037 = vmatprep.subr.bf16.mxu0 0
  %1038 = vmatpush1.bf16.msra.mxu0 0
  %1039 = vmatprep.subr.bf16.mxu0 0
  %1040 = vmatpush1.bf16.msra.mxu0 0
  %1041 = vmatprep.subr.bf16.mxu0 0
  %1042 = vmatpush1.bf16.msra.mxu0 0
  %1043 = vmatprep.subr.bf16.mxu0 0
  %1044 = vmatpush1.bf16.msra.mxu0 0
  %1045 = vmatprep.subr.bf16.mxu0 0
  %1046 = vmatpush1.bf16.msra.mxu0 0
  %1047 = vmatprep.subr.bf16.mxu0 0
  %1048 = vmatpush1.bf16.msra.mxu0 0
  %1049 = vmatprep.subr.bf16.mxu0 0
  %1050 = vmatpush1.bf16.msra.mxu0 0
  %1051 = vmatprep.subr.bf16.mxu0 0
  %1052 = vmatpush1.bf16.msra.mxu0 0
  %1053 = vmatprep.subr.bf16.mxu0 0
  %1054 = vmatpush1.bf16.msra.mxu0 0
  %1055 = vmatprep.subr.bf16.mxu0 0
  %1056 = vmatpush1.bf16.msra.mxu0 0
  %1057 = vmatprep.subr.bf16.mxu0 0
  %1058 = vmatpush1.bf16.msra.mxu0 0
  %1059 = vmatprep.subr.bf16.mxu0 0
  %1060 = vmatpush1.bf16.msra.mxu0 0
  %1061 = vmatprep.subr.bf16.mxu0 0
  %1062 = vmatpush1.bf16.msra.mxu0 0
  %1063 = vmatprep.subr.bf16.mxu0 0
  %1064 = vmatpush1.bf16.msra.mxu0 0
  %1065 = vmatprep.mubr.bf16.mxu0 0
  %1066 = vmatmul.mubr.bf16.gmra.mrb[0].mxu0 %v1031
  %v1067 = vpop.f32.mrb[0].mxu0
  %v1068 = vadd.f32 %v218, %v1067
  %v1069 = vpop.f32.mrb[0].mxu0
  %v1070 = vpop.f32.mrb[0].mxu0
  %v1071 = vpop.f32.mrb[0].mxu0
  %1072 = vdwg.mxu0
  %1073 = vmatprep.subr.bf16.mxu0 0
  %1074 = vmatpush1.bf16.msra.mxu0 %v280
  %1075 = vmatprep.subr.bf16.mxu0 0
  %1076 = vmatpush1.bf16.msra.mxu0 0
  %1077 = vmatprep.subr.bf16.mxu0 0
  %1078 = vmatpush1.bf16.msra.mxu0 0
  %1079 = vmatprep.subr.bf16.mxu0 0
  %1080 = vmatpush1.bf16.msra.mxu0 0
  %1081 = vmatprep.subr.bf16.mxu0 0
  %1082 = vmatpush1.bf16.msra.mxu0 0
  %1083 = vmatprep.subr.bf16.mxu0 0
  %1084 = vmatpush1.bf16.msra.mxu0 0
  %1085 = vmatprep.subr.bf16.mxu0 0
  %1086 = vmatpush1.bf16.msra.mxu0 0
  %1087 = vmatprep.subr.bf16.mxu0 0
  %1088 = vmatpush1.bf16.msra.mxu0 0
  %1089 = vmatprep.subr.bf16.mxu0 0
  %1090 = vmatpush1.bf16.msra.mxu0 0
  %1091 = vmatprep.subr.bf16.mxu0 0
  %1092 = vmatpush1.bf16.msra.mxu0 0
  %1093 = vmatprep.subr.bf16.mxu0 0
  %1094 = vmatpush1.bf16.msra.mxu0 0
  %1095 = vmatprep.subr.bf16.mxu0 0
  %1096 = vmatpush1.bf16.msra.mxu0 0
  %1097 = vmatprep.subr.bf16.mxu0 0
  %1098 = vmatpush1.bf16.msra.mxu0 0
  %1099 = vmatprep.subr.bf16.mxu0 0
  %1100 = vmatpush1.bf16.msra.mxu0 0
  %1101 = vmatprep.subr.bf16.mxu0 0
  %1102 = vmatpush1.bf16.msra.mxu0 0
  %1103 = vmatprep.subr.bf16.mxu0 0
  %1104 = vmatpush1.bf16.msra.mxu0 0
  %1105 = vmatprep.mubr.bf16.mxu0 0
  %1106 = vmatmul.mubr.bf16.gmra.mrb[0].mxu0 %v1031
  %v1107 = vpop.f32.mrb[0].mxu0
  %v1108 = vadd.f32 %v274, %v1107
  %v1109 = vpop.f32.mrb[0].mxu0
  %v1110 = vpop.f32.mrb[0].mxu0
  %v1111 = vpop.f32.mrb[0].mxu0
  %1112 = vdwg.mxu0
  %1113 = vmatprep.subr.bf16.mxu0 0
  %1114 = vmatpush1.bf16.msra.mxu0 %v332
  %1115 = vmatprep.subr.bf16.mxu0 0
  %1116 = vmatpush1.bf16.msra.mxu0 0
  %1117 = vmatprep.subr.bf16.mxu0 0
  %1118 = vmatpush1.bf16.msra.mxu0 0
  %1119 = vmatprep.subr.bf16.mxu0 0
  %1120 = vmatpush1.bf16.msra.mxu0 0
  %1121 = vmatprep.subr.bf16.mxu0 0
  %1122 = vmatpush1.bf16.msra.mxu0 0
  %1123 = vmatprep.subr.bf16.mxu0 0
  %1124 = vmatpush1.bf16.msra.mxu0 0
  %1125 = vmatprep.subr.bf16.mxu0 0
  %1126 = vmatpush1.bf16.msra.mxu0 0
  %1127 = vmatprep.subr.bf16.mxu0 0
  %1128 = vmatpush1.bf16.msra.mxu0 0
  %1129 = vmatprep.subr.bf16.mxu0 0
  %1130 = vmatpush1.bf16.msra.mxu0 0
  %1131 = vmatprep.subr.bf16.mxu0 0
  %1132 = vmatpush1.bf16.msra.mxu0 0
  %1133 = vmatprep.subr.bf16.mxu0 0
  %1134 = vmatpush1.bf16.msra.mxu0 0
  %1135 = vmatprep.subr.bf16.mxu0 0
  %1136 = vmatpush1.bf16.msra.mxu0 0
  %1137 = vmatprep.subr.bf16.mxu0 0
  %1138 = vmatpush1.bf16.msra.mxu0 0
  %1139 = vmatprep.subr.bf16.mxu0 0
  %1140 = vmatpush1.bf16.msra.mxu0 0
  %1141 = vmatprep.subr.bf16.mxu0 0
  %1142 = vmatpush1.bf16.msra.mxu0 0
  %1143 = vmatprep.subr.bf16.mxu0 0
  %1144 = vmatpush1.bf16.msra.mxu0 0
  %1145 = vmatprep.mubr.bf16.mxu0 0
  %1146 = vmatmul.mubr.bf16.gmra.mrb[0].mxu0 %v1031
  %v1147 = vpop.f32.mrb[0].mxu0
  %v1148 = vadd.f32 %v326, %v1147
  %v1149 = vpop.f32.mrb[0].mxu0
  %v1150 = vpop.f32.mrb[0].mxu0
  %v1151 = vpop.f32.mrb[0].mxu0
  %1152 = vdwg.mxu0
  %v1154 = vrot.slane %v1068, 6
  %v1156 = vadd.f32 %v88, %v1154
  %v1157 = vxor.u32 %v1156, 2147483648
  %v1158 = vmul.f32 %v1157, 1.442695
  %v1159 = vpow.pop %v1158
  %v1160 = vadd.f32 %v1159, 1.0
  %v1161 = vrcp.pop %v1160
  %v1162 = vmul.f32 1.0, %v1161
  %v1164 = vrot.slane %v1108, 6
  %v1166 = vadd.f32 %v142, %v1164
  %v1167 = vxor.u32 %v1166, 2147483648
  %v1168 = vmul.f32 %v1167, 1.442695
  %v1169 = vpow.pop %v1168
  %v1170 = vadd.f32 %v1169, 1.0
  %v1171 = vrcp.pop %v1170
  %v1172 = vmul.f32 1.0, %v1171
  %v1174 = vrot.slane %v1148, 6
  %v1176 = vmul.f32 %v1162, %v1174
  %v1177 = vadd.f32 %v196, %v1176
  %v1178 = vtanh.pop %v1177
  %v1179 = vsub.f32 1.0, %v1172
  %v1180 = vmul.f32 %v1179, %v1178
  %v1182 = vrot.slane %v1027, 6
  %v1184 = vmul.f32 %v1172, %v1182
  %v1185 = vadd.f32 %v1180, %v1184
  %v1186 = vpack.c.bf16 %v1185, %v1185
  %1187 = vst.msk [vmem:[%s5 + $0x4] sm:$0x2] %vm555, %v1186
  %v1189 = vrot.slane %v1186, 1
  %v1191 = vsel %vm226, %v1189, 0
  %1193 = vmatprep.subr.bf16.mxu0 0
  %1194 = vmatpush1.bf16.msra.mxu0 %v224
  %1195 = vmatprep.subr.bf16.mxu0 0
  %1196 = vmatpush1.bf16.msra.mxu0 0
  %1197 = vmatprep.subr.bf16.mxu0 0
  %1198 = vmatpush1.bf16.msra.mxu0 0
  %1199 = vmatprep.subr.bf16.mxu0 0
  %1200 = vmatpush1.bf16.msra.mxu0 0
  %1201 = vmatprep.subr.bf16.mxu0 0
  %1202 = vmatpush1.bf16.msra.mxu0 0
  %1203 = vmatprep.subr.bf16.mxu0 0
  %1204 = vmatpush1.bf16.msra.mxu0 0
  %1205 = vmatprep.subr.bf16.mxu0 0
  %1206 = vmatpush1.bf16.msra.mxu0 0
  %1207 = vmatprep.subr.bf16.mxu0 0
  %1208 = vmatpush1.bf16.msra.mxu0 0
  %1209 = vmatprep.subr.bf16.mxu0 0
  %1210 = vmatpush1.bf16.msra.mxu0 0
  %1211 = vmatprep.subr.bf16.mxu0 0
  %1212 = vmatpush1.bf16.msra.mxu0 0
  %1213 = vmatprep.subr.bf16.mxu0 0
  %1214 = vmatpush1.bf16.msra.mxu0 0
  %1215 = vmatprep.subr.bf16.mxu0 0
  %1216 = vmatpush1.bf16.msra.mxu0 0
  %1217 = vmatprep.subr.bf16.mxu0 0
  %1218 = vmatpush1.bf16.msra.mxu0 0
  %1219 = vmatprep.subr.bf16.mxu0 0
  %1220 = vmatpush1.bf16.msra.mxu0 0
  %1221 = vmatprep.subr.bf16.mxu0 0
  %1222 = vmatpush1.bf16.msra.mxu0 0
  %1223 = vmatprep.subr.bf16.mxu0 0
  %1224 = vmatpush1.bf16.msra.mxu0 0
  %1225 = vmatprep.mubr.bf16.mxu0 0
  %1226 = vmatmul.mubr.bf16.gmra.mrb[0].mxu0 %v1191
  %v1227 = vpop.f32.mrb[0].mxu0
  %v1228 = vadd.f32 %v218, %v1227
  %v1229 = vpop.f32.mrb[0].mxu0
  %v1230 = vpop.f32.mrb[0].mxu0
  %v1231 = vpop.f32.mrb[0].mxu0
  %1232 = vdwg.mxu0
  %1233 = vmatprep.subr.bf16.mxu0 0
  %1234 = vmatpush1.bf16.msra.mxu0 %v280
  %1235 = vmatprep.subr.bf16.mxu0 0
  %1236 = vmatpush1.bf16.msra.mxu0 0
  %1237 = vmatprep.subr.bf16.mxu0 0
  %1238 = vmatpush1.bf16.msra.mxu0 0
  %1239 = vmatprep.subr.bf16.mxu0 0
  %1240 = vmatpush1.bf16.msra.mxu0 0
  %1241 = vmatprep.subr.bf16.mxu0 0
  %1242 = vmatpush1.bf16.msra.mxu0 0
  %1243 = vmatprep.subr.bf16.mxu0 0
  %1244 = vmatpush1.bf16.msra.mxu0 0
  %1245 = vmatprep.subr.bf16.mxu0 0
  %1246 = vmatpush1.bf16.msra.mxu0 0
  %1247 = vmatprep.subr.bf16.mxu0 0
  %1248 = vmatpush1.bf16.msra.mxu0 0
  %1249 = vmatprep.subr.bf16.mxu0 0
  %1250 = vmatpush1.bf16.msra.mxu0 0
  %1251 = vmatprep.subr.bf16.mxu0 0
  %1252 = vmatpush1.bf16.msra.mxu0 0
  %1253 = vmatprep.subr.bf16.mxu0 0
  %1254 = vmatpush1.bf16.msra.mxu0 0
  %1255 = vmatprep.subr.bf16.mxu0 0
  %1256 = vmatpush1.bf16.msra.mxu0 0
  %1257 = vmatprep.subr.bf16.mxu0 0
  %1258 = vmatpush1.bf16.msra.mxu0 0
  %1259 = vmatprep.subr.bf16.mxu0 0
  %1260 = vmatpush1.bf16.msra.mxu0 0
  %1261 = vmatprep.subr.bf16.mxu0 0
  %1262 = vmatpush1.bf16.msra.mxu0 0
  %1263 = vmatprep.subr.bf16.mxu0 0
  %1264 = vmatpush1.bf16.msra.mxu0 0
  %1265 = vmatprep.mubr.bf16.mxu0 0
  %1266 = vmatmul.mubr.bf16.gmra.mrb[0].mxu0 %v1191
  %v1267 = vpop.f32.mrb[0].mxu0
  %v1268 = vadd.f32 %v274, %v1267
  %v1269 = vpop.f32.mrb[0].mxu0
  %v1270 = vpop.f32.mrb[0].mxu0
  %v1271 = vpop.f32.mrb[0].mxu0
  %1272 = vdwg.mxu0
  %1273 = vmatprep.subr.bf16.mxu0 0
  %1274 = vmatpush1.bf16.msra.mxu0 %v332
  %1275 = vmatprep.subr.bf16.mxu0 0
  %1276 = vmatpush1.bf16.msra.mxu0 0
  %1277 = vmatprep.subr.bf16.mxu0 0
  %1278 = vmatpush1.bf16.msra.mxu0 0
  %1279 = vmatprep.subr.bf16.mxu0 0
  %1280 = vmatpush1.bf16.msra.mxu0 0
  %1281 = vmatprep.subr.bf16.mxu0 0
  %1282 = vmatpush1.bf16.msra.mxu0 0
  %1283 = vmatprep.subr.bf16.mxu0 0
  %1284 = vmatpush1.bf16.msra.mxu0 0
  %1285 = vmatprep.subr.bf16.mxu0 0
  %1286 = vmatpush1.bf16.msra.mxu0 0
  %1287 = vmatprep.subr.bf16.mxu0 0
  %1288 = vmatpush1.bf16.msra.mxu0 0
  %1289 = vmatprep.subr.bf16.mxu0 0
  %1290 = vmatpush1.bf16.msra.mxu0 0
  %1291 = vmatprep.subr.bf16.mxu0 0
  %1292 = vmatpush1.bf16.msra.mxu0 0
  %1293 = vmatprep.subr.bf16.mxu0 0
  %1294 = vmatpush1.bf16.msra.mxu0 0
  %1295 = vmatprep.subr.bf16.mxu0 0
  %1296 = vmatpush1.bf16.msra.mxu0 0
  %1297 = vmatprep.subr.bf16.mxu0 0
  %1298 = vmatpush1.bf16.msra.mxu0 0
  %1299 = vmatprep.subr.bf16.mxu0 0
  %1300 = vmatpush1.bf16.msra.mxu0 0
  %1301 = vmatprep.subr.bf16.mxu0 0
  %1302 = vmatpush1.bf16.msra.mxu0 0
  %1303 = vmatprep.subr.bf16.mxu0 0
  %1304 = vmatpush1.bf16.msra.mxu0 0
  %1305 = vmatprep.mubr.bf16.mxu0 0
  %1306 = vmatmul.mubr.bf16.gmra.mrb[0].mxu0 %v1191
  %v1307 = vpop.f32.mrb[0].mxu0
  %v1308 = vadd.f32 %v326, %v1307
  %v1309 = vpop.f32.mrb[0].mxu0
  %v1310 = vpop.f32.mrb[0].mxu0
  %v1311 = vpop.f32.mrb[0].mxu0
  %1312 = vdwg.mxu0
  %v1314 = vrot.slane %v1228, 4
  %v1316 = vadd.f32 %v88, %v1314
  %v1317 = vxor.u32 %v1316, 2147483648
  %v1318 = vmul.f32 %v1317, 1.442695
  %v1319 = vpow.pop %v1318
  %v1320 = vadd.f32 %v1319, 1.0
  %v1321 = vrcp.pop %v1320
  %v1322 = vmul.f32 1.0, %v1321
  %v1324 = vrot.slane %v1268, 4
  %v1326 = vadd.f32 %v142, %v1324
  %v1327 = vxor.u32 %v1326, 2147483648
  %v1328 = vmul.f32 %v1327, 1.442695
  %v1329 = vpow.pop %v1328
  %v1330 = vadd.f32 %v1329, 1.0
  %v1331 = vrcp.pop %v1330
  %v1332 = vmul.f32 1.0, %v1331
  %v1334 = vrot.slane %v1308, 4
  %v1336 = vmul.f32 %v1322, %v1334
  %v1337 = vadd.f32 %v196, %v1336
  %v1338 = vtanh.pop %v1337
  %v1339 = vsub.f32 1.0, %v1332
  %v1340 = vmul.f32 %v1339, %v1338
  %v1342 = vrot.slane %v1185, 6
  %v1344 = vmul.f32 %v1332, %v1342
  %v1345 = vadd.f32 %v1340, %v1344
  %v1346 = vpack.c.bf16 %v1345, %v1345
  %1347 = vst.msk [vmem:[%s5 + $0x4] sm:$0x4] %vm716, %v1346
  %v1349 = vrot.slane %v1346, 2
  %v1351 = vsel %vm226, %v1349, 0
  %1353 = vmatprep.subr.bf16.mxu0 0
  %1354 = vmatpush1.bf16.msra.mxu0 %v224
  %1355 = vmatprep.subr.bf16.mxu0 0
  %1356 = vmatpush1.bf16.msra.mxu0 0
  %1357 = vmatprep.subr.bf16.mxu0 0
  %1358 = vmatpush1.bf16.msra.mxu0 0
  %1359 = vmatprep.subr.bf16.mxu0 0
  %1360 = vmatpush1.bf16.msra.mxu0 0
  %1361 = vmatprep.subr.bf16.mxu0 0
  %1362 = vmatpush1.bf16.msra.mxu0 0
  %1363 = vmatprep.subr.bf16.mxu0 0
  %1364 = vmatpush1.bf16.msra.mxu0 0
  %1365 = vmatprep.subr.bf16.mxu0 0
  %1366 = vmatpush1.bf16.msra.mxu0 0
  %1367 = vmatprep.subr.bf16.mxu0 0
  %1368 = vmatpush1.bf16.msra.mxu0 0
  %1369 = vmatprep.subr.bf16.mxu0 0
  %1370 = vmatpush1.bf16.msra.mxu0 0
  %1371 = vmatprep.subr.bf16.mxu0 0
  %1372 = vmatpush1.bf16.msra.mxu0 0
  %1373 = vmatprep.subr.bf16.mxu0 0
  %1374 = vmatpush1.bf16.msra.mxu0 0
  %1375 = vmatprep.subr.bf16.mxu0 0
  %1376 = vmatpush1.bf16.msra.mxu0 0
  %1377 = vmatprep.subr.bf16.mxu0 0
  %1378 = vmatpush1.bf16.msra.mxu0 0
  %1379 = vmatprep.subr.bf16.mxu0 0
  %1380 = vmatpush1.bf16.msra.mxu0 0
  %1381 = vmatprep.subr.bf16.mxu0 0
  %1382 = vmatpush1.bf16.msra.mxu0 0
  %1383 = vmatprep.subr.bf16.mxu0 0
  %1384 = vmatpush1.bf16.msra.mxu0 0
  %1385 = vmatprep.mubr.bf16.mxu0 0
  %1386 = vmatmul.mubr.bf16.gmra.mrb[0].mxu0 %v1351
  %v1387 = vpop.f32.mrb[0].mxu0
  %v1388 = vadd.f32 %v218, %v1387
  %v1389 = vpop.f32.mrb[0].mxu0
  %v1390 = vpop.f32.mrb[0].mxu0
  %v1391 = vpop.f32.mrb[0].mxu0
  %1392 = vdwg.mxu0
  %1393 = vmatprep.subr.bf16.mxu0 0
  %1394 = vmatpush1.bf16.msra.mxu0 %v280
  %1395 = vmatprep.subr.bf16.mxu0 0
  %1396 = vmatpush1.bf16.msra.mxu0 0
  %1397 = vmatprep.subr.bf16.mxu0 0
  %1398 = vmatpush1.bf16.msra.mxu0 0
  %1399 = vmatprep.subr.bf16.mxu0 0
  %1400 = vmatpush1.bf16.msra.mxu0 0
  %1401 = vmatprep.subr.bf16.mxu0 0
  %1402 = vmatpush1.bf16.msra.mxu0 0
  %1403 = vmatprep.subr.bf16.mxu0 0
  %1404 = vmatpush1.bf16.msra.mxu0 0
  %1405 = vmatprep.subr.bf16.mxu0 0
  %1406 = vmatpush1.bf16.msra.mxu0 0
  %1407 = vmatprep.subr.bf16.mxu0 0
  %1408 = vmatpush1.bf16.msra.mxu0 0
  %1409 = vmatprep.subr.bf16.mxu0 0
  %1410 = vmatpush1.bf16.msra.mxu0 0
  %1411 = vmatprep.subr.bf16.mxu0 0
  %1412 = vmatpush1.bf16.msra.mxu0 0
  %1413 = vmatprep.subr.bf16.mxu0 0
  %1414 = vmatpush1.bf16.msra.mxu0 0
  %1415 = vmatprep.subr.bf16.mxu0 0
  %1416 = vmatpush1.bf16.msra.mxu0 0
  %1417 = vmatprep.subr.bf16.mxu0 0
  %1418 = vmatpush1.bf16.msra.mxu0 0
  %1419 = vmatprep.subr.bf16.mxu0 0
  %1420 = vmatpush1.bf16.msra.mxu0 0
  %1421 = vmatprep.subr.bf16.mxu0 0
  %1422 = vmatpush1.bf16.msra.mxu0 0
  %1423 = vmatprep.subr.bf16.mxu0 0
  %1424 = vmatpush1.bf16.msra.mxu0 0
  %1425 = vmatprep.mubr.bf16.mxu0 0
  %1426 = vmatmul.mubr.bf16.gmra.mrb[0].mxu0 %v1351
  %v1427 = vpop.f32.mrb[0].mxu0
  %v1428 = vadd.f32 %v274, %v1427
  %v1429 = vpop.f32.mrb[0].mxu0
  %v1430 = vpop.f32.mrb[0].mxu0
  %v1431 = vpop.f32.mrb[0].mxu0
  %1432 = vdwg.mxu0
  %1433 = vmatprep.subr.bf16.mxu0 0
  %1434 = vmatpush1.bf16.msra.mxu0 %v332
  %1435 = vmatprep.subr.bf16.mxu0 0
  %1436 = vmatpush1.bf16.msra.mxu0 0
  %1437 = vmatprep.subr.bf16.mxu0 0
  %1438 = vmatpush1.bf16.msra.mxu0 0
  %1439 = vmatprep.subr.bf16.mxu0 0
  %1440 = vmatpush1.bf16.msra.mxu0 0
  %1441 = vmatprep.subr.bf16.mxu0 0
  %1442 = vmatpush1.bf16.msra.mxu0 0
  %1443 = vmatprep.subr.bf16.mxu0 0
  %1444 = vmatpush1.bf16.msra.mxu0 0
  %1445 = vmatprep.subr.bf16.mxu0 0
  %1446 = vmatpush1.bf16.msra.mxu0 0
  %1447 = vmatprep.subr.bf16.mxu0 0
  %1448 = vmatpush1.bf16.msra.mxu0 0
  %1449 = vmatprep.subr.bf16.mxu0 0
  %1450 = vmatpush1.bf16.msra.mxu0 0
  %1451 = vmatprep.subr.bf16.mxu0 0
  %1452 = vmatpush1.bf16.msra.mxu0 0
  %1453 = vmatprep.subr.bf16.mxu0 0
  %1454 = vmatpush1.bf16.msra.mxu0 0
  %1455 = vmatprep.subr.bf16.mxu0 0
  %1456 = vmatpush1.bf16.msra.mxu0 0
  %1457 = vmatprep.subr.bf16.mxu0 0
  %1458 = vmatpush1.bf16.msra.mxu0 0
  %1459 = vmatprep.subr.bf16.mxu0 0
  %1460 = vmatpush1.bf16.msra.mxu0 0
  %1461 = vmatprep.subr.bf16.mxu0 0
  %1462 = vmatpush1.bf16.msra.mxu0 0
  %1463 = vmatprep.subr.bf16.mxu0 0
  %1464 = vmatpush1.bf16.msra.mxu0 0
  %1465 = vmatprep.mubr.bf16.mxu0 0
  %1466 = vmatmul.mubr.bf16.gmra.mrb[0].mxu0 %v1351
  %v1467 = vpop.f32.mrb[0].mxu0
  %v1468 = vadd.f32 %v326, %v1467
  %v1469 = vpop.f32.mrb[0].mxu0
  %v1470 = vpop.f32.mrb[0].mxu0
  %v1471 = vpop.f32.mrb[0].mxu0
  %1472 = vdwg.mxu0
  %v1474 = vrot.slane %v1388, 2
  %v1476 = vadd.f32 %v88, %v1474
  %v1477 = vxor.u32 %v1476, 2147483648
  %v1478 = vmul.f32 %v1477, 1.442695
  %v1479 = vpow.pop %v1478
  %v1480 = vadd.f32 %v1479, 1.0
  %v1481 = vrcp.pop %v1480
  %v1482 = vmul.f32 1.0, %v1481
  %v1484 = vrot.slane %v1428, 2
  %v1486 = vadd.f32 %v142, %v1484
  %v1487 = vxor.u32 %v1486, 2147483648
  %v1488 = vmul.f32 %v1487, 1.442695
  %v1489 = vpow.pop %v1488
  %v1490 = vadd.f32 %v1489, 1.0
  %v1491 = vrcp.pop %v1490
  %v1492 = vmul.f32 1.0, %v1491
  %v1494 = vrot.slane %v1468, 2
  %v1496 = vmul.f32 %v1482, %v1494
  %v1497 = vadd.f32 %v196, %v1496
  %v1498 = vtanh.pop %v1497
  %v1499 = vsub.f32 1.0, %v1492
  %v1500 = vmul.f32 %v1499, %v1498
  %v1502 = vrot.slane %v1345, 6
  %v1504 = vmul.f32 %v1492, %v1502
  %v1505 = vadd.f32 %v1500, %v1504
  %v1506 = vpack.c.bf16 %v1505, %v1505
  %1507 = vst.msk [vmem:[%s5 + $0x4] sm:$0x8] %vm877, %v1506
  %vm1508 = vcmask 130054
  %1509 = vst.msk [vmem:[#allocation2 - $0x6] sm:$0xc0] %vm1508, %v1505
  // Predicated region
  $region26: #{thoc_forward.11} parent=0 // pred_check
    _
  $region27: #{thoc_forward.11} parent=0 // pred_check_branch
    %1511 = sbr.rel (0) target = $region29
  $region28: #{thoc_forward.11} parent=0 // pred_region
    _
  $region29: #{thoc_forward.11} parent=0 // pred_fallthru
    _
  // Predicated region
  $region30: #{thoc_forward.11} parent=0 // pred_check
    _
  $region31: #{thoc_forward.11} parent=0 // pred_check_branch
    %1513 = sbr.rel (0) target = $region33
  $region32: #{thoc_forward.11} parent=0 // pred_region
    _
  $region33: #{thoc_forward.11} parent=0 // pred_fallthru
    _

// kernel: thoc_forward.16
$region0: #{thoc_forward.16}
  #allocation0 [shape = 'u32[]', space=smem, size = 0x4, offset = 0x4, fixed_abs, tag = 'smem constant byte address 0x4 - core index']
  #allocation1 [shape = 'u32[144,128]{1,0:T(1,128)}', space=vmem, size = 0x12000, scoped, tag = 'internal scratch']
  %s0 = inlined_call_operand.vmem [shape: bf16[96,16], index: 0, kind: input, shape index: {}]
  %s1 = inlined_call_operand.vmem [shape: bf16[16,16], index: 1, kind: input, shape index: {}]
  %s2 = inlined_call_operand.vmem [shape: f32[1,16], index: 2, kind: input, shape index: {}]
  %s3 = inlined_call_operand.vmem [shape: bf16[16,4], index: 3, kind: input, shape index: {}]
  %s4 = inlined_call_operand.vmem [shape: f32[96,4], index: 4, kind: output, shape index: {0}]
  %s5 = inlined_call_operand.vmem [shape: f32[96,16], index: 5, kind: output, shape index: {1}]
  %6 = xla_tuple %s4, %s5
  %s7 = sld [smem:[#allocation0]]
  $region34: #{thoc_forward.16} parent=0
    _
  %s9 = ssub.s32 1, %s7
  %s10 = scalar_select 0, %s9, %s7
  // Predicated region
  $region2: #{thoc_forward.16} parent=0 // pred_check
    _
  $region3: #{thoc_forward.16} parent=0 // pred_check_branch
    %12 = sbr.rel (0) target = $region5
  $region4: #{thoc_forward.16} parent=0 // pred_region
    _
  $region5: #{thoc_forward.16} parent=0 // pred_fallthru
    _
  // Predicated region
  $region6: #{thoc_forward.16} parent=0 // pred_check
    _
  $region7: #{thoc_forward.16} parent=0 // pred_check_branch
    %14 = sbr.rel (0) target = $region9
  $region8: #{thoc_forward.16} parent=0 // pred_region
    _
  $region9: #{thoc_forward.16} parent=0 // pred_fallthru
    _
  // Predicated region
  $region10: #{thoc_forward.16} parent=0 // pred_check
    _
  $region11: #{thoc_forward.16} parent=0 // pred_check_branch
    %16 = sbr.rel (0) target = $region13
  $region12: #{thoc_forward.16} parent=0 // pred_region
    _
  $region13: #{thoc_forward.16} parent=0 // pred_fallthru
    _
  // Predicated region
  $region14: #{thoc_forward.16} parent=0 // pred_check
    _
  $region15: #{thoc_forward.16} parent=0 // pred_check_branch
    %18 = sbr.rel (0) target = $region17
  $region16: #{thoc_forward.16} parent=0 // pred_region
    _
  $region17: #{thoc_forward.16} parent=0 // pred_fallthru
    _
  %v20 = vld [vmem:[%s0] sm:$0xf]
  %v21 = vld [vmem:[%s0 + $0x4] sm:$0xf]
  %v22 = vld [vmem:[%s0 + $0x8] sm:$0xf]
  %v23 = vld [vmem:[%s0 + $0xc] sm:$0xf]
  %v24 = vld [vmem:[%s0 + $0x10] sm:$0xf]
  %v25 = vld [vmem:[%s0 + $0x14] sm:$0xf]
  %v26 = vld [vmem:[%s0 + $0x18] sm:$0xf]
  %v27 = vld [vmem:[%s0 + $0x1c] sm:$0xf]
  %v28 = vld [vmem:[%s0 + $0x20] sm:$0xf]
  %v29 = vld [vmem:[%s0 + $0x24] sm:$0xf]
  %v30 = vld [vmem:[%s0 + $0x28] sm:$0xf]
  %v31 = vld [vmem:[%s0 + $0x2c] sm:$0xf]
  %v32 = vunpack.c.l.bf16 %v20
  %v33 = vunpack.c.l.bf16 %v21
  %v34 = vunpack.c.l.bf16 %v22
  %v35 = vunpack.c.l.bf16 %v23
  %v36 = vunpack.c.l.bf16 %v24
  %v37 = vunpack.c.l.bf16 %v25
  %v38 = vunpack.c.l.bf16 %v26
  %v39 = vunpack.c.l.bf16 %v27
  %v40 = vunpack.c.l.bf16 %v28
  %v41 = vunpack.c.l.bf16 %v29
  %v42 = vunpack.c.l.bf16 %v30
  %v43 = vunpack.c.l.bf16 %v31
  %v44 = vld [vmem:[%s1] sm:$0xf]
  %v45 = vld [vmem:[%s1 + $0x4] sm:$0xf]
  %v46 = vld [vmem:[%s2] sm:$0x1]
  %v48 = vlaneseq
  %v49 = vshrl.u32 %v48, 7
  %v50 = vsub.s32 0, %v49
  %v51 = vrot.slane %v46, %v50
  %v65 = vunpack.c.l.b16 %v20
  %v66 = vunpack.c.l.b16 %v21
  %v67 = vunpack.c.l.b16 %v22
  %v68 = vunpack.c.l.b16 %v23
  %v69 = vunpack.c.l.b16 %v24
  %v70 = vunpack.c.l.b16 %v25
  %v71 = vunpack.c.l.b16 %v26
  %v72 = vunpack.c.l.b16 %v27
  %v73 = vunpack.c.l.b16 %v28
  %v74 = vunpack.c.l.b16 %v29
  %v75 = vunpack.c.l.b16 %v30
  %v76 = vunpack.c.l.b16 %v31
  %v77 = vpack.c.b16 %v66, %v65
  %v78 = vpack.c.b16 %v68, %v67
  %v79 = vpack.c.b16 %v70, %v69
  %v80 = vpack.c.b16 %v72, %v71
  %v81 = vpack.c.b16 %v74, %v73
  %v82 = vpack.c.b16 %v76, %v75
  %v85 = vunpack.c.l.b16 %v44
  %v86 = vunpack.c.l.b16 %v45
  %v87 = vpack.c.b16 %v86, %v85
  %vm89 = vcmask 130048
  %v91 = vsel %vm89, %v77, 0
  %v94 = vsel %vm89, %v78, 0
  %v97 = vsel %vm89, %v79, 0
  %v100 = vsel %vm89, %v80, 0
  %v103 = vsel %vm89, %v81, 0
  %v106 = vsel %vm89, %v82, 0
  %108 = vmatprep.subr.bf16.mxu0 0
  %109 = vmatpush1.bf16.msra.mxu0 %v87
  %110 = vmatprep.subr.bf16.mxu0 0
  %111 = vmatpush1.bf16.msra.mxu0 0
  %112 = vmatprep.subr.bf16.mxu0 0
  %113 = vmatpush1.bf16.msra.mxu0 0
  %114 = vmatprep.subr.bf16.mxu0 0
  %115 = vmatpush1.bf16.msra.mxu0 0
  %116 = vmatprep.subr.bf16.mxu0 0
  %117 = vmatpush1.bf16.msra.mxu0 0
  %118 = vmatprep.subr.bf16.mxu0 0
  %119 = vmatpush1.bf16.msra.mxu0 0
  %120 = vmatprep.subr.bf16.mxu0 0
  %121 = vmatpush1.bf16.msra.mxu0 0
  %122 = vmatprep.subr.bf16.mxu0 0
  %123 = vmatpush1.bf16.msra.mxu0 0
  %124 = vmatprep.subr.bf16.mxu0 0
  %125 = vmatpush1.bf16.msra.mxu0 0
  %126 = vmatprep.subr.bf16.mxu0 0
  %127 = vmatpush1.bf16.msra.mxu0 0
  %128 = vmatprep.subr.bf16.mxu0 0
  %129 = vmatpush1.bf16.msra.mxu0 0
  %130 = vmatprep.subr.bf16.mxu0 0
  %131 = vmatpush1.bf16.msra.mxu0 0
  %132 = vmatprep.subr.bf16.mxu0 0
  %133 = vmatpush1.bf16.msra.mxu0 0
  %134 = vmatprep.subr.bf16.mxu0 0
  %135 = vmatpush1.bf16.msra.mxu0 0
  %136 = vmatprep.subr.bf16.mxu0 0
  %137 = vmatpush1.bf16.msra.mxu0 0
  %138 = vmatprep.subr.bf16.mxu0 0
  %139 = vmatpush1.bf16.msra.mxu0 0
  %140 = vmatprep.mubr.bf16.mxu0 0
  %141 = vmatmul.mubr.bf16.gmra.mrb[0].mxu0 %v91
  %v142 = vpop.f32.mrb[0].mxu0
  %v143 = vadd.f32 %v51, %v142
  %v144 = vpop.f32.mrb[0].mxu0
  %v145 = vpop.f32.mrb[0].mxu0
  %v146 = vadd.f32 %v51, %v145
  %v147 = vpop.f32.mrb[0].mxu0
  %148 = vmatprep.mubr.bf16.mxu0 0
  %149 = vmatmul.mubr.bf16.gmra.mrb[0].mxu0 %v94
  %v150 = vpop.f32.mrb[0].mxu0
  %v151 = vadd.f32 %v51, %v150
  %v152 = vpop.f32.mrb[0].mxu0
  %v153 = vpop.f32.mrb[0].mxu0
  %v154 = vadd.f32 %v51, %v153
  %v155 = vpop.f32.mrb[0].mxu0
  %156 = vmatprep.mubr.bf16.mxu0 0
  %157 = vmatmul.mubr.bf16.gmra.mrb[0].mxu0 %v97
  %v158 = vpop.f32.mrb[0].mxu0
  %v159 = vadd.f32 %v51, %v158
  %v160 = vpop.f32.mrb[0].mxu0
  %v161 = vpop.f32.mrb[0].mxu0
  %v162 = vadd.f32 %v51, %v161
  %v163 = vpop.f32.mrb[0].mxu0
  %164 = vmatprep.mubr.bf16.mxu0 0
  %165 = vmatmul.mubr.bf16.gmra.mrb[0].mxu0 %v100
  %v166 = vpop.f32.mrb[0].mxu0
  %v167 = vadd.f32 %v51, %v166
  %v168 = vpop.f32.mrb[0].mxu0
  %v169 = vpop.f32.mrb[0].mxu0
  %v170 = vadd.f32 %v51, %v169
  %v171 = vpop.f32.mrb[0].mxu0
  %172 = vmatprep.mubr.bf16.mxu0 0
  %173 = vmatmul.mubr.bf16.gmra.mrb[0].mxu0 %v103
  %v174 = vpop.f32.mrb[0].mxu0
  %v175 = vadd.f32 %v51, %v174
  %v176 = vpop.f32.mrb[0].mxu0
  %v177 = vpop.f32.mrb[0].mxu0
  %v178 = vadd.f32 %v51, %v177
  %v179 = vpop.f32.mrb[0].mxu0
  %180 = vmatprep.mubr.bf16.mxu0 0
  %181 = vmatmul.mubr.bf16.gmra.mrb[0].mxu0 %v106
  %v182 = vpop.f32.mrb[0].mxu0
  %v183 = vadd.f32 %v51, %v182
  %v184 = vpop.f32.mrb[0].mxu0
  %v185 = vpop.f32.mrb[0].mxu0
  %v186 = vadd.f32 %v51, %v185
  %v187 = vpop.f32.mrb[0].mxu0
  %188 = vdwg.mxu0
  %v189 = vmax.f32 %v143, 0.0
  %v190 = vmax.f32 %v146, 0.0
  %v191 = vmax.f32 %v151, 0.0
  %v192 = vmax.f32 %v154, 0.0
  %v193 = vmax.f32 %v159, 0.0
  %v194 = vmax.f32 %v162, 0.0
  %v195 = vmax.f32 %v167, 0.0
  %v196 = vmax.f32 %v170, 0.0
  %v197 = vmax.f32 %v175, 0.0
  %v198 = vmax.f32 %v178, 0.0
  %v199 = vmax.f32 %v183, 0.0
  %v200 = vmax.f32 %v186, 0.0
  %201 = vst.msk [vmem:[%s5] sm:$0xff] %vm89, %v189
  %202 = vst.msk [vmem:[%s5 + $0x8] sm:$0xff] %vm89, %v190
  %203 = vst.msk [vmem:[%s5 + $0x10] sm:$0xff] %vm89, %v191
  %204 = vst.msk [vmem:[%s5 + $0x18] sm:$0xff] %vm89, %v192
  %205 = vst.msk [vmem:[%s5 + $0x20] sm:$0xff] %vm89, %v193
  %206 = vst.msk [vmem:[%s5 + $0x28] sm:$0xff] %vm89, %v194
  %207 = vst.msk [vmem:[%s5 + $0x30] sm:$0xff] %vm89, %v195
  %208 = vst.msk [vmem:[%s5 + $0x38] sm:$0xff] %vm89, %v196
  %209 = vst.msk [vmem:[%s5 + $0x40] sm:$0xff] %vm89, %v197
  %210 = vst.msk [vmem:[%s5 + $0x48] sm:$0xff] %vm89, %v198
  %211 = vst.msk [vmem:[%s5 + $0x50] sm:$0xff] %vm89, %v199
  %212 = vst.msk [vmem:[%s5 + $0x58] sm:$0xff] %vm89, %v200
  %v213 = vmul.f32 %v32, %v32
  %v214 = vmul.f32 %v33, %v33
  %v215 = vmul.f32 %v34, %v34
  %v216 = vmul.f32 %v35, %v35
  %v217 = vmul.f32 %v36, %v36
  %v218 = vmul.f32 %v37, %v37
  %v219 = vmul.f32 %v38, %v38
  %v220 = vmul.f32 %v39, %v39
  %v221 = vmul.f32 %v40, %v40
  %v222 = vmul.f32 %v41, %v41
  %v223 = vmul.f32 %v42, %v42
  %v224 = vmul.f32 %v43, %v43
  %v225 = vsel %vm89, %v213, 0.0
  %226 = vadd.xlane.f32.xlu0 %v225
  %v227 = vpop.xlane.xlu0 %226
  %v228 = vsel %vm89, %v214, 0.0
  %229 = vadd.xlane.f32.xlu0 %v228
  %v230 = vpop.xlane.xlu0 %229
  %v231 = vsel %vm89, %v215, 0.0
  %232 = vadd.xlane.f32.xlu0 %v231
  %v233 = vpop.xlane.xlu0 %232
  %v234 = vsel %vm89, %v216, 0.0
  %235 = vadd.xlane.f32.xlu0 %v234
  %v236 = vpop.xlane.xlu0 %235
  %v237 = vsel %vm89, %v217, 0.0
  %238 = vadd.xlane.f32.xlu0 %v237
  %v239 = vpop.xlane.xlu0 %238
  %v240 = vsel %vm89, %v218, 0.0
  %241 = vadd.xlane.f32.xlu0 %v240
  %v242 = vpop.xlane.xlu0 %241
  %v243 = vsel %vm89, %v219, 0.0
  %244 = vadd.xlane.f32.xlu0 %v243
  %v245 = vpop.xlane.xlu0 %244
  %v246 = vsel %vm89, %v220, 0.0
  %247 = vadd.xlane.f32.xlu0 %v246
  %v248 = vpop.xlane.xlu0 %247
  %v249 = vsel %vm89, %v221, 0.0
  %250 = vadd.xlane.f32.xlu0 %v249
  %v251 = vpop.xlane.xlu0 %250
  %v252 = vsel %vm89, %v222, 0.0
  %253 = vadd.xlane.f32.xlu0 %v252
  %v254 = vpop.xlane.xlu0 %253
  %v255 = vsel %vm89, %v223, 0.0
  %256 = vadd.xlane.f32.xlu0 %v255
  %v257 = vpop.xlane.xlu0 %256
  %v258 = vsel %vm89, %v224, 0.0
  %259 = vadd.xlane.f32.xlu0 %v258
  %v260 = vpop.xlane.xlu0 %259
  %v261 = vrsqrt.pop %v227
  %v262 = vmul.f32 %v227, %v261
  %vm263 = vcmp.eq.f32.partialorder %v227, inf
  %v264 = vsel %vm263, %v227, %v262
  %vm265 = vcmp.eq.f32.partialorder %v227, 0.0
  %v266 = vand.u32 %v227, 2147483648
  %v267 = vsel %vm265, %v266, %v264
  %v268 = vrsqrt.pop %v230
  %v269 = vmul.f32 %v230, %v268
  %vm270 = vcmp.eq.f32.partialorder %v230, inf
  %v271 = vsel %vm270, %v230, %v269
  %vm272 = vcmp.eq.f32.partialorder %v230, 0.0
  %v273 = vand.u32 %v230, 2147483648
  %v274 = vsel %vm272, %v273, %v271
  %v275 = vrsqrt.pop %v233
  %v276 = vmul.f32 %v233, %v275
  %vm277 = vcmp.eq.f32.partialorder %v233, inf
  %v278 = vsel %vm277, %v233, %v276
  %vm279 = vcmp.eq.f32.partialorder %v233, 0.0
  %v280 = vand.u32 %v233, 2147483648
  %v281 = vsel %vm279, %v280, %v278
  %v282 = vrsqrt.pop %v236
  %v283 = vmul.f32 %v236, %v282
  %vm284 = vcmp.eq.f32.partialorder %v236, inf
  %v285 = vsel %vm284, %v236, %v283
  %vm286 = vcmp.eq.f32.partialorder %v236, 0.0
  %v287 = vand.u32 %v236, 2147483648
  %v288 = vsel %vm286, %v287, %v285
  %v289 = vrsqrt.pop %v239
  %v290 = vmul.f32 %v239, %v289
  %vm291 = vcmp.eq.f32.partialorder %v239, inf
  %v292 = vsel %vm291, %v239, %v290
  %vm293 = vcmp.eq.f32.partialorder %v239, 0.0
  %v294 = vand.u32 %v239, 2147483648
  %v295 = vsel %vm293, %v294, %v292
  %v296 = vrsqrt.pop %v242
  %v297 = vmul.f32 %v242, %v296
  %vm298 = vcmp.eq.f32.partialorder %v242, inf
  %v299 = vsel %vm298, %v242, %v297
  %vm300 = vcmp.eq.f32.partialorder %v242, 0.0
  %v301 = vand.u32 %v242, 2147483648
  %v302 = vsel %vm300, %v301, %v299
  %v303 = vrsqrt.pop %v245
  %v304 = vmul.f32 %v245, %v303
  %vm305 = vcmp.eq.f32.partialorder %v245, inf
  %v306 = vsel %vm305, %v245, %v304
  %vm307 = vcmp.eq.f32.partialorder %v245, 0.0
  %v308 = vand.u32 %v245, 2147483648
  %v309 = vsel %vm307, %v308, %v306
  %v310 = vrsqrt.pop %v248
  %v311 = vmul.f32 %v248, %v310
  %vm312 = vcmp.eq.f32.partialorder %v248, inf
  %v313 = vsel %vm312, %v248, %v311
  %vm314 = vcmp.eq.f32.partialorder %v248, 0.0
  %v315 = vand.u32 %v248, 2147483648
  %v316 = vsel %vm314, %v315, %v313
  %v317 = vrsqrt.pop %v251
  %v318 = vmul.f32 %v251, %v317
  %vm319 = vcmp.eq.f32.partialorder %v251, inf
  %v320 = vsel %vm319, %v251, %v318
  %vm321 = vcmp.eq.f32.partialorder %v251, 0.0
  %v322 = vand.u32 %v251, 2147483648
  %v323 = vsel %vm321, %v322, %v320
  %v324 = vrsqrt.pop %v254
  %v325 = vmul.f32 %v254, %v324
  %vm326 = vcmp.eq.f32.partialorder %v254, inf
  %v327 = vsel %vm326, %v254, %v325
  %vm328 = vcmp.eq.f32.partialorder %v254, 0.0
  %v329 = vand.u32 %v254, 2147483648
  %v330 = vsel %vm328, %v329, %v327
  %v331 = vrsqrt.pop %v257
  %v332 = vmul.f32 %v257, %v331
  %vm333 = vcmp.eq.f32.partialorder %v257, inf
  %v334 = vsel %vm333, %v257, %v332
  %vm335 = vcmp.eq.f32.partialorder %v257, 0.0
  %v336 = vand.u32 %v257, 2147483648
  %v337 = vsel %vm335, %v336, %v334
  %v338 = vrsqrt.pop %v260
  %v339 = vmul.f32 %v260, %v338
  %vm340 = vcmp.eq.f32.partialorder %v260, inf
  %v341 = vsel %vm340, %v260, %v339
  %vm342 = vcmp.eq.f32.partialorder %v260, 0.0
  %v343 = vand.u32 %v260, 2147483648
  %v344 = vsel %vm342, %v343, %v341
  %v345 = vmax.f32 %v267, 1e-08
  %v346 = vmax.f32 %v274, 1e-08
  %v347 = vmax.f32 %v281, 1e-08
  %v348 = vmax.f32 %v288, 1e-08
  %v349 = vmax.f32 %v295, 1e-08
  %v350 = vmax.f32 %v302, 1e-08
  %v351 = vmax.f32 %v309, 1e-08
  %v352 = vmax.f32 %v316, 1e-08
  %v353 = vmax.f32 %v323, 1e-08
  %v354 = vmax.f32 %v330, 1e-08
  %v355 = vmax.f32 %v337, 1e-08
  %v356 = vmax.f32 %v344, 1e-08
  %v357 = vrcp.pop %v345
  %v358 = vrcp.pop %v346
  %v359 = vrcp.pop %v347
  %v360 = vrcp.pop %v348
  %v361 = vrcp.pop %v349
  %v362 = vrcp.pop %v350
  %v363 = vrcp.pop %v351
  %v364 = vrcp.pop %v352
  %v365 = vrcp.pop %v353
  %v366 = vrcp.pop %v354
  %v367 = vrcp.pop %v355
  %v368 = vrcp.pop %v356
  %v369 = vld [vmem:[%s3] sm:$0xf]
  %v370 = vld [vmem:[%s3 + $0x4] sm:$0xf]
  %v373 = vunpack.c.l.b16 %v369
  %v374 = vunpack.c.l.b16 %v370
  %v375 = vpack.c.b16 %v374, %v373
  %377 = vmatprep.subr.bf16.mxu0 0
  %378 = vmatpush1.bf16.msra.mxu0 %v375
  %379 = vmatprep.subr.bf16.mxu0 0
  %380 = vmatpush1.bf16.msra.mxu0 0
  %381 = vmatprep.subr.bf16.mxu0 0
  %382 = vmatpush1.bf16.msra.mxu0 0
  %383 = vmatprep.subr.bf16.mxu0 0
  %384 = vmatpush1.bf16.msra.mxu0 0
  %385 = vmatprep.subr.bf16.mxu0 0
  %386 = vmatpush1.bf16.msra.mxu0 0
  %387 = vmatprep.subr.bf16.mxu0 0
  %388 = vmatpush1.bf16.msra.mxu0 0
  %389 = vmatprep.subr.bf16.mxu0 0
  %390 = vmatpush1.bf16.msra.mxu0 0
  %391 = vmatprep.subr.bf16.mxu0 0
  %392 = vmatpush1.bf16.msra.mxu0 0
  %393 = vmatprep.subr.bf16.mxu0 0
  %394 = vmatpush1.bf16.msra.mxu0 0
  %395 = vmatprep.subr.bf16.mxu0 0
  %396 = vmatpush1.bf16.msra.mxu0 0
  %397 = vmatprep.subr.bf16.mxu0 0
  %398 = vmatpush1.bf16.msra.mxu0 0
  %399 = vmatprep.subr.bf16.mxu0 0
  %400 = vmatpush1.bf16.msra.mxu0 0
  %401 = vmatprep.subr.bf16.mxu0 0
  %402 = vmatpush1.bf16.msra.mxu0 0
  %403 = vmatprep.subr.bf16.mxu0 0
  %404 = vmatpush1.bf16.msra.mxu0 0
  %405 = vmatprep.subr.bf16.mxu0 0
  %406 = vmatpush1.bf16.msra.mxu0 0
  %407 = vmatprep.subr.bf16.mxu0 0
  %408 = vmatpush1.bf16.msra.mxu0 0
  %409 = vmatprep.mubr.bf16.mxu0 0
  %410 = vmatmul.mubr.bf16.gmra.mrb[0].mxu0 %v91
  %v411 = vpop.f32.mrb[0].mxu0
  %v412 = vadd.f32 0.0, %v411
  %v413 = vpop.f32.mrb[0].mxu0
  %v414 = vpop.f32.mrb[0].mxu0
  %v415 = vadd.f32 0.0, %v414
  %v416 = vpop.f32.mrb[0].mxu0
  %417 = vmatprep.mubr.bf16.mxu0 0
  %418 = vmatmul.mubr.bf16.gmra.mrb[0].mxu0 %v94
  %v419 = vpop.f32.mrb[0].mxu0
  %v420 = vadd.f32 0.0, %v419
  %v421 = vpop.f32.mrb[0].mxu0
  %v422 = vpop.f32.mrb[0].mxu0
  %v423 = vadd.f32 0.0, %v422
  %v424 = vpop.f32.mrb[0].mxu0
  %425 = vmatprep.mubr.bf16.mxu0 0
  %426 = vmatmul.mubr.bf16.gmra.mrb[0].mxu0 %v97
  %v427 = vpop.f32.mrb[0].mxu0
  %v428 = vadd.f32 0.0, %v427
  %v429 = vpop.f32.mrb[0].mxu0
  %v430 = vpop.f32.mrb[0].mxu0
  %v431 = vadd.f32 0.0, %v430
  %v432 = vpop.f32.mrb[0].mxu0
  %433 = vmatprep.mubr.bf16.mxu0 0
  %434 = vmatmul.mubr.bf16.gmra.mrb[0].mxu0 %v100
  %v435 = vpop.f32.mrb[0].mxu0
  %v436 = vadd.f32 0.0, %v435
  %v437 = vpop.f32.mrb[0].mxu0
  %v438 = vpop.f32.mrb[0].mxu0
  %v439 = vadd.f32 0.0, %v438
  %v440 = vpop.f32.mrb[0].mxu0
  %441 = vmatprep.mubr.bf16.mxu0 0
  %442 = vmatmul.mubr.bf16.gmra.mrb[0].mxu0 %v103
  %v443 = vpop.f32.mrb[0].mxu0
  %v444 = vadd.f32 0.0, %v443
  %v445 = vpop.f32.mrb[0].mxu0
  %v446 = vpop.f32.mrb[0].mxu0
  %v447 = vadd.f32 0.0, %v446
  %v448 = vpop.f32.mrb[0].mxu0
  %449 = vmatprep.mubr.bf16.mxu0 0
  %450 = vmatmul.mubr.bf16.gmra.mrb[0].mxu0 %v106
  %v451 = vpop.f32.mrb[0].mxu0
  %v452 = vadd.f32 0.0, %v451
  %v453 = vpop.f32.mrb[0].mxu0
  %v454 = vpop.f32.mrb[0].mxu0
  %v455 = vadd.f32 0.0, %v454
  %v456 = vpop.f32.mrb[0].mxu0
  %457 = vdwg.mxu0
  %v458 = vmul.f32 %v412, %v357
  %v459 = vmul.f32 %v415, %v358
  %v460 = vmul.f32 %v420, %v359
  %v461 = vmul.f32 %v423, %v360
  %v462 = vmul.f32 %v428, %v361
  %v463 = vmul.f32 %v431, %v362
  %v464 = vmul.f32 %v436, %v363
  %v465 = vmul.f32 %v439, %v364
  %v466 = vmul.f32 %v444, %v365
  %v467 = vmul.f32 %v447, %v366
  %v468 = vmul.f32 %v452, %v367
  %v469 = vmul.f32 %v455, %v368
  %v470 = vmul.f32 %v458, 1.442695
  %v471 = vpow.pop %v470
  %v472 = vmul.f32 %v459, 1.442695
  %v473 = vpow.pop %v472
  %v474 = vmul.f32 %v460, 1.442695
  %v475 = vpow.pop %v474
  %v476 = vmul.f32 %v461, 1.442695
  %v477 = vpow.pop %v476
  %v478 = vmul.f32 %v462, 1.442695
  %v479 = vpow.pop %v478
  %v480 = vmul.f32 %v463, 1.442695
  %v481 = vpow.pop %v480
  %v482 = vmul.f32 %v464, 1.442695
  %v483 = vpow.pop %v482
  %v484 = vmul.f32 %v465, 1.442695
  %v485 = vpow.pop %v484
  %v486 = vmul.f32 %v466, 1.442695
  %v487 = vpow.pop %v486
  %v488 = vmul.f32 %v467, 1.442695
  %v489 = vpow.pop %v488
  %v490 = vmul.f32 %v468, 1.442695
  %v491 = vpow.pop %v490
  %v492 = vmul.f32 %v469, 1.442695
  %v493 = vpow.pop %v492
  %vm494 = vcmask 31744
  %v495 = vsel %vm494, %v471, 0.0
  %496 = vadd.xlane.f32.xlu0 %v495
  %v497 = vpop.xlane.xlu0 %496
  %v498 = vsel %vm494, %v473, 0.0
  %499 = vadd.xlane.f32.xlu0 %v498
  %v500 = vpop.xlane.xlu0 %499
  %v501 = vsel %vm494, %v475, 0.0
  %502 = vadd.xlane.f32.xlu0 %v501
  %v503 = vpop.xlane.xlu0 %502
  %v504 = vsel %vm494, %v477, 0.0
  %505 = vadd.xlane.f32.xlu0 %v504
  %v506 = vpop.xlane.xlu0 %505
  %v507 = vsel %vm494, %v479, 0.0
  %508 = vadd.xlane.f32.xlu0 %v507
  %v509 = vpop.xlane.xlu0 %508
  %v510 = vsel %vm494, %v481, 0.0
  %511 = vadd.xlane.f32.xlu0 %v510
  %v512 = vpop.xlane.xlu0 %511
  %v513 = vsel %vm494, %v483, 0.0
  %514 = vadd.xlane.f32.xlu0 %v513
  %v515 = vpop.xlane.xlu0 %514
  %v516 = vsel %vm494, %v485, 0.0
  %517 = vadd.xlane.f32.xlu0 %v516
  %v518 = vpop.xlane.xlu0 %517
  %v519 = vsel %vm494, %v487, 0.0
  %520 = vadd.xlane.f32.xlu0 %v519
  %v521 = vpop.xlane.xlu0 %520
  %v522 = vsel %vm494, %v489, 0.0
  %523 = vadd.xlane.f32.xlu0 %v522
  %v524 = vpop.xlane.xlu0 %523
  %v525 = vsel %vm494, %v491, 0.0
  %526 = vadd.xlane.f32.xlu0 %v525
  %v527 = vpop.xlane.xlu0 %526
  %v528 = vsel %vm494, %v493, 0.0
  %529 = vadd.xlane.f32.xlu0 %v528
  %v530 = vpop.xlane.xlu0 %529
  %v531 = vrcp.pop %v497
  %v532 = vrcp.pop %v500
  %v533 = vrcp.pop %v503
  %v534 = vrcp.pop %v506
  %v535 = vrcp.pop %v509
  %v536 = vrcp.pop %v512
  %v537 = vrcp.pop %v515
  %v538 = vrcp.pop %v518
  %v539 = vrcp.pop %v521
  %v540 = vrcp.pop %v524
  %v541 = vrcp.pop %v527
  %v542 = vrcp.pop %v530
  %v543 = vmul.f32 %v471, %v531
  %v544 = vmul.f32 %v473, %v532
  %v545 = vmul.f32 %v475, %v533
  %v546 = vmul.f32 %v477, %v534
  %v547 = vmul.f32 %v479, %v535
  %v548 = vmul.f32 %v481, %v536
  %v549 = vmul.f32 %v483, %v537
  %v550 = vmul.f32 %v485, %v538
  %v551 = vmul.f32 %v487, %v539
  %v552 = vmul.f32 %v489, %v540
  %v553 = vmul.f32 %v491, %v541
  %v554 = vmul.f32 %v493, %v542
  %555 = vst.msk [vmem:[%s4] sm:$0xff] %vm494, %v543
  %556 = vst.msk [vmem:[%s4 + $0x8] sm:$0xff] %vm494, %v544
  %557 = vst.msk [vmem:[%s4 + $0x10] sm:$0xff] %vm494, %v545
  %558 = vst.msk [vmem:[%s4 + $0x18] sm:$0xff] %vm494, %v546
  %559 = vst.msk [vmem:[%s4 + $0x20] sm:$0xff] %vm494, %v547
  %560 = vst.msk [vmem:[%s4 + $0x28] sm:$0xff] %vm494, %v548
  %561 = vst.msk [vmem:[%s4 + $0x30] sm:$0xff] %vm494, %v549
  %562 = vst.msk [vmem:[%s4 + $0x38] sm:$0xff] %vm494, %v550
  %563 = vst.msk [vmem:[%s4 + $0x40] sm:$0xff] %vm494, %v551
  %564 = vst.msk [vmem:[%s4 + $0x48] sm:$0xff] %vm494, %v552
  %565 = vst.msk [vmem:[%s4 + $0x50] sm:$0xff] %vm494, %v553
  %566 = vst.msk [vmem:[%s4 + $0x58] sm:$0xff] %vm494, %v554
  // Predicated region
  $region18: #{thoc_forward.16} parent=0 // pred_check
    _
  $region19: #{thoc_forward.16} parent=0 // pred_check_branch
    %568 = sbr.rel (0) target = $region21
  $region20: #{thoc_forward.16} parent=0 // pred_region
    _
  $region21: #{thoc_forward.16} parent=0 // pred_fallthru
    _
  // Predicated region
  $region22: #{thoc_forward.16} parent=0 // pred_check
    _
  $region23: #{thoc_forward.16} parent=0 // pred_check_branch
    %570 = sbr.rel (0) target = $region25
  $region24: #{thoc_forward.16} parent=0 // pred_region
    _
  $region25: #{thoc_forward.16} parent=0 // pred_fallthru
    _
  // Predicated region
  $region26: #{thoc_forward.16} parent=0 // pred_check
    _
  $region27: #{thoc_forward.16} parent=0 // pred_check_branch
    %572 = sbr.rel (0) target = $region29
  $region28: #{thoc_forward.16} parent=0 // pred_region
    _
  $region29: #{thoc_forward.16} parent=0 // pred_fallthru
    _
  // Predicated region
  $region30: #{thoc_forward.16} parent=0 // pred_check
    _
  $region31: #{thoc_forward.16} parent=0 // pred_check_branch
    %574 = sbr.rel (0) target = $region33
  $region32: #{thoc_forward.16} parent=0 // pred_region
    _
  $region33: #{thoc_forward.16} parent=0 // pred_fallthru
    _

// kernel: thoc_forward.17
$region0: #{thoc_forward.17}
  #allocation0 [shape = 'u32[]', space=smem, size = 0x4, offset = 0x4, fixed_abs, tag = 'smem constant byte address 0x4 - core index']
  #allocation1 [shape = 'u32[144,128]{1,0:T(1,128)}', space=vmem, size = 0x12000, scoped, tag = 'internal scratch']
  %s0 = inlined_call_operand.vmem [shape: bf16[4,16,16], index: 0, kind: input, shape index: {}]
  %s1 = inlined_call_operand.vmem [shape: bf16[16,16], index: 1, kind: input, shape index: {}]
  %s2 = inlined_call_operand.vmem [shape: bf16[16,16], index: 2, kind: input, shape index: {}]
  %s3 = inlined_call_operand.vmem [shape: bf16[16,16], index: 3, kind: input, shape index: {}]
  %s4 = inlined_call_operand.vmem [shape: f32[1,16], index: 4, kind: input, shape index: {}]
  %s5 = inlined_call_operand.vmem [shape: f32[4,16,16], index: 5, kind: output, shape index: {}]
  %s6 = sld [smem:[#allocation0]]
  $region53: #{thoc_forward.17} parent=0
    _
  %s8 = ssub.s32 1, %s6
  %s9 = scalar_select 0, %s8, %s6
  loop: start=0, step=1, limit=6
  $region2: #{thoc_forward.17} parent=0 // loop_pre_header
    _
  $region3: #{thoc_forward.17} parent=0 // loop_header
    %s11 = sphi 0, %s15
    %p12 = scmp.ge.s32.totalorder %s11, 6
    %s18 = sphi 0, %s30
    %s19 = sphi 0, %s26
    %s20 = sphi 0, %s18
    %s21 = sphi 0, %s19
    %s22 = sphi 0, %s20
    %s23 = sphi 0, %s21
    %s35 = sphi 0, %s37
    %s38 = sphi 0, %s35
    %s39 = sphi 0, %s38
    %s55 = sphi 0, %s39
    %s61 = sphi 0, %s63
    %s64 = sphi 0, %s61
    %s65 = sphi 0, %s64
    %s81 = sphi 0, %s65
    %s85 = sphi 0, %s85
    %s87 = sphi 0, %s85
    %s88 = sphi 0, %s87
    %s102 = sphi 0, %s88
    %s106 = sphi 0, %s106
    %s108 = sphi 0, %s106
    %s109 = sphi 0, %s108
    %s123 = sphi 0, %s109
    %s127 = sphi 0, %s127
    %s129 = sphi 0, %s127
    %s130 = sphi 0, %s129
    %s144 = sphi 0, %s130
    %s152 = sphi 0, %s154
    %s155 = sphi 0, %s152
    %s156 = sphi 0, %s155
    %s172 = sphi 0, %s156
  $region4: #{thoc_forward.17} parent=0 // loop_header_branch
    %14 = sbr.rel (%p12) target = $region8
  $region5: #{thoc_forward.17} parent=0 // loop_body
    %s16 = ssub.s32 %s11, 1
    %s17 = ssub.s32 %s11, 2
    %s24 = sadd.s32 1, %s19
    %p25 = scmp.ge.s32.totalorder %s24, 1
    %s26 = scalar_select %p25, 0, %s24
    %s27 = sadd.s32 1, %s18
    %s28 = scalar_select %p25, %s27, %s18
    %p29 = scmp.ge.s32.totalorder %s28, 4
    %s30 = scalar_select %p29, 0, %s28
    %s31 = ssub.s32 %s18, %s30
    %s32 = ssub.s32 %s19, %s26
    %s33 = sor.u32 %s31, %s32
    %p34 = scmp.eq.s32.totalorder %s33, 0
    %s36 = sadd.s32 %s35, 1
    %s37 = scalar_select %p34, %s35, %s36
    %p40 = pneg %p34
    %p41 = scmp.eq.s32.totalorder %s11, 3
    %p42 = por %p40, %p41
    %p43 = scmp.ne.s32.totalorder %s35, %s38
    %p44 = scmp.eq.s32.totalorder %s11, 0
    %p45 = por %p43, %p44
    %p46 = scmp.ne.s32.totalorder %s35, %s38
    %p47 = scmp.eq.s32.totalorder %s16, 3
    %p48 = por %p46, %p47
    %p49 = scmp.ne.s32.totalorder %s38, %s39
    %p50 = scmp.eq.s32.totalorder %s16, 0
    %p51 = por %p49, %p50
    %p52 = scmp.ne.s32.totalorder %s38, %s39
    %p53 = scmp.eq.s32.totalorder %s17, 3
    %p54 = por %p52, %p53
    %p56 = scmp.ne.s32.totalorder %s39, %s55
    %p57 = scmp.eq.s32.totalorder %s17, 0
    %p58 = por %p56, %p57
    %s59 = ssub.s32 %s19, %s26
    %p60 = scmp.eq.s32.totalorder %s59, 0
    %s62 = sadd.s32 %s61, 1
    %s63 = scalar_select %p60, %s61, %s62
    %p66 = pneg %p60
    %p67 = scmp.eq.s32.totalorder %s11, 3
    %p68 = por %p66, %p67
    %p69 = scmp.ne.s32.totalorder %s61, %s64
    %p70 = scmp.eq.s32.totalorder %s11, 0
    %p71 = por %p69, %p70
    %p72 = scmp.ne.s32.totalorder %s61, %s64
    %p73 = scmp.eq.s32.totalorder %s16, 3
    %p74 = por %p72, %p73
    %p75 = scmp.ne.s32.totalorder %s64, %s65
    %p76 = scmp.eq.s32.totalorder %s16, 0
    %p77 = por %p75, %p76
    %p78 = scmp.ne.s32.totalorder %s64, %s65
    %p79 = scmp.eq.s32.totalorder %s17, 3
    %p80 = por %p78, %p79
    %p82 = scmp.ne.s32.totalorder %s65, %s81
    %p83 = scmp.eq.s32.totalorder %s17, 0
    %p84 = por %p82, %p83
    %s86 = sadd.s32 %s85, 1
    %p89 = scmp.eq.s32.totalorder %s11, 3
    %p90 = scmp.ne.s32.totalorder %s85, %s87
    %p91 = scmp.eq.s32.totalorder %s11, 0
    %p92 = por %p90, %p91
    %p93 = scmp.ne.s32.totalorder %s85, %s87
    %p94 = scmp.eq.s32.totalorder %s16, 3
    %p95 = por %p93, %p94
    %p96 = scmp.ne.s32.totalorder %s87, %s88
    %p97 = scmp.eq.s32.totalorder %s16, 0
    %p98 = por %p96, %p97
    %p99 = scmp.ne.s32.totalorder %s87, %s88
    %p100 = scmp.eq.s32.totalorder %s17, 3
    %p101 = por %p99, %p100
    %p103 = scmp.ne.s32.totalorder %s88, %s102
    %p104 = scmp.eq.s32.totalorder %s17, 0
    %p105 = por %p103, %p104
    %s107 = sadd.s32 %s106, 1
    %p110 = scmp.eq.s32.totalorder %s11, 3
    %p111 = scmp.ne.s32.totalorder %s106, %s108
    %p112 = scmp.eq.s32.totalorder %s11, 0
    %p113 = por %p111, %p112
    %p114 = scmp.ne.s32.totalorder %s106, %s108
    %p115 = scmp.eq.s32.totalorder %s16, 3
    %p116 = por %p114, %p115
    %p117 = scmp.ne.s32.totalorder %s108, %s109
    %p118 = scmp.eq.s32.totalorder %s16, 0
    %p119 = por %p117, %p118
    %p120 = scmp.ne.s32.totalorder %s108, %s109
    %p121 = scmp.eq.s32.totalorder %s17, 3
    %p122 = por %p120, %p121
    %p124 = scmp.ne.s32.totalorder %s109, %s123
    %p125 = scmp.eq.s32.totalorder %s17, 0
    %p126 = por %p124, %p125
    %s128 = sadd.s32 %s127, 1
    %p131 = scmp.eq.s32.totalorder %s11, 3
    %p132 = scmp.ne.s32.totalorder %s127, %s129
    %p133 = scmp.eq.s32.totalorder %s11, 0
    %p134 = por %p132, %p133
    %p135 = scmp.ne.s32.totalorder %s127, %s129
    %p136 = scmp.eq.s32.totalorder %s16, 3
    %p137 = por %p135, %p136
    %p138 = scmp.ne.s32.totalorder %s129, %s130
    %p139 = scmp.eq.s32.totalorder %s16, 0
    %p140 = por %p138, %p139
    %p141 = scmp.ne.s32.totalorder %s129, %s130
    %p142 = scmp.eq.s32.totalorder %s17, 3
    %p143 = por %p141, %p142
    %p145 = scmp.ne.s32.totalorder %s130, %s144
    %p146 = scmp.eq.s32.totalorder %s17, 0
    %p147 = por %p145, %p146
    %s148 = ssub.s32 %s18, %s30
    %s149 = ssub.s32 %s19, %s26
    %s150 = sor.u32 %s148, %s149
    %p151 = scmp.eq.s32.totalorder %s150, 0
    %s153 = sadd.s32 %s152, 1
    %s154 = scalar_select %p151, %s152, %s153
    %p157 = pneg %p151
    %p158 = scmp.eq.s32.totalorder %s11, 3
    %p159 = por %p157, %p158
    %p160 = scmp.ne.s32.totalorder %s152, %s155
    %p161 = scmp.eq.s32.totalorder %s11, 0
    %p162 = por %p160, %p161
    %p163 = scmp.ne.s32.totalorder %s152, %s155
    %p164 = scmp.eq.s32.totalorder %s16, 3
    %p165 = por %p163, %p164
    %p166 = scmp.ne.s32.totalorder %s155, %s156
    %p167 = scmp.eq.s32.totalorder %s16, 0
    %p168 = por %p166, %p167
    %p169 = scmp.ne.s32.totalorder %s155, %s156
    %p170 = scmp.eq.s32.totalorder %s17, 3
    %p171 = por %p169, %p170
    %p173 = scmp.ne.s32.totalorder %s156, %s172
    %p174 = scmp.eq.s32.totalorder %s17, 0
    %p175 = por %p173, %p174
    %p176 = scmp.le.s32.totalorder 1, %s11
    %p177 = scmp.lt.s32.totalorder %s11, 5
    %p178 = pnand %p176, %p177
    %p179 = pneg %p178
    // Predicated region
    $region9: #{thoc_forward.17} parent=5 // pred_check
      _
    $region10: #{thoc_forward.17} parent=5 // pred_check_branch
      %181 = sbr.rel (%p178) target = $region12
    $region11: #{thoc_forward.17} parent=5 // pred_region
      %s182 = ssub.s32 %s11, 1
      // Predicated region
      $region13: #{thoc_forward.17} parent=11 // pred_check
        %p183 = pneg %p77
      $region14: #{thoc_forward.17} parent=11 // pred_check_branch
        %185 = sbr.rel (%p183) target = $region16
      $region15: #{thoc_forward.17} parent=11 // pred_region
        %s186 = smul.u32 2, %s21
        %p187 = scmp.lt.s32.totalorder %s186, 1
        %s188 = scalar_select %p187, %s186, 1
        %s189 = smul.addr %s188, 4
        %s190 = scalar_lea.vmem %s1, %s189
        %s191 = smul.u32 2, %s21
      $region16: #{thoc_forward.17} parent=11 // pred_fallthru
        _
      // Predicated region
      $region17: #{thoc_forward.17} parent=11 // pred_check
        %p192 = pneg %p98
      $region18: #{thoc_forward.17} parent=11 // pred_check_branch
        %194 = sbr.rel (%p192) target = $region20
      $region19: #{thoc_forward.17} parent=11 // pred_region
        _
      $region20: #{thoc_forward.17} parent=11 // pred_fallthru
        _
      // Predicated region
      $region21: #{thoc_forward.17} parent=11 // pred_check
        %p195 = pneg %p119
      $region22: #{thoc_forward.17} parent=11 // pred_check_branch
        %197 = sbr.rel (%p195) target = $region24
      $region23: #{thoc_forward.17} parent=11 // pred_region
        _
      $region24: #{thoc_forward.17} parent=11 // pred_fallthru
        _
      // Predicated region
      $region25: #{thoc_forward.17} parent=11 // pred_check
        %p198 = pneg %p140
      $region26: #{thoc_forward.17} parent=11 // pred_check_branch
        %200 = sbr.rel (%p198) target = $region28
      $region27: #{thoc_forward.17} parent=11 // pred_region
        _
      $region28: #{thoc_forward.17} parent=11 // pred_fallthru
        _
    $region12: #{thoc_forward.17} parent=5 // pred_fallthru
      _
    %p201 = scmp.lt.s32.totalorder %s11, 4
    // Predicated region
    $region29: #{thoc_forward.17} parent=5 // pred_check
      %p202 = pneg %p201
    $region30: #{thoc_forward.17} parent=5 // pred_check_branch
      %204 = sbr.rel (%p202) target = $region32
    $region31: #{thoc_forward.17} parent=5 // pred_region
      // Predicated region
      $region33: #{thoc_forward.17} parent=31 // pred_check
        %p205 = pneg %p45
      $region34: #{thoc_forward.17} parent=31 // pred_check_branch
        %207 = sbr.rel (%p205) target = $region36
      $region35: #{thoc_forward.17} parent=31 // pred_region
        %s208 = smul.u32 2, %s19
        %p209 = scmp.lt.s32.totalorder %s18, 3
        %s210 = scalar_select %p209, %s18, 3
        %p211 = scmp.lt.s32.totalorder %s208, 1
        %s212 = scalar_select %p211, %s208, 1
        %s213 = smul.addr %s210, 2
        %s214 = sadd.s32 %s212, %s213
        %s215 = smul.addr %s214, 4
        %s216 = scalar_lea.vmem %s0, %s215
        %s217 = smul.u32 2, %s19
      $region36: #{thoc_forward.17} parent=31 // pred_fallthru
        _
    $region32: #{thoc_forward.17} parent=5 // pred_fallthru
      _
    %p218 = scmp.le.s32.totalorder 1, %s11
    %p219 = scmp.lt.s32.totalorder %s11, 5
    %p220 = pnand %p218, %p219
    %p221 = pneg %p220
    // Predicated region
    $region37: #{thoc_forward.17} parent=5 // pred_check
      _
    $region38: #{thoc_forward.17} parent=5 // pred_check_branch
      %223 = sbr.rel (%p220) target = $region40
    $region39: #{thoc_forward.17} parent=5 // pred_region
      %s224 = ssub.s32 %s11, 1
      %s225 = smul.u32 2, %s21
      %p226 = scmp.lt.s32.totalorder %s20, 3
      %s227 = scalar_select %p226, %s20, 3
      %p228 = scmp.lt.s32.totalorder %s225, 1
      %s229 = scalar_select %p228, %s225, 1
      %s230 = smul.addr %s227, 2
      %s231 = sadd.s32 %s229, %s230
      %s232 = smul.addr %s231, 4
      %s233 = scalar_lea.vmem %s0, %s232
      %p234 = pneg %p51
      %p235 = pneg %p48
      %s236 = smul.u32 2, %s21
      %p237 = scmp.lt.s32.totalorder %s236, 1
      %s238 = scalar_select %p237, %s236, 1
      %s239 = smul.addr %s238, 4
      %s240 = scalar_lea.vmem %s1, %s239
      %p241 = pneg %p77
      %p242 = pneg %p74
      %p243 = pneg %p98
      %p244 = pneg %p95
      %p245 = pneg %p119
      %p246 = pneg %p116
      %p247 = pneg %p140
      %p248 = pneg %p137
      %p249 = pneg %p168
      %p250 = pneg %p165
      %s251 = smul.u32 2, %s21
      %p252 = scmp.lt.s32.totalorder %s20, 3
      %s253 = scalar_select %p252, %s20, 3
      %p254 = scmp.lt.s32.totalorder %s251, 1
      %s255 = scalar_select %p254, %s251, 1
      %s256 = smul.addr %s253, 2
      %s257 = sadd.s32 %s255, %s256
      %s258 = smul.addr %s257, 8
      %s259 = scalar_lea.vmem %s5, %s258
      %s260 = smul.u32 2, %s21
      %p261 = scmp.lt.s32.totalorder %s20, 3
      %s262 = scalar_select %p261, %s20, 3
      %p263 = scmp.lt.s32.totalorder %s260, 1
      %s264 = scalar_select %p263, %s260, 1
      %s265 = smul.addr %s262, 2
      %s266 = sadd.s32 %s264, %s265
      %s267 = smul.addr %s266, 4
      %s268 = scalar_lea.vmem %s0, %s267
      %s269 = smul.u32 2, %s21
      %s270 = smul.u32 2, %s21
      %p271 = scmp.lt.s32.totalorder %s270, 1
      %s272 = scalar_select %p271, %s270, 1
      %s273 = smul.addr %s272, 4
      %s274 = scalar_lea.vmem %s1, %s273
      %s275 = smul.u32 2, %s21
      %s276 = smul.u32 2, %s21
      %p277 = scmp.lt.s32.totalorder %s20, 3
      %s278 = scalar_select %p277, %s20, 3
      %p279 = scmp.lt.s32.totalorder %s276, 1
      %s280 = scalar_select %p279, %s276, 1
      %s281 = smul.addr %s278, 2
      %s282 = sadd.s32 %s280, %s281
      %s283 = smul.addr %s282, 8
      %s284 = scalar_lea.vmem %s5, %s283
      %s285 = smul.u32 2, %s21
      %v287 = vld [vmem:[%s268] sm:$0xf]
      %v288 = vld [vmem:[%s268 + $0x4] sm:$0xf]
      %v289 = vld [vmem:[%s2] sm:$0xf]
      %v290 = vld [vmem:[%s2 + $0x4] sm:$0xf]
      %v291 = vld [vmem:[%s274] sm:$0xf]
      %v292 = vld [vmem:[%s274 + $0x4] sm:$0xf]
      %v293 = vld [vmem:[%s3] sm:$0xf]
      %v294 = vld [vmem:[%s3 + $0x4] sm:$0xf]
      %v297 = vunpack.c.l.b16 %v291
      %v298 = vunpack.c.l.b16 %v292
      %v299 = vpack.c.b16 %v298, %v297
      %v302 = vunpack.c.l.b16 %v293
      %v303 = vunpack.c.l.b16 %v294
      %v304 = vpack.c.b16 %v303, %v302
      %vm306 = vcmask 130048
      %v308 = vsel %vm306, %v299, 0
      %310 = vmatprep.subr.bf16.mxu0 0
      %311 = vmatpush1.bf16.msra.mxu0 %v304
      %312 = vmatprep.subr.bf16.mxu0 0
      %313 = vmatpush1.bf16.msra.mxu0 0
      %314 = vmatprep.subr.bf16.mxu0 0
      %315 = vmatpush1.bf16.msra.mxu0 0
      %316 = vmatprep.subr.bf16.mxu0 0
      %317 = vmatpush1.bf16.msra.mxu0 0
      %318 = vmatprep.subr.bf16.mxu0 0
      %319 = vmatpush1.bf16.msra.mxu0 0
      %320 = vmatprep.subr.bf16.mxu0 0
      %321 = vmatpush1.bf16.msra.mxu0 0
      %322 = vmatprep.subr.bf16.mxu0 0
      %323 = vmatpush1.bf16.msra.mxu0 0
      %324 = vmatprep.subr.bf16.mxu0 0
      %325 = vmatpush1.bf16.msra.mxu0 0
      %326 = vmatprep.subr.bf16.mxu0 0
      %327 = vmatpush1.bf16.msra.mxu0 0
      %328 = vmatprep.subr.bf16.mxu0 0
      %329 = vmatpush1.bf16.msra.mxu0 0
      %330 = vmatprep.subr.bf16.mxu0 0
      %331 = vmatpush1.bf16.msra.mxu0 0
      %332 = vmatprep.subr.bf16.mxu0 0
      %333 = vmatpush1.bf16.msra.mxu0 0
      %334 = vmatprep.subr.bf16.mxu0 0
      %335 = vmatpush1.bf16.msra.mxu0 0
      %336 = vmatprep.subr.bf16.mxu0 0
      %337 = vmatpush1.bf16.msra.mxu0 0
      %338 = vmatprep.subr.bf16.mxu0 0
      %339 = vmatpush1.bf16.msra.mxu0 0
      %340 = vmatprep.subr.bf16.mxu0 0
      %341 = vmatpush1.bf16.msra.mxu0 0
      %342 = vmatprep.mubr.bf16.mxu0 0
      %343 = vmatmul.mubr.bf16.gmra.mrb[0].mxu0 %v308
      %v344 = vpop.f32.mrb[0].mxu0
      %v345 = vadd.f32 0.0, %v344
      %v346 = vpop.f32.mrb[0].mxu0
      %v347 = vpop.f32.mrb[0].mxu0
      %v348 = vadd.f32 0.0, %v347
      %v349 = vpop.f32.mrb[0].mxu0
      %350 = vdwg.mxu0
      %v353 = vunpack.c.l.b16 %v287
      %v354 = vunpack.c.l.b16 %v288
      %v355 = vpack.c.b16 %v354, %v353
      %v358 = vunpack.c.l.b16 %v289
      %v359 = vunpack.c.l.b16 %v290
      %v360 = vpack.c.b16 %v359, %v358
      %v363 = vsel %vm306, %v355, 0
      %365 = vmatprep.subr.bf16.mxu0 0
      %366 = vmatpush1.bf16.msra.mxu0 %v360
      %367 = vmatprep.subr.bf16.mxu0 0
      %368 = vmatpush1.bf16.msra.mxu0 0
      %369 = vmatprep.subr.bf16.mxu0 0
      %370 = vmatpush1.bf16.msra.mxu0 0
      %371 = vmatprep.subr.bf16.mxu0 0
      %372 = vmatpush1.bf16.msra.mxu0 0
      %373 = vmatprep.subr.bf16.mxu0 0
      %374 = vmatpush1.bf16.msra.mxu0 0
      %375 = vmatprep.subr.bf16.mxu0 0
      %376 = vmatpush1.bf16.msra.mxu0 0
      %377 = vmatprep.subr.bf16.mxu0 0
      %378 = vmatpush1.bf16.msra.mxu0 0
      %379 = vmatprep.subr.bf16.mxu0 0
      %380 = vmatpush1.bf16.msra.mxu0 0
      %381 = vmatprep.subr.bf16.mxu0 0
      %382 = vmatpush1.bf16.msra.mxu0 0
      %383 = vmatprep.subr.bf16.mxu0 0
      %384 = vmatpush1.bf16.msra.mxu0 0
      %385 = vmatprep.subr.bf16.mxu0 0
      %386 = vmatpush1.bf16.msra.mxu0 0
      %387 = vmatprep.subr.bf16.mxu0 0
      %388 = vmatpush1.bf16.msra.mxu0 0
      %389 = vmatprep.subr.bf16.mxu0 0
      %390 = vmatpush1.bf16.msra.mxu0 0
      %391 = vmatprep.subr.bf16.mxu0 0
      %392 = vmatpush1.bf16.msra.mxu0 0
      %393 = vmatprep.subr.bf16.mxu0 0
      %394 = vmatpush1.bf16.msra.mxu0 0
      %395 = vmatprep.subr.bf16.mxu0 0
      %396 = vmatpush1.bf16.msra.mxu0 0
      %397 = vmatprep.mubr.bf16.mxu0 0
      %398 = vmatmul.mubr.bf16.gmra.mrb[0].mxu0 %v363
      %v399 = vpop.f32.mrb[0].mxu0
      %v400 = vadd.f32 %v345, %v399
      %v401 = vpop.f32.mrb[0].mxu0
      %v402 = vpop.f32.mrb[0].mxu0
      %v403 = vadd.f32 %v348, %v402
      %v404 = vpop.f32.mrb[0].mxu0
      %405 = vdwg.mxu0
      %v406 = vld [vmem:[%s4] sm:$0x1]
      %v408 = vlaneseq
      %v409 = vshrl.u32 %v408, 7
      %v410 = vsub.s32 0, %v409
      %v411 = vrot.slane %v406, %v410
      %v413 = vadd.f32 %v400, %v411
      %v414 = vadd.f32 %v403, %v411
      %415 = vst.msk [vmem:[%s284] sm:$0xff] %vm306, %v413
      %416 = vst.msk [vmem:[%s284 + $0x8] sm:$0xff] %vm306, %v414
      %s417 = smul.u32 2, %s21
      %p418 = scmp.lt.s32.totalorder %s20, 3
      %s419 = scalar_select %p418, %s20, 3
      %p420 = scmp.lt.s32.totalorder %s417, 1
      %s421 = scalar_select %p420, %s417, 1
      %s422 = smul.addr %s419, 2
      %s423 = sadd.s32 %s421, %s422
      %s424 = smul.addr %s423, 8
      %s425 = scalar_lea.vmem %s5, %s424
      // Predicated region
      $region41: #{thoc_forward.17} parent=39 // pred_check
        %p426 = pneg %p165
      $region42: #{thoc_forward.17} parent=39 // pred_check_branch
        %428 = sbr.rel (%p426) target = $region44
      $region43: #{thoc_forward.17} parent=39 // pred_region
        %s429 = smul.u32 2, %s21
      $region44: #{thoc_forward.17} parent=39 // pred_fallthru
        _
    $region40: #{thoc_forward.17} parent=5 // pred_fallthru
      _
    %p430 = scmp.le.s32.totalorder 2, %s11
    // Predicated region
    $region45: #{thoc_forward.17} parent=5 // pred_check
      %p431 = pneg %p430
    $region46: #{thoc_forward.17} parent=5 // pred_check_branch
      %433 = sbr.rel (%p431) target = $region48
    $region47: #{thoc_forward.17} parent=5 // pred_region
      %s434 = ssub.s32 %s11, 2
      // Predicated region
      $region49: #{thoc_forward.17} parent=47 // pred_check
        %p435 = pneg %p171
      $region50: #{thoc_forward.17} parent=47 // pred_check_branch
        %437 = sbr.rel (%p435) target = $region52
      $region51: #{thoc_forward.17} parent=47 // pred_region
        %s438 = smul.u32 2, %s23
        %p439 = scmp.lt.s32.totalorder %s22, 3
        %s440 = scalar_select %p439, %s22, 3
        %p441 = scmp.lt.s32.totalorder %s438, 1
        %s442 = scalar_select %p441, %s438, 1
        %s443 = smul.addr %s440, 2
        %s444 = sadd.s32 %s442, %s443
        %s445 = smul.addr %s444, 8
        %s446 = scalar_lea.vmem %s5, %s445
      $region52: #{thoc_forward.17} parent=47 // pred_fallthru
        _
    $region48: #{thoc_forward.17} parent=5 // pred_fallthru
      _
  $region6: #{thoc_forward.17} parent=0 // loop_footer
    %s15 = sadd.s32 1, %s11
  $region7: #{thoc_forward.17} parent=0 // loop_footer_branch
    %10 = sbr.rel target = $region3
  $region8: #{thoc_forward.17} parent=0 // loop_exit
    _

// kernel: thoc_forward.13
$region0: #{thoc_forward.13}
  #allocation0 [shape = 'u32[]', space=smem, size = 0x4, offset = 0x4, fixed_abs, tag = 'smem constant byte address 0x4 - core index']
  #allocation1 [shape = 'u32[144,128]{1,0:T(1,128)}', space=vmem, size = 0x12000, scoped, tag = 'internal scratch']
  #allocation2 [shape = 'f32[4,16]{1,0:T(4,128)}', space=vmem, size = 0x800, scoped, tag = 'scratch operand']
  %s0 = inlined_call_operand.vmem [shape: bf16[2,8,16], index: 0, kind: input, shape index: {}]
  %s1 = inlined_call_operand.vmem [shape: bf16[3,16,16], index: 1, kind: input, shape index: {}]
  %s2 = inlined_call_operand.vmem [shape: bf16[3,16,16], index: 2, kind: input, shape index: {}]
  %s3 = inlined_call_operand.vmem [shape: f32[3,1,16], index: 3, kind: input, shape index: {}]
  %s4 = inlined_call_operand.vmem [shape: f32[3,1,16], index: 4, kind: input, shape index: {}]
  %s5 = inlined_call_operand.vmem [shape: bf16[2,8,16], index: 5, kind: output, shape index: {}]
  %s6 = sld [smem:[#allocation0]]
  $region57: #{thoc_forward.13} parent=0
    _
  %s8 = ssub.s32 1, %s6
  %s9 = scalar_select 0, %s8, %s6
  loop: start=0, step=1, limit=4
  $region2: #{thoc_forward.13} parent=0 // loop_pre_header
    _
  $region3: #{thoc_forward.13} parent=0 // loop_header
    %s11 = sphi 0, %s15
    %p12 = scmp.ge.s32.totalorder %s11, 4
    %s18 = sphi 0, %s30
    %s19 = sphi 0, %s26
    %s20 = sphi 0, %s18
    %s21 = sphi 0, %s19
    %s22 = sphi 0, %s20
    %s23 = sphi 0, %s21
    %s35 = sphi 0, %s37
    %s38 = sphi 0, %s35
    %s39 = sphi 0, %s38
    %s55 = sphi 0, %s39
    %s59 = sphi 0, %s59
    %s61 = sphi 0, %s59
    %s62 = sphi 0, %s61
    %s76 = sphi 0, %s62
    %s80 = sphi 0, %s80
    %s82 = sphi 0, %s80
    %s83 = sphi 0, %s82
    %s97 = sphi 0, %s83
    %s101 = sphi 0, %s101
    %s103 = sphi 0, %s101
    %s104 = sphi 0, %s103
    %s118 = sphi 0, %s104
    %s122 = sphi 0, %s122
    %s124 = sphi 0, %s122
    %s125 = sphi 0, %s124
    %s139 = sphi 0, %s125
    %s147 = sphi 0, %s149
    %s150 = sphi 0, %s147
    %s151 = sphi 0, %s150
    %s167 = sphi 0, %s151
  $region4: #{thoc_forward.13} parent=0 // loop_header_branch
    %14 = sbr.rel (%p12) target = $region8
  $region5: #{thoc_forward.13} parent=0 // loop_body
    %s16 = ssub.s32 %s11, 1
    %s17 = ssub.s32 %s11, 2
    %s24 = sadd.s32 1, %s19
    %p25 = scmp.ge.s32.totalorder %s24, 1
    %s26 = scalar_select %p25, 0, %s24
    %s27 = sadd.s32 1, %s18
    %s28 = scalar_select %p25, %s27, %s18
    %p29 = scmp.ge.s32.totalorder %s28, 2
    %s30 = scalar_select %p29, 0, %s28
    %s31 = ssub.s32 %s18, %s30
    %s32 = ssub.s32 %s19, %s26
    %s33 = sor.u32 %s31, %s32
    %p34 = scmp.eq.s32.totalorder %s33, 0
    %s36 = sadd.s32 %s35, 1
    %s37 = scalar_select %p34, %s35, %s36
    %p40 = pneg %p34
    %p41 = scmp.eq.s32.totalorder %s11, 1
    %p42 = por %p40, %p41
    %p43 = scmp.ne.s32.totalorder %s35, %s38
    %p44 = scmp.eq.s32.totalorder %s11, 0
    %p45 = por %p43, %p44
    %p46 = scmp.ne.s32.totalorder %s35, %s38
    %p47 = scmp.eq.s32.totalorder %s16, 1
    %p48 = por %p46, %p47
    %p49 = scmp.ne.s32.totalorder %s38, %s39
    %p50 = scmp.eq.s32.totalorder %s16, 0
    %p51 = por %p49, %p50
    %p52 = scmp.ne.s32.totalorder %s38, %s39
    %p53 = scmp.eq.s32.totalorder %s17, 1
    %p54 = por %p52, %p53
    %p56 = scmp.ne.s32.totalorder %s39, %s55
    %p57 = scmp.eq.s32.totalorder %s17, 0
    %p58 = por %p56, %p57
    %s60 = sadd.s32 %s59, 1
    %p63 = scmp.eq.s32.totalorder %s11, 1
    %p64 = scmp.ne.s32.totalorder %s59, %s61
    %p65 = scmp.eq.s32.totalorder %s11, 0
    %p66 = por %p64, %p65
    %p67 = scmp.ne.s32.totalorder %s59, %s61
    %p68 = scmp.eq.s32.totalorder %s16, 1
    %p69 = por %p67, %p68
    %p70 = scmp.ne.s32.totalorder %s61, %s62
    %p71 = scmp.eq.s32.totalorder %s16, 0
    %p72 = por %p70, %p71
    %p73 = scmp.ne.s32.totalorder %s61, %s62
    %p74 = scmp.eq.s32.totalorder %s17, 1
    %p75 = por %p73, %p74
    %p77 = scmp.ne.s32.totalorder %s62, %s76
    %p78 = scmp.eq.s32.totalorder %s17, 0
    %p79 = por %p77, %p78
    %s81 = sadd.s32 %s80, 1
    %p84 = scmp.eq.s32.totalorder %s11, 1
    %p85 = scmp.ne.s32.totalorder %s80, %s82
    %p86 = scmp.eq.s32.totalorder %s11, 0
    %p87 = por %p85, %p86
    %p88 = scmp.ne.s32.totalorder %s80, %s82
    %p89 = scmp.eq.s32.totalorder %s16, 1
    %p90 = por %p88, %p89
    %p91 = scmp.ne.s32.totalorder %s82, %s83
    %p92 = scmp.eq.s32.totalorder %s16, 0
    %p93 = por %p91, %p92
    %p94 = scmp.ne.s32.totalorder %s82, %s83
    %p95 = scmp.eq.s32.totalorder %s17, 1
    %p96 = por %p94, %p95
    %p98 = scmp.ne.s32.totalorder %s83, %s97
    %p99 = scmp.eq.s32.totalorder %s17, 0
    %p100 = por %p98, %p99
    %s102 = sadd.s32 %s101, 1
    %p105 = scmp.eq.s32.totalorder %s11, 1
    %p106 = scmp.ne.s32.totalorder %s101, %s103
    %p107 = scmp.eq.s32.totalorder %s11, 0
    %p108 = por %p106, %p107
    %p109 = scmp.ne.s32.totalorder %s101, %s103
    %p110 = scmp.eq.s32.totalorder %s16, 1
    %p111 = por %p109, %p110
    %p112 = scmp.ne.s32.totalorder %s103, %s104
    %p113 = scmp.eq.s32.totalorder %s16, 0
    %p114 = por %p112, %p113
    %p115 = scmp.ne.s32.totalorder %s103, %s104
    %p116 = scmp.eq.s32.totalorder %s17, 1
    %p117 = por %p115, %p116
    %p119 = scmp.ne.s32.totalorder %s104, %s118
    %p120 = scmp.eq.s32.totalorder %s17, 0
    %p121 = por %p119, %p120
    %s123 = sadd.s32 %s122, 1
    %p126 = scmp.eq.s32.totalorder %s11, 1
    %p127 = scmp.ne.s32.totalorder %s122, %s124
    %p128 = scmp.eq.s32.totalorder %s11, 0
    %p129 = por %p127, %p128
    %p130 = scmp.ne.s32.totalorder %s122, %s124
    %p131 = scmp.eq.s32.totalorder %s16, 1
    %p132 = por %p130, %p131
    %p133 = scmp.ne.s32.totalorder %s124, %s125
    %p134 = scmp.eq.s32.totalorder %s16, 0
    %p135 = por %p133, %p134
    %p136 = scmp.ne.s32.totalorder %s124, %s125
    %p137 = scmp.eq.s32.totalorder %s17, 1
    %p138 = por %p136, %p137
    %p140 = scmp.ne.s32.totalorder %s125, %s139
    %p141 = scmp.eq.s32.totalorder %s17, 0
    %p142 = por %p140, %p141
    %s143 = ssub.s32 %s18, %s30
    %s144 = ssub.s32 %s19, %s26
    %s145 = sor.u32 %s143, %s144
    %p146 = scmp.eq.s32.totalorder %s145, 0
    %s148 = sadd.s32 %s147, 1
    %s149 = scalar_select %p146, %s147, %s148
    %p152 = pneg %p146
    %p153 = scmp.eq.s32.totalorder %s11, 1
    %p154 = por %p152, %p153
    %p155 = scmp.ne.s32.totalorder %s147, %s150
    %p156 = scmp.eq.s32.totalorder %s11, 0
    %p157 = por %p155, %p156
    %p158 = scmp.ne.s32.totalorder %s147, %s150
    %p159 = scmp.eq.s32.totalorder %s16, 1
    %p160 = por %p158, %p159
    %p161 = scmp.ne.s32.totalorder %s150, %s151
    %p162 = scmp.eq.s32.totalorder %s16, 0
    %p163 = por %p161, %p162
    %p164 = scmp.ne.s32.totalorder %s150, %s151
    %p165 = scmp.eq.s32.totalorder %s17, 1
    %p166 = por %p164, %p165
    %p168 = scmp.ne.s32.totalorder %s151, %s167
    %p169 = scmp.eq.s32.totalorder %s17, 0
    %p170 = por %p168, %p169
    %p171 = scmp.le.s32.totalorder 1, %s11
    %p172 = scmp.lt.s32.totalorder %s11, 3
    %p173 = pnand %p171, %p172
    %p174 = pneg %p173
    // Predicated region
    $region9: #{thoc_forward.13} parent=5 // pred_check
      _
    $region10: #{thoc_forward.13} parent=5 // pred_check_branch
      %176 = sbr.rel (%p173) target = $region12
    $region11: #{thoc_forward.13} parent=5 // pred_region
      %s177 = ssub.s32 %s11, 1
      // Predicated region
      $region13: #{thoc_forward.13} parent=11 // pred_check
        %p178 = pneg %p72
      $region14: #{thoc_forward.13} parent=11 // pred_check_branch
        %180 = sbr.rel (%p178) target = $region16
      $region15: #{thoc_forward.13} parent=11 // pred_region
        _
      $region16: #{thoc_forward.13} parent=11 // pred_fallthru
        _
      // Predicated region
      $region17: #{thoc_forward.13} parent=11 // pred_check
        %p181 = pneg %p93
      $region18: #{thoc_forward.13} parent=11 // pred_check_branch
        %183 = sbr.rel (%p181) target = $region20
      $region19: #{thoc_forward.13} parent=11 // pred_region
        _
      $region20: #{thoc_forward.13} parent=11 // pred_fallthru
        _
      // Predicated region
      $region21: #{thoc_forward.13} parent=11 // pred_check
        %p184 = pneg %p114
      $region22: #{thoc_forward.13} parent=11 // pred_check_branch
        %186 = sbr.rel (%p184) target = $region24
      $region23: #{thoc_forward.13} parent=11 // pred_region
        _
      $region24: #{thoc_forward.13} parent=11 // pred_fallthru
        _
      // Predicated region
      $region25: #{thoc_forward.13} parent=11 // pred_check
        %p187 = pneg %p135
      $region26: #{thoc_forward.13} parent=11 // pred_check_branch
        %189 = sbr.rel (%p187) target = $region28
      $region27: #{thoc_forward.13} parent=11 // pred_region
        _
      $region28: #{thoc_forward.13} parent=11 // pred_fallthru
        _
    $region12: #{thoc_forward.13} parent=5 // pred_fallthru
      _
    %p190 = scmp.lt.s32.totalorder %s11, 2
    // Predicated region
    $region29: #{thoc_forward.13} parent=5 // pred_check
      %p191 = pneg %p190
    $region30: #{thoc_forward.13} parent=5 // pred_check_branch
      %193 = sbr.rel (%p191) target = $region32
    $region31: #{thoc_forward.13} parent=5 // pred_region
      // Predicated region
      $region33: #{thoc_forward.13} parent=31 // pred_check
        %p194 = pneg %p45
      $region34: #{thoc_forward.13} parent=31 // pred_check_branch
        %196 = sbr.rel (%p194) target = $region36
      $region35: #{thoc_forward.13} parent=31 // pred_region
        %p197 = scmp.lt.s32.totalorder %s18, 1
        %s198 = scalar_select %p197, %s18, 1
        %p199 = scmp.lt.s32.totalorder %s19, 0
        %s200 = scalar_select %p199, %s19, 0
        %s201 = sadd.s32 %s200, %s198
        %s202 = smul.addr %s201, 4
        %s203 = scalar_lea.vmem %s0, %s202
      $region36: #{thoc_forward.13} parent=31 // pred_fallthru
        _
    $region32: #{thoc_forward.13} parent=5 // pred_fallthru
      _
    %p204 = scmp.le.s32.totalorder 1, %s11
    %p205 = scmp.lt.s32.totalorder %s11, 3
    %p206 = pnand %p204, %p205
    %p207 = pneg %p206
    // Predicated region
    $region37: #{thoc_forward.13} parent=5 // pred_check
      _
    $region38: #{thoc_forward.13} parent=5 // pred_check_branch
      %209 = sbr.rel (%p206) target = $region40
    $region39: #{thoc_forward.13} parent=5 // pred_region
      %s210 = ssub.s32 %s11, 1
      %p211 = scmp.lt.s32.totalorder %s20, 1
      %s212 = scalar_select %p211, %s20, 1
      %p213 = scmp.lt.s32.totalorder %s21, 0
      %s214 = scalar_select %p213, %s21, 0
      %s215 = sadd.s32 %s214, %s212
      %s216 = smul.addr %s215, 4
      %s217 = scalar_lea.vmem %s0, %s216
      %p218 = pneg %p51
      %p219 = pneg %p48
      %p220 = pneg %p72
      %p221 = pneg %p69
      %p222 = pneg %p93
      %p223 = pneg %p90
      %p224 = pneg %p114
      %p225 = pneg %p111
      %p226 = pneg %p135
      %p227 = pneg %p132
      %p228 = pneg %p163
      %p229 = pneg %p160
      %p230 = scmp.lt.s32.totalorder %s20, 1
      %s231 = scalar_select %p230, %s20, 1
      %p232 = scmp.lt.s32.totalorder %s21, 0
      %s233 = scalar_select %p232, %s21, 0
      %s234 = sadd.s32 %s233, %s231
      %s235 = smul.addr %s234, 4
      %s236 = scalar_lea.vmem %s5, %s235
      %p237 = scmp.lt.s32.totalorder %s20, 1
      %s238 = scalar_select %p237, %s20, 1
      %p239 = scmp.lt.s32.totalorder %s21, 0
      %s240 = scalar_select %p239, %s21, 0
      %s241 = sadd.s32 %s240, %s238
      %s242 = smul.addr %s241, 4
      %s243 = scalar_lea.vmem %s0, %s242
      %p244 = scmp.lt.s32.totalorder %s20, 1
      %s245 = scalar_select %p244, %s20, 1
      %p246 = scmp.lt.s32.totalorder %s21, 0
      %s247 = scalar_select %p246, %s21, 0
      %s248 = sadd.s32 %s247, %s245
      %s249 = smul.addr %s248, 4
      %s250 = scalar_lea.vmem %s5, %s249
      %p252 = scmp.eq.s32.totalorder %s21, 0
      // Predicated region
      $region41: #{thoc_forward.13} parent=39 // pred_check
        %p253 = pneg %p252
      $region42: #{thoc_forward.13} parent=39 // pred_check_branch
        %255 = sbr.rel (%p253) target = $region44
      $region43: #{thoc_forward.13} parent=39 // pred_region
        %vm256 = vcmask 125952
        %257 = vst.msk [vmem:[#allocation2] sm:$0xf] %vm256, 0.0
      $region44: #{thoc_forward.13} parent=39 // pred_fallthru
        _
      %v258 = vld [vmem:[%s243] sm:$0xf]
      %v259 = vld [vmem:[%s1] sm:$0xf]
      %v260 = vld [vmem:[%s1 + $0x4] sm:$0xf]
      %v261 = vld [vmem:[%s3] sm:$0x1]
      %v263 = vlaneseq
      %v264 = vshrl.u32 %v263, 7
      %v265 = vsub.s32 0, %v264
      %v266 = vrot.slane %v261, %v265
      %v270 = vunpack.c.l.b16 %v259
      %v271 = vunpack.c.l.b16 %v260
      %v272 = vpack.c.b16 %v271, %v270
      %vm274 = vcmask 130048
      %v276 = vsel %vm274, %v258, 0
      %278 = vmatprep.subr.bf16.mxu0 0
      %279 = vmatpush1.bf16.msra.mxu0 %v272
      %280 = vmatprep.subr.bf16.mxu0 0
      %281 = vmatpush1.bf16.msra.mxu0 0
      %282 = vmatprep.subr.bf16.mxu0 0
      %283 = vmatpush1.bf16.msra.mxu0 0
      %284 = vmatprep.subr.bf16.mxu0 0
      %285 = vmatpush1.bf16.msra.mxu0 0
      %286 = vmatprep.subr.bf16.mxu0 0
      %287 = vmatpush1.bf16.msra.mxu0 0
      %288 = vmatprep.subr.bf16.mxu0 0
      %289 = vmatpush1.bf16.msra.mxu0 0
      %290 = vmatprep.subr.bf16.mxu0 0
      %291 = vmatpush1.bf16.msra.mxu0 0
      %292 = vmatprep.subr.bf16.mxu0 0
      %293 = vmatpush1.bf16.msra.mxu0 0
      %294 = vmatprep.subr.bf16.mxu0 0
      %295 = vmatpush1.bf16.msra.mxu0 0
      %296 = vmatprep.subr.bf16.mxu0 0
      %297 = vmatpush1.bf16.msra.mxu0 0
      %298 = vmatprep.subr.bf16.mxu0 0
      %299 = vmatpush1.bf16.msra.mxu0 0
      %300 = vmatprep.subr.bf16.mxu0 0
      %301 = vmatpush1.bf16.msra.mxu0 0
      %302 = vmatprep.subr.bf16.mxu0 0
      %303 = vmatpush1.bf16.msra.mxu0 0
      %304 = vmatprep.subr.bf16.mxu0 0
      %305 = vmatpush1.bf16.msra.mxu0 0
      %306 = vmatprep.subr.bf16.mxu0 0
      %307 = vmatpush1.bf16.msra.mxu0 0
      %308 = vmatprep.subr.bf16.mxu0 0
      %309 = vmatpush1.bf16.msra.mxu0 0
      %310 = vmatprep.mubr.bf16.mxu0 0
      %311 = vmatmul.mubr.bf16.gmra.mrb[0].mxu0 %v276
      %v312 = vpop.f32.mrb[0].mxu0
      %v313 = vadd.f32 %v266, %v312
      %v314 = vpop.f32.mrb[0].mxu0
      %v315 = vpop.f32.mrb[0].mxu0
      %v316 = vpop.f32.mrb[0].mxu0
      %317 = vdwg.mxu0
      %s318 = scalar_lea.vmem %s1, 8
      %v319 = vld [vmem:[%s318] sm:$0xf]
      %v320 = vld [vmem:[%s318 + $0x4] sm:$0xf]
      %s321 = scalar_lea.vmem %s3, 1
      %v322 = vld [vmem:[%s321] sm:$0x1]
      %v324 = vlaneseq
      %v325 = vshrl.u32 %v324, 7
      %v326 = vsub.s32 0, %v325
      %v327 = vrot.slane %v322, %v326
      %v331 = vunpack.c.l.b16 %v319
      %v332 = vunpack.c.l.b16 %v320
      %v333 = vpack.c.b16 %v332, %v331
      %335 = vmatprep.subr.bf16.mxu0 0
      %336 = vmatpush1.bf16.msra.mxu0 %v333
      %337 = vmatprep.subr.bf16.mxu0 0
      %338 = vmatpush1.bf16.msra.mxu0 0
      %339 = vmatprep.subr.bf16.mxu0 0
      %340 = vmatpush1.bf16.msra.mxu0 0
      %341 = vmatprep.subr.bf16.mxu0 0
      %342 = vmatpush1.bf16.msra.mxu0 0
      %343 = vmatprep.subr.bf16.mxu0 0
      %344 = vmatpush1.bf16.msra.mxu0 0
      %345 = vmatprep.subr.bf16.mxu0 0
      %346 = vmatpush1.bf16.msra.mxu0 0
      %347 = vmatprep.subr.bf16.mxu0 0
      %348 = vmatpush1.bf16.msra.mxu0 0
      %349 = vmatprep.subr.bf16.mxu0 0
      %350 = vmatpush1.bf16.msra.mxu0 0
      %351 = vmatprep.subr.bf16.mxu0 0
      %352 = vmatpush1.bf16.msra.mxu0 0
      %353 = vmatprep.subr.bf16.mxu0 0
      %354 = vmatpush1.bf16.msra.mxu0 0
      %355 = vmatprep.subr.bf16.mxu0 0
      %356 = vmatpush1.bf16.msra.mxu0 0
      %357 = vmatprep.subr.bf16.mxu0 0
      %358 = vmatpush1.bf16.msra.mxu0 0
      %359 = vmatprep.subr.bf16.mxu0 0
      %360 = vmatpush1.bf16.msra.mxu0 0
      %361 = vmatprep.subr.bf16.mxu0 0
      %362 = vmatpush1.bf16.msra.mxu0 0
      %363 = vmatprep.subr.bf16.mxu0 0
      %364 = vmatpush1.bf16.msra.mxu0 0
      %365 = vmatprep.subr.bf16.mxu0 0
      %366 = vmatpush1.bf16.msra.mxu0 0
      %367 = vmatprep.mubr.bf16.mxu0 0
      %368 = vmatmul.mubr.bf16.gmra.mrb[0].mxu0 %v276
      %v369 = vpop.f32.mrb[0].mxu0
      %v370 = vadd.f32 %v327, %v369
      %v371 = vpop.f32.mrb[0].mxu0
      %v372 = vpop.f32.mrb[0].mxu0
      %v373 = vpop.f32.mrb[0].mxu0
      %374 = vdwg.mxu0
      %s375 = scalar_lea.vmem %s1, 16
      %v376 = vld [vmem:[%s375] sm:$0xf]
      %v377 = vld [vmem:[%s375 + $0x4] sm:$0xf]
      %s378 = scalar_lea.vmem %s3, 2
      %v379 = vld [vmem:[%s378] sm:$0x1]
      %v381 = vlaneseq
      %v382 = vshrl.u32 %v381, 7
      %v383 = vsub.s32 0, %v382
      %v384 = vrot.slane %v379, %v383
      %v388 = vunpack.c.l.b16 %v376
      %v389 = vunpack.c.l.b16 %v377
      %v390 = vpack.c.b16 %v389, %v388
      %392 = vmatprep.subr.bf16.mxu0 0
      %393 = vmatpush1.bf16.msra.mxu0 %v390
      %394 = vmatprep.subr.bf16.mxu0 0
      %395 = vmatpush1.bf16.msra.mxu0 0
      %396 = vmatprep.subr.bf16.mxu0 0
      %397 = vmatpush1.bf16.msra.mxu0 0
      %398 = vmatprep.subr.bf16.mxu0 0
      %399 = vmatpush1.bf16.msra.mxu0 0
      %400 = vmatprep.subr.bf16.mxu0 0
      %401 = vmatpush1.bf16.msra.mxu0 0
      %402 = vmatprep.subr.bf16.mxu0 0
      %403 = vmatpush1.bf16.msra.mxu0 0
      %404 = vmatprep.subr.bf16.mxu0 0
      %405 = vmatpush1.bf16.msra.mxu0 0
      %406 = vmatprep.subr.bf16.mxu0 0
      %407 = vmatpush1.bf16.msra.mxu0 0
      %408 = vmatprep.subr.bf16.mxu0 0
      %409 = vmatpush1.bf16.msra.mxu0 0
      %410 = vmatprep.subr.bf16.mxu0 0
      %411 = vmatpush1.bf16.msra.mxu0 0
      %412 = vmatprep.subr.bf16.mxu0 0
      %413 = vmatpush1.bf16.msra.mxu0 0
      %414 = vmatprep.subr.bf16.mxu0 0
      %415 = vmatpush1.bf16.msra.mxu0 0
      %416 = vmatprep.subr.bf16.mxu0 0
      %417 = vmatpush1.bf16.msra.mxu0 0
      %418 = vmatprep.subr.bf16.mxu0 0
      %419 = vmatpush1.bf16.msra.mxu0 0
      %420 = vmatprep.subr.bf16.mxu0 0
      %421 = vmatpush1.bf16.msra.mxu0 0
      %422 = vmatprep.subr.bf16.mxu0 0
      %423 = vmatpush1.bf16.msra.mxu0 0
      %424 = vmatprep.mubr.bf16.mxu0 0
      %425 = vmatmul.mubr.bf16.gmra.mrb[0].mxu0 %v276
      %v426 = vpop.f32.mrb[0].mxu0
      %v427 = vadd.f32 %v384, %v426
      %v428 = vpop.f32.mrb[0].mxu0
      %v429 = vpop.f32.mrb[0].mxu0
      %v430 = vpop.f32.mrb[0].mxu0
      %431 = vdwg.mxu0
      %v432 = vld [vmem:[%s2] sm:$0xf]
      %v433 = vld [vmem:[%s2 + $0x4] sm:$0xf]
      %s434 = scalar_lea.vmem %s2, 8
      %v435 = vld [vmem:[%s434] sm:$0xf]
      %v436 = vld [vmem:[%s434 + $0x4] sm:$0xf]
      %s437 = scalar_lea.vmem %s2, 16
      %v438 = vld [vmem:[%s437] sm:$0xf]
      %v439 = vld [vmem:[%s437 + $0x4] sm:$0xf]
      %v440 = vld [vmem:[%s4] sm:$0x1]
      %s441 = scalar_lea.vmem %s4, 1
      %v442 = vld [vmem:[%s441] sm:$0x1]
      %s443 = scalar_lea.vmem %s4, 2
      %v444 = vld [vmem:[%s443] sm:$0x1]
      %v445 = vld [vmem:[#allocation2] sm:$0xf]
      %v446 = vpack.c.bf16 %v445, %v445
      %v448 = vlaneseq
      %v449 = vshrl.u32 %v448, 7
      %v450 = vsub.s32 0, %v449
      %v451 = vrot.slane %v440, %v450
      %v455 = vunpack.c.l.b16 %v432
      %v456 = vunpack.c.l.b16 %v433
      %v457 = vpack.c.b16 %v456, %v455
      %v460 = vsel %vm274, %v446, 0
      %462 = vmatprep.subr.bf16.mxu0 0
      %463 = vmatpush1.bf16.msra.mxu0 %v457
      %464 = vmatprep.subr.bf16.mxu0 0
      %465 = vmatpush1.bf16.msra.mxu0 0
      %466 = vmatprep.subr.bf16.mxu0 0
      %467 = vmatpush1.bf16.msra.mxu0 0
      %468 = vmatprep.subr.bf16.mxu0 0
      %469 = vmatpush1.bf16.msra.mxu0 0
      %470 = vmatprep.subr.bf16.mxu0 0
      %471 = vmatpush1.bf16.msra.mxu0 0
      %472 = vmatprep.subr.bf16.mxu0 0
      %473 = vmatpush1.bf16.msra.mxu0 0
      %474 = vmatprep.subr.bf16.mxu0 0
      %475 = vmatpush1.bf16.msra.mxu0 0
      %476 = vmatprep.subr.bf16.mxu0 0
      %477 = vmatpush1.bf16.msra.mxu0 0
      %478 = vmatprep.subr.bf16.mxu0 0
      %479 = vmatpush1.bf16.msra.mxu0 0
      %480 = vmatprep.subr.bf16.mxu0 0
      %481 = vmatpush1.bf16.msra.mxu0 0
      %482 = vmatprep.subr.bf16.mxu0 0
      %483 = vmatpush1.bf16.msra.mxu0 0
      %484 = vmatprep.subr.bf16.mxu0 0
      %485 = vmatpush1.bf16.msra.mxu0 0
      %486 = vmatprep.subr.bf16.mxu0 0
      %487 = vmatpush1.bf16.msra.mxu0 0
      %488 = vmatprep.subr.bf16.mxu0 0
      %489 = vmatpush1.bf16.msra.mxu0 0
      %490 = vmatprep.subr.bf16.mxu0 0
      %491 = vmatpush1.bf16.msra.mxu0 0
      %492 = vmatprep.subr.bf16.mxu0 0
      %493 = vmatpush1.bf16.msra.mxu0 0
      %494 = vmatprep.mubr.bf16.mxu0 0
      %495 = vmatmul.mubr.bf16.gmra.mrb[0].mxu0 %v460
      %v496 = vpop.f32.mrb[0].mxu0
      %v497 = vadd.f32 %v451, %v496
      %v498 = vpop.f32.mrb[0].mxu0
      %v499 = vpop.f32.mrb[0].mxu0
      %v500 = vpop.f32.mrb[0].mxu0
      %501 = vdwg.mxu0
      %v503 = vlaneseq
      %v504 = vshrl.u32 %v503, 7
      %v505 = vsub.s32 0, %v504
      %v506 = vrot.slane %v442, %v505
      %v510 = vunpack.c.l.b16 %v435
      %v511 = vunpack.c.l.b16 %v436
      %v512 = vpack.c.b16 %v511, %v510
      %514 = vmatprep.subr.bf16.mxu0 0
      %515 = vmatpush1.bf16.msra.mxu0 %v512
      %516 = vmatprep.subr.bf16.mxu0 0
      %517 = vmatpush1.bf16.msra.mxu0 0
      %518 = vmatprep.subr.bf16.mxu0 0
      %519 = vmatpush1.bf16.msra.mxu0 0
      %520 = vmatprep.subr.bf16.mxu0 0
      %521 = vmatpush1.bf16.msra.mxu0 0
      %522 = vmatprep.subr.bf16.mxu0 0
      %523 = vmatpush1.bf16.msra.mxu0 0
      %524 = vmatprep.subr.bf16.mxu0 0
      %525 = vmatpush1.bf16.msra.mxu0 0
      %526 = vmatprep.subr.bf16.mxu0 0
      %527 = vmatpush1.bf16.msra.mxu0 0
      %528 = vmatprep.subr.bf16.mxu0 0
      %529 = vmatpush1.bf16.msra.mxu0 0
      %530 = vmatprep.subr.bf16.mxu0 0
      %531 = vmatpush1.bf16.msra.mxu0 0
      %532 = vmatprep.subr.bf16.mxu0 0
      %533 = vmatpush1.bf16.msra.mxu0 0
      %534 = vmatprep.subr.bf16.mxu0 0
      %535 = vmatpush1.bf16.msra.mxu0 0
      %536 = vmatprep.subr.bf16.mxu0 0
      %537 = vmatpush1.bf16.msra.mxu0 0
      %538 = vmatprep.subr.bf16.mxu0 0
      %539 = vmatpush1.bf16.msra.mxu0 0
      %540 = vmatprep.subr.bf16.mxu0 0
      %541 = vmatpush1.bf16.msra.mxu0 0
      %542 = vmatprep.subr.bf16.mxu0 0
      %543 = vmatpush1.bf16.msra.mxu0 0
      %544 = vmatprep.subr.bf16.mxu0 0
      %545 = vmatpush1.bf16.msra.mxu0 0
      %546 = vmatprep.mubr.bf16.mxu0 0
      %547 = vmatmul.mubr.bf16.gmra.mrb[0].mxu0 %v460
      %v548 = vpop.f32.mrb[0].mxu0
      %v549 = vadd.f32 %v506, %v548
      %v550 = vpop.f32.mrb[0].mxu0
      %v551 = vpop.f32.mrb[0].mxu0
      %v552 = vpop.f32.mrb[0].mxu0
      %553 = vdwg.mxu0
      %v555 = vlaneseq
      %v556 = vshrl.u32 %v555, 7
      %v557 = vsub.s32 0, %v556
      %v558 = vrot.slane %v444, %v557
      %v562 = vunpack.c.l.b16 %v438
      %v563 = vunpack.c.l.b16 %v439
      %v564 = vpack.c.b16 %v563, %v562
      %566 = vmatprep.subr.bf16.mxu0 0
      %567 = vmatpush1.bf16.msra.mxu0 %v564
      %568 = vmatprep.subr.bf16.mxu0 0
      %569 = vmatpush1.bf16.msra.mxu0 0
      %570 = vmatprep.subr.bf16.mxu0 0
      %571 = vmatpush1.bf16.msra.mxu0 0
      %572 = vmatprep.subr.bf16.mxu0 0
      %573 = vmatpush1.bf16.msra.mxu0 0
      %574 = vmatprep.subr.bf16.mxu0 0
      %575 = vmatpush1.bf16.msra.mxu0 0
      %576 = vmatprep.subr.bf16.mxu0 0
      %577 = vmatpush1.bf16.msra.mxu0 0
      %578 = vmatprep.subr.bf16.mxu0 0
      %579 = vmatpush1.bf16.msra.mxu0 0
      %580 = vmatprep.subr.bf16.mxu0 0
      %581 = vmatpush1.bf16.msra.mxu0 0
      %582 = vmatprep.subr.bf16.mxu0 0
      %583 = vmatpush1.bf16.msra.mxu0 0
      %584 = vmatprep.subr.bf16.mxu0 0
      %585 = vmatpush1.bf16.msra.mxu0 0
      %586 = vmatprep.subr.bf16.mxu0 0
      %587 = vmatpush1.bf16.msra.mxu0 0
      %588 = vmatprep.subr.bf16.mxu0 0
      %589 = vmatpush1.bf16.msra.mxu0 0
      %590 = vmatprep.subr.bf16.mxu0 0
      %591 = vmatpush1.bf16.msra.mxu0 0
      %592 = vmatprep.subr.bf16.mxu0 0
      %593 = vmatpush1.bf16.msra.mxu0 0
      %594 = vmatprep.subr.bf16.mxu0 0
      %595 = vmatpush1.bf16.msra.mxu0 0
      %596 = vmatprep.subr.bf16.mxu0 0
      %597 = vmatpush1.bf16.msra.mxu0 0
      %598 = vmatprep.mubr.bf16.mxu0 0
      %599 = vmatmul.mubr.bf16.gmra.mrb[0].mxu0 %v460
      %v600 = vpop.f32.mrb[0].mxu0
      %v601 = vadd.f32 %v558, %v600
      %v602 = vpop.f32.mrb[0].mxu0
      %v603 = vpop.f32.mrb[0].mxu0
      %v604 = vpop.f32.mrb[0].mxu0
      %605 = vdwg.mxu0
      %v606 = vadd.f32 %v313, %v497
      %v607 = vxor.u32 %v606, 2147483648
      %v608 = vmul.f32 %v607, 1.442695
      %v609 = vpow.pop %v608
      %v610 = vadd.f32 %v609, 1.0
      %v611 = vrcp.pop %v610
      %v612 = vmul.f32 1.0, %v611
      %v613 = vadd.f32 %v370, %v549
      %v614 = vxor.u32 %v613, 2147483648
      %v615 = vmul.f32 %v614, 1.442695
      %v616 = vpow.pop %v615
      %v617 = vadd.f32 %v616, 1.0
      %v618 = vrcp.pop %v617
      %v619 = vmul.f32 1.0, %v618
      %v620 = vmul.f32 %v612, %v601
      %v621 = vadd.f32 %v427, %v620
      %v622 = vtanh.pop %v621
      %v623 = vsub.f32 1.0, %v619
      %v624 = vmul.f32 %v623, %v622
      %v625 = vmul.f32 %v619, %v445
      %v626 = vadd.f32 %v624, %v625
      %v627 = vpack.c.bf16 %v626, %v626
      %vm628 = vcmask 123904
      %629 = vst.msk [vmem:[%s250] sm:$0x3] %vm628, %v627
      %v631 = vsel %vm274, %v627, 0
      %633 = vmatprep.subr.bf16.mxu0 0
      %634 = vmatpush1.bf16.msra.mxu0 %v457
      %635 = vmatprep.subr.bf16.mxu0 0
      %636 = vmatpush1.bf16.msra.mxu0 0
      %637 = vmatprep.subr.bf16.mxu0 0
      %638 = vmatpush1.bf16.msra.mxu0 0
      %639 = vmatprep.subr.bf16.mxu0 0
      %640 = vmatpush1.bf16.msra.mxu0 0
      %641 = vmatprep.subr.bf16.mxu0 0
      %642 = vmatpush1.bf16.msra.mxu0 0
      %643 = vmatprep.subr.bf16.mxu0 0
      %644 = vmatpush1.bf16.msra.mxu0 0
      %645 = vmatprep.subr.bf16.mxu0 0
      %646 = vmatpush1.bf16.msra.mxu0 0
      %647 = vmatprep.subr.bf16.mxu0 0
      %648 = vmatpush1.bf16.msra.mxu0 0
      %649 = vmatprep.subr.bf16.mxu0 0
      %650 = vmatpush1.bf16.msra.mxu0 0
      %651 = vmatprep.subr.bf16.mxu0 0
      %652 = vmatpush1.bf16.msra.mxu0 0
      %653 = vmatprep.subr.bf16.mxu0 0
      %654 = vmatpush1.bf16.msra.mxu0 0
      %655 = vmatprep.subr.bf16.mxu0 0
      %656 = vmatpush1.bf16.msra.mxu0 0
      %657 = vmatprep.subr.bf16.mxu0 0
      %658 = vmatpush1.bf16.msra.mxu0 0
      %659 = vmatprep.subr.bf16.mxu0 0
      %660 = vmatpush1.bf16.msra.mxu0 0
      %661 = vmatprep.subr.bf16.mxu0 0
      %662 = vmatpush1.bf16.msra.mxu0 0
      %663 = vmatprep.subr.bf16.mxu0 0
      %664 = vmatpush1.bf16.msra.mxu0 0
      %665 = vmatprep.mubr.bf16.mxu0 0
      %666 = vmatmul.mubr.bf16.gmra.mrb[0].mxu0 %v631
      %v667 = vpop.f32.mrb[0].mxu0
      %v668 = vadd.f32 %v451, %v667
      %v669 = vpop.f32.mrb[0].mxu0
      %v670 = vpop.f32.mrb[0].mxu0
      %v671 = vpop.f32.mrb[0].mxu0
      %672 = vdwg.mxu0
      %673 = vmatprep.subr.bf16.mxu0 0
      %674 = vmatpush1.bf16.msra.mxu0 %v512
      %675 = vmatprep.subr.bf16.mxu0 0
      %676 = vmatpush1.bf16.msra.mxu0 0
      %677 = vmatprep.subr.bf16.mxu0 0
      %678 = vmatpush1.bf16.msra.mxu0 0
      %679 = vmatprep.subr.bf16.mxu0 0
      %680 = vmatpush1.bf16.msra.mxu0 0
      %681 = vmatprep.subr.bf16.mxu0 0
      %682 = vmatpush1.bf16.msra.mxu0 0
      %683 = vmatprep.subr.bf16.mxu0 0
      %684 = vmatpush1.bf16.msra.mxu0 0
      %685 = vmatprep.subr.bf16.mxu0 0
      %686 = vmatpush1.bf16.msra.mxu0 0
      %687 = vmatprep.subr.bf16.mxu0 0
      %688 = vmatpush1.bf16.msra.mxu0 0
      %689 = vmatprep.subr.bf16.mxu0 0
      %690 = vmatpush1.bf16.msra.mxu0 0
      %691 = vmatprep.subr.bf16.mxu0 0
      %692 = vmatpush1.bf16.msra.mxu0 0
      %693 = vmatprep.subr.bf16.mxu0 0
      %694 = vmatpush1.bf16.msra.mxu0 0
      %695 = vmatprep.subr.bf16.mxu0 0
      %696 = vmatpush1.bf16.msra.mxu0 0
      %697 = vmatprep.subr.bf16.mxu0 0
      %698 = vmatpush1.bf16.msra.mxu0 0
      %699 = vmatprep.subr.bf16.mxu0 0
      %700 = vmatpush1.bf16.msra.mxu0 0
      %701 = vmatprep.subr.bf16.mxu0 0
      %702 = vmatpush1.bf16.msra.mxu0 0
      %703 = vmatprep.subr.bf16.mxu0 0
      %704 = vmatpush1.bf16.msra.mxu0 0
      %705 = vmatprep.mubr.bf16.mxu0 0
      %706 = vmatmul.mubr.bf16.gmra.mrb[0].mxu0 %v631
      %v707 = vpop.f32.mrb[0].mxu0
      %v708 = vadd.f32 %v506, %v707
      %v709 = vpop.f32.mrb[0].mxu0
      %v710 = vpop.f32.mrb[0].mxu0
      %v711 = vpop.f32.mrb[0].mxu0
      %712 = vdwg.mxu0
      %713 = vmatprep.subr.bf16.mxu0 0
      %714 = vmatpush1.bf16.msra.mxu0 %v564
      %715 = vmatprep.subr.bf16.mxu0 0
      %716 = vmatpush1.bf16.msra.mxu0 0
      %717 = vmatprep.subr.bf16.mxu0 0
      %718 = vmatpush1.bf16.msra.mxu0 0
      %719 = vmatprep.subr.bf16.mxu0 0
      %720 = vmatpush1.bf16.msra.mxu0 0
      %721 = vmatprep.subr.bf16.mxu0 0
      %722 = vmatpush1.bf16.msra.mxu0 0
      %723 = vmatprep.subr.bf16.mxu0 0
      %724 = vmatpush1.bf16.msra.mxu0 0
      %725 = vmatprep.subr.bf16.mxu0 0
      %726 = vmatpush1.bf16.msra.mxu0 0
      %727 = vmatprep.subr.bf16.mxu0 0
      %728 = vmatpush1.bf16.msra.mxu0 0
      %729 = vmatprep.subr.bf16.mxu0 0
      %730 = vmatpush1.bf16.msra.mxu0 0
      %731 = vmatprep.subr.bf16.mxu0 0
      %732 = vmatpush1.bf16.msra.mxu0 0
      %733 = vmatprep.subr.bf16.mxu0 0
      %734 = vmatpush1.bf16.msra.mxu0 0
      %735 = vmatprep.subr.bf16.mxu0 0
      %736 = vmatpush1.bf16.msra.mxu0 0
      %737 = vmatprep.subr.bf16.mxu0 0
      %738 = vmatpush1.bf16.msra.mxu0 0
      %739 = vmatprep.subr.bf16.mxu0 0
      %740 = vmatpush1.bf16.msra.mxu0 0
      %741 = vmatprep.subr.bf16.mxu0 0
      %742 = vmatpush1.bf16.msra.mxu0 0
      %743 = vmatprep.subr.bf16.mxu0 0
      %744 = vmatpush1.bf16.msra.mxu0 0
      %745 = vmatprep.mubr.bf16.mxu0 0
      %746 = vmatmul.mubr.bf16.gmra.mrb[0].mxu0 %v631
      %v747 = vpop.f32.mrb[0].mxu0
      %v748 = vadd.f32 %v558, %v747
      %v749 = vpop.f32.mrb[0].mxu0
      %v750 = vpop.f32.mrb[0].mxu0
      %v751 = vpop.f32.mrb[0].mxu0
      %752 = vdwg.mxu0
      %v754 = vrot.slane %v668, 4
      %v756 = vadd.f32 %v313, %v754
      %v757 = vxor.u32 %v756, 2147483648
      %v758 = vmul.f32 %v757, 1.442695
      %v759 = vpow.pop %v758
      %v760 = vadd.f32 %v759, 1.0
      %v761 = vrcp.pop %v760
      %v762 = vmul.f32 1.0, %v761
      %v764 = vrot.slane %v708, 4
      %v766 = vadd.f32 %v370, %v764
      %v767 = vxor.u32 %v766, 2147483648
      %v768 = vmul.f32 %v767, 1.442695
      %v769 = vpow.pop %v768
      %v770 = vadd.f32 %v769, 1.0
      %v771 = vrcp.pop %v770
      %v772 = vmul.f32 1.0, %v771
      %v774 = vrot.slane %v748, 4
      %v776 = vmul.f32 %v762, %v774
      %v777 = vadd.f32 %v427, %v776
      %v778 = vtanh.pop %v777
      %v779 = vsub.f32 1.0, %v772
      %v780 = vmul.f32 %v779, %v778
      %v782 = vrot.slane %v626, 4
      %v784 = vmul.f32 %v772, %v782
      %v785 = vadd.f32 %v780, %v784
      %v786 = vpack.c.bf16 %v785, %v785
      %vm787 = vcmask 125954
      %788 = vst.msk [vmem:[%s250] sm:$0xc] %vm787, %v786
      %vm789 = vcmask 130052
      %790 = vst.msk [vmem:[#allocation2 - $0x4] sm:$0xf0] %vm789, %v785
      %p791 = scmp.lt.s32.totalorder %s20, 1
      %s792 = scalar_select %p791, %s20, 1
      %p793 = scmp.lt.s32.totalorder %s21, 0
      %s794 = scalar_select %p793, %s21, 0
      %s795 = sadd.s32 %s794, %s792
      %s796 = smul.addr %s795, 4
      %s797 = scalar_lea.vmem %s5, %s796
      // Predicated region
      $region45: #{thoc_forward.13} parent=39 // pred_check
        %p798 = pneg %p160
      $region46: #{thoc_forward.13} parent=39 // pred_check_branch
        %800 = sbr.rel (%p798) target = $region48
      $region47: #{thoc_forward.13} parent=39 // pred_region
        _
      $region48: #{thoc_forward.13} parent=39 // pred_fallthru
        _
    $region40: #{thoc_forward.13} parent=5 // pred_fallthru
      _
    %p801 = scmp.le.s32.totalorder 2, %s11
    // Predicated region
    $region49: #{thoc_forward.13} parent=5 // pred_check
      %p802 = pneg %p801
    $region50: #{thoc_forward.13} parent=5 // pred_check_branch
      %804 = sbr.rel (%p802) target = $region52
    $region51: #{thoc_forward.13} parent=5 // pred_region
      %s805 = ssub.s32 %s11, 2
      // Predicated region
      $region53: #{thoc_forward.13} parent=51 // pred_check
        %p806 = pneg %p166
      $region54: #{thoc_forward.13} parent=51 // pred_check_branch
        %808 = sbr.rel (%p806) target = $region56
      $region55: #{thoc_forward.13} parent=51 // pred_region
        %p809 = scmp.lt.s32.totalorder %s22, 1
        %s810 = scalar_select %p809, %s22, 1
        %p811 = scmp.lt.s32.totalorder %s23, 0
        %s812 = scalar_select %p811, %s23, 0
        %s813 = sadd.s32 %s812, %s810
        %s814 = smul.addr %s813, 4
        %s815 = scalar_lea.vmem %s5, %s814
      $region56: #{thoc_forward.13} parent=51 // pred_fallthru
        _
    $region52: #{thoc_forward.13} parent=5 // pred_fallthru
      _
  $region6: #{thoc_forward.13} parent=0 // loop_footer
    %s15 = sadd.s32 1, %s11
  $region7: #{thoc_forward.13} parent=0 // loop_footer_branch
    %10 = sbr.rel target = $region3
  $region8: #{thoc_forward.13} parent=0 // loop_exit
    _

// kernel: thoc_forward.18
$region0: #{thoc_forward.18}
  #allocation0 [shape = 'u32[]', space=smem, size = 0x4, offset = 0x4, fixed_abs, tag = 'smem constant byte address 0x4 - core index']
  #allocation1 [shape = 'u32[144,128]{1,0:T(1,128)}', space=vmem, size = 0x12000, scoped, tag = 'internal scratch']
  %s0 = inlined_call_operand.vmem [shape: bf16[64,16], index: 0, kind: input, shape index: {}]
  %s1 = inlined_call_operand.vmem [shape: bf16[16,16], index: 1, kind: input, shape index: {}]
  %s2 = inlined_call_operand.vmem [shape: f32[1,16], index: 2, kind: input, shape index: {}]
  %s3 = inlined_call_operand.vmem [shape: bf16[16,2], index: 3, kind: input, shape index: {}]
  %s4 = inlined_call_operand.vmem [shape: f32[64,2], index: 4, kind: output, shape index: {0}]
  %s5 = inlined_call_operand.vmem [shape: f32[64,16], index: 5, kind: output, shape index: {1}]
  %6 = xla_tuple %s4, %s5
  %s7 = sld [smem:[#allocation0]]
  $region34: #{thoc_forward.18} parent=0
    _
  %s9 = ssub.s32 1, %s7
  %s10 = scalar_select 0, %s9, %s7
  // Predicated region
  $region2: #{thoc_forward.18} parent=0 // pred_check
    _
  $region3: #{thoc_forward.18} parent=0 // pred_check_branch
    %12 = sbr.rel (0) target = $region5
  $region4: #{thoc_forward.18} parent=0 // pred_region
    _
  $region5: #{thoc_forward.18} parent=0 // pred_fallthru
    _
  // Predicated region
  $region6: #{thoc_forward.18} parent=0 // pred_check
    _
  $region7: #{thoc_forward.18} parent=0 // pred_check_branch
    %14 = sbr.rel (0) target = $region9
  $region8: #{thoc_forward.18} parent=0 // pred_region
    _
  $region9: #{thoc_forward.18} parent=0 // pred_fallthru
    _
  // Predicated region
  $region10: #{thoc_forward.18} parent=0 // pred_check
    _
  $region11: #{thoc_forward.18} parent=0 // pred_check_branch
    %16 = sbr.rel (0) target = $region13
  $region12: #{thoc_forward.18} parent=0 // pred_region
    _
  $region13: #{thoc_forward.18} parent=0 // pred_fallthru
    _
  // Predicated region
  $region14: #{thoc_forward.18} parent=0 // pred_check
    _
  $region15: #{thoc_forward.18} parent=0 // pred_check_branch
    %18 = sbr.rel (0) target = $region17
  $region16: #{thoc_forward.18} parent=0 // pred_region
    _
  $region17: #{thoc_forward.18} parent=0 // pred_fallthru
    _
  %v20 = vld [vmem:[%s0] sm:$0xf]
  %v21 = vld [vmem:[%s0 + $0x4] sm:$0xf]
  %v22 = vld [vmem:[%s0 + $0x8] sm:$0xf]
  %v23 = vld [vmem:[%s0 + $0xc] sm:$0xf]
  %v24 = vld [vmem:[%s0 + $0x10] sm:$0xf]
  %v25 = vld [vmem:[%s0 + $0x14] sm:$0xf]
  %v26 = vld [vmem:[%s0 + $0x18] sm:$0xf]
  %v27 = vld [vmem:[%s0 + $0x1c] sm:$0xf]
  %v28 = vunpack.c.l.bf16 %v20
  %v29 = vunpack.c.l.bf16 %v21
  %v30 = vunpack.c.l.bf16 %v22
  %v31 = vunpack.c.l.bf16 %v23
  %v32 = vunpack.c.l.bf16 %v24
  %v33 = vunpack.c.l.bf16 %v25
  %v34 = vunpack.c.l.bf16 %v26
  %v35 = vunpack.c.l.bf16 %v27
  %v36 = vld [vmem:[%s1] sm:$0xf]
  %v37 = vld [vmem:[%s1 + $0x4] sm:$0xf]
  %v38 = vld [vmem:[%s2] sm:$0x1]
  %v40 = vlaneseq
  %v41 = vshrl.u32 %v40, 7
  %v42 = vsub.s32 0, %v41
  %v43 = vrot.slane %v38, %v42
  %v53 = vunpack.c.l.b16 %v20
  %v54 = vunpack.c.l.b16 %v21
  %v55 = vunpack.c.l.b16 %v22
  %v56 = vunpack.c.l.b16 %v23
  %v57 = vunpack.c.l.b16 %v24
  %v58 = vunpack.c.l.b16 %v25
  %v59 = vunpack.c.l.b16 %v26
  %v60 = vunpack.c.l.b16 %v27
  %v61 = vpack.c.b16 %v54, %v53
  %v62 = vpack.c.b16 %v56, %v55
  %v63 = vpack.c.b16 %v58, %v57
  %v64 = vpack.c.b16 %v60, %v59
  %v67 = vunpack.c.l.b16 %v36
  %v68 = vunpack.c.l.b16 %v37
  %v69 = vpack.c.b16 %v68, %v67
  %vm71 = vcmask 130048
  %v73 = vsel %vm71, %v61, 0
  %v76 = vsel %vm71, %v62, 0
  %v79 = vsel %vm71, %v63, 0
  %v82 = vsel %vm71, %v64, 0
  %84 = vmatprep.subr.bf16.mxu0 0
  %85 = vmatpush1.bf16.msra.mxu0 %v69
  %86 = vmatprep.subr.bf16.mxu0 0
  %87 = vmatpush1.bf16.msra.mxu0 0
  %88 = vmatprep.subr.bf16.mxu0 0
  %89 = vmatpush1.bf16.msra.mxu0 0
  %90 = vmatprep.subr.bf16.mxu0 0
  %91 = vmatpush1.bf16.msra.mxu0 0
  %92 = vmatprep.subr.bf16.mxu0 0
  %93 = vmatpush1.bf16.msra.mxu0 0
  %94 = vmatprep.subr.bf16.mxu0 0
  %95 = vmatpush1.bf16.msra.mxu0 0
  %96 = vmatprep.subr.bf16.mxu0 0
  %97 = vmatpush1.bf16.msra.mxu0 0
  %98 = vmatprep.subr.bf16.mxu0 0
  %99 = vmatpush1.bf16.msra.mxu0 0
  %100 = vmatprep.subr.bf16.mxu0 0
  %101 = vmatpush1.bf16.msra.mxu0 0
  %102 = vmatprep.subr.bf16.mxu0 0
  %103 = vmatpush1.bf16.msra.mxu0 0
  %104 = vmatprep.subr.bf16.mxu0 0
  %105 = vmatpush1.bf16.msra.mxu0 0
  %106 = vmatprep.subr.bf16.mxu0 0
  %107 = vmatpush1.bf16.msra.mxu0 0
  %108 = vmatprep.subr.bf16.mxu0 0
  %109 = vmatpush1.bf16.msra.mxu0 0
  %110 = vmatprep.subr.bf16.mxu0 0
  %111 = vmatpush1.bf16.msra.mxu0 0
  %112 = vmatprep.subr.bf16.mxu0 0
  %113 = vmatpush1.bf16.msra.mxu0 0
  %114 = vmatprep.subr.bf16.mxu0 0
  %115 = vmatpush1.bf16.msra.mxu0 0
  %116 = vmatprep.mubr.bf16.mxu0 0
  %117 = vmatmul.mubr.bf16.gmra.mrb[0].mxu0 %v73
  %v118 = vpop.f32.mrb[0].mxu0
  %v119 = vadd.f32 %v43, %v118
  %v120 = vpop.f32.mrb[0].mxu0
  %v121 = vpop.f32.mrb[0].mxu0
  %v122 = vadd.f32 %v43, %v121
  %v123 = vpop.f32.mrb[0].mxu0
  %124 = vmatprep.mubr.bf16.mxu0 0
  %125 = vmatmul.mubr.bf16.gmra.mrb[0].mxu0 %v76
  %v126 = vpop.f32.mrb[0].mxu0
  %v127 = vadd.f32 %v43, %v126
  %v128 = vpop.f32.mrb[0].mxu0
  %v129 = vpop.f32.mrb[0].mxu0
  %v130 = vadd.f32 %v43, %v129
  %v131 = vpop.f32.mrb[0].mxu0
  %132 = vmatprep.mubr.bf16.mxu0 0
  %133 = vmatmul.mubr.bf16.gmra.mrb[0].mxu0 %v79
  %v134 = vpop.f32.mrb[0].mxu0
  %v135 = vadd.f32 %v43, %v134
  %v136 = vpop.f32.mrb[0].mxu0
  %v137 = vpop.f32.mrb[0].mxu0
  %v138 = vadd.f32 %v43, %v137
  %v139 = vpop.f32.mrb[0].mxu0
  %140 = vmatprep.mubr.bf16.mxu0 0
  %141 = vmatmul.mubr.bf16.gmra.mrb[0].mxu0 %v82
  %v142 = vpop.f32.mrb[0].mxu0
  %v143 = vadd.f32 %v43, %v142
  %v144 = vpop.f32.mrb[0].mxu0
  %v145 = vpop.f32.mrb[0].mxu0
  %v146 = vadd.f32 %v43, %v145
  %v147 = vpop.f32.mrb[0].mxu0
  %148 = vdwg.mxu0
  %v149 = vmax.f32 %v119, 0.0
  %v150 = vmax.f32 %v122, 0.0
  %v151 = vmax.f32 %v127, 0.0
  %v152 = vmax.f32 %v130, 0.0
  %v153 = vmax.f32 %v135, 0.0
  %v154 = vmax.f32 %v138, 0.0
  %v155 = vmax.f32 %v143, 0.0
  %v156 = vmax.f32 %v146, 0.0
  %157 = vst.msk [vmem:[%s5] sm:$0xff] %vm71, %v149
  %158 = vst.msk [vmem:[%s5 + $0x8] sm:$0xff] %vm71, %v150
  %159 = vst.msk [vmem:[%s5 + $0x10] sm:$0xff] %vm71, %v151
  %160 = vst.msk [vmem:[%s5 + $0x18] sm:$0xff] %vm71, %v152
  %161 = vst.msk [vmem:[%s5 + $0x20] sm:$0xff] %vm71, %v153
  %162 = vst.msk [vmem:[%s5 + $0x28] sm:$0xff] %vm71, %v154
  %163 = vst.msk [vmem:[%s5 + $0x30] sm:$0xff] %vm71, %v155
  %164 = vst.msk [vmem:[%s5 + $0x38] sm:$0xff] %vm71, %v156
  %v165 = vmul.f32 %v28, %v28
  %v166 = vmul.f32 %v29, %v29
  %v167 = vmul.f32 %v30, %v30
  %v168 = vmul.f32 %v31, %v31
  %v169 = vmul.f32 %v32, %v32
  %v170 = vmul.f32 %v33, %v33
  %v171 = vmul.f32 %v34, %v34
  %v172 = vmul.f32 %v35, %v35
  %v173 = vsel %vm71, %v165, 0.0
  %174 = vadd.xlane.f32.xlu0 %v173
  %v175 = vpop.xlane.xlu0 %174
  %v176 = vsel %vm71, %v166, 0.0
  %177 = vadd.xlane.f32.xlu0 %v176
  %v178 = vpop.xlane.xlu0 %177
  %v179 = vsel %vm71, %v167, 0.0
  %180 = vadd.xlane.f32.xlu0 %v179
  %v181 = vpop.xlane.xlu0 %180
  %v182 = vsel %vm71, %v168, 0.0
  %183 = vadd.xlane.f32.xlu0 %v182
  %v184 = vpop.xlane.xlu0 %183
  %v185 = vsel %vm71, %v169, 0.0
  %186 = vadd.xlane.f32.xlu0 %v185
  %v187 = vpop.xlane.xlu0 %186
  %v188 = vsel %vm71, %v170, 0.0
  %189 = vadd.xlane.f32.xlu0 %v188
  %v190 = vpop.xlane.xlu0 %189
  %v191 = vsel %vm71, %v171, 0.0
  %192 = vadd.xlane.f32.xlu0 %v191
  %v193 = vpop.xlane.xlu0 %192
  %v194 = vsel %vm71, %v172, 0.0
  %195 = vadd.xlane.f32.xlu0 %v194
  %v196 = vpop.xlane.xlu0 %195
  %v197 = vrsqrt.pop %v175
  %v198 = vmul.f32 %v175, %v197
  %vm199 = vcmp.eq.f32.partialorder %v175, inf
  %v200 = vsel %vm199, %v175, %v198
  %vm201 = vcmp.eq.f32.partialorder %v175, 0.0
  %v202 = vand.u32 %v175, 2147483648
  %v203 = vsel %vm201, %v202, %v200
  %v204 = vrsqrt.pop %v178
  %v205 = vmul.f32 %v178, %v204
  %vm206 = vcmp.eq.f32.partialorder %v178, inf
  %v207 = vsel %vm206, %v178, %v205
  %vm208 = vcmp.eq.f32.partialorder %v178, 0.0
  %v209 = vand.u32 %v178, 2147483648
  %v210 = vsel %vm208, %v209, %v207
  %v211 = vrsqrt.pop %v181
  %v212 = vmul.f32 %v181, %v211
  %vm213 = vcmp.eq.f32.partialorder %v181, inf
  %v214 = vsel %vm213, %v181, %v212
  %vm215 = vcmp.eq.f32.partialorder %v181, 0.0
  %v216 = vand.u32 %v181, 2147483648
  %v217 = vsel %vm215, %v216, %v214
  %v218 = vrsqrt.pop %v184
  %v219 = vmul.f32 %v184, %v218
  %vm220 = vcmp.eq.f32.partialorder %v184, inf
  %v221 = vsel %vm220, %v184, %v219
  %vm222 = vcmp.eq.f32.partialorder %v184, 0.0
  %v223 = vand.u32 %v184, 2147483648
  %v224 = vsel %vm222, %v223, %v221
  %v225 = vrsqrt.pop %v187
  %v226 = vmul.f32 %v187, %v225
  %vm227 = vcmp.eq.f32.partialorder %v187, inf
  %v228 = vsel %vm227, %v187, %v226
  %vm229 = vcmp.eq.f32.partialorder %v187, 0.0
  %v230 = vand.u32 %v187, 2147483648
  %v231 = vsel %vm229, %v230, %v228
  %v232 = vrsqrt.pop %v190
  %v233 = vmul.f32 %v190, %v232
  %vm234 = vcmp.eq.f32.partialorder %v190, inf
  %v235 = vsel %vm234, %v190, %v233
  %vm236 = vcmp.eq.f32.partialorder %v190, 0.0
  %v237 = vand.u32 %v190, 2147483648
  %v238 = vsel %vm236, %v237, %v235
  %v239 = vrsqrt.pop %v193
  %v240 = vmul.f32 %v193, %v239
  %vm241 = vcmp.eq.f32.partialorder %v193, inf
  %v242 = vsel %vm241, %v193, %v240
  %vm243 = vcmp.eq.f32.partialorder %v193, 0.0
  %v244 = vand.u32 %v193, 2147483648
  %v245 = vsel %vm243, %v244, %v242
  %v246 = vrsqrt.pop %v196
  %v247 = vmul.f32 %v196, %v246
  %vm248 = vcmp.eq.f32.partialorder %v196, inf
  %v249 = vsel %vm248, %v196, %v247
  %vm250 = vcmp.eq.f32.partialorder %v196, 0.0
  %v251 = vand.u32 %v196, 2147483648
  %v252 = vsel %vm250, %v251, %v249
  %v253 = vmax.f32 %v203, 1e-08
  %v254 = vmax.f32 %v210, 1e-08
  %v255 = vmax.f32 %v217, 1e-08
  %v256 = vmax.f32 %v224, 1e-08
  %v257 = vmax.f32 %v231, 1e-08
  %v258 = vmax.f32 %v238, 1e-08
  %v259 = vmax.f32 %v245, 1e-08
  %v260 = vmax.f32 %v252, 1e-08
  %v261 = vrcp.pop %v253
  %v262 = vrcp.pop %v254
  %v263 = vrcp.pop %v255
  %v264 = vrcp.pop %v256
  %v265 = vrcp.pop %v257
  %v266 = vrcp.pop %v258
  %v267 = vrcp.pop %v259
  %v268 = vrcp.pop %v260
  %v269 = vld [vmem:[%s3] sm:$0xf]
  %v270 = vld [vmem:[%s3 + $0x4] sm:$0xf]
  %v273 = vunpack.c.l.b16 %v269
  %v274 = vunpack.c.l.b16 %v270
  %v275 = vpack.c.b16 %v274, %v273
  %277 = vmatprep.subr.bf16.mxu0 0
  %278 = vmatpush1.bf16.msra.mxu0 %v275
  %279 = vmatprep.subr.bf16.mxu0 0
  %280 = vmatpush1.bf16.msra.mxu0 0
  %281 = vmatprep.subr.bf16.mxu0 0
  %282 = vmatpush1.bf16.msra.mxu0 0
  %283 = vmatprep.subr.bf16.mxu0 0
  %284 = vmatpush1.bf16.msra.mxu0 0
  %285 = vmatprep.subr.bf16.mxu0 0
  %286 = vmatpush1.bf16.msra.mxu0 0
  %287 = vmatprep.subr.bf16.mxu0 0
  %288 = vmatpush1.bf16.msra.mxu0 0
  %289 = vmatprep.subr.bf16.mxu0 0
  %290 = vmatpush1.bf16.msra.mxu0 0
  %291 = vmatprep.subr.bf16.mxu0 0
  %292 = vmatpush1.bf16.msra.mxu0 0
  %293 = vmatprep.subr.bf16.mxu0 0
  %294 = vmatpush1.bf16.msra.mxu0 0
  %295 = vmatprep.subr.bf16.mxu0 0
  %296 = vmatpush1.bf16.msra.mxu0 0
  %297 = vmatprep.subr.bf16.mxu0 0
  %298 = vmatpush1.bf16.msra.mxu0 0
  %299 = vmatprep.subr.bf16.mxu0 0
  %300 = vmatpush1.bf16.msra.mxu0 0
  %301 = vmatprep.subr.bf16.mxu0 0
  %302 = vmatpush1.bf16.msra.mxu0 0
  %303 = vmatprep.subr.bf16.mxu0 0
  %304 = vmatpush1.bf16.msra.mxu0 0
  %305 = vmatprep.subr.bf16.mxu0 0
  %306 = vmatpush1.bf16.msra.mxu0 0
  %307 = vmatprep.subr.bf16.mxu0 0
  %308 = vmatpush1.bf16.msra.mxu0 0
  %309 = vmatprep.mubr.bf16.mxu0 0
  %310 = vmatmul.mubr.bf16.gmra.mrb[0].mxu0 %v73
  %v311 = vpop.f32.mrb[0].mxu0
  %v312 = vadd.f32 0.0, %v311
  %v313 = vpop.f32.mrb[0].mxu0
  %v314 = vpop.f32.mrb[0].mxu0
  %v315 = vadd.f32 0.0, %v314
  %v316 = vpop.f32.mrb[0].mxu0
  %317 = vmatprep.mubr.bf16.mxu0 0
  %318 = vmatmul.mubr.bf16.gmra.mrb[0].mxu0 %v76
  %v319 = vpop.f32.mrb[0].mxu0
  %v320 = vadd.f32 0.0, %v319
  %v321 = vpop.f32.mrb[0].mxu0
  %v322 = vpop.f32.mrb[0].mxu0
  %v323 = vadd.f32 0.0, %v322
  %v324 = vpop.f32.mrb[0].mxu0
  %325 = vmatprep.mubr.bf16.mxu0 0
  %326 = vmatmul.mubr.bf16.gmra.mrb[0].mxu0 %v79
  %v327 = vpop.f32.mrb[0].mxu0
  %v328 = vadd.f32 0.0, %v327
  %v329 = vpop.f32.mrb[0].mxu0
  %v330 = vpop.f32.mrb[0].mxu0
  %v331 = vadd.f32 0.0, %v330
  %v332 = vpop.f32.mrb[0].mxu0
  %333 = vmatprep.mubr.bf16.mxu0 0
  %334 = vmatmul.mubr.bf16.gmra.mrb[0].mxu0 %v82
  %v335 = vpop.f32.mrb[0].mxu0
  %v336 = vadd.f32 0.0, %v335
  %v337 = vpop.f32.mrb[0].mxu0
  %v338 = vpop.f32.mrb[0].mxu0
  %v339 = vadd.f32 0.0, %v338
  %v340 = vpop.f32.mrb[0].mxu0
  %341 = vdwg.mxu0
  %v342 = vmul.f32 %v312, %v261
  %v343 = vmul.f32 %v315, %v262
  %v344 = vmul.f32 %v320, %v263
  %v345 = vmul.f32 %v323, %v264
  %v346 = vmul.f32 %v328, %v265
  %v347 = vmul.f32 %v331, %v266
  %v348 = vmul.f32 %v336, %v267
  %v349 = vmul.f32 %v339, %v268
  %v350 = vmul.f32 %v342, 1.442695
  %v351 = vpow.pop %v350
  %v352 = vmul.f32 %v343, 1.442695
  %v353 = vpow.pop %v352
  %v354 = vmul.f32 %v344, 1.442695
  %v355 = vpow.pop %v354
  %v356 = vmul.f32 %v345, 1.442695
  %v357 = vpow.pop %v356
  %v358 = vmul.f32 %v346, 1.442695
  %v359 = vpow.pop %v358
  %v360 = vmul.f32 %v347, 1.442695
  %v361 = vpow.pop %v360
  %v362 = vmul.f32 %v348, 1.442695
  %v363 = vpow.pop %v362
  %v364 = vmul.f32 %v349, 1.442695
  %v365 = vpow.pop %v364
  %vm366 = vcmask 15360
  %v367 = vsel %vm366, %v351, 0.0
  %368 = vadd.xlane.f32.xlu0 %v367
  %v369 = vpop.xlane.xlu0 %368
  %v370 = vsel %vm366, %v353, 0.0
  %371 = vadd.xlane.f32.xlu0 %v370
  %v372 = vpop.xlane.xlu0 %371
  %v373 = vsel %vm366, %v355, 0.0
  %374 = vadd.xlane.f32.xlu0 %v373
  %v375 = vpop.xlane.xlu0 %374
  %v376 = vsel %vm366, %v357, 0.0
  %377 = vadd.xlane.f32.xlu0 %v376
  %v378 = vpop.xlane.xlu0 %377
  %v379 = vsel %vm366, %v359, 0.0
  %380 = vadd.xlane.f32.xlu0 %v379
  %v381 = vpop.xlane.xlu0 %380
  %v382 = vsel %vm366, %v361, 0.0
  %383 = vadd.xlane.f32.xlu0 %v382
  %v384 = vpop.xlane.xlu0 %383
  %v385 = vsel %vm366, %v363, 0.0
  %386 = vadd.xlane.f32.xlu0 %v385
  %v387 = vpop.xlane.xlu0 %386
  %v388 = vsel %vm366, %v365, 0.0
  %389 = vadd.xlane.f32.xlu0 %v388
  %v390 = vpop.xlane.xlu0 %389
  %v391 = vrcp.pop %v369
  %v392 = vrcp.pop %v372
  %v393 = vrcp.pop %v375
  %v394 = vrcp.pop %v378
  %v395 = vrcp.pop %v381
  %v396 = vrcp.pop %v384
  %v397 = vrcp.pop %v387
  %v398 = vrcp.pop %v390
  %v399 = vmul.f32 %v351, %v391
  %v400 = vmul.f32 %v353, %v392
  %v401 = vmul.f32 %v355, %v393
  %v402 = vmul.f32 %v357, %v394
  %v403 = vmul.f32 %v359, %v395
  %v404 = vmul.f32 %v361, %v396
  %v405 = vmul.f32 %v363, %v397
  %v406 = vmul.f32 %v365, %v398
  %407 = vst.msk [vmem:[%s4] sm:$0xff] %vm366, %v399
  %408 = vst.msk [vmem:[%s4 + $0x8] sm:$0xff] %vm366, %v400
  %409 = vst.msk [vmem:[%s4 + $0x10] sm:$0xff] %vm366, %v401
  %410 = vst.msk [vmem:[%s4 + $0x18] sm:$0xff] %vm366, %v402
  %411 = vst.msk [vmem:[%s4 + $0x20] sm:$0xff] %vm366, %v403
  %412 = vst.msk [vmem:[%s4 + $0x28] sm:$0xff] %vm366, %v404
  %413 = vst.msk [vmem:[%s4 + $0x30] sm:$0xff] %vm366, %v405
  %414 = vst.msk [vmem:[%s4 + $0x38] sm:$0xff] %vm366, %v406
  // Predicated region
  $region18: #{thoc_forward.18} parent=0 // pred_check
    _
  $region19: #{thoc_forward.18} parent=0 // pred_check_branch
    %416 = sbr.rel (0) target = $region21
  $region20: #{thoc_forward.18} parent=0 // pred_region
    _
  $region21: #{thoc_forward.18} parent=0 // pred_fallthru
    _
  // Predicated region
  $region22: #{thoc_forward.18} parent=0 // pred_check
    _
  $region23: #{thoc_forward.18} parent=0 // pred_check_branch
    %418 = sbr.rel (0) target = $region25
  $region24: #{thoc_forward.18} parent=0 // pred_region
    _
  $region25: #{thoc_forward.18} parent=0 // pred_fallthru
    _
  // Predicated region
  $region26: #{thoc_forward.18} parent=0 // pred_check
    _
  $region27: #{thoc_forward.18} parent=0 // pred_check_branch
    %420 = sbr.rel (0) target = $region29
  $region28: #{thoc_forward.18} parent=0 // pred_region
    _
  $region29: #{thoc_forward.18} parent=0 // pred_fallthru
    _
  // Predicated region
  $region30: #{thoc_forward.18} parent=0 // pred_check
    _
  $region31: #{thoc_forward.18} parent=0 // pred_check_branch
    %422 = sbr.rel (0) target = $region33
  $region32: #{thoc_forward.18} parent=0 // pred_region
    _
  $region33: #{thoc_forward.18} parent=0 // pred_fallthru
    _

// kernel: thoc_forward.19
$region0: #{thoc_forward.19}
  #allocation0 [shape = 'u32[]', space=smem, size = 0x4, offset = 0x4, fixed_abs, tag = 'smem constant byte address 0x4 - core index']
  #allocation1 [shape = 'u32[144,128]{1,0:T(1,128)}', space=vmem, size = 0x12000, scoped, tag = 'internal scratch']
  %s0 = inlined_call_operand.vmem [shape: bf16[32,16], index: 0, kind: input, shape index: {}]
  %s1 = inlined_call_operand.vmem [shape: f32[1,16], index: 1, kind: input, shape index: {}]
  %s2 = inlined_call_operand.vmem [shape: f32[32,1], index: 2, kind: output, shape index: {}]
  %s3 = sld [smem:[#allocation0]]
  $region18: #{thoc_forward.19} parent=0
    _
  %s5 = ssub.s32 1, %s3
  %s6 = scalar_select 0, %s5, %s3
  // Predicated region
  $region2: #{thoc_forward.19} parent=0 // pred_check
    _
  $region3: #{thoc_forward.19} parent=0 // pred_check_branch
    %8 = sbr.rel (0) target = $region5
  $region4: #{thoc_forward.19} parent=0 // pred_region
    _
  $region5: #{thoc_forward.19} parent=0 // pred_fallthru
    _
  // Predicated region
  $region6: #{thoc_forward.19} parent=0 // pred_check
    _
  $region7: #{thoc_forward.19} parent=0 // pred_check_branch
    %10 = sbr.rel (0) target = $region9
  $region8: #{thoc_forward.19} parent=0 // pred_region
    _
  $region9: #{thoc_forward.19} parent=0 // pred_fallthru
    _
  %v11 = vld [vmem:[%s0] sm:$0xf]
  %v12 = vld [vmem:[%s0 + $0x4] sm:$0xf]
  %v13 = vld [vmem:[%s0 + $0x8] sm:$0xf]
  %v14 = vld [vmem:[%s0 + $0xc] sm:$0xf]
  %v15 = vunpack.c.l.bf16 %v11
  %v16 = vunpack.c.l.bf16 %v12
  %v17 = vunpack.c.l.bf16 %v13
  %v18 = vunpack.c.l.bf16 %v14
  %v19 = vld [vmem:[%s1] sm:$0x1]
  %v21 = vlaneseq
  %v22 = vshrl.u32 %v21, 7
  %v23 = vsub.s32 0, %v22
  %v24 = vrot.slane %v19, %v23
  %v26 = vmul.f32 %v15, %v24
  %v27 = vmul.f32 %v16, %v24
  %v28 = vmul.f32 %v17, %v24
  %v29 = vmul.f32 %v18, %v24
  %vm30 = vcmask 130048
  %v31 = vsel %vm30, %v26, 0.0
  %32 = vadd.xlane.f32.xlu0 %v31
  %v33 = vpop.xlane.xlu0 %32
  %v34 = vsel %vm30, %v27, 0.0
  %35 = vadd.xlane.f32.xlu0 %v34
  %v36 = vpop.xlane.xlu0 %35
  %v37 = vsel %vm30, %v28, 0.0
  %38 = vadd.xlane.f32.xlu0 %v37
  %v39 = vpop.xlane.xlu0 %38
  %v40 = vsel %vm30, %v29, 0.0
  %41 = vadd.xlane.f32.xlu0 %v40
  %v42 = vpop.xlane.xlu0 %41
  %v43 = vmul.f32 %v15, %v15
  %v44 = vmul.f32 %v16, %v16
  %v45 = vmul.f32 %v17, %v17
  %v46 = vmul.f32 %v18, %v18
  %v47 = vsel %vm30, %v43, 0.0
  %48 = vadd.xlane.f32.xlu0 %v47
  %v49 = vpop.xlane.xlu0 %48
  %v50 = vsel %vm30, %v44, 0.0
  %51 = vadd.xlane.f32.xlu0 %v50
  %v52 = vpop.xlane.xlu0 %51
  %v53 = vsel %vm30, %v45, 0.0
  %54 = vadd.xlane.f32.xlu0 %v53
  %v55 = vpop.xlane.xlu0 %54
  %v56 = vsel %vm30, %v46, 0.0
  %57 = vadd.xlane.f32.xlu0 %v56
  %v58 = vpop.xlane.xlu0 %57
  %v59 = vrsqrt.pop %v49
  %v60 = vmul.f32 %v49, %v59
  %vm61 = vcmp.eq.f32.partialorder %v49, inf
  %v62 = vsel %vm61, %v49, %v60
  %vm63 = vcmp.eq.f32.partialorder %v49, 0.0
  %v64 = vand.u32 %v49, 2147483648
  %v65 = vsel %vm63, %v64, %v62
  %v66 = vrsqrt.pop %v52
  %v67 = vmul.f32 %v52, %v66
  %vm68 = vcmp.eq.f32.partialorder %v52, inf
  %v69 = vsel %vm68, %v52, %v67
  %vm70 = vcmp.eq.f32.partialorder %v52, 0.0
  %v71 = vand.u32 %v52, 2147483648
  %v72 = vsel %vm70, %v71, %v69
  %v73 = vrsqrt.pop %v55
  %v74 = vmul.f32 %v55, %v73
  %vm75 = vcmp.eq.f32.partialorder %v55, inf
  %v76 = vsel %vm75, %v55, %v74
  %vm77 = vcmp.eq.f32.partialorder %v55, 0.0
  %v78 = vand.u32 %v55, 2147483648
  %v79 = vsel %vm77, %v78, %v76
  %v80 = vrsqrt.pop %v58
  %v81 = vmul.f32 %v58, %v80
  %vm82 = vcmp.eq.f32.partialorder %v58, inf
  %v83 = vsel %vm82, %v58, %v81
  %vm84 = vcmp.eq.f32.partialorder %v58, 0.0
  %v85 = vand.u32 %v58, 2147483648
  %v86 = vsel %vm84, %v85, %v83
  %v87 = vmax.f32 %v65, 1e-08
  %v88 = vmax.f32 %v72, 1e-08
  %v89 = vmax.f32 %v79, 1e-08
  %v90 = vmax.f32 %v86, 1e-08
  %v91 = vrcp.pop %v87
  %v92 = vrcp.pop %v88
  %v93 = vrcp.pop %v89
  %v94 = vrcp.pop %v90
  %v95 = vmul.f32 %v33, %v91
  %v96 = vmul.f32 %v36, %v92
  %v97 = vmul.f32 %v39, %v93
  %v98 = vmul.f32 %v42, %v94
  %vm99 = vcmask 7168
  %100 = vst.msk [vmem:[%s2] sm:$0xff] %vm99, %v95
  %101 = vst.msk [vmem:[%s2 + $0x8] sm:$0xff] %vm99, %v96
  %102 = vst.msk [vmem:[%s2 + $0x10] sm:$0xff] %vm99, %v97
  %103 = vst.msk [vmem:[%s2 + $0x18] sm:$0xff] %vm99, %v98
  // Predicated region
  $region10: #{thoc_forward.19} parent=0 // pred_check
    _
  $region11: #{thoc_forward.19} parent=0 // pred_check_branch
    %105 = sbr.rel (0) target = $region13
  $region12: #{thoc_forward.19} parent=0 // pred_region
    _
  $region13: #{thoc_forward.19} parent=0 // pred_fallthru
    _
  // Predicated region
  $region14: #{thoc_forward.19} parent=0 // pred_check
    _
  $region15: #{thoc_forward.19} parent=0 // pred_check_branch
    %107 = sbr.rel (0) target = $region17
  $region16: #{thoc_forward.19} parent=0 // pred_region
    _
  $region17: #{thoc_forward.19} parent=0 // pred_fallthru
    _

// kernel: thoc_forward.21
$region0: #{thoc_forward.21}
  #allocation0 [shape = 'u32[]', space=smem, size = 0x4, offset = 0x4, fixed_abs, tag = 'smem constant byte address 0x4 - core index']
  #allocation1 [shape = 'u32[144,128]{1,0:T(1,128)}', space=vmem, size = 0x12000, scoped, tag = 'internal scratch']
  %s0 = inlined_call_operand.vmem [shape: bf16[48,16], index: 0, kind: input, shape index: {}]
  %s1 = inlined_call_operand.vmem [shape: bf16[16,4], index: 1, kind: input, shape index: {}]
  %s2 = inlined_call_operand.vmem [shape: f32[1,4], index: 2, kind: input, shape index: {}]
  %s3 = inlined_call_operand.vmem [shape: f32[48,4], index: 3, kind: output, shape index: {}]
  %s4 = sld [smem:[#allocation0]]
  $region22: #{thoc_forward.21} parent=0
    _
  %s6 = ssub.s32 1, %s4
  %s7 = scalar_select 0, %s6, %s4
  // Predicated region
  $region2: #{thoc_forward.21} parent=0 // pred_check
    _
  $region3: #{thoc_forward.21} parent=0 // pred_check_branch
    %9 = sbr.rel (0) target = $region5
  $region4: #{thoc_forward.21} parent=0 // pred_region
    _
  $region5: #{thoc_forward.21} parent=0 // pred_fallthru
    _
  // Predicated region
  $region6: #{thoc_forward.21} parent=0 // pred_check
    _
  $region7: #{thoc_forward.21} parent=0 // pred_check_branch
    %11 = sbr.rel (0) target = $region9
  $region8: #{thoc_forward.21} parent=0 // pred_region
    _
  $region9: #{thoc_forward.21} parent=0 // pred_fallthru
    _
  // Predicated region
  $region10: #{thoc_forward.21} parent=0 // pred_check
    _
  $region11: #{thoc_forward.21} parent=0 // pred_check_branch
    %13 = sbr.rel (0) target = $region13
  $region12: #{thoc_forward.21} parent=0 // pred_region
    _
  $region13: #{thoc_forward.21} parent=0 // pred_fallthru
    _
  %v15 = vld [vmem:[%s0] sm:$0xf]
  %v16 = vld [vmem:[%s0 + $0x4] sm:$0xf]
  %v17 = vld [vmem:[%s0 + $0x8] sm:$0xf]
  %v18 = vld [vmem:[%s0 + $0xc] sm:$0xf]
  %v19 = vld [vmem:[%s0 + $0x10] sm:$0xf]
  %v20 = vld [vmem:[%s0 + $0x14] sm:$0xf]
  %v21 = vld [vmem:[%s1] sm:$0xf]
  %v22 = vld [vmem:[%s1 + $0x4] sm:$0xf]
  %v23 = vld [vmem:[%s2] sm:$0x1]
  %v25 = vlaneseq
  %v26 = vshrl.u32 %v25, 7
  %v27 = vsub.s32 0, %v26
  %v28 = vrot.slane %v23, %v27
  %v36 = vunpack.c.l.b16 %v15
  %v37 = vunpack.c.l.b16 %v16
  %v38 = vunpack.c.l.b16 %v17
  %v39 = vunpack.c.l.b16 %v18
  %v40 = vunpack.c.l.b16 %v19
  %v41 = vunpack.c.l.b16 %v20
  %v42 = vpack.c.b16 %v37, %v36
  %v43 = vpack.c.b16 %v39, %v38
  %v44 = vpack.c.b16 %v41, %v40
  %v47 = vunpack.c.l.b16 %v21
  %v48 = vunpack.c.l.b16 %v22
  %v49 = vpack.c.b16 %v48, %v47
  %vm51 = vcmask 130048
  %v53 = vsel %vm51, %v42, 0
  %v56 = vsel %vm51, %v43, 0
  %v59 = vsel %vm51, %v44, 0
  %61 = vmatprep.subr.bf16.mxu0 0
  %62 = vmatpush1.bf16.msra.mxu0 %v49
  %63 = vmatprep.subr.bf16.mxu0 0
  %64 = vmatpush1.bf16.msra.mxu0 0
  %65 = vmatprep.subr.bf16.mxu0 0
  %66 = vmatpush1.bf16.msra.mxu0 0
  %67 = vmatprep.subr.bf16.mxu0 0
  %68 = vmatpush1.bf16.msra.mxu0 0
  %69 = vmatprep.subr.bf16.mxu0 0
  %70 = vmatpush1.bf16.msra.mxu0 0
  %71 = vmatprep.subr.bf16.mxu0 0
  %72 = vmatpush1.bf16.msra.mxu0 0
  %73 = vmatprep.subr.bf16.mxu0 0
  %74 = vmatpush1.bf16.msra.mxu0 0
  %75 = vmatprep.subr.bf16.mxu0 0
  %76 = vmatpush1.bf16.msra.mxu0 0
  %77 = vmatprep.subr.bf16.mxu0 0
  %78 = vmatpush1.bf16.msra.mxu0 0
  %79 = vmatprep.subr.bf16.mxu0 0
  %80 = vmatpush1.bf16.msra.mxu0 0
  %81 = vmatprep.subr.bf16.mxu0 0
  %82 = vmatpush1.bf16.msra.mxu0 0
  %83 = vmatprep.subr.bf16.mxu0 0
  %84 = vmatpush1.bf16.msra.mxu0 0
  %85 = vmatprep.subr.bf16.mxu0 0
  %86 = vmatpush1.bf16.msra.mxu0 0
  %87 = vmatprep.subr.bf16.mxu0 0
  %88 = vmatpush1.bf16.msra.mxu0 0
  %89 = vmatprep.subr.bf16.mxu0 0
  %90 = vmatpush1.bf16.msra.mxu0 0
  %91 = vmatprep.subr.bf16.mxu0 0
  %92 = vmatpush1.bf16.msra.mxu0 0
  %93 = vmatprep.mubr.bf16.mxu0 0
  %94 = vmatmul.mubr.bf16.gmra.mrb[0].mxu0 %v53
  %v95 = vpop.f32.mrb[0].mxu0
  %v96 = vadd.f32 %v28, %v95
  %v97 = vpop.f32.mrb[0].mxu0
  %v98 = vpop.f32.mrb[0].mxu0
  %v99 = vadd.f32 %v28, %v98
  %v100 = vpop.f32.mrb[0].mxu0
  %101 = vmatprep.mubr.bf16.mxu0 0
  %102 = vmatmul.mubr.bf16.gmra.mrb[0].mxu0 %v56
  %v103 = vpop.f32.mrb[0].mxu0
  %v104 = vadd.f32 %v28, %v103
  %v105 = vpop.f32.mrb[0].mxu0
  %v106 = vpop.f32.mrb[0].mxu0
  %v107 = vadd.f32 %v28, %v106
  %v108 = vpop.f32.mrb[0].mxu0
  %109 = vmatprep.mubr.bf16.mxu0 0
  %110 = vmatmul.mubr.bf16.gmra.mrb[0].mxu0 %v59
  %v111 = vpop.f32.mrb[0].mxu0
  %v112 = vadd.f32 %v28, %v111
  %v113 = vpop.f32.mrb[0].mxu0
  %v114 = vpop.f32.mrb[0].mxu0
  %v115 = vadd.f32 %v28, %v114
  %v116 = vpop.f32.mrb[0].mxu0
  %117 = vdwg.mxu0
  %vm118 = vcmask 31744
  %119 = vst.msk [vmem:[%s3] sm:$0xff] %vm118, %v96
  %120 = vst.msk [vmem:[%s3 + $0x8] sm:$0xff] %vm118, %v99
  %121 = vst.msk [vmem:[%s3 + $0x10] sm:$0xff] %vm118, %v104
  %122 = vst.msk [vmem:[%s3 + $0x18] sm:$0xff] %vm118, %v107
  %123 = vst.msk [vmem:[%s3 + $0x20] sm:$0xff] %vm118, %v112
  %124 = vst.msk [vmem:[%s3 + $0x28] sm:$0xff] %vm118, %v115
  // Predicated region
  $region14: #{thoc_forward.21} parent=0 // pred_check
    _
  $region15: #{thoc_forward.21} parent=0 // pred_check_branch
    %126 = sbr.rel (0) target = $region17
  $region16: #{thoc_forward.21} parent=0 // pred_region
    _
  $region17: #{thoc_forward.21} parent=0 // pred_fallthru
    _
  // Predicated region
  $region18: #{thoc_forward.21} parent=0 // pred_check
    _
  $region19: #{thoc_forward.21} parent=0 // pred_check_branch
    %128 = sbr.rel (0) target = $region21
  $region20: #{thoc_forward.21} parent=0 // pred_region
    _
  $region21: #{thoc_forward.21} parent=0 // pred_fallthru
    _

// kernel: thoc_forward.20
$region0: #{thoc_forward.20}
  #allocation0 [shape = 'u32[]', space=smem, size = 0x4, offset = 0x4, fixed_abs, tag = 'smem constant byte address 0x4 - core index']
  #allocation1 [shape = 'u32[144,128]{1,0:T(1,128)}', space=vmem, size = 0x12000, scoped, tag = 'internal scratch']
  %s0 = inlined_call_operand.vmem [shape: f32[3,16,6], index: 0, kind: input, shape index: {}]
  %s1 = inlined_call_operand.vmem [shape: f32[3,6,16], index: 1, kind: input, shape index: {}]
  %s2 = inlined_call_operand.vmem [shape: f32[3,16,16], index: 2, kind: output, shape index: {}]
  %s3 = sld [smem:[#allocation0]]
  $region41: #{thoc_forward.20} parent=0
    _
  %s5 = ssub.s32 1, %s3
  %s6 = scalar_select 0, %s5, %s3
  loop: start=0, step=1, limit=5
  $region2: #{thoc_forward.20} parent=0 // loop_pre_header
    _
  $region3: #{thoc_forward.20} parent=0 // loop_header
    %s8 = sphi 0, %s12
    %p9 = scmp.ge.s32.totalorder %s8, 5
    %s18 = sphi 0, %s20
    %s21 = sphi 0, %s18
    %s22 = sphi 0, %s21
    %s38 = sphi 0, %s22
    %s44 = sphi 0, %s46
    %s47 = sphi 0, %s44
    %s48 = sphi 0, %s47
    %s64 = sphi 0, %s48
    %s70 = sphi 0, %s72
    %s73 = sphi 0, %s70
    %s74 = sphi 0, %s73
    %s90 = sphi 0, %s74
  $region4: #{thoc_forward.20} parent=0 // loop_header_branch
    %11 = sbr.rel (%p9) target = $region8
  $region5: #{thoc_forward.20} parent=0 // loop_body
    %s13 = ssub.s32 %s8, 1
    %s14 = ssub.s32 %s8, 2
    %s15 = sadd.s32 %s8, 1
    %s16 = ssub.s32 %s8, %s15
    %p17 = scmp.eq.s32.totalorder %s16, 0
    %s19 = sadd.s32 %s18, 1
    %s20 = scalar_select %p17, %s18, %s19
    %p23 = pneg %p17
    %p24 = scmp.eq.s32.totalorder %s8, 2
    %p25 = por %p23, %p24
    %p26 = scmp.ne.s32.totalorder %s18, %s21
    %p27 = scmp.eq.s32.totalorder %s8, 0
    %p28 = por %p26, %p27
    %p29 = scmp.ne.s32.totalorder %s18, %s21
    %p30 = scmp.eq.s32.totalorder %s13, 2
    %p31 = por %p29, %p30
    %p32 = scmp.ne.s32.totalorder %s21, %s22
    %p33 = scmp.eq.s32.totalorder %s13, 0
    %p34 = por %p32, %p33
    %p35 = scmp.ne.s32.totalorder %s21, %s22
    %p36 = scmp.eq.s32.totalorder %s14, 2
    %p37 = por %p35, %p36
    %p39 = scmp.ne.s32.totalorder %s22, %s38
    %p40 = scmp.eq.s32.totalorder %s14, 0
    %p41 = por %p39, %p40
    %s42 = ssub.s32 %s8, %s15
    %p43 = scmp.eq.s32.totalorder %s42, 0
    %s45 = sadd.s32 %s44, 1
    %s46 = scalar_select %p43, %s44, %s45
    %p49 = pneg %p43
    %p50 = scmp.eq.s32.totalorder %s8, 2
    %p51 = por %p49, %p50
    %p52 = scmp.ne.s32.totalorder %s44, %s47
    %p53 = scmp.eq.s32.totalorder %s8, 0
    %p54 = por %p52, %p53
    %p55 = scmp.ne.s32.totalorder %s44, %s47
    %p56 = scmp.eq.s32.totalorder %s13, 2
    %p57 = por %p55, %p56
    %p58 = scmp.ne.s32.totalorder %s47, %s48
    %p59 = scmp.eq.s32.totalorder %s13, 0
    %p60 = por %p58, %p59
    %p61 = scmp.ne.s32.totalorder %s47, %s48
    %p62 = scmp.eq.s32.totalorder %s14, 2
    %p63 = por %p61, %p62
    %p65 = scmp.ne.s32.totalorder %s48, %s64
    %p66 = scmp.eq.s32.totalorder %s14, 0
    %p67 = por %p65, %p66
    %s68 = ssub.s32 %s8, %s15
    %p69 = scmp.eq.s32.totalorder %s68, 0
    %s71 = sadd.s32 %s70, 1
    %s72 = scalar_select %p69, %s70, %s71
    %p75 = pneg %p69
    %p76 = scmp.eq.s32.totalorder %s8, 2
    %p77 = por %p75, %p76
    %p78 = scmp.ne.s32.totalorder %s70, %s73
    %p79 = scmp.eq.s32.totalorder %s8, 0
    %p80 = por %p78, %p79
    %p81 = scmp.ne.s32.totalorder %s70, %s73
    %p82 = scmp.eq.s32.totalorder %s13, 2
    %p83 = por %p81, %p82
    %p84 = scmp.ne.s32.totalorder %s73, %s74
    %p85 = scmp.eq.s32.totalorder %s13, 0
    %p86 = por %p84, %p85
    %p87 = scmp.ne.s32.totalorder %s73, %s74
    %p88 = scmp.eq.s32.totalorder %s14, 2
    %p89 = por %p87, %p88
    %p91 = scmp.ne.s32.totalorder %s74, %s90
    %p92 = scmp.eq.s32.totalorder %s14, 0
    %p93 = por %p91, %p92
    %p94 = scmp.le.s32.totalorder 1, %s8
    %p95 = scmp.lt.s32.totalorder %s8, 4
    %p96 = pnand %p94, %p95
    %p97 = pneg %p96
    // Predicated region
    $region9: #{thoc_forward.20} parent=5 // pred_check
      _
    $region10: #{thoc_forward.20} parent=5 // pred_check_branch
      %99 = sbr.rel (%p96) target = $region12
    $region11: #{thoc_forward.20} parent=5 // pred_region
      %s100 = ssub.s32 %s8, 1
    $region12: #{thoc_forward.20} parent=5 // pred_fallthru
      _
    %p101 = scmp.lt.s32.totalorder %s8, 3
    // Predicated region
    $region13: #{thoc_forward.20} parent=5 // pred_check
      %p102 = pneg %p101
    $region14: #{thoc_forward.20} parent=5 // pred_check_branch
      %104 = sbr.rel (%p102) target = $region16
    $region15: #{thoc_forward.20} parent=5 // pred_region
      // Predicated region
      $region17: #{thoc_forward.20} parent=15 // pred_check
        %p105 = pneg %p28
      $region18: #{thoc_forward.20} parent=15 // pred_check_branch
        %107 = sbr.rel (%p105) target = $region20
      $region19: #{thoc_forward.20} parent=15 // pred_region
        %p108 = scmp.lt.s32.totalorder %s8, 2
        %s109 = scalar_select %p108, %s8, 2
        %s110 = smul.addr %s109, 2
        %s111 = smul.addr %s110, 8
        %s112 = scalar_lea.vmem %s0, %s111
      $region20: #{thoc_forward.20} parent=15 // pred_fallthru
        _
      // Predicated region
      $region21: #{thoc_forward.20} parent=15 // pred_check
        %p113 = pneg %p54
      $region22: #{thoc_forward.20} parent=15 // pred_check_branch
        %115 = sbr.rel (%p113) target = $region24
      $region23: #{thoc_forward.20} parent=15 // pred_region
        %p116 = scmp.lt.s32.totalorder %s8, 2
        %s117 = scalar_select %p116, %s8, 2
        %s118 = smul.addr %s117, 8
        %s119 = scalar_lea.vmem %s1, %s118
      $region24: #{thoc_forward.20} parent=15 // pred_fallthru
        _
    $region16: #{thoc_forward.20} parent=5 // pred_fallthru
      _
    %p120 = scmp.le.s32.totalorder 1, %s8
    %p121 = scmp.lt.s32.totalorder %s8, 4
    %p122 = pnand %p120, %p121
    %p123 = pneg %p122
    // Predicated region
    $region25: #{thoc_forward.20} parent=5 // pred_check
      _
    $region26: #{thoc_forward.20} parent=5 // pred_check_branch
      %125 = sbr.rel (%p122) target = $region28
    $region27: #{thoc_forward.20} parent=5 // pred_region
      %s126 = ssub.s32 %s8, 1
      %p127 = scmp.lt.s32.totalorder %s13, 2
      %s128 = scalar_select %p127, %s13, 2
      %s129 = smul.addr %s128, 2
      %s130 = smul.addr %s129, 8
      %s131 = scalar_lea.vmem %s0, %s130
      %p132 = pneg %p34
      %p133 = pneg %p31
      %p134 = scmp.lt.s32.totalorder %s13, 2
      %s135 = scalar_select %p134, %s13, 2
      %s136 = smul.addr %s135, 8
      %s137 = scalar_lea.vmem %s1, %s136
      %p138 = pneg %p60
      %p139 = pneg %p57
      %p140 = pneg %p86
      %p141 = pneg %p83
      %p142 = scmp.lt.s32.totalorder %s13, 2
      %s143 = scalar_select %p142, %s13, 2
      %s144 = smul.addr %s143, 2
      %s145 = smul.addr %s144, 8
      %s146 = scalar_lea.vmem %s2, %s145
      %p147 = scmp.lt.s32.totalorder %s13, 2
      %s148 = scalar_select %p147, %s13, 2
      %s149 = smul.addr %s148, 2
      %s150 = smul.addr %s149, 8
      %s151 = scalar_lea.vmem %s0, %s150
      %p152 = scmp.lt.s32.totalorder %s13, 2
      %s153 = scalar_select %p152, %s13, 2
      %s154 = smul.addr %s153, 8
      %s155 = scalar_lea.vmem %s1, %s154
      %p156 = scmp.lt.s32.totalorder %s13, 2
      %s157 = scalar_select %p156, %s13, 2
      %s158 = smul.addr %s157, 2
      %s159 = smul.addr %s158, 8
      %s160 = scalar_lea.vmem %s2, %s159
      %v161 = vld [vmem:[%s151] sm:$0xff]
      %v162 = vld [vmem:[%s151 + $0x8] sm:$0xff]
      %v163 = vld [vmem:[%s155] sm:$0x3f]
      %vm164 = vcmask 48128
      %v166 = vsel %vm164, %v161, 0
      %v169 = vsel %vm164, %v162, 0
      %vm171 = vcmask 1045504
      %v173 = vsel %vm171, %v163, 0
      %175 = vmatprep.subr.mxu0 0.0
      %176 = vmatpush1.msra.mxu0 %v173
      %177 = vmatprep.subr.mxu0 0.0
      %178 = vmatpush1.msra.mxu0 0.0
      %179 = vmatprep.subr.mxu0 0.0
      %180 = vmatpush1.msra.mxu0 0.0
      %181 = vmatprep.subr.mxu0 0.0
      %182 = vmatpush1.msra.mxu0 0.0
      %183 = vmatprep.subr.mxu0 0.0
      %184 = vmatpush1.msra.mxu0 0.0
      %185 = vmatprep.subr.mxu0 0.0
      %186 = vmatpush1.msra.mxu0 0.0
      %187 = vmatprep.subr.mxu0 0.0
      %188 = vmatpush1.msra.mxu0 0.0
      %189 = vmatprep.subr.mxu0 0.0
      %190 = vmatpush1.msra.mxu0 0.0
      %191 = vmatprep.subr.mxu0 0.0
      %192 = vmatpush1.msra.mxu0 0.0
      %193 = vmatprep.subr.mxu0 0.0
      %194 = vmatpush1.msra.mxu0 0.0
      %195 = vmatprep.subr.mxu0 0.0
      %196 = vmatpush1.msra.mxu0 0.0
      %197 = vmatprep.subr.mxu0 0.0
      %198 = vmatpush1.msra.mxu0 0.0
      %199 = vmatprep.subr.mxu0 0.0
      %200 = vmatpush1.msra.mxu0 0.0
      %201 = vmatprep.subr.mxu0 0.0
      %202 = vmatpush1.msra.mxu0 0.0
      %203 = vmatprep.subr.mxu0 0.0
      %204 = vmatpush1.msra.mxu0 0.0
      %205 = vmatprep.subr.mxu0 0.0
      %206 = vmatpush1.msra.mxu0 0.0
      %207 = vmatprep.subr.mxu0 0.0
      %208 = vmatpush1.msra.mxu0 0.0
      %209 = vmatprep.subr.mxu0 0.0
      %210 = vmatpush1.msra.mxu0 0.0
      %211 = vmatprep.subr.mxu0 0.0
      %212 = vmatpush1.msra.mxu0 0.0
      %213 = vmatprep.subr.mxu0 0.0
      %214 = vmatpush1.msra.mxu0 0.0
      %215 = vmatprep.subr.mxu0 0.0
      %216 = vmatpush1.msra.mxu0 0.0
      %217 = vmatprep.subr.mxu0 0.0
      %218 = vmatpush1.msra.mxu0 0.0
      %219 = vmatprep.subr.mxu0 0.0
      %220 = vmatpush1.msra.mxu0 0.0
      %221 = vmatprep.subr.mxu0 0.0
      %222 = vmatpush1.msra.mxu0 0.0
      %223 = vmatprep.subr.mxu0 0.0
      %224 = vmatpush1.msra.mxu0 0.0
      %225 = vmatprep.subr.mxu0 0.0
      %226 = vmatpush1.msra.mxu0 0.0
      %227 = vmatprep.subr.mxu0 0.0
      %228 = vmatpush1.msra.mxu0 0.0
      %229 = vmatprep.subr.mxu0 0.0
      %230 = vmatpush1.msra.mxu0 0.0
      %231 = vmatprep.subr.mxu0 0.0
      %232 = vmatpush1.msra.mxu0 0.0
      %233 = vmatprep.subr.mxu0 0.0
      %234 = vmatpush1.msra.mxu0 0.0
      %235 = vmatprep.subr.mxu0 0.0
      %236 = vmatpush1.msra.mxu0 0.0
      %237 = vmatprep.subr.mxu0 0.0
      %238 = vmatpush1.msra.mxu0 0.0
      %239 = vmatprep.mubr.f32.mxu0 0.0
      %240 = vmatmul.mubr.f32.gmra.mrb[0].mxu0 %v166
      %v241 = vpop.f32.mrb[0].mxu0
      %v242 = vadd.f32 0.0, %v241
      %v243 = vpop.f32.mrb[0].mxu0
      %244 = vmatprep.mubr.f32.mxu0 0.0
      %245 = vmatmul.mubr.f32.gmra.mrb[0].mxu0 %v169
      %v246 = vpop.f32.mrb[0].mxu0
      %v247 = vadd.f32 0.0, %v246
      %v248 = vpop.f32.mrb[0].mxu0
      %249 = vdwg.mxu0
      %v250 = vlaneseq
      %v251 = vshrl.u32 %v250, 7
      %v252 = vadd.s32 %v251, 8
      %v253 = vlaneseq
      %v254 = vand.u32 %v253, 127
      %vm255 = vcmp.eq.s32.totalorder %v251, %v254
      %vm256 = vcmp.eq.s32.totalorder %v252, %v254
      %v257 = vsel %vm255, 1.0, 0.0
      %v258 = vsel %vm256, 1.0, 0.0
      %v259 = vsub.f32 %v242, %v257
      %v260 = vsub.f32 %v247, %v258
      %v261 = vmul.f32 %v259, %v259
      %v262 = vmul.f32 %v260, %v260
      %vm263 = vcmask 130048
      %264 = vst.msk [vmem:[%s160] sm:$0xff] %vm263, %v261
      %265 = vst.msk [vmem:[%s160 + $0x8] sm:$0xff] %vm263, %v262
      %p266 = scmp.lt.s32.totalorder %s13, 2
      %s267 = scalar_select %p266, %s13, 2
      %s268 = smul.addr %s267, 2
      %s269 = smul.addr %s268, 8
      %s270 = scalar_lea.vmem %s2, %s269
      // Predicated region
      $region29: #{thoc_forward.20} parent=27 // pred_check
        %p271 = pneg %p83
      $region30: #{thoc_forward.20} parent=27 // pred_check_branch
        %273 = sbr.rel (%p271) target = $region32
      $region31: #{thoc_forward.20} parent=27 // pred_region
        _
      $region32: #{thoc_forward.20} parent=27 // pred_fallthru
        _
    $region28: #{thoc_forward.20} parent=5 // pred_fallthru
      _
    %p274 = scmp.le.s32.totalorder 2, %s8
    // Predicated region
    $region33: #{thoc_forward.20} parent=5 // pred_check
      %p275 = pneg %p274
    $region34: #{thoc_forward.20} parent=5 // pred_check_branch
      %277 = sbr.rel (%p275) target = $region36
    $region35: #{thoc_forward.20} parent=5 // pred_region
      %s278 = ssub.s32 %s8, 2
      // Predicated region
      $region37: #{thoc_forward.20} parent=35 // pred_check
        %p279 = pneg %p89
      $region38: #{thoc_forward.20} parent=35 // pred_check_branch
        %281 = sbr.rel (%p279) target = $region40
      $region39: #{thoc_forward.20} parent=35 // pred_region
        %p282 = scmp.lt.s32.totalorder %s14, 2
        %s283 = scalar_select %p282, %s14, 2
        %s284 = smul.addr %s283, 2
        %s285 = smul.addr %s284, 8
        %s286 = scalar_lea.vmem %s2, %s285
      $region40: #{thoc_forward.20} parent=35 // pred_fallthru
        _
    $region36: #{thoc_forward.20} parent=5 // pred_fallthru
      _
  $region6: #{thoc_forward.20} parent=0 // loop_footer
    %s12 = sadd.s32 1, %s8
  $region7: #{thoc_forward.20} parent=0 // loop_footer_branch
    %7 = sbr.rel target = $region3
  $region8: #{thoc_forward.20} parent=0 // loop_exit
    _

</llo_original>
